<compile_context>
chip_gen: v6e
topology: v6e:2x2x1
jax: 0.10.0
libtpu: 0.0.40
codegen_flags: <defaults>
</compile_context>

<pallas_src>
import functools

import numpy as np
import jax
import jax.numpy as jnp
from jax.experimental import pallas as pl
from jax.experimental.pallas import tpu as pltpu


# ----------------------------- geometry helpers -----------------------------

def _geom(h, w):
    """Padded-flat layout constants for an HxW image.

    Per image the buffer holds [1 guard zero][ (H+2)*(W+2) zero-ring-padded image ]
    [tail zeros], rounded up to a multiple of 128 lanes.  Conv outputs are computed for
    the contiguous span of rows 1..H of the padded grid (START .. START+SQ) and the
    interior mask zeroes the left/right ring columns so the layout is self-sustaining.
    """
    wp, hp = w + 2, h + 2
    lp = hp * wp
    lbuf = ((lp + 2 + 127) // 128) * 128
    start = 1 + wp                 # buffer index of padded coord (yp=1, xp=0)
    sq = h * wp                    # computed span (all interior rows, full padded width)
    offs = tuple(dy * wp + dx for dy in (-1, 0, 1) for dx in (-1, 0, 1))
    return wp, lbuf, start, sq, offs


def _interior_mask(h, w):
    wp = w + 2
    row = np.concatenate([[0.0], np.ones(w, np.float32), [0.0]]).astype(np.float32)
    return np.tile(row, h).reshape(1, h * wp)


def _embed_padded_flat(x_nchw, lbuf):
    """(N,C,H,W) -> (N,C,Lbuf) padded-flat layout (pure rearrangement glue)."""
    n, c, h, w = x_nchw.shape
    lp = (h + 2) * (w + 2)
    xp = jnp.pad(x_nchw, ((0, 0), (0, 0), (1, 1), (1, 1)))
    xf = xp.reshape(n, c, lp)
    return jnp.pad(xf, ((0, 0), (0, 0), (1, lbuf - lp - 1)))


# ----------------------------- Pallas kernels -----------------------------

def _conv_block_kernel(x_ref, w_ref, b_ref, m_ref, o_ref, *, offs, start, sq):
    """Folded UnetBlock: 3x3 conv (+identity+adapter folded) + bias + ReLU.

    x_ref: (Cin, Lbuf) bf16 for one image,  w_ref: (9, Cout, Cin) bf16,
    b_ref: (Cout, 1) f32,  m_ref: (1, SQ) f32 interior mask,  o_ref: (Cout, Lbuf) bf16.
    """
    cout = o_ref.shape[0]
    xv = x_ref[...]                                       # (Cin, Lbuf)
    acc = jnp.zeros((cout, sq), jnp.float32)
    for k, off in enumerate(offs):                        # 9 shifted in-VMEM taps
        xs = xv[:, start + off: start + off + sq]         # (Cin, SQ)
        acc = acc + jnp.dot(w_ref[k], xs, preferred_element_type=jnp.float32)
    y = jnp.maximum(acc + b_ref[...], 0.0) * m_ref[...]   # ReLU + keep zero ring
    o_ref[...] = jnp.zeros(o_ref.shape, o_ref.dtype)      # zero guards / top & bottom ring
    o_ref[:, start:start + sq] = y.astype(o_ref.dtype)


def _conv_block_sr_kernel(x_ref, w_ref, b_ref, wsr_ref, bsr_ref, o_ref, *, offs, start, sq):
    """Last UnetBlock fused with the ESPCN 1x1 conv head.

    The ReLU activation stays in VMEM; only the (12, SQ) sub-pixel output hits HBM.
    """
    f = w_ref.shape[1]
    xv = x_ref[...]
    acc = jnp.zeros((f, sq), jnp.float32)
    for k, off in enumerate(offs):
        xs = xv[:, start + off: start + off + sq]
        acc = acc + jnp.dot(w_ref[k], xs, preferred_element_type=jnp.float32)
    h = jnp.maximum(acc + b_ref[...], 0.0).astype(wsr_ref.dtype)       # (F, SQ)
    o_ref[...] = (jnp.dot(wsr_ref[...], h, preferred_element_type=jnp.float32)
                  + bsr_ref[...])                                      # (12, SQ) f32


def _bicubic_add_clip_kernel(sr_ref, x_ref, wh_ref, wwt_ref, o_ref, *, wimg):
    """Separable bicubic x2 upsample of the input (per sub-pixel offset so the result is
    already in pre-PixelShuffle channel order), fused with the skip-add and Hardtanh.

    sr_ref: (12, H, W+2) f32 (padded-flat reshaped),  x_ref: (3, H, W) f32,
    wh_ref: (2, H, H) f32,  wwt_ref: (2, W, W) f32,  o_ref: (12, H, W) f32.
    """
    cin = x_ref.shape[0]
    for c in range(cin):
        xc = x_ref[c]                                                   # (H, W)
        for r1 in range(2):
            t = jnp.dot(wh_ref[r1], xc, preferred_element_type=jnp.float32)
            for r2 in range(2):
                up = jnp.dot(t, wwt_ref[r2], preferred_element_type=jnp.float32)
                ch = c * 4 + r1 * 2 + r2
                srp = sr_ref[ch][:, 1:wimg + 1]                         # drop ring columns
                o_ref[ch, :, :] = jnp.clip(srp + up, -1.0, 1.0)


# ----------------------------- pallas_call wrappers -----------------------------

_PAR = pltpu.CompilerParams(dimension_semantics=("parallel",))


def conv_block(x, w_eff, b_eff, mask, h, w):
    n, cin, lbuf = x.shape
    cout = w_eff.shape[1]
    _, _, start, sq, offs = _geom(h, w)
    kern = functools.partial(_conv_block_kernel, offs=offs, start=start, sq=sq)
    return pl.pallas_call(
        kern,
        out_shape=jax.ShapeDtypeStruct((n, cout, lbuf), jnp.bfloat16),
        grid=(n,),
        in_specs=[
            pl.BlockSpec((None, cin, lbuf), lambda i: (i, 0, 0)),
            pl.BlockSpec((9, cout, cin), lambda i: (0, 0, 0)),
            pl.BlockSpec((cout, 1), lambda i: (0, 0)),
            pl.BlockSpec((1, sq), lambda i: (0, 0)),
        ],
        out_specs=pl.BlockSpec((None, cout, lbuf), lambda i: (i, 0, 0)),
        compiler_params=_PAR,
    )(x, w_eff, b_eff, mask)


def conv_block_sr(x, w_eff, b_eff, w_sr, b_sr, h, w):
    n, cin, lbuf = x.shape
    f = w_eff.shape[1]
    c12 = w_sr.shape[0]
    _, _, start, sq, offs = _geom(h, w)
    kern = functools.partial(_conv_block_sr_kernel, offs=offs, start=start, sq=sq)
    return pl.pallas_call(
        kern,
        out_shape=jax.ShapeDtypeStruct((n, c12, sq), jnp.float32),
        grid=(n,),
        in_specs=[
            pl.BlockSpec((None, cin, lbuf), lambda i: (i, 0, 0)),
            pl.BlockSpec((9, f, cin), lambda i: (0, 0, 0)),
            pl.BlockSpec((f, 1), lambda i: (0, 0)),
            pl.BlockSpec((c12, f), lambda i: (0, 0)),
            pl.BlockSpec((c12, 1), lambda i: (0, 0)),
        ],
        out_specs=pl.BlockSpec((None, c12, sq), lambda i: (i, 0, 0)),
        compiler_params=_PAR,
    )(x, w_eff, b_eff, w_sr, b_sr)


def bicubic_skip_add_clip(sr_flat, x_nchw, wh_pair, wwt_pair):
    n, c12, sq = sr_flat.shape
    _, cin, h, w = x_nchw.shape
    wp = w + 2
    sr_planes = sr_flat.reshape(n, c12, h, wp)        # contiguous reshape (free)
    kern = functools.partial(_bicubic_add_clip_kernel, wimg=w)
    return pl.pallas_call(
        kern,
        out_shape=jax.ShapeDtypeStruct((n, c12, h, w), jnp.float32),
        grid=(n,),
        in_specs=[
            pl.BlockSpec((None, c12, h, wp), lambda i: (i, 0, 0, 0)),
            pl.BlockSpec((None, cin, h, w), lambda i: (i, 0, 0, 0)),
            pl.BlockSpec((2, h, h), lambda i: (0, 0, 0)),
            pl.BlockSpec((2, w, w), lambda i: (0, 0, 0)),
        ],
        out_specs=pl.BlockSpec((None, c12, h, w), lambda i: (i, 0, 0, 0)),
        compiler_params=_PAR,
    )(sr_planes, x_nchw.astype(jnp.float32), wh_pair, wwt_pair)


# ----------------------------- glue: shuffle / weights / bicubic matrices ------------

def pixel_shuffle_nchw(x, r):
    """(N, C*r*r, H, W) -> (N, C, H*r, W*r) with PyTorch PixelShuffle ordering (glue)."""
    n, c, h, w = x.shape
    co = c // (r * r)
    x = x.reshape(n, co, r, r, h, w)
    x = x.transpose(0, 1, 4, 2, 5, 3)
    return x.reshape(n, co, h * r, w * r)


def fold_block_weights(w3, b3, w1, b1, use_residual):
    """conv3x3(x) + x + conv1x1(x) == one 3x3 conv with a modified center tap
    (exactly UnetBlock.reparametrize_convs).  Returns (9, Cout, Cin) bf16, (Cout,1) f32."""
    if use_residual:
        cout, cin = w1.shape
        w3 = w3.at[:, :, 1, 1].add(w1 + jnp.eye(cout, cin, dtype=w1.dtype))
        b = b3 + b1
    else:
        b = b3
    wk = jnp.transpose(w3, (2, 3, 0, 1)).reshape(9, w3.shape[0], w3.shape[1])
    return wk.astype(jnp.bfloat16), b.reshape(-1, 1).astype(jnp.float32)


def bicubic_matrix_align_corners(n_in, n_out, a=-0.75):
    """Dense 1-D bicubic interpolation matrix matching torch Upsample(mode='bicubic',
    align_corners=True) with border-replicated taps."""
    m = np.zeros((n_out, n_in), dtype=np.float32)
    scale = (n_in - 1) / (n_out - 1) if n_out > 1 else 0.0

    def cc1(t):  # |t| <= 1
        return ((a + 2.0) * t - (a + 3.0)) * t * t + 1.0

    def cc2(t):  # 1 < |t| < 2
        return ((a * t - 5.0 * a) * t + 8.0 * a) * t - 4.0 * a

    for p in range(n_out):
        s = p * scale
        i0 = int(np.floor(s))
        t = s - i0
        coeffs = (cc2(t + 1.0), cc1(t), cc1(1.0 - t), cc2(2.0 - t))
        for k in range(4):
            idx = min(max(i0 - 1 + k, 0), n_in - 1)
            m[p, idx] += coeffs[k]
    return m


# ----------------------------- model -----------------------------

def init_params(key, n_filters, n_blocks, h, w):
    chans = [(3, n_filters)] + [(n_filters, n_filters)] * (n_blocks - 1)
    keys = jax.random.split(key, len(chans) * 4 + 2)
    ki = 0
    blocks = []
    for cin, cout in chans:
        w3 = jax.random.normal(keys[ki], (cout, cin, 3, 3), jnp.float32) * 0.1; ki += 1
        b3 = jax.random.normal(keys[ki], (cout,), jnp.float32) * 0.1; ki += 1
        w1 = jax.random.normal(keys[ki], (cout, cin), jnp.float32) * 0.1; ki += 1
        b1 = jax.random.normal(keys[ki], (cout,), jnp.float32) * 0.1; ki += 1
        # residual path is active only when in_channels == out_channels (UnetBlock.forward)
        blocks.append(fold_block_weights(w3, b3, w1, b1, use_residual=(cin == cout)))
    w_sr = jax.random.normal(keys[ki], (4 * 3, n_filters), jnp.float32) * 0.1; ki += 1
    b_sr = jax.random.normal(keys[ki], (4 * 3,), jnp.float32) * 0.1; ki += 1

    wh = bicubic_matrix_align_corners(h, 2 * h)            # (2H, H)
    ww = bicubic_matrix_align_corners(w, 2 * w)            # (2W, W)
    wh_pair = jnp.asarray(np.stack([wh[0::2], wh[1::2]]))          # (2, H, H)
    wwt_pair = jnp.asarray(np.stack([ww[0::2].T, ww[1::2].T]))     # (2, W, W)

    return dict(
        blocks=blocks,
        w_sr=w_sr.astype(jnp.bfloat16),
        b_sr=b_sr.reshape(-1, 1).astype(jnp.float32),
        wh_pair=wh_pair,
        wwt_pair=wwt_pair,
        mask=jnp.asarray(_interior_mask(h, w)),
    )


def simple_resnet_forward(x_nchw, params):
    n, c, h, w = x_nchw.shape
    _, lbuf, _, _, _ = _geom(h, w)

    x = x_nchw.astype(jnp.float32)
    a = _embed_padded_flat(x, lbuf).astype(jnp.bfloat16)             # (N, 3, Lbuf)

    blocks = params["blocks"]
    for wk, bk in blocks[:-1]:                                       # UnetBlocks 0..n-2
        a = conv_block(a, wk, bk, params["mask"], h, w)
    wk, bk = blocks[-1]                                              # last block + 1x1 head
    sr_flat = conv_block_sr(a, wk, bk, params["w_sr"], params["b_sr"], h, w)  # (N,12,SQ)

    y = bicubic_skip_add_clip(sr_flat, x, params["wh_pair"], params["wwt_pair"])  # (N,12,H,W)
    return pixel_shuffle_nchw(y, 2)                                  # (N, 3, 2H, 2W)


if __name__ == "__main__":
    N, C, H, W = 2, 3, 16, 16
    n_filters, n_blocks = 8, 3

    key = jax.random.PRNGKey(0)
    k_x, k_p = jax.random.split(key)
    x = jax.random.normal(k_x, (N, C, H, W), jnp.float32)
    params = init_params(k_p, n_filters, n_blocks, H, W)

    fwd = jax.jit(lambda inp: simple_resnet_forward(inp, params))
    out = fwd(x)
    jax.block_until_ready(out)

    assert out.shape == (N, 3, 2 * H, 2 * W), out.shape
    assert bool(jnp.all(jnp.isfinite(out)))
    assert float(jnp.max(out)) <= 1.0 and float(jnp.min(out)) >= -1.0
    print("KERNEL_OK")
</pallas_src>

<mosaic_0001>
module attributes {stable_mosaic.version = 11 : i64} {
  func.func @_conv_block_kernel(%arg0: i32, %arg1: memref<1x3x384xbf16, #tpu.memory_space<vmem>>, %arg2: memref<9x8x3xbf16, #tpu.memory_space<vmem>>, %arg3: memref<8x1xf32, #tpu.memory_space<vmem>>, %arg4: memref<1x288xf32, #tpu.memory_space<vmem>>, %arg5: memref<1x8x384xbf16, #tpu.memory_space<vmem>>) attributes {dimension_semantics = [#tpu.dimension_semantics<parallel>], iteration_bounds = array<i64: 2>, scalar_prefetch = 0 : i64, scratch_operands = 0 : i64, tpu.core_type = #tpu.core_type<tc>, window_params = [{transform_indices = @transform_0, window_bounds = array<i64: 1, 3, 384>}, {pipeline_mode = #tpu.pipeline_mode<synchronous>, transform_indices = @transform_1, window_bounds = array<i64: 9, 8, 3>}, {pipeline_mode = #tpu.pipeline_mode<synchronous>, transform_indices = @transform_2, window_bounds = array<i64: 8, 1>}, {pipeline_mode = #tpu.pipeline_mode<synchronous>, transform_indices = @transform_3, window_bounds = array<i64: 1, 288>}, {transform_indices = @transform_4, window_bounds = array<i64: 1, 8, 384>}]} {
    %c0 = arith.constant 0 : index
    %c0_0 = arith.constant 0 : index
    %c0_1 = arith.constant 0 : index
    %0 = vector.load %arg1[%c0, %c0_0, %c0_1] : memref<1x3x384xbf16, #tpu.memory_space<vmem>>, vector<1x3x384xbf16>
    %1 = vector.shape_cast %0 : vector<1x3x384xbf16> to vector<3x384xbf16>
    %cst = arith.constant 0.000000e+00 : f32
    %2 = vector.broadcast %cst : f32 to vector<8x288xf32>
    %3 = vector.extract_strided_slice %1 {offsets = [0, 0], sizes = [3, 288], strides = [1, 1]} : vector<3x384xbf16> to vector<3x288xbf16>
    %c0_2 = arith.constant 0 : index
    %c0_3 = arith.constant 0 : index
    %c0_4 = arith.constant 0 : index
    %4 = vector.load %arg2[%c0_2, %c0_3, %c0_4] : memref<9x8x3xbf16, #tpu.memory_space<vmem>>, vector<1x8x3xbf16>
    %5 = vector.shape_cast %4 : vector<1x8x3xbf16> to vector<8x3xbf16>
    %cst_5 = arith.constant dense<0.000000e+00> : vector<8x288xf32>
    %6 = tpu.matmul %5, %3, %cst_5 {dimension_numbers = #tpu.dot_dimension_numbers<[1], [0], [0], [1], [0, 0, 1, 1], [], []>} : vector<8x3xbf16>, vector<3x288xbf16>, vector<8x288xf32> -> vector<8x288xf32>
    %7 = arith.addf %2, %6 : vector<8x288xf32>
    %8 = vector.extract_strided_slice %1 {offsets = [0, 1], sizes = [3, 288], strides = [1, 1]} : vector<3x384xbf16> to vector<3x288xbf16>
    %c1 = arith.constant 1 : index
    %c0_6 = arith.constant 0 : index
    %c0_7 = arith.constant 0 : index
    %9 = vector.load %arg2[%c1, %c0_6, %c0_7] : memref<9x8x3xbf16, #tpu.memory_space<vmem>>, vector<1x8x3xbf16>
    %10 = vector.shape_cast %9 : vector<1x8x3xbf16> to vector<8x3xbf16>
    %cst_8 = arith.constant dense<0.000000e+00> : vector<8x288xf32>
    %11 = tpu.matmul %10, %8, %cst_8 {dimension_numbers = #tpu.dot_dimension_numbers<[1], [0], [0], [1], [0, 0, 1, 1], [], []>} : vector<8x3xbf16>, vector<3x288xbf16>, vector<8x288xf32> -> vector<8x288xf32>
    %12 = arith.addf %7, %11 : vector<8x288xf32>
    %13 = vector.extract_strided_slice %1 {offsets = [0, 2], sizes = [3, 288], strides = [1, 1]} : vector<3x384xbf16> to vector<3x288xbf16>
    %c2 = arith.constant 2 : index
    %c0_9 = arith.constant 0 : index
    %c0_10 = arith.constant 0 : index
    %14 = vector.load %arg2[%c2, %c0_9, %c0_10] : memref<9x8x3xbf16, #tpu.memory_space<vmem>>, vector<1x8x3xbf16>
    %15 = vector.shape_cast %14 : vector<1x8x3xbf16> to vector<8x3xbf16>
    %cst_11 = arith.constant dense<0.000000e+00> : vector<8x288xf32>
    %16 = tpu.matmul %15, %13, %cst_11 {dimension_numbers = #tpu.dot_dimension_numbers<[1], [0], [0], [1], [0, 0, 1, 1], [], []>} : vector<8x3xbf16>, vector<3x288xbf16>, vector<8x288xf32> -> vector<8x288xf32>
    %17 = arith.addf %12, %16 : vector<8x288xf32>
    %18 = vector.extract_strided_slice %1 {offsets = [0, 18], sizes = [3, 288], strides = [1, 1]} : vector<3x384xbf16> to vector<3x288xbf16>
    %c3 = arith.constant 3 : index
    %c0_12 = arith.constant 0 : index
    %c0_13 = arith.constant 0 : index
    %19 = vector.load %arg2[%c3, %c0_12, %c0_13] : memref<9x8x3xbf16, #tpu.memory_space<vmem>>, vector<1x8x3xbf16>
    %20 = vector.shape_cast %19 : vector<1x8x3xbf16> to vector<8x3xbf16>
    %cst_14 = arith.constant dense<0.000000e+00> : vector<8x288xf32>
    %21 = tpu.matmul %20, %18, %cst_14 {dimension_numbers = #tpu.dot_dimension_numbers<[1], [0], [0], [1], [0, 0, 1, 1], [], []>} : vector<8x3xbf16>, vector<3x288xbf16>, vector<8x288xf32> -> vector<8x288xf32>
    %22 = arith.addf %17, %21 : vector<8x288xf32>
    %23 = vector.extract_strided_slice %1 {offsets = [0, 19], sizes = [3, 288], strides = [1, 1]} : vector<3x384xbf16> to vector<3x288xbf16>
    %c4 = arith.constant 4 : index
    %c0_15 = arith.constant 0 : index
    %c0_16 = arith.constant 0 : index
    %24 = vector.load %arg2[%c4, %c0_15, %c0_16] : memref<9x8x3xbf16, #tpu.memory_space<vmem>>, vector<1x8x3xbf16>
    %25 = vector.shape_cast %24 : vector<1x8x3xbf16> to vector<8x3xbf16>
    %cst_17 = arith.constant dense<0.000000e+00> : vector<8x288xf32>
    %26 = tpu.matmul %25, %23, %cst_17 {dimension_numbers = #tpu.dot_dimension_numbers<[1], [0], [0], [1], [0, 0, 1, 1], [], []>} : vector<8x3xbf16>, vector<3x288xbf16>, vector<8x288xf32> -> vector<8x288xf32>
    %27 = arith.addf %22, %26 : vector<8x288xf32>
    %28 = vector.extract_strided_slice %1 {offsets = [0, 20], sizes = [3, 288], strides = [1, 1]} : vector<3x384xbf16> to vector<3x288xbf16>
    %c5 = arith.constant 5 : index
    %c0_18 = arith.constant 0 : index
    %c0_19 = arith.constant 0 : index
    %29 = vector.load %arg2[%c5, %c0_18, %c0_19] : memref<9x8x3xbf16, #tpu.memory_space<vmem>>, vector<1x8x3xbf16>
    %30 = vector.shape_cast %29 : vector<1x8x3xbf16> to vector<8x3xbf16>
    %cst_20 = arith.constant dense<0.000000e+00> : vector<8x288xf32>
    %31 = tpu.matmul %30, %28, %cst_20 {dimension_numbers = #tpu.dot_dimension_numbers<[1], [0], [0], [1], [0, 0, 1, 1], [], []>} : vector<8x3xbf16>, vector<3x288xbf16>, vector<8x288xf32> -> vector<8x288xf32>
    %32 = arith.addf %27, %31 : vector<8x288xf32>
    %33 = vector.extract_strided_slice %1 {offsets = [0, 36], sizes = [3, 288], strides = [1, 1]} : vector<3x384xbf16> to vector<3x288xbf16>
    %c6 = arith.constant 6 : index
    %c0_21 = arith.constant 0 : index
    %c0_22 = arith.constant 0 : index
    %34 = vector.load %arg2[%c6, %c0_21, %c0_22] : memref<9x8x3xbf16, #tpu.memory_space<vmem>>, vector<1x8x3xbf16>
    %35 = vector.shape_cast %34 : vector<1x8x3xbf16> to vector<8x3xbf16>
    %cst_23 = arith.constant dense<0.000000e+00> : vector<8x288xf32>
    %36 = tpu.matmul %35, %33, %cst_23 {dimension_numbers = #tpu.dot_dimension_numbers<[1], [0], [0], [1], [0, 0, 1, 1], [], []>} : vector<8x3xbf16>, vector<3x288xbf16>, vector<8x288xf32> -> vector<8x288xf32>
    %37 = arith.addf %32, %36 : vector<8x288xf32>
    %38 = vector.extract_strided_slice %1 {offsets = [0, 37], sizes = [3, 288], strides = [1, 1]} : vector<3x384xbf16> to vector<3x288xbf16>
    %c7 = arith.constant 7 : index
    %c0_24 = arith.constant 0 : index
    %c0_25 = arith.constant 0 : index
    %39 = vector.load %arg2[%c7, %c0_24, %c0_25] : memref<9x8x3xbf16, #tpu.memory_space<vmem>>, vector<1x8x3xbf16>
    %40 = vector.shape_cast %39 : vector<1x8x3xbf16> to vector<8x3xbf16>
    %cst_26 = arith.constant dense<0.000000e+00> : vector<8x288xf32>
    %41 = tpu.matmul %40, %38, %cst_26 {dimension_numbers = #tpu.dot_dimension_numbers<[1], [0], [0], [1], [0, 0, 1, 1], [], []>} : vector<8x3xbf16>, vector<3x288xbf16>, vector<8x288xf32> -> vector<8x288xf32>
    %42 = arith.addf %37, %41 : vector<8x288xf32>
    %43 = vector.extract_strided_slice %1 {offsets = [0, 38], sizes = [3, 288], strides = [1, 1]} : vector<3x384xbf16> to vector<3x288xbf16>
    %c8 = arith.constant 8 : index
    %c0_27 = arith.constant 0 : index
    %c0_28 = arith.constant 0 : index
    %44 = vector.load %arg2[%c8, %c0_27, %c0_28] : memref<9x8x3xbf16, #tpu.memory_space<vmem>>, vector<1x8x3xbf16>
    %45 = vector.shape_cast %44 : vector<1x8x3xbf16> to vector<8x3xbf16>
    %cst_29 = arith.constant dense<0.000000e+00> : vector<8x288xf32>
    %46 = tpu.matmul %45, %43, %cst_29 {dimension_numbers = #tpu.dot_dimension_numbers<[1], [0], [0], [1], [0, 0, 1, 1], [], []>} : vector<8x3xbf16>, vector<3x288xbf16>, vector<8x288xf32> -> vector<8x288xf32>
    %47 = arith.addf %42, %46 : vector<8x288xf32>
    %c0_30 = arith.constant 0 : index
    %c0_31 = arith.constant 0 : index
    %48 = vector.load %arg3[%c0_30, %c0_31] : memref<8x1xf32, #tpu.memory_space<vmem>>, vector<8x1xf32>
    %49 = vector.broadcast %48 : vector<8x1xf32> to vector<8x288xf32>
    %50 = arith.addf %47, %49 : vector<8x288xf32>
    %cst_32 = arith.constant 0.000000e+00 : f32
    %51 = vector.broadcast %cst_32 : f32 to vector<8x288xf32>
    %52 = arith.maximumf %50, %51 : vector<8x288xf32>
    %c0_33 = arith.constant 0 : index
    %c0_34 = arith.constant 0 : index
    %53 = vector.load %arg4[%c0_33, %c0_34] : memref<1x288xf32, #tpu.memory_space<vmem>>, vector<1x288xf32>
    %54 = vector.broadcast %53 : vector<1x288xf32> to vector<8x288xf32>
    %55 = arith.mulf %52, %54 : vector<8x288xf32>
    %cst_35 = arith.constant 0.000000e+00 : bf16
    %56 = vector.broadcast %cst_35 : bf16 to vector<8x384xbf16>
    %c0_36 = arith.constant 0 : index
    %c0_37 = arith.constant 0 : index
    %c0_38 = arith.constant 0 : index
    %57 = vector.load %arg5[%c0_36, %c0_37, %c0_38] : memref<1x8x384xbf16, #tpu.memory_space<vmem>>, vector<1x8x384xbf16>
    %58 = vector.shape_cast %57 : vector<1x8x384xbf16> to vector<8x384xbf16>
    %59 = vector.shape_cast %56 : vector<8x384xbf16> to vector<1x8x384xbf16>
    tpu.vector_store %arg5[%c0_36, %c0_37, %c0_38], %59 {strides = array<i32>} : memref<1x8x384xbf16, #tpu.memory_space<vmem>>, vector<1x8x384xbf16>,
    %60 = arith.truncf %55 : vector<8x288xf32> to vector<8x288xbf16>
    %c0_39 = arith.constant 0 : index
    %c0_40 = arith.constant 0 : index
    %c19 = arith.constant 19 : index
    %61 = vector.load %arg5[%c0_39, %c0_40, %c19] : memref<1x8x384xbf16, #tpu.memory_space<vmem>>, vector<1x8x288xbf16>
    %62 = vector.shape_cast %61 : vector<1x8x288xbf16> to vector<8x288xbf16>
    %63 = vector.shape_cast %60 : vector<8x288xbf16> to vector<1x8x288xbf16>
    tpu.vector_store %arg5[%c0_39, %c0_40, %c19], %63 {strides = array<i32>} : memref<1x8x384xbf16, #tpu.memory_space<vmem>>, vector<1x8x288xbf16>,
    return
  }
  func.func @transform_0(%arg0: i32) -> (i32, i32, i32) {
    %c0_i32 = arith.constant 0 : i32
    %c0_i32_0 = arith.constant 0 : i32
    %c0_i32_1 = arith.constant 0 : i32
    return %arg0, %c0_i32, %c0_i32_0 : i32, i32, i32
  }
  func.func @transform_1(%arg0: i32) -> (i32, i32, i32) {
    %c0_i32 = arith.constant 0 : i32
    %c0_i32_0 = arith.constant 0 : i32
    %c0_i32_1 = arith.constant 0 : i32
    %c0_i32_2 = arith.constant 0 : i32
    return %c0_i32, %c0_i32_0, %c0_i32_1 : i32, i32, i32
  }
  func.func @transform_2(%arg0: i32) -> (i32, i32) {
    %c0_i32 = arith.constant 0 : i32
    %c0_i32_0 = arith.constant 0 : i32
    %c0_i32_1 = arith.constant 0 : i32
    return %c0_i32, %c0_i32_0 : i32, i32
  }
  func.func @transform_3(%arg0: i32) -> (i32, i32) {
    %c0_i32 = arith.constant 0 : i32
    %c0_i32_0 = arith.constant 0 : i32
    %c0_i32_1 = arith.constant 0 : i32
    return %c0_i32, %c0_i32_0 : i32, i32
  }
  func.func @transform_4(%arg0: i32) -> (i32, i32, i32) {
    %c0_i32 = arith.constant 0 : i32
    %c0_i32_0 = arith.constant 0 : i32
    %c0_i32_1 = arith.constant 0 : i32
    return %arg0, %c0_i32, %c0_i32_0 : i32, i32, i32
  }
}

module attributes {stable_mosaic.version = 11 : i64} {
  func.func @_conv_block_sr_kernel(%arg0: i32, %arg1: memref<1x8x384xbf16, #tpu.memory_space<vmem>>, %arg2: memref<9x8x8xbf16, #tpu.memory_space<vmem>>, %arg3: memref<8x1xf32, #tpu.memory_space<vmem>>, %arg4: memref<12x8xbf16, #tpu.memory_space<vmem>>, %arg5: memref<12x1xf32, #tpu.memory_space<vmem>>, %arg6: memref<1x12x288xf32, #tpu.memory_space<vmem>>) attributes {dimension_semantics = [#tpu.dimension_semantics<parallel>], iteration_bounds = array<i64: 2>, scalar_prefetch = 0 : i64, scratch_operands = 0 : i64, tpu.core_type = #tpu.core_type<tc>, window_params = [{transform_indices = @transform_0, window_bounds = array<i64: 1, 8, 384>}, {pipeline_mode = #tpu.pipeline_mode<synchronous>, transform_indices = @transform_1, window_bounds = array<i64: 9, 8, 8>}, {pipeline_mode = #tpu.pipeline_mode<synchronous>, transform_indices = @transform_2, window_bounds = array<i64: 8, 1>}, {pipeline_mode = #tpu.pipeline_mode<synchronous>, transform_indices = @transform_3, window_bounds = array<i64: 12, 8>}, {pipeline_mode = #tpu.pipeline_mode<synchronous>, transform_indices = @transform_4, window_bounds = array<i64: 12, 1>}, {transform_indices = @transform_5, window_bounds = array<i64: 1, 12, 288>}]} {
    %c0 = arith.constant 0 : index
    %c0_0 = arith.constant 0 : index
    %c0_1 = arith.constant 0 : index
    %0 = vector.load %arg1[%c0, %c0_0, %c0_1] : memref<1x8x384xbf16, #tpu.memory_space<vmem>>, vector<1x8x384xbf16>
    %1 = vector.shape_cast %0 : vector<1x8x384xbf16> to vector<8x384xbf16>
    %cst = arith.constant 0.000000e+00 : f32
    %2 = vector.broadcast %cst : f32 to vector<8x288xf32>
    %3 = vector.extract_strided_slice %1 {offsets = [0, 0], sizes = [8, 288], strides = [1, 1]} : vector<8x384xbf16> to vector<8x288xbf16>
    %c0_2 = arith.constant 0 : index
    %c0_3 = arith.constant 0 : index
    %c0_4 = arith.constant 0 : index
    %4 = vector.load %arg2[%c0_2, %c0_3, %c0_4] : memref<9x8x8xbf16, #tpu.memory_space<vmem>>, vector<1x8x8xbf16>
    %5 = vector.shape_cast %4 : vector<1x8x8xbf16> to vector<8x8xbf16>
    %cst_5 = arith.constant dense<0.000000e+00> : vector<8x288xf32>
    %6 = tpu.matmul %5, %3, %cst_5 {dimension_numbers = #tpu.dot_dimension_numbers<[1], [0], [0], [1], [0, 0, 1, 1], [], []>} : vector<8x8xbf16>, vector<8x288xbf16>, vector<8x288xf32> -> vector<8x288xf32>
    %7 = arith.addf %2, %6 : vector<8x288xf32>
    %8 = vector.extract_strided_slice %1 {offsets = [0, 1], sizes = [8, 288], strides = [1, 1]} : vector<8x384xbf16> to vector<8x288xbf16>
    %c1 = arith.constant 1 : index
    %c0_6 = arith.constant 0 : index
    %c0_7 = arith.constant 0 : index
    %9 = vector.load %arg2[%c1, %c0_6, %c0_7] : memref<9x8x8xbf16, #tpu.memory_space<vmem>>, vector<1x8x8xbf16>
    %10 = vector.shape_cast %9 : vector<1x8x8xbf16> to vector<8x8xbf16>
    %cst_8 = arith.constant dense<0.000000e+00> : vector<8x288xf32>
    %11 = tpu.matmul %10, %8, %cst_8 {dimension_numbers = #tpu.dot_dimension_numbers<[1], [0], [0], [1], [0, 0, 1, 1], [], []>} : vector<8x8xbf16>, vector<8x288xbf16>, vector<8x288xf32> -> vector<8x288xf32>
    %12 = arith.addf %7, %11 : vector<8x288xf32>
    %13 = vector.extract_strided_slice %1 {offsets = [0, 2], sizes = [8, 288], strides = [1, 1]} : vector<8x384xbf16> to vector<8x288xbf16>
    %c2 = arith.constant 2 : index
    %c0_9 = arith.constant 0 : index
    %c0_10 = arith.constant 0 : index
    %14 = vector.load %arg2[%c2, %c0_9, %c0_10] : memref<9x8x8xbf16, #tpu.memory_space<vmem>>, vector<1x8x8xbf16>
    %15 = vector.shape_cast %14 : vector<1x8x8xbf16> to vector<8x8xbf16>
    %cst_11 = arith.constant dense<0.000000e+00> : vector<8x288xf32>
    %16 = tpu.matmul %15, %13, %cst_11 {dimension_numbers = #tpu.dot_dimension_numbers<[1], [0], [0], [1], [0, 0, 1, 1], [], []>} : vector<8x8xbf16>, vector<8x288xbf16>, vector<8x288xf32> -> vector<8x288xf32>
    %17 = arith.addf %12, %16 : vector<8x288xf32>
    %18 = vector.extract_strided_slice %1 {offsets = [0, 18], sizes = [8, 288], strides = [1, 1]} : vector<8x384xbf16> to vector<8x288xbf16>
    %c3 = arith.constant 3 : index
    %c0_12 = arith.constant 0 : index
    %c0_13 = arith.constant 0 : index
    %19 = vector.load %arg2[%c3, %c0_12, %c0_13] : memref<9x8x8xbf16, #tpu.memory_space<vmem>>, vector<1x8x8xbf16>
    %20 = vector.shape_cast %19 : vector<1x8x8xbf16> to vector<8x8xbf16>
    %cst_14 = arith.constant dense<0.000000e+00> : vector<8x288xf32>
    %21 = tpu.matmul %20, %18, %cst_14 {dimension_numbers = #tpu.dot_dimension_numbers<[1], [0], [0], [1], [0, 0, 1, 1], [], []>} : vector<8x8xbf16>, vector<8x288xbf16>, vector<8x288xf32> -> vector<8x288xf32>
    %22 = arith.addf %17, %21 : vector<8x288xf32>
    %23 = vector.extract_strided_slice %1 {offsets = [0, 19], sizes = [8, 288], strides = [1, 1]} : vector<8x384xbf16> to vector<8x288xbf16>
    %c4 = arith.constant 4 : index
    %c0_15 = arith.constant 0 : index
    %c0_16 = arith.constant 0 : index
    %24 = vector.load %arg2[%c4, %c0_15, %c0_16] : memref<9x8x8xbf16, #tpu.memory_space<vmem>>, vector<1x8x8xbf16>
    %25 = vector.shape_cast %24 : vector<1x8x8xbf16> to vector<8x8xbf16>
    %cst_17 = arith.constant dense<0.000000e+00> : vector<8x288xf32>
    %26 = tpu.matmul %25, %23, %cst_17 {dimension_numbers = #tpu.dot_dimension_numbers<[1], [0], [0], [1], [0, 0, 1, 1], [], []>} : vector<8x8xbf16>, vector<8x288xbf16>, vector<8x288xf32> -> vector<8x288xf32>
    %27 = arith.addf %22, %26 : vector<8x288xf32>
    %28 = vector.extract_strided_slice %1 {offsets = [0, 20], sizes = [8, 288], strides = [1, 1]} : vector<8x384xbf16> to vector<8x288xbf16>
    %c5 = arith.constant 5 : index
    %c0_18 = arith.constant 0 : index
    %c0_19 = arith.constant 0 : index
    %29 = vector.load %arg2[%c5, %c0_18, %c0_19] : memref<9x8x8xbf16, #tpu.memory_space<vmem>>, vector<1x8x8xbf16>
    %30 = vector.shape_cast %29 : vector<1x8x8xbf16> to vector<8x8xbf16>
    %cst_20 = arith.constant dense<0.000000e+00> : vector<8x288xf32>
    %31 = tpu.matmul %30, %28, %cst_20 {dimension_numbers = #tpu.dot_dimension_numbers<[1], [0], [0], [1], [0, 0, 1, 1], [], []>} : vector<8x8xbf16>, vector<8x288xbf16>, vector<8x288xf32> -> vector<8x288xf32>
    %32 = arith.addf %27, %31 : vector<8x288xf32>
    %33 = vector.extract_strided_slice %1 {offsets = [0, 36], sizes = [8, 288], strides = [1, 1]} : vector<8x384xbf16> to vector<8x288xbf16>
    %c6 = arith.constant 6 : index
    %c0_21 = arith.constant 0 : index
    %c0_22 = arith.constant 0 : index
    %34 = vector.load %arg2[%c6, %c0_21, %c0_22] : memref<9x8x8xbf16, #tpu.memory_space<vmem>>, vector<1x8x8xbf16>
    %35 = vector.shape_cast %34 : vector<1x8x8xbf16> to vector<8x8xbf16>
    %cst_23 = arith.constant dense<0.000000e+00> : vector<8x288xf32>
    %36 = tpu.matmul %35, %33, %cst_23 {dimension_numbers = #tpu.dot_dimension_numbers<[1], [0], [0], [1], [0, 0, 1, 1], [], []>} : vector<8x8xbf16>, vector<8x288xbf16>, vector<8x288xf32> -> vector<8x288xf32>
    %37 = arith.addf %32, %36 : vector<8x288xf32>
    %38 = vector.extract_strided_slice %1 {offsets = [0, 37], sizes = [8, 288], strides = [1, 1]} : vector<8x384xbf16> to vector<8x288xbf16>
    %c7 = arith.constant 7 : index
    %c0_24 = arith.constant 0 : index
    %c0_25 = arith.constant 0 : index
    %39 = vector.load %arg2[%c7, %c0_24, %c0_25] : memref<9x8x8xbf16, #tpu.memory_space<vmem>>, vector<1x8x8xbf16>
    %40 = vector.shape_cast %39 : vector<1x8x8xbf16> to vector<8x8xbf16>
    %cst_26 = arith.constant dense<0.000000e+00> : vector<8x288xf32>
    %41 = tpu.matmul %40, %38, %cst_26 {dimension_numbers = #tpu.dot_dimension_numbers<[1], [0], [0], [1], [0, 0, 1, 1], [], []>} : vector<8x8xbf16>, vector<8x288xbf16>, vector<8x288xf32> -> vector<8x288xf32>
    %42 = arith.addf %37, %41 : vector<8x288xf32>
    %43 = vector.extract_strided_slice %1 {offsets = [0, 38], sizes = [8, 288], strides = [1, 1]} : vector<8x384xbf16> to vector<8x288xbf16>
    %c8 = arith.constant 8 : index
    %c0_27 = arith.constant 0 : index
    %c0_28 = arith.constant 0 : index
    %44 = vector.load %arg2[%c8, %c0_27, %c0_28] : memref<9x8x8xbf16, #tpu.memory_space<vmem>>, vector<1x8x8xbf16>
    %45 = vector.shape_cast %44 : vector<1x8x8xbf16> to vector<8x8xbf16>
    %cst_29 = arith.constant dense<0.000000e+00> : vector<8x288xf32>
    %46 = tpu.matmul %45, %43, %cst_29 {dimension_numbers = #tpu.dot_dimension_numbers<[1], [0], [0], [1], [0, 0, 1, 1], [], []>} : vector<8x8xbf16>, vector<8x288xbf16>, vector<8x288xf32> -> vector<8x288xf32>
    %47 = arith.addf %42, %46 : vector<8x288xf32>
    %c0_30 = arith.constant 0 : index
    %c0_31 = arith.constant 0 : index
    %48 = vector.load %arg3[%c0_30, %c0_31] : memref<8x1xf32, #tpu.memory_space<vmem>>, vector<8x1xf32>
    %49 = vector.broadcast %48 : vector<8x1xf32> to vector<8x288xf32>
    %50 = arith.addf %47, %49 : vector<8x288xf32>
    %cst_32 = arith.constant 0.000000e+00 : f32
    %51 = vector.broadcast %cst_32 : f32 to vector<8x288xf32>
    %52 = arith.maximumf %50, %51 : vector<8x288xf32>
    %53 = arith.truncf %52 : vector<8x288xf32> to vector<8x288xbf16>
    %c0_33 = arith.constant 0 : index
    %c0_34 = arith.constant 0 : index
    %54 = vector.load %arg4[%c0_33, %c0_34] : memref<12x8xbf16, #tpu.memory_space<vmem>>, vector<12x8xbf16>
    %cst_35 = arith.constant dense<0.000000e+00> : vector<12x288xf32>
    %55 = tpu.matmul %54, %53, %cst_35 {dimension_numbers = #tpu.dot_dimension_numbers<[1], [0], [0], [1], [0, 0, 1, 1], [], []>} : vector<12x8xbf16>, vector<8x288xbf16>, vector<12x288xf32> -> vector<12x288xf32>
    %c0_36 = arith.constant 0 : index
    %c0_37 = arith.constant 0 : index
    %56 = vector.load %arg5[%c0_36, %c0_37] : memref<12x1xf32, #tpu.memory_space<vmem>>, vector<12x1xf32>
    %57 = vector.broadcast %56 : vector<12x1xf32> to vector<12x288xf32>
    %58 = arith.addf %55, %57 : vector<12x288xf32>
    %c0_38 = arith.constant 0 : index
    %c0_39 = arith.constant 0 : index
    %c0_40 = arith.constant 0 : index
    %59 = vector.load %arg6[%c0_38, %c0_39, %c0_40] : memref<1x12x288xf32, #tpu.memory_space<vmem>>, vector<1x12x288xf32>
    %60 = vector.shape_cast %59 : vector<1x12x288xf32> to vector<12x288xf32>
    %61 = vector.shape_cast %58 : vector<12x288xf32> to vector<1x12x288xf32>
    tpu.vector_store %arg6[%c0_38, %c0_39, %c0_40], %61 {strides = array<i32>} : memref<1x12x288xf32, #tpu.memory_space<vmem>>, vector<1x12x288xf32>,
    return
  }
  func.func @transform_0(%arg0: i32) -> (i32, i32, i32) {
    %c0_i32 = arith.constant 0 : i32
    %c0_i32_0 = arith.constant 0 : i32
    %c0_i32_1 = arith.constant 0 : i32
    return %arg0, %c0_i32, %c0_i32_0 : i32, i32, i32
  }
  func.func @transform_1(%arg0: i32) -> (i32, i32, i32) {
    %c0_i32 = arith.constant 0 : i32
    %c0_i32_0 = arith.constant 0 : i32
    %c0_i32_1 = arith.constant 0 : i32
    %c0_i32_2 = arith.constant 0 : i32
    return %c0_i32, %c0_i32_0, %c0_i32_1 : i32, i32, i32
  }
  func.func @transform_2(%arg0: i32) -> (i32, i32) {
    %c0_i32 = arith.constant 0 : i32
    %c0_i32_0 = arith.constant 0 : i32
    %c0_i32_1 = arith.constant 0 : i32
    return %c0_i32, %c0_i32_0 : i32, i32
  }
  func.func @transform_3(%arg0: i32) -> (i32, i32) {
    %c0_i32 = arith.constant 0 : i32
    %c0_i32_0 = arith.constant 0 : i32
    %c0_i32_1 = arith.constant 0 : i32
    return %c0_i32, %c0_i32_0 : i32, i32
  }
  func.func @transform_4(%arg0: i32) -> (i32, i32) {
    %c0_i32 = arith.constant 0 : i32
    %c0_i32_0 = arith.constant 0 : i32
    %c0_i32_1 = arith.constant 0 : i32
    return %c0_i32, %c0_i32_0 : i32, i32
  }
  func.func @transform_5(%arg0: i32) -> (i32, i32, i32) {
    %c0_i32 = arith.constant 0 : i32
    %c0_i32_0 = arith.constant 0 : i32
    %c0_i32_1 = arith.constant 0 : i32
    return %arg0, %c0_i32, %c0_i32_0 : i32, i32, i32
  }
}

module attributes {stable_mosaic.version = 11 : i64} {
  func.func @_conv_block_kernel(%arg0: i32, %arg1: memref<1x8x384xbf16, #tpu.memory_space<vmem>>, %arg2: memref<9x8x8xbf16, #tpu.memory_space<vmem>>, %arg3: memref<8x1xf32, #tpu.memory_space<vmem>>, %arg4: memref<1x288xf32, #tpu.memory_space<vmem>>, %arg5: memref<1x8x384xbf16, #tpu.memory_space<vmem>>) attributes {dimension_semantics = [#tpu.dimension_semantics<parallel>], iteration_bounds = array<i64: 2>, scalar_prefetch = 0 : i64, scratch_operands = 0 : i64, tpu.core_type = #tpu.core_type<tc>, window_params = [{transform_indices = @transform_0, window_bounds = array<i64: 1, 8, 384>}, {pipeline_mode = #tpu.pipeline_mode<synchronous>, transform_indices = @transform_1, window_bounds = array<i64: 9, 8, 8>}, {pipeline_mode = #tpu.pipeline_mode<synchronous>, transform_indices = @transform_2, window_bounds = array<i64: 8, 1>}, {pipeline_mode = #tpu.pipeline_mode<synchronous>, transform_indices = @transform_3, window_bounds = array<i64: 1, 288>}, {transform_indices = @transform_4, window_bounds = array<i64: 1, 8, 384>}]} {
    %c0 = arith.constant 0 : index
    %c0_0 = arith.constant 0 : index
    %c0_1 = arith.constant 0 : index
    %0 = vector.load %arg1[%c0, %c0_0, %c0_1] : memref<1x8x384xbf16, #tpu.memory_space<vmem>>, vector<1x8x384xbf16>
    %1 = vector.shape_cast %0 : vector<1x8x384xbf16> to vector<8x384xbf16>
    %cst = arith.constant 0.000000e+00 : f32
    %2 = vector.broadcast %cst : f32 to vector<8x288xf32>
    %3 = vector.extract_strided_slice %1 {offsets = [0, 0], sizes = [8, 288], strides = [1, 1]} : vector<8x384xbf16> to vector<8x288xbf16>
    %c0_2 = arith.constant 0 : index
    %c0_3 = arith.constant 0 : index
    %c0_4 = arith.constant 0 : index
    %4 = vector.load %arg2[%c0_2, %c0_3, %c0_4] : memref<9x8x8xbf16, #tpu.memory_space<vmem>>, vector<1x8x8xbf16>
    %5 = vector.shape_cast %4 : vector<1x8x8xbf16> to vector<8x8xbf16>
    %cst_5 = arith.constant dense<0.000000e+00> : vector<8x288xf32>
    %6 = tpu.matmul %5, %3, %cst_5 {dimension_numbers = #tpu.dot_dimension_numbers<[1], [0], [0], [1], [0, 0, 1, 1], [], []>} : vector<8x8xbf16>, vector<8x288xbf16>, vector<8x288xf32> -> vector<8x288xf32>
    %7 = arith.addf %2, %6 : vector<8x288xf32>
    %8 = vector.extract_strided_slice %1 {offsets = [0, 1], sizes = [8, 288], strides = [1, 1]} : vector<8x384xbf16> to vector<8x288xbf16>
    %c1 = arith.constant 1 : index
    %c0_6 = arith.constant 0 : index
    %c0_7 = arith.constant 0 : index
    %9 = vector.load %arg2[%c1, %c0_6, %c0_7] : memref<9x8x8xbf16, #tpu.memory_space<vmem>>, vector<1x8x8xbf16>
    %10 = vector.shape_cast %9 : vector<1x8x8xbf16> to vector<8x8xbf16>
    %cst_8 = arith.constant dense<0.000000e+00> : vector<8x288xf32>
    %11 = tpu.matmul %10, %8, %cst_8 {dimension_numbers = #tpu.dot_dimension_numbers<[1], [0], [0], [1], [0, 0, 1, 1], [], []>} : vector<8x8xbf16>, vector<8x288xbf16>, vector<8x288xf32> -> vector<8x288xf32>
    %12 = arith.addf %7, %11 : vector<8x288xf32>
    %13 = vector.extract_strided_slice %1 {offsets = [0, 2], sizes = [8, 288], strides = [1, 1]} : vector<8x384xbf16> to vector<8x288xbf16>
    %c2 = arith.constant 2 : index
    %c0_9 = arith.constant 0 : index
    %c0_10 = arith.constant 0 : index
    %14 = vector.load %arg2[%c2, %c0_9, %c0_10] : memref<9x8x8xbf16, #tpu.memory_space<vmem>>, vector<1x8x8xbf16>
    %15 = vector.shape_cast %14 : vector<1x8x8xbf16> to vector<8x8xbf16>
    %cst_11 = arith.constant dense<0.000000e+00> : vector<8x288xf32>
    %16 = tpu.matmul %15, %13, %cst_11 {dimension_numbers = #tpu.dot_dimension_numbers<[1], [0], [0], [1], [0, 0, 1, 1], [], []>} : vector<8x8xbf16>, vector<8x288xbf16>, vector<8x288xf32> -> vector<8x288xf32>
    %17 = arith.addf %12, %16 : vector<8x288xf32>
    %18 = vector.extract_strided_slice %1 {offsets = [0, 18], sizes = [8, 288], strides = [1, 1]} : vector<8x384xbf16> to vector<8x288xbf16>
    %c3 = arith.constant 3 : index
    %c0_12 = arith.constant 0 : index
    %c0_13 = arith.constant 0 : index
    %19 = vector.load %arg2[%c3, %c0_12, %c0_13] : memref<9x8x8xbf16, #tpu.memory_space<vmem>>, vector<1x8x8xbf16>
    %20 = vector.shape_cast %19 : vector<1x8x8xbf16> to vector<8x8xbf16>
    %cst_14 = arith.constant dense<0.000000e+00> : vector<8x288xf32>
    %21 = tpu.matmul %20, %18, %cst_14 {dimension_numbers = #tpu.dot_dimension_numbers<[1], [0], [0], [1], [0, 0, 1, 1], [], []>} : vector<8x8xbf16>, vector<8x288xbf16>, vector<8x288xf32> -> vector<8x288xf32>
    %22 = arith.addf %17, %21 : vector<8x288xf32>
    %23 = vector.extract_strided_slice %1 {offsets = [0, 19], sizes = [8, 288], strides = [1, 1]} : vector<8x384xbf16> to vector<8x288xbf16>
    %c4 = arith.constant 4 : index
    %c0_15 = arith.constant 0 : index
    %c0_16 = arith.constant 0 : index
    %24 = vector.load %arg2[%c4, %c0_15, %c0_16] : memref<9x8x8xbf16, #tpu.memory_space<vmem>>, vector<1x8x8xbf16>
    %25 = vector.shape_cast %24 : vector<1x8x8xbf16> to vector<8x8xbf16>
    %cst_17 = arith.constant dense<0.000000e+00> : vector<8x288xf32>
    %26 = tpu.matmul %25, %23, %cst_17 {dimension_numbers = #tpu.dot_dimension_numbers<[1], [0], [0], [1], [0, 0, 1, 1], [], []>} : vector<8x8xbf16>, vector<8x288xbf16>, vector<8x288xf32> -> vector<8x288xf32>
    %27 = arith.addf %22, %26 : vector<8x288xf32>
    %28 = vector.extract_strided_slice %1 {offsets = [0, 20], sizes = [8, 288], strides = [1, 1]} : vector<8x384xbf16> to vector<8x288xbf16>
    %c5 = arith.constant 5 : index
    %c0_18 = arith.constant 0 : index
    %c0_19 = arith.constant 0 : index
    %29 = vector.load %arg2[%c5, %c0_18, %c0_19] : memref<9x8x8xbf16, #tpu.memory_space<vmem>>, vector<1x8x8xbf16>
    %30 = vector.shape_cast %29 : vector<1x8x8xbf16> to vector<8x8xbf16>
    %cst_20 = arith.constant dense<0.000000e+00> : vector<8x288xf32>
    %31 = tpu.matmul %30, %28, %cst_20 {dimension_numbers = #tpu.dot_dimension_numbers<[1], [0], [0], [1], [0, 0, 1, 1], [], []>} : vector<8x8xbf16>, vector<8x288xbf16>, vector<8x288xf32> -> vector<8x288xf32>
    %32 = arith.addf %27, %31 : vector<8x288xf32>
    %33 = vector.extract_strided_slice %1 {offsets = [0, 36], sizes = [8, 288], strides = [1, 1]} : vector<8x384xbf16> to vector<8x288xbf16>
    %c6 = arith.constant 6 : index
    %c0_21 = arith.constant 0 : index
    %c0_22 = arith.constant 0 : index
    %34 = vector.load %arg2[%c6, %c0_21, %c0_22] : memref<9x8x8xbf16, #tpu.memory_space<vmem>>, vector<1x8x8xbf16>
    %35 = vector.shape_cast %34 : vector<1x8x8xbf16> to vector<8x8xbf16>
    %cst_23 = arith.constant dense<0.000000e+00> : vector<8x288xf32>
    %36 = tpu.matmul %35, %33, %cst_23 {dimension_numbers = #tpu.dot_dimension_numbers<[1], [0], [0], [1], [0, 0, 1, 1], [], []>} : vector<8x8xbf16>, vector<8x288xbf16>, vector<8x288xf32> -> vector<8x288xf32>
    %37 = arith.addf %32, %36 : vector<8x288xf32>
    %38 = vector.extract_strided_slice %1 {offsets = [0, 37], sizes = [8, 288], strides = [1, 1]} : vector<8x384xbf16> to vector<8x288xbf16>
    %c7 = arith.constant 7 : index
    %c0_24 = arith.constant 0 : index
    %c0_25 = arith.constant 0 : index
    %39 = vector.load %arg2[%c7, %c0_24, %c0_25] : memref<9x8x8xbf16, #tpu.memory_space<vmem>>, vector<1x8x8xbf16>
    %40 = vector.shape_cast %39 : vector<1x8x8xbf16> to vector<8x8xbf16>
    %cst_26 = arith.constant dense<0.000000e+00> : vector<8x288xf32>
    %41 = tpu.matmul %40, %38, %cst_26 {dimension_numbers = #tpu.dot_dimension_numbers<[1], [0], [0], [1], [0, 0, 1, 1], [], []>} : vector<8x8xbf16>, vector<8x288xbf16>, vector<8x288xf32> -> vector<8x288xf32>
    %42 = arith.addf %37, %41 : vector<8x288xf32>
    %43 = vector.extract_strided_slice %1 {offsets = [0, 38], sizes = [8, 288], strides = [1, 1]} : vector<8x384xbf16> to vector<8x288xbf16>
    %c8 = arith.constant 8 : index
    %c0_27 = arith.constant 0 : index
    %c0_28 = arith.constant 0 : index
    %44 = vector.load %arg2[%c8, %c0_27, %c0_28] : memref<9x8x8xbf16, #tpu.memory_space<vmem>>, vector<1x8x8xbf16>
    %45 = vector.shape_cast %44 : vector<1x8x8xbf16> to vector<8x8xbf16>
    %cst_29 = arith.constant dense<0.000000e+00> : vector<8x288xf32>
    %46 = tpu.matmul %45, %43, %cst_29 {dimension_numbers = #tpu.dot_dimension_numbers<[1], [0], [0], [1], [0, 0, 1, 1], [], []>} : vector<8x8xbf16>, vector<8x288xbf16>, vector<8x288xf32> -> vector<8x288xf32>
    %47 = arith.addf %42, %46 : vector<8x288xf32>
    %c0_30 = arith.constant 0 : index
    %c0_31 = arith.constant 0 : index
    %48 = vector.load %arg3[%c0_30, %c0_31] : memref<8x1xf32, #tpu.memory_space<vmem>>, vector<8x1xf32>
    %49 = vector.broadcast %48 : vector<8x1xf32> to vector<8x288xf32>
    %50 = arith.addf %47, %49 : vector<8x288xf32>
    %cst_32 = arith.constant 0.000000e+00 : f32
    %51 = vector.broadcast %cst_32 : f32 to vector<8x288xf32>
    %52 = arith.maximumf %50, %51 : vector<8x288xf32>
    %c0_33 = arith.constant 0 : index
    %c0_34 = arith.constant 0 : index
    %53 = vector.load %arg4[%c0_33, %c0_34] : memref<1x288xf32, #tpu.memory_space<vmem>>, vector<1x288xf32>
    %54 = vector.broadcast %53 : vector<1x288xf32> to vector<8x288xf32>
    %55 = arith.mulf %52, %54 : vector<8x288xf32>
    %cst_35 = arith.constant 0.000000e+00 : bf16
    %56 = vector.broadcast %cst_35 : bf16 to vector<8x384xbf16>
    %c0_36 = arith.constant 0 : index
    %c0_37 = arith.constant 0 : index
    %c0_38 = arith.constant 0 : index
    %57 = vector.load %arg5[%c0_36, %c0_37, %c0_38] : memref<1x8x384xbf16, #tpu.memory_space<vmem>>, vector<1x8x384xbf16>
    %58 = vector.shape_cast %57 : vector<1x8x384xbf16> to vector<8x384xbf16>
    %59 = vector.shape_cast %56 : vector<8x384xbf16> to vector<1x8x384xbf16>
    tpu.vector_store %arg5[%c0_36, %c0_37, %c0_38], %59 {strides = array<i32>} : memref<1x8x384xbf16, #tpu.memory_space<vmem>>, vector<1x8x384xbf16>,
    %60 = arith.truncf %55 : vector<8x288xf32> to vector<8x288xbf16>
    %c0_39 = arith.constant 0 : index
    %c0_40 = arith.constant 0 : index
    %c19 = arith.constant 19 : index
    %61 = vector.load %arg5[%c0_39, %c0_40, %c19] : memref<1x8x384xbf16, #tpu.memory_space<vmem>>, vector<1x8x288xbf16>
    %62 = vector.shape_cast %61 : vector<1x8x288xbf16> to vector<8x288xbf16>
    %63 = vector.shape_cast %60 : vector<8x288xbf16> to vector<1x8x288xbf16>
    tpu.vector_store %arg5[%c0_39, %c0_40, %c19], %63 {strides = array<i32>} : memref<1x8x384xbf16, #tpu.memory_space<vmem>>, vector<1x8x288xbf16>,
    return
  }
  func.func @transform_0(%arg0: i32) -> (i32, i32, i32) {
    %c0_i32 = arith.constant 0 : i32
    %c0_i32_0 = arith.constant 0 : i32
    %c0_i32_1 = arith.constant 0 : i32
    return %arg0, %c0_i32, %c0_i32_0 : i32, i32, i32
  }
  func.func @transform_1(%arg0: i32) -> (i32, i32, i32) {
    %c0_i32 = arith.constant 0 : i32
    %c0_i32_0 = arith.constant 0 : i32
    %c0_i32_1 = arith.constant 0 : i32
    %c0_i32_2 = arith.constant 0 : i32
    return %c0_i32, %c0_i32_0, %c0_i32_1 : i32, i32, i32
  }
  func.func @transform_2(%arg0: i32) -> (i32, i32) {
    %c0_i32 = arith.constant 0 : i32
    %c0_i32_0 = arith.constant 0 : i32
    %c0_i32_1 = arith.constant 0 : i32
    return %c0_i32, %c0_i32_0 : i32, i32
  }
  func.func @transform_3(%arg0: i32) -> (i32, i32) {
    %c0_i32 = arith.constant 0 : i32
    %c0_i32_0 = arith.constant 0 : i32
    %c0_i32_1 = arith.constant 0 : i32
    return %c0_i32, %c0_i32_0 : i32, i32
  }
  func.func @transform_4(%arg0: i32) -> (i32, i32, i32) {
    %c0_i32 = arith.constant 0 : i32
    %c0_i32_0 = arith.constant 0 : i32
    %c0_i32_1 = arith.constant 0 : i32
    return %arg0, %c0_i32, %c0_i32_0 : i32, i32, i32
  }
}

module attributes {stable_mosaic.version = 11 : i64} {
  func.func @_bicubic_add_clip_kernel(%arg0: i32, %arg1: memref<1x12x16x18xf32, #tpu.memory_space<vmem>>, %arg2: memref<1x3x16x16xf32, #tpu.memory_space<vmem>>, %arg3: memref<2x16x16xf32, #tpu.memory_space<vmem>>, %arg4: memref<2x16x16xf32, #tpu.memory_space<vmem>>, %arg5: memref<1x12x16x16xf32, #tpu.memory_space<vmem>>) attributes {dimension_semantics = [#tpu.dimension_semantics<parallel>], iteration_bounds = array<i64: 2>, scalar_prefetch = 0 : i64, scratch_operands = 0 : i64, tpu.core_type = #tpu.core_type<tc>, window_params = [{transform_indices = @transform_0, window_bounds = array<i64: 1, 12, 16, 18>}, {transform_indices = @transform_1, window_bounds = array<i64: 1, 3, 16, 16>}, {pipeline_mode = #tpu.pipeline_mode<synchronous>, transform_indices = @transform_2, window_bounds = array<i64: 2, 16, 16>}, {pipeline_mode = #tpu.pipeline_mode<synchronous>, transform_indices = @transform_3, window_bounds = array<i64: 2, 16, 16>}, {transform_indices = @transform_4, window_bounds = array<i64: 1, 12, 16, 16>}]} {
    %c0 = arith.constant 0 : index
    %c0_0 = arith.constant 0 : index
    %c0_1 = arith.constant 0 : index
    %c0_2 = arith.constant 0 : index
    %0 = vector.load %arg2[%c0, %c0_0, %c0_1, %c0_2] : memref<1x3x16x16xf32, #tpu.memory_space<vmem>>, vector<1x1x16x16xf32>
    %1 = vector.shape_cast %0 : vector<1x1x16x16xf32> to vector<16x16xf32>
    %c0_3 = arith.constant 0 : index
    %c0_4 = arith.constant 0 : index
    %c0_5 = arith.constant 0 : index
    %2 = vector.load %arg3[%c0_3, %c0_4, %c0_5] : memref<2x16x16xf32, #tpu.memory_space<vmem>>, vector<1x16x16xf32>
    %3 = vector.shape_cast %2 : vector<1x16x16xf32> to vector<16x16xf32>
    %cst = arith.constant dense<0.000000e+00> : vector<16x16xf32>
    %4 = tpu.matmul %3, %1, %cst {dimension_numbers = #tpu.dot_dimension_numbers<[1], [0], [0], [1], [0, 0, 1, 1], [], []>} : vector<16x16xf32>, vector<16x16xf32>, vector<16x16xf32> -> vector<16x16xf32>
    %c0_6 = arith.constant 0 : index
    %c0_7 = arith.constant 0 : index
    %c0_8 = arith.constant 0 : index
    %5 = vector.load %arg4[%c0_6, %c0_7, %c0_8] : memref<2x16x16xf32, #tpu.memory_space<vmem>>, vector<1x16x16xf32>
    %6 = vector.shape_cast %5 : vector<1x16x16xf32> to vector<16x16xf32>
    %cst_9 = arith.constant dense<0.000000e+00> : vector<16x16xf32>
    %7 = tpu.matmul %4, %6, %cst_9 {dimension_numbers = #tpu.dot_dimension_numbers<[1], [0], [0], [1], [0, 0, 1, 1], [], []>} : vector<16x16xf32>, vector<16x16xf32>, vector<16x16xf32> -> vector<16x16xf32>
    %c0_10 = arith.constant 0 : index
    %c0_11 = arith.constant 0 : index
    %c0_12 = arith.constant 0 : index
    %c0_13 = arith.constant 0 : index
    %8 = vector.load %arg1[%c0_10, %c0_11, %c0_12, %c0_13] : memref<1x12x16x18xf32, #tpu.memory_space<vmem>>, vector<1x1x16x18xf32>
    %9 = vector.shape_cast %8 : vector<1x1x16x18xf32> to vector<16x18xf32>
    %10 = vector.extract_strided_slice %9 {offsets = [0, 1], sizes = [16, 16], strides = [1, 1]} : vector<16x18xf32> to vector<16x16xf32>
    %11 = arith.addf %10, %7 : vector<16x16xf32>
    %cst_14 = arith.constant -1.000000e+00 : f32
    %cst_15 = arith.constant 1.000000e+00 : f32
    %12 = vector.broadcast %cst_14 : f32 to vector<16x16xf32>
    %13 = arith.maximumf %12, %11 : vector<16x16xf32>
    %14 = vector.broadcast %cst_15 : f32 to vector<16x16xf32>
    %15 = arith.minimumf %14, %13 : vector<16x16xf32>
    %c0_16 = arith.constant 0 : index
    %c0_17 = arith.constant 0 : index
    %c0_18 = arith.constant 0 : index
    %c0_19 = arith.constant 0 : index
    %16 = vector.load %arg5[%c0_16, %c0_17, %c0_18, %c0_19] : memref<1x12x16x16xf32, #tpu.memory_space<vmem>>, vector<1x1x16x16xf32>
    %17 = vector.shape_cast %16 : vector<1x1x16x16xf32> to vector<16x16xf32>
    %18 = vector.shape_cast %15 : vector<16x16xf32> to vector<1x1x16x16xf32>
    tpu.vector_store %arg5[%c0_16, %c0_17, %c0_18, %c0_19], %18 {strides = array<i32>} : memref<1x12x16x16xf32, #tpu.memory_space<vmem>>, vector<1x1x16x16xf32>,
    %c1 = arith.constant 1 : index
    %c0_20 = arith.constant 0 : index
    %c0_21 = arith.constant 0 : index
    %19 = vector.load %arg4[%c1, %c0_20, %c0_21] : memref<2x16x16xf32, #tpu.memory_space<vmem>>, vector<1x16x16xf32>
    %20 = vector.shape_cast %19 : vector<1x16x16xf32> to vector<16x16xf32>
    %cst_22 = arith.constant dense<0.000000e+00> : vector<16x16xf32>
    %21 = tpu.matmul %4, %20, %cst_22 {dimension_numbers = #tpu.dot_dimension_numbers<[1], [0], [0], [1], [0, 0, 1, 1], [], []>} : vector<16x16xf32>, vector<16x16xf32>, vector<16x16xf32> -> vector<16x16xf32>
    %c0_23 = arith.constant 0 : index
    %c1_24 = arith.constant 1 : index
    %c0_25 = arith.constant 0 : index
    %c0_26 = arith.constant 0 : index
    %22 = vector.load %arg1[%c0_23, %c1_24, %c0_25, %c0_26] : memref<1x12x16x18xf32, #tpu.memory_space<vmem>>, vector<1x1x16x18xf32>
    %23 = vector.shape_cast %22 : vector<1x1x16x18xf32> to vector<16x18xf32>
    %24 = vector.extract_strided_slice %23 {offsets = [0, 1], sizes = [16, 16], strides = [1, 1]} : vector<16x18xf32> to vector<16x16xf32>
    %25 = arith.addf %24, %21 : vector<16x16xf32>
    %cst_27 = arith.constant -1.000000e+00 : f32
    %cst_28 = arith.constant 1.000000e+00 : f32
    %26 = vector.broadcast %cst_27 : f32 to vector<16x16xf32>
    %27 = arith.maximumf %26, %25 : vector<16x16xf32>
    %28 = vector.broadcast %cst_28 : f32 to vector<16x16xf32>
    %29 = arith.minimumf %28, %27 : vector<16x16xf32>
    %c0_29 = arith.constant 0 : index
    %c1_30 = arith.constant 1 : index
    %c0_31 = arith.constant 0 : index
    %c0_32 = arith.constant 0 : index
    %30 = vector.load %arg5[%c0_29, %c1_30, %c0_31, %c0_32] : memref<1x12x16x16xf32, #tpu.memory_space<vmem>>, vector<1x1x16x16xf32>
    %31 = vector.shape_cast %30 : vector<1x1x16x16xf32> to vector<16x16xf32>
    %32 = vector.shape_cast %29 : vector<16x16xf32> to vector<1x1x16x16xf32>
    tpu.vector_store %arg5[%c0_29, %c1_30, %c0_31, %c0_32], %32 {strides = array<i32>} : memref<1x12x16x16xf32, #tpu.memory_space<vmem>>, vector<1x1x16x16xf32>,
    %c1_33 = arith.constant 1 : index
    %c0_34 = arith.constant 0 : index
    %c0_35 = arith.constant 0 : index
    %33 = vector.load %arg3[%c1_33, %c0_34, %c0_35] : memref<2x16x16xf32, #tpu.memory_space<vmem>>, vector<1x16x16xf32>
    %34 = vector.shape_cast %33 : vector<1x16x16xf32> to vector<16x16xf32>
    %cst_36 = arith.constant dense<0.000000e+00> : vector<16x16xf32>
    %35 = tpu.matmul %34, %1, %cst_36 {dimension_numbers = #tpu.dot_dimension_numbers<[1], [0], [0], [1], [0, 0, 1, 1], [], []>} : vector<16x16xf32>, vector<16x16xf32>, vector<16x16xf32> -> vector<16x16xf32>
    %c0_37 = arith.constant 0 : index
    %c0_38 = arith.constant 0 : index
    %c0_39 = arith.constant 0 : index
    %36 = vector.load %arg4[%c0_37, %c0_38, %c0_39] : memref<2x16x16xf32, #tpu.memory_space<vmem>>, vector<1x16x16xf32>
    %37 = vector.shape_cast %36 : vector<1x16x16xf32> to vector<16x16xf32>
    %cst_40 = arith.constant dense<0.000000e+00> : vector<16x16xf32>
    %38 = tpu.matmul %35, %37, %cst_40 {dimension_numbers = #tpu.dot_dimension_numbers<[1], [0], [0], [1], [0, 0, 1, 1], [], []>} : vector<16x16xf32>, vector<16x16xf32>, vector<16x16xf32> -> vector<16x16xf32>
    %c0_41 = arith.constant 0 : index
    %c2 = arith.constant 2 : index
    %c0_42 = arith.constant 0 : index
    %c0_43 = arith.constant 0 : index
    %39 = vector.load %arg1[%c0_41, %c2, %c0_42, %c0_43] : memref<1x12x16x18xf32, #tpu.memory_space<vmem>>, vector<1x1x16x18xf32>
    %40 = vector.shape_cast %39 : vector<1x1x16x18xf32> to vector<16x18xf32>
    %41 = vector.extract_strided_slice %40 {offsets = [0, 1], sizes = [16, 16], strides = [1, 1]} : vector<16x18xf32> to vector<16x16xf32>
    %42 = arith.addf %41, %38 : vector<16x16xf32>
    %cst_44 = arith.constant -1.000000e+00 : f32
    %cst_45 = arith.constant 1.000000e+00 : f32
    %43 = vector.broadcast %cst_44 : f32 to vector<16x16xf32>
    %44 = arith.maximumf %43, %42 : vector<16x16xf32>
    %45 = vector.broadcast %cst_45 : f32 to vector<16x16xf32>
    %46 = arith.minimumf %45, %44 : vector<16x16xf32>
    %c0_46 = arith.constant 0 : index
    %c2_47 = arith.constant 2 : index
    %c0_48 = arith.constant 0 : index
    %c0_49 = arith.constant 0 : index
    %47 = vector.load %arg5[%c0_46, %c2_47, %c0_48, %c0_49] : memref<1x12x16x16xf32, #tpu.memory_space<vmem>>, vector<1x1x16x16xf32>
    %48 = vector.shape_cast %47 : vector<1x1x16x16xf32> to vector<16x16xf32>
    %49 = vector.shape_cast %46 : vector<16x16xf32> to vector<1x1x16x16xf32>
    tpu.vector_store %arg5[%c0_46, %c2_47, %c0_48, %c0_49], %49 {strides = array<i32>} : memref<1x12x16x16xf32, #tpu.memory_space<vmem>>, vector<1x1x16x16xf32>,
    %c1_50 = arith.constant 1 : index
    %c0_51 = arith.constant 0 : index
    %c0_52 = arith.constant 0 : index
    %50 = vector.load %arg4[%c1_50, %c0_51, %c0_52] : memref<2x16x16xf32, #tpu.memory_space<vmem>>, vector<1x16x16xf32>
    %51 = vector.shape_cast %50 : vector<1x16x16xf32> to vector<16x16xf32>
    %cst_53 = arith.constant dense<0.000000e+00> : vector<16x16xf32>
    %52 = tpu.matmul %35, %51, %cst_53 {dimension_numbers = #tpu.dot_dimension_numbers<[1], [0], [0], [1], [0, 0, 1, 1], [], []>} : vector<16x16xf32>, vector<16x16xf32>, vector<16x16xf32> -> vector<16x16xf32>
    %c0_54 = arith.constant 0 : index
    %c3 = arith.constant 3 : index
    %c0_55 = arith.constant 0 : index
    %c0_56 = arith.constant 0 : index
    %53 = vector.load %arg1[%c0_54, %c3, %c0_55, %c0_56] : memref<1x12x16x18xf32, #tpu.memory_space<vmem>>, vector<1x1x16x18xf32>
    %54 = vector.shape_cast %53 : vector<1x1x16x18xf32> to vector<16x18xf32>
    %55 = vector.extract_strided_slice %54 {offsets = [0, 1], sizes = [16, 16], strides = [1, 1]} : vector<16x18xf32> to vector<16x16xf32>
    %56 = arith.addf %55, %52 : vector<16x16xf32>
    %cst_57 = arith.constant -1.000000e+00 : f32
    %cst_58 = arith.constant 1.000000e+00 : f32
    %57 = vector.broadcast %cst_57 : f32 to vector<16x16xf32>
    %58 = arith.maximumf %57, %56 : vector<16x16xf32>
    %59 = vector.broadcast %cst_58 : f32 to vector<16x16xf32>
    %60 = arith.minimumf %59, %58 : vector<16x16xf32>
    %c0_59 = arith.constant 0 : index
    %c3_60 = arith.constant 3 : index
    %c0_61 = arith.constant 0 : index
    %c0_62 = arith.constant 0 : index
    %61 = vector.load %arg5[%c0_59, %c3_60, %c0_61, %c0_62] : memref<1x12x16x16xf32, #tpu.memory_space<vmem>>, vector<1x1x16x16xf32>
    %62 = vector.shape_cast %61 : vector<1x1x16x16xf32> to vector<16x16xf32>
    %63 = vector.shape_cast %60 : vector<16x16xf32> to vector<1x1x16x16xf32>
    tpu.vector_store %arg5[%c0_59, %c3_60, %c0_61, %c0_62], %63 {strides = array<i32>} : memref<1x12x16x16xf32, #tpu.memory_space<vmem>>, vector<1x1x16x16xf32>,
    %c0_63 = arith.constant 0 : index
    %c1_64 = arith.constant 1 : index
    %c0_65 = arith.constant 0 : index
    %c0_66 = arith.constant 0 : index
    %64 = vector.load %arg2[%c0_63, %c1_64, %c0_65, %c0_66] : memref<1x3x16x16xf32, #tpu.memory_space<vmem>>, vector<1x1x16x16xf32>
    %65 = vector.shape_cast %64 : vector<1x1x16x16xf32> to vector<16x16xf32>
    %c0_67 = arith.constant 0 : index
    %c0_68 = arith.constant 0 : index
    %c0_69 = arith.constant 0 : index
    %66 = vector.load %arg3[%c0_67, %c0_68, %c0_69] : memref<2x16x16xf32, #tpu.memory_space<vmem>>, vector<1x16x16xf32>
    %67 = vector.shape_cast %66 : vector<1x16x16xf32> to vector<16x16xf32>
    %cst_70 = arith.constant dense<0.000000e+00> : vector<16x16xf32>
    %68 = tpu.matmul %67, %65, %cst_70 {dimension_numbers = #tpu.dot_dimension_numbers<[1], [0], [0], [1], [0, 0, 1, 1], [], []>} : vector<16x16xf32>, vector<16x16xf32>, vector<16x16xf32> -> vector<16x16xf32>
    %c0_71 = arith.constant 0 : index
    %c0_72 = arith.constant 0 : index
    %c0_73 = arith.constant 0 : index
    %69 = vector.load %arg4[%c0_71, %c0_72, %c0_73] : memref<2x16x16xf32, #tpu.memory_space<vmem>>, vector<1x16x16xf32>
    %70 = vector.shape_cast %69 : vector<1x16x16xf32> to vector<16x16xf32>
    %cst_74 = arith.constant dense<0.000000e+00> : vector<16x16xf32>
    %71 = tpu.matmul %68, %70, %cst_74 {dimension_numbers = #tpu.dot_dimension_numbers<[1], [0], [0], [1], [0, 0, 1, 1], [], []>} : vector<16x16xf32>, vector<16x16xf32>, vector<16x16xf32> -> vector<16x16xf32>
    %c0_75 = arith.constant 0 : index
    %c4 = arith.constant 4 : index
    %c0_76 = arith.constant 0 : index
    %c0_77 = arith.constant 0 : index
    %72 = vector.load %arg1[%c0_75, %c4, %c0_76, %c0_77] : memref<1x12x16x18xf32, #tpu.memory_space<vmem>>, vector<1x1x16x18xf32>
    %73 = vector.shape_cast %72 : vector<1x1x16x18xf32> to vector<16x18xf32>
    %74 = vector.extract_strided_slice %73 {offsets = [0, 1], sizes = [16, 16], strides = [1, 1]} : vector<16x18xf32> to vector<16x16xf32>
    %75 = arith.addf %74, %71 : vector<16x16xf32>
    %cst_78 = arith.constant -1.000000e+00 : f32
    %cst_79 = arith.constant 1.000000e+00 : f32
    %76 = vector.broadcast %cst_78 : f32 to vector<16x16xf32>
    %77 = arith.maximumf %76, %75 : vector<16x16xf32>
    %78 = vector.broadcast %cst_79 : f32 to vector<16x16xf32>
    %79 = arith.minimumf %78, %77 : vector<16x16xf32>
    %c0_80 = arith.constant 0 : index
    %c4_81 = arith.constant 4 : index
    %c0_82 = arith.constant 0 : index
    %c0_83 = arith.constant 0 : index
    %80 = vector.load %arg5[%c0_80, %c4_81, %c0_82, %c0_83] : memref<1x12x16x16xf32, #tpu.memory_space<vmem>>, vector<1x1x16x16xf32>
    %81 = vector.shape_cast %80 : vector<1x1x16x16xf32> to vector<16x16xf32>
    %82 = vector.shape_cast %79 : vector<16x16xf32> to vector<1x1x16x16xf32>
    tpu.vector_store %arg5[%c0_80, %c4_81, %c0_82, %c0_83], %82 {strides = array<i32>} : memref<1x12x16x16xf32, #tpu.memory_space<vmem>>, vector<1x1x16x16xf32>,
    %c1_84 = arith.constant 1 : index
    %c0_85 = arith.constant 0 : index
    %c0_86 = arith.constant 0 : index
    %83 = vector.load %arg4[%c1_84, %c0_85, %c0_86] : memref<2x16x16xf32, #tpu.memory_space<vmem>>, vector<1x16x16xf32>
    %84 = vector.shape_cast %83 : vector<1x16x16xf32> to vector<16x16xf32>
    %cst_87 = arith.constant dense<0.000000e+00> : vector<16x16xf32>
    %85 = tpu.matmul %68, %84, %cst_87 {dimension_numbers = #tpu.dot_dimension_numbers<[1], [0], [0], [1], [0, 0, 1, 1], [], []>} : vector<16x16xf32>, vector<16x16xf32>, vector<16x16xf32> -> vector<16x16xf32>
    %c0_88 = arith.constant 0 : index
    %c5 = arith.constant 5 : index
    %c0_89 = arith.constant 0 : index
    %c0_90 = arith.constant 0 : index
    %86 = vector.load %arg1[%c0_88, %c5, %c0_89, %c0_90] : memref<1x12x16x18xf32, #tpu.memory_space<vmem>>, vector<1x1x16x18xf32>
    %87 = vector.shape_cast %86 : vector<1x1x16x18xf32> to vector<16x18xf32>
    %88 = vector.extract_strided_slice %87 {offsets = [0, 1], sizes = [16, 16], strides = [1, 1]} : vector<16x18xf32> to vector<16x16xf32>
    %89 = arith.addf %88, %85 : vector<16x16xf32>
    %cst_91 = arith.constant -1.000000e+00 : f32
    %cst_92 = arith.constant 1.000000e+00 : f32
    %90 = vector.broadcast %cst_91 : f32 to vector<16x16xf32>
    %91 = arith.maximumf %90, %89 : vector<16x16xf32>
    %92 = vector.broadcast %cst_92 : f32 to vector<16x16xf32>
    %93 = arith.minimumf %92, %91 : vector<16x16xf32>
    %c0_93 = arith.constant 0 : index
    %c5_94 = arith.constant 5 : index
    %c0_95 = arith.constant 0 : index
    %c0_96 = arith.constant 0 : index
    %94 = vector.load %arg5[%c0_93, %c5_94, %c0_95, %c0_96] : memref<1x12x16x16xf32, #tpu.memory_space<vmem>>, vector<1x1x16x16xf32>
    %95 = vector.shape_cast %94 : vector<1x1x16x16xf32> to vector<16x16xf32>
    %96 = vector.shape_cast %93 : vector<16x16xf32> to vector<1x1x16x16xf32>
    tpu.vector_store %arg5[%c0_93, %c5_94, %c0_95, %c0_96], %96 {strides = array<i32>} : memref<1x12x16x16xf32, #tpu.memory_space<vmem>>, vector<1x1x16x16xf32>,
    %c1_97 = arith.constant 1 : index
    %c0_98 = arith.constant 0 : index
    %c0_99 = arith.constant 0 : index
    %97 = vector.load %arg3[%c1_97, %c0_98, %c0_99] : memref<2x16x16xf32, #tpu.memory_space<vmem>>, vector<1x16x16xf32>
    %98 = vector.shape_cast %97 : vector<1x16x16xf32> to vector<16x16xf32>
    %cst_100 = arith.constant dense<0.000000e+00> : vector<16x16xf32>
    %99 = tpu.matmul %98, %65, %cst_100 {dimension_numbers = #tpu.dot_dimension_numbers<[1], [0], [0], [1], [0, 0, 1, 1], [], []>} : vector<16x16xf32>, vector<16x16xf32>, vector<16x16xf32> -> vector<16x16xf32>
    %c0_101 = arith.constant 0 : index
    %c0_102 = arith.constant 0 : index
    %c0_103 = arith.constant 0 : index
    %100 = vector.load %arg4[%c0_101, %c0_102, %c0_103] : memref<2x16x16xf32, #tpu.memory_space<vmem>>, vector<1x16x16xf32>
    %101 = vector.shape_cast %100 : vector<1x16x16xf32> to vector<16x16xf32>
    %cst_104 = arith.constant dense<0.000000e+00> : vector<16x16xf32>
    %102 = tpu.matmul %99, %101, %cst_104 {dimension_numbers = #tpu.dot_dimension_numbers<[1], [0], [0], [1], [0, 0, 1, 1], [], []>} : vector<16x16xf32>, vector<16x16xf32>, vector<16x16xf32> -> vector<16x16xf32>
    %c0_105 = arith.constant 0 : index
    %c6 = arith.constant 6 : index
    %c0_106 = arith.constant 0 : index
    %c0_107 = arith.constant 0 : index
    %103 = vector.load %arg1[%c0_105, %c6, %c0_106, %c0_107] : memref<1x12x16x18xf32, #tpu.memory_space<vmem>>, vector<1x1x16x18xf32>
    %104 = vector.shape_cast %103 : vector<1x1x16x18xf32> to vector<16x18xf32>
    %105 = vector.extract_strided_slice %104 {offsets = [0, 1], sizes = [16, 16], strides = [1, 1]} : vector<16x18xf32> to vector<16x16xf32>
    %106 = arith.addf %105, %102 : vector<16x16xf32>
    %cst_108 = arith.constant -1.000000e+00 : f32
    %cst_109 = arith.constant 1.000000e+00 : f32
    %107 = vector.broadcast %cst_108 : f32 to vector<16x16xf32>
    %108 = arith.maximumf %107, %106 : vector<16x16xf32>
    %109 = vector.broadcast %cst_109 : f32 to vector<16x16xf32>
    %110 = arith.minimumf %109, %108 : vector<16x16xf32>
    %c0_110 = arith.constant 0 : index
    %c6_111 = arith.constant 6 : index
    %c0_112 = arith.constant 0 : index
    %c0_113 = arith.constant 0 : index
    %111 = vector.load %arg5[%c0_110, %c6_111, %c0_112, %c0_113] : memref<1x12x16x16xf32, #tpu.memory_space<vmem>>, vector<1x1x16x16xf32>
    %112 = vector.shape_cast %111 : vector<1x1x16x16xf32> to vector<16x16xf32>
    %113 = vector.shape_cast %110 : vector<16x16xf32> to vector<1x1x16x16xf32>
    tpu.vector_store %arg5[%c0_110, %c6_111, %c0_112, %c0_113], %113 {strides = array<i32>} : memref<1x12x16x16xf32, #tpu.memory_space<vmem>>, vector<1x1x16x16xf32>,
    %c1_114 = arith.constant 1 : index
    %c0_115 = arith.constant 0 : index
    %c0_116 = arith.constant 0 : index
    %114 = vector.load %arg4[%c1_114, %c0_115, %c0_116] : memref<2x16x16xf32, #tpu.memory_space<vmem>>, vector<1x16x16xf32>
    %115 = vector.shape_cast %114 : vector<1x16x16xf32> to vector<16x16xf32>
    %cst_117 = arith.constant dense<0.000000e+00> : vector<16x16xf32>
    %116 = tpu.matmul %99, %115, %cst_117 {dimension_numbers = #tpu.dot_dimension_numbers<[1], [0], [0], [1], [0, 0, 1, 1], [], []>} : vector<16x16xf32>, vector<16x16xf32>, vector<16x16xf32> -> vector<16x16xf32>
    %c0_118 = arith.constant 0 : index
    %c7 = arith.constant 7 : index
    %c0_119 = arith.constant 0 : index
    %c0_120 = arith.constant 0 : index
    %117 = vector.load %arg1[%c0_118, %c7, %c0_119, %c0_120] : memref<1x12x16x18xf32, #tpu.memory_space<vmem>>, vector<1x1x16x18xf32>
    %118 = vector.shape_cast %117 : vector<1x1x16x18xf32> to vector<16x18xf32>
    %119 = vector.extract_strided_slice %118 {offsets = [0, 1], sizes = [16, 16], strides = [1, 1]} : vector<16x18xf32> to vector<16x16xf32>
    %120 = arith.addf %119, %116 : vector<16x16xf32>
    %cst_121 = arith.constant -1.000000e+00 : f32
    %cst_122 = arith.constant 1.000000e+00 : f32
    %121 = vector.broadcast %cst_121 : f32 to vector<16x16xf32>
    %122 = arith.maximumf %121, %120 : vector<16x16xf32>
    %123 = vector.broadcast %cst_122 : f32 to vector<16x16xf32>
    %124 = arith.minimumf %123, %122 : vector<16x16xf32>
    %c0_123 = arith.constant 0 : index
    %c7_124 = arith.constant 7 : index
    %c0_125 = arith.constant 0 : index
    %c0_126 = arith.constant 0 : index
    %125 = vector.load %arg5[%c0_123, %c7_124, %c0_125, %c0_126] : memref<1x12x16x16xf32, #tpu.memory_space<vmem>>, vector<1x1x16x16xf32>
    %126 = vector.shape_cast %125 : vector<1x1x16x16xf32> to vector<16x16xf32>
    %127 = vector.shape_cast %124 : vector<16x16xf32> to vector<1x1x16x16xf32>
    tpu.vector_store %arg5[%c0_123, %c7_124, %c0_125, %c0_126], %127 {strides = array<i32>} : memref<1x12x16x16xf32, #tpu.memory_space<vmem>>, vector<1x1x16x16xf32>,
    %c0_127 = arith.constant 0 : index
    %c2_128 = arith.constant 2 : index
    %c0_129 = arith.constant 0 : index
    %c0_130 = arith.constant 0 : index
    %128 = vector.load %arg2[%c0_127, %c2_128, %c0_129, %c0_130] : memref<1x3x16x16xf32, #tpu.memory_space<vmem>>, vector<1x1x16x16xf32>
    %129 = vector.shape_cast %128 : vector<1x1x16x16xf32> to vector<16x16xf32>
    %c0_131 = arith.constant 0 : index
    %c0_132 = arith.constant 0 : index
    %c0_133 = arith.constant 0 : index
    %130 = vector.load %arg3[%c0_131, %c0_132, %c0_133] : memref<2x16x16xf32, #tpu.memory_space<vmem>>, vector<1x16x16xf32>
    %131 = vector.shape_cast %130 : vector<1x16x16xf32> to vector<16x16xf32>
    %cst_134 = arith.constant dense<0.000000e+00> : vector<16x16xf32>
    %132 = tpu.matmul %131, %129, %cst_134 {dimension_numbers = #tpu.dot_dimension_numbers<[1], [0], [0], [1], [0, 0, 1, 1], [], []>} : vector<16x16xf32>, vector<16x16xf32>, vector<16x16xf32> -> vector<16x16xf32>
    %c0_135 = arith.constant 0 : index
    %c0_136 = arith.constant 0 : index
    %c0_137 = arith.constant 0 : index
    %133 = vector.load %arg4[%c0_135, %c0_136, %c0_137] : memref<2x16x16xf32, #tpu.memory_space<vmem>>, vector<1x16x16xf32>
    %134 = vector.shape_cast %133 : vector<1x16x16xf32> to vector<16x16xf32>
    %cst_138 = arith.constant dense<0.000000e+00> : vector<16x16xf32>
    %135 = tpu.matmul %132, %134, %cst_138 {dimension_numbers = #tpu.dot_dimension_numbers<[1], [0], [0], [1], [0, 0, 1, 1], [], []>} : vector<16x16xf32>, vector<16x16xf32>, vector<16x16xf32> -> vector<16x16xf32>
    %c0_139 = arith.constant 0 : index
    %c8 = arith.constant 8 : index
    %c0_140 = arith.constant 0 : index
    %c0_141 = arith.constant 0 : index
    %136 = vector.load %arg1[%c0_139, %c8, %c0_140, %c0_141] : memref<1x12x16x18xf32, #tpu.memory_space<vmem>>, vector<1x1x16x18xf32>
    %137 = vector.shape_cast %136 : vector<1x1x16x18xf32> to vector<16x18xf32>
    %138 = vector.extract_strided_slice %137 {offsets = [0, 1], sizes = [16, 16], strides = [1, 1]} : vector<16x18xf32> to vector<16x16xf32>
    %139 = arith.addf %138, %135 : vector<16x16xf32>
    %cst_142 = arith.constant -1.000000e+00 : f32
    %cst_143 = arith.constant 1.000000e+00 : f32
    %140 = vector.broadcast %cst_142 : f32 to vector<16x16xf32>
    %141 = arith.maximumf %140, %139 : vector<16x16xf32>
    %142 = vector.broadcast %cst_143 : f32 to vector<16x16xf32>
    %143 = arith.minimumf %142, %141 : vector<16x16xf32>
    %c0_144 = arith.constant 0 : index
    %c8_145 = arith.constant 8 : index
    %c0_146 = arith.constant 0 : index
    %c0_147 = arith.constant 0 : index
    %144 = vector.load %arg5[%c0_144, %c8_145, %c0_146, %c0_147] : memref<1x12x16x16xf32, #tpu.memory_space<vmem>>, vector<1x1x16x16xf32>
    %145 = vector.shape_cast %144 : vector<1x1x16x16xf32> to vector<16x16xf32>
    %146 = vector.shape_cast %143 : vector<16x16xf32> to vector<1x1x16x16xf32>
    tpu.vector_store %arg5[%c0_144, %c8_145, %c0_146, %c0_147], %146 {strides = array<i32>} : memref<1x12x16x16xf32, #tpu.memory_space<vmem>>, vector<1x1x16x16xf32>,
    %c1_148 = arith.constant 1 : index
    %c0_149 = arith.constant 0 : index
    %c0_150 = arith.constant 0 : index
    %147 = vector.load %arg4[%c1_148, %c0_149, %c0_150] : memref<2x16x16xf32, #tpu.memory_space<vmem>>, vector<1x16x16xf32>
    %148 = vector.shape_cast %147 : vector<1x16x16xf32> to vector<16x16xf32>
    %cst_151 = arith.constant dense<0.000000e+00> : vector<16x16xf32>
    %149 = tpu.matmul %132, %148, %cst_151 {dimension_numbers = #tpu.dot_dimension_numbers<[1], [0], [0], [1], [0, 0, 1, 1], [], []>} : vector<16x16xf32>, vector<16x16xf32>, vector<16x16xf32> -> vector<16x16xf32>
    %c0_152 = arith.constant 0 : index
    %c9 = arith.constant 9 : index
    %c0_153 = arith.constant 0 : index
    %c0_154 = arith.constant 0 : index
    %150 = vector.load %arg1[%c0_152, %c9, %c0_153, %c0_154] : memref<1x12x16x18xf32, #tpu.memory_space<vmem>>, vector<1x1x16x18xf32>
    %151 = vector.shape_cast %150 : vector<1x1x16x18xf32> to vector<16x18xf32>
    %152 = vector.extract_strided_slice %151 {offsets = [0, 1], sizes = [16, 16], strides = [1, 1]} : vector<16x18xf32> to vector<16x16xf32>
    %153 = arith.addf %152, %149 : vector<16x16xf32>
    %cst_155 = arith.constant -1.000000e+00 : f32
    %cst_156 = arith.constant 1.000000e+00 : f32
    %154 = vector.broadcast %cst_155 : f32 to vector<16x16xf32>
    %155 = arith.maximumf %154, %153 : vector<16x16xf32>
    %156 = vector.broadcast %cst_156 : f32 to vector<16x16xf32>
    %157 = arith.minimumf %156, %155 : vector<16x16xf32>
    %c0_157 = arith.constant 0 : index
    %c9_158 = arith.constant 9 : index
    %c0_159 = arith.constant 0 : index
    %c0_160 = arith.constant 0 : index
    %158 = vector.load %arg5[%c0_157, %c9_158, %c0_159, %c0_160] : memref<1x12x16x16xf32, #tpu.memory_space<vmem>>, vector<1x1x16x16xf32>
    %159 = vector.shape_cast %158 : vector<1x1x16x16xf32> to vector<16x16xf32>
    %160 = vector.shape_cast %157 : vector<16x16xf32> to vector<1x1x16x16xf32>
    tpu.vector_store %arg5[%c0_157, %c9_158, %c0_159, %c0_160], %160 {strides = array<i32>} : memref<1x12x16x16xf32, #tpu.memory_space<vmem>>, vector<1x1x16x16xf32>,
    %c1_161 = arith.constant 1 : index
    %c0_162 = arith.constant 0 : index
    %c0_163 = arith.constant 0 : index
    %161 = vector.load %arg3[%c1_161, %c0_162, %c0_163] : memref<2x16x16xf32, #tpu.memory_space<vmem>>, vector<1x16x16xf32>
    %162 = vector.shape_cast %161 : vector<1x16x16xf32> to vector<16x16xf32>
    %cst_164 = arith.constant dense<0.000000e+00> : vector<16x16xf32>
    %163 = tpu.matmul %162, %129, %cst_164 {dimension_numbers = #tpu.dot_dimension_numbers<[1], [0], [0], [1], [0, 0, 1, 1], [], []>} : vector<16x16xf32>, vector<16x16xf32>, vector<16x16xf32> -> vector<16x16xf32>
    %c0_165 = arith.constant 0 : index
    %c0_166 = arith.constant 0 : index
    %c0_167 = arith.constant 0 : index
    %164 = vector.load %arg4[%c0_165, %c0_166, %c0_167] : memref<2x16x16xf32, #tpu.memory_space<vmem>>, vector<1x16x16xf32>
    %165 = vector.shape_cast %164 : vector<1x16x16xf32> to vector<16x16xf32>
    %cst_168 = arith.constant dense<0.000000e+00> : vector<16x16xf32>
    %166 = tpu.matmul %163, %165, %cst_168 {dimension_numbers = #tpu.dot_dimension_numbers<[1], [0], [0], [1], [0, 0, 1, 1], [], []>} : vector<16x16xf32>, vector<16x16xf32>, vector<16x16xf32> -> vector<16x16xf32>
    %c0_169 = arith.constant 0 : index
    %c10 = arith.constant 10 : index
    %c0_170 = arith.constant 0 : index
    %c0_171 = arith.constant 0 : index
    %167 = vector.load %arg1[%c0_169, %c10, %c0_170, %c0_171] : memref<1x12x16x18xf32, #tpu.memory_space<vmem>>, vector<1x1x16x18xf32>
    %168 = vector.shape_cast %167 : vector<1x1x16x18xf32> to vector<16x18xf32>
    %169 = vector.extract_strided_slice %168 {offsets = [0, 1], sizes = [16, 16], strides = [1, 1]} : vector<16x18xf32> to vector<16x16xf32>
    %170 = arith.addf %169, %166 : vector<16x16xf32>
    %cst_172 = arith.constant -1.000000e+00 : f32
    %cst_173 = arith.constant 1.000000e+00 : f32
    %171 = vector.broadcast %cst_172 : f32 to vector<16x16xf32>
    %172 = arith.maximumf %171, %170 : vector<16x16xf32>
    %173 = vector.broadcast %cst_173 : f32 to vector<16x16xf32>
    %174 = arith.minimumf %173, %172 : vector<16x16xf32>
    %c0_174 = arith.constant 0 : index
    %c10_175 = arith.constant 10 : index
    %c0_176 = arith.constant 0 : index
    %c0_177 = arith.constant 0 : index
    %175 = vector.load %arg5[%c0_174, %c10_175, %c0_176, %c0_177] : memref<1x12x16x16xf32, #tpu.memory_space<vmem>>, vector<1x1x16x16xf32>
    %176 = vector.shape_cast %175 : vector<1x1x16x16xf32> to vector<16x16xf32>
    %177 = vector.shape_cast %174 : vector<16x16xf32> to vector<1x1x16x16xf32>
    tpu.vector_store %arg5[%c0_174, %c10_175, %c0_176, %c0_177], %177 {strides = array<i32>} : memref<1x12x16x16xf32, #tpu.memory_space<vmem>>, vector<1x1x16x16xf32>,
    %c1_178 = arith.constant 1 : index
    %c0_179 = arith.constant 0 : index
    %c0_180 = arith.constant 0 : index
    %178 = vector.load %arg4[%c1_178, %c0_179, %c0_180] : memref<2x16x16xf32, #tpu.memory_space<vmem>>, vector<1x16x16xf32>
    %179 = vector.shape_cast %178 : vector<1x16x16xf32> to vector<16x16xf32>
    %cst_181 = arith.constant dense<0.000000e+00> : vector<16x16xf32>
    %180 = tpu.matmul %163, %179, %cst_181 {dimension_numbers = #tpu.dot_dimension_numbers<[1], [0], [0], [1], [0, 0, 1, 1], [], []>} : vector<16x16xf32>, vector<16x16xf32>, vector<16x16xf32> -> vector<16x16xf32>
    %c0_182 = arith.constant 0 : index
    %c11 = arith.constant 11 : index
    %c0_183 = arith.constant 0 : index
    %c0_184 = arith.constant 0 : index
    %181 = vector.load %arg1[%c0_182, %c11, %c0_183, %c0_184] : memref<1x12x16x18xf32, #tpu.memory_space<vmem>>, vector<1x1x16x18xf32>
    %182 = vector.shape_cast %181 : vector<1x1x16x18xf32> to vector<16x18xf32>
    %183 = vector.extract_strided_slice %182 {offsets = [0, 1], sizes = [16, 16], strides = [1, 1]} : vector<16x18xf32> to vector<16x16xf32>
    %184 = arith.addf %183, %180 : vector<16x16xf32>
    %cst_185 = arith.constant -1.000000e+00 : f32
    %cst_186 = arith.constant 1.000000e+00 : f32
    %185 = vector.broadcast %cst_185 : f32 to vector<16x16xf32>
    %186 = arith.maximumf %185, %184 : vector<16x16xf32>
    %187 = vector.broadcast %cst_186 : f32 to vector<16x16xf32>
    %188 = arith.minimumf %187, %186 : vector<16x16xf32>
    %c0_187 = arith.constant 0 : index
    %c11_188 = arith.constant 11 : index
    %c0_189 = arith.constant 0 : index
    %c0_190 = arith.constant 0 : index
    %189 = vector.load %arg5[%c0_187, %c11_188, %c0_189, %c0_190] : memref<1x12x16x16xf32, #tpu.memory_space<vmem>>, vector<1x1x16x16xf32>
    %190 = vector.shape_cast %189 : vector<1x1x16x16xf32> to vector<16x16xf32>
    %191 = vector.shape_cast %188 : vector<16x16xf32> to vector<1x1x16x16xf32>
    tpu.vector_store %arg5[%c0_187, %c11_188, %c0_189, %c0_190], %191 {strides = array<i32>} : memref<1x12x16x16xf32, #tpu.memory_space<vmem>>, vector<1x1x16x16xf32>,
    return
  }
  func.func @transform_0(%arg0: i32) -> (i32, i32, i32, i32) {
    %c0_i32 = arith.constant 0 : i32
    %c0_i32_0 = arith.constant 0 : i32
    %c0_i32_1 = arith.constant 0 : i32
    %c0_i32_2 = arith.constant 0 : i32
    return %arg0, %c0_i32, %c0_i32_0, %c0_i32_1 : i32, i32, i32, i32
  }
  func.func @transform_1(%arg0: i32) -> (i32, i32, i32, i32) {
    %c0_i32 = arith.constant 0 : i32
    %c0_i32_0 = arith.constant 0 : i32
    %c0_i32_1 = arith.constant 0 : i32
    %c0_i32_2 = arith.constant 0 : i32
    return %arg0, %c0_i32, %c0_i32_0, %c0_i32_1 : i32, i32, i32, i32
  }
  func.func @transform_2(%arg0: i32) -> (i32, i32, i32) {
    %c0_i32 = arith.constant 0 : i32
    %c0_i32_0 = arith.constant 0 : i32
    %c0_i32_1 = arith.constant 0 : i32
    %c0_i32_2 = arith.constant 0 : i32
    return %c0_i32, %c0_i32_0, %c0_i32_1 : i32, i32, i32
  }
  func.func @transform_3(%arg0: i32) -> (i32, i32, i32) {
    %c0_i32 = arith.constant 0 : i32
    %c0_i32_0 = arith.constant 0 : i32
    %c0_i32_1 = arith.constant 0 : i32
    %c0_i32_2 = arith.constant 0 : i32
    return %c0_i32, %c0_i32_0, %c0_i32_1 : i32, i32, i32
  }
  func.func @transform_4(%arg0: i32) -> (i32, i32, i32, i32) {
    %c0_i32 = arith.constant 0 : i32
    %c0_i32_0 = arith.constant 0 : i32
    %c0_i32_1 = arith.constant 0 : i32
    %c0_i32_2 = arith.constant 0 : i32
    return %arg0, %c0_i32, %c0_i32_0, %c0_i32_1 : i32, i32, i32, i32
  }
}

</mosaic_0001>

<llo_original>
// kernel: _lambda_.6
$region0: #{_lambda_.6}
  #allocation0 [shape = 'u32[]', space=smem, size = 0x4, offset = 0x4, fixed_abs, tag = 'smem constant byte address 0x4 - core index']
  #allocation1 [shape = 'u32[144,128]{1,0:T(1,128)}', space=vmem, size = 0x12000, scoped, tag = 'internal scratch']
  %s0 = inlined_call_operand.vmem [shape: bf16[2,8,384], index: 0, kind: input, shape index: {}]
  %s1 = inlined_call_operand.hbm [shape: bf16[9,8,8], index: 1, kind: input, shape index: {}]
  %s2 = inlined_call_operand.hbm [shape: f32[8,1], index: 2, kind: input, shape index: {}]
  %s3 = inlined_call_operand.hbm [shape: bf16[12,8], index: 3, kind: input, shape index: {}]
  %s4 = inlined_call_operand.hbm [shape: f32[12,1], index: 4, kind: input, shape index: {}]
  %s5 = inlined_call_operand.vmem [shape: f32[2,12,288], index: 5, kind: output, shape index: {}]
  %s6 = sld [smem:[#allocation0]]
  $region69: #{_lambda_.6} parent=0
    _
  %s8 = ssub.s32 1, %s6
  %s9 = scalar_select 0, %s8, %s6
  $region1: #{_lambda_.6} parent=0
    #allocation2 [shape = 'u8[18432]{0}', space=vmem, size = 0x4800, scoped, tag = 'input window, operand 1, single buffered']
    #allocation3 [shape = 's32[2]{0}', space=sflag, size = 0x8, scoped, tag = 'scoped memory for _lambda_.6']
    #allocation4 [shape = 'u8[4096]{0}', space=vmem, size = 0x1000, scoped, tag = 'input window, operand 2, single buffered']
    #allocation5 [shape = 's32[1]{0}', space=sflag, size = 0x4, scoped, tag = 'scoped memory for _lambda_.6']
    #allocation6 [shape = 'u8[4096]{0}', space=vmem, size = 0x1000, scoped, tag = 'input window, operand 3, single buffered']
    #allocation7 [shape = 'u8[8192]{0}', space=vmem, size = 0x2000, scoped, tag = 'input window, operand 4, single buffered']
    #allocation8 [shape = 's32[1]{0}', space=sflag, size = 0x4, scoped, tag = 'scoped memory for _lambda_.6']
    %10 = vsyncpa [#allocation3], 0
    %11 = vsyncpa [#allocation5], 0
    %12 = vsyncpa [#allocation8], 0
    loop: start=0, step=1, limit=4
    $region2: #{_lambda_.6} parent=1 // loop_pre_header
      _
    $region3: #{_lambda_.6} parent=1 // loop_header
      %s14 = sphi 0, %s18
      %p15 = scmp.ge.s32.totalorder %s14, 4
      %s24 = sphi 0, %s26
      %s27 = sphi 0, %s24
      %s28 = sphi 0, %s27
      %s44 = sphi 0, %s28
      %s48 = sphi 0, %s48
      %s50 = sphi 0, %s48
      %s51 = sphi 0, %s50
      %s65 = sphi 0, %s51
      %s69 = sphi 0, %s69
      %s71 = sphi 0, %s69
      %s72 = sphi 0, %s71
      %s86 = sphi 0, %s72
      %s90 = sphi 0, %s90
      %s92 = sphi 0, %s90
      %s93 = sphi 0, %s92
      %s107 = sphi 0, %s93
      %s111 = sphi 0, %s111
      %s113 = sphi 0, %s111
      %s114 = sphi 0, %s113
      %s128 = sphi 0, %s114
      %s134 = sphi 0, %s136
      %s137 = sphi 0, %s134
      %s138 = sphi 0, %s137
      %s154 = sphi 0, %s138
    $region4: #{_lambda_.6} parent=1 // loop_header_branch
      %17 = sbr.rel (%p15) target = $region8
    $region5: #{_lambda_.6} parent=1 // loop_body
      %s19 = ssub.s32 %s14, 1
      %s20 = ssub.s32 %s14, 2
      %s21 = sadd.s32 %s14, 1
      %s22 = ssub.s32 %s14, %s21
      %p23 = scmp.eq.s32.totalorder %s22, 0
      %s25 = sadd.s32 %s24, 1
      %s26 = scalar_select %p23, %s24, %s25
      %p29 = pneg %p23
      %p30 = scmp.eq.s32.totalorder %s14, 1
      %p31 = por %p29, %p30
      %p32 = scmp.ne.s32.totalorder %s24, %s27
      %p33 = scmp.eq.s32.totalorder %s14, 0
      %p34 = por %p32, %p33
      %p35 = scmp.ne.s32.totalorder %s24, %s27
      %p36 = scmp.eq.s32.totalorder %s19, 1
      %p37 = por %p35, %p36
      %p38 = scmp.ne.s32.totalorder %s27, %s28
      %p39 = scmp.eq.s32.totalorder %s19, 0
      %p40 = por %p38, %p39
      %p41 = scmp.ne.s32.totalorder %s27, %s28
      %p42 = scmp.eq.s32.totalorder %s20, 1
      %p43 = por %p41, %p42
      %p45 = scmp.ne.s32.totalorder %s28, %s44
      %p46 = scmp.eq.s32.totalorder %s20, 0
      %p47 = por %p45, %p46
      %s49 = sadd.s32 %s48, 1
      %p52 = scmp.eq.s32.totalorder %s14, 1
      %p53 = scmp.ne.s32.totalorder %s48, %s50
      %p54 = scmp.eq.s32.totalorder %s14, 0
      %p55 = por %p53, %p54
      %p56 = scmp.ne.s32.totalorder %s48, %s50
      %p57 = scmp.eq.s32.totalorder %s19, 1
      %p58 = por %p56, %p57
      %p59 = scmp.ne.s32.totalorder %s50, %s51
      %p60 = scmp.eq.s32.totalorder %s19, 0
      %p61 = por %p59, %p60
      %p62 = scmp.ne.s32.totalorder %s50, %s51
      %p63 = scmp.eq.s32.totalorder %s20, 1
      %p64 = por %p62, %p63
      %p66 = scmp.ne.s32.totalorder %s51, %s65
      %p67 = scmp.eq.s32.totalorder %s20, 0
      %p68 = por %p66, %p67
      %s70 = sadd.s32 %s69, 1
      %p73 = scmp.eq.s32.totalorder %s14, 1
      %p74 = scmp.ne.s32.totalorder %s69, %s71
      %p75 = scmp.eq.s32.totalorder %s14, 0
      %p76 = por %p74, %p75
      %p77 = scmp.ne.s32.totalorder %s69, %s71
      %p78 = scmp.eq.s32.totalorder %s19, 1
      %p79 = por %p77, %p78
      %p80 = scmp.ne.s32.totalorder %s71, %s72
      %p81 = scmp.eq.s32.totalorder %s19, 0
      %p82 = por %p80, %p81
      %p83 = scmp.ne.s32.totalorder %s71, %s72
      %p84 = scmp.eq.s32.totalorder %s20, 1
      %p85 = por %p83, %p84
      %p87 = scmp.ne.s32.totalorder %s72, %s86
      %p88 = scmp.eq.s32.totalorder %s20, 0
      %p89 = por %p87, %p88
      %s91 = sadd.s32 %s90, 1
      %p94 = scmp.eq.s32.totalorder %s14, 1
      %p95 = scmp.ne.s32.totalorder %s90, %s92
      %p96 = scmp.eq.s32.totalorder %s14, 0
      %p97 = por %p95, %p96
      %p98 = scmp.ne.s32.totalorder %s90, %s92
      %p99 = scmp.eq.s32.totalorder %s19, 1
      %p100 = por %p98, %p99
      %p101 = scmp.ne.s32.totalorder %s92, %s93
      %p102 = scmp.eq.s32.totalorder %s19, 0
      %p103 = por %p101, %p102
      %p104 = scmp.ne.s32.totalorder %s92, %s93
      %p105 = scmp.eq.s32.totalorder %s20, 1
      %p106 = por %p104, %p105
      %p108 = scmp.ne.s32.totalorder %s93, %s107
      %p109 = scmp.eq.s32.totalorder %s20, 0
      %p110 = por %p108, %p109
      %s112 = sadd.s32 %s111, 1
      %p115 = scmp.eq.s32.totalorder %s14, 1
      %p116 = scmp.ne.s32.totalorder %s111, %s113
      %p117 = scmp.eq.s32.totalorder %s14, 0
      %p118 = por %p116, %p117
      %p119 = scmp.ne.s32.totalorder %s111, %s113
      %p120 = scmp.eq.s32.totalorder %s19, 1
      %p121 = por %p119, %p120
      %p122 = scmp.ne.s32.totalorder %s113, %s114
      %p123 = scmp.eq.s32.totalorder %s19, 0
      %p124 = por %p122, %p123
      %p125 = scmp.ne.s32.totalorder %s113, %s114
      %p126 = scmp.eq.s32.totalorder %s20, 1
      %p127 = por %p125, %p126
      %p129 = scmp.ne.s32.totalorder %s114, %s128
      %p130 = scmp.eq.s32.totalorder %s20, 0
      %p131 = por %p129, %p130
      %s132 = ssub.s32 %s14, %s21
      %p133 = scmp.eq.s32.totalorder %s132, 0
      %s135 = sadd.s32 %s134, 1
      %s136 = scalar_select %p133, %s134, %s135
      %p139 = pneg %p133
      %p140 = scmp.eq.s32.totalorder %s14, 1
      %p141 = por %p139, %p140
      %p142 = scmp.ne.s32.totalorder %s134, %s137
      %p143 = scmp.eq.s32.totalorder %s14, 0
      %p144 = por %p142, %p143
      %p145 = scmp.ne.s32.totalorder %s134, %s137
      %p146 = scmp.eq.s32.totalorder %s19, 1
      %p147 = por %p145, %p146
      %p148 = scmp.ne.s32.totalorder %s137, %s138
      %p149 = scmp.eq.s32.totalorder %s19, 0
      %p150 = por %p148, %p149
      %p151 = scmp.ne.s32.totalorder %s137, %s138
      %p152 = scmp.eq.s32.totalorder %s20, 1
      %p153 = por %p151, %p152
      %p155 = scmp.ne.s32.totalorder %s138, %s154
      %p156 = scmp.eq.s32.totalorder %s20, 0
      %p157 = por %p155, %p156
      %p158 = scmp.le.s32.totalorder 1, %s14
      %p159 = scmp.lt.s32.totalorder %s14, 3
      %p160 = pnand %p158, %p159
      %p161 = pneg %p160
      // Predicated region
      $region9: #{_lambda_.6} parent=5 // pred_check
        _
      $region10: #{_lambda_.6} parent=5 // pred_check_branch
        %163 = sbr.rel (%p160) target = $region12
      $region11: #{_lambda_.6} parent=5 // pred_region
        %s164 = ssub.s32 %s14, 1
        // Predicated region
        $region13: #{_lambda_.6} parent=11 // pred_check
          %p165 = pneg %p61
        $region14: #{_lambda_.6} parent=11 // pred_check_branch
          %167 = sbr.rel (%p165) target = $region16
        $region15: #{_lambda_.6} parent=11 // pred_region
          %s169 = ssub.s32 576, 576
          %170 = vsyncadd [#allocation3], %s169
          %s171 = sshll.u32 [#allocation2], 4
          %s172 = int_to_ptr.vmem [resolvable:$true] %s171
          %177 = dma.hbm_to_vmem [thread:$0]  %s1, 576, %s172, [#allocation3], 64, 64, 4
        $region16: #{_lambda_.6} parent=11 // pred_fallthru
          _
        // Predicated region
        $region17: #{_lambda_.6} parent=11 // pred_check
          %p178 = pneg %p82
        $region18: #{_lambda_.6} parent=11 // pred_check_branch
          %180 = sbr.rel (%p178) target = $region20
        $region19: #{_lambda_.6} parent=11 // pred_region
          %s182 = ssub.s32 128, 128
          %183 = vsyncadd [#allocation5], %s182
          %s185 = sshll.u32 [#allocation4], 4
          %s186 = int_to_ptr.vmem [resolvable:$true] %s185
          %188 = dma.hbm_to_vmem [thread:$0]  %s2, 128, %s186, [#allocation5]
        $region20: #{_lambda_.6} parent=11 // pred_fallthru
          _
        // Predicated region
        $region21: #{_lambda_.6} parent=11 // pred_check
          %p189 = pneg %p103
        $region22: #{_lambda_.6} parent=11 // pred_check_branch
          %191 = sbr.rel (%p189) target = $region24
        $region23: #{_lambda_.6} parent=11 // pred_region
          %s193 = ssub.s32 128, 128
          %194 = vsyncadd [#allocation5], %s193
          %s195 = sshll.u32 [#allocation6], 4
          %s196 = int_to_ptr.vmem [resolvable:$true] %s195
          %201 = dma.hbm_to_vmem [thread:$0]  %s3, 128, %s196, [#allocation5], 64, 64, 4
        $region24: #{_lambda_.6} parent=11 // pred_fallthru
          _
        // Predicated region
        $region25: #{_lambda_.6} parent=11 // pred_check
          %p202 = pneg %p124
        $region26: #{_lambda_.6} parent=11 // pred_check_branch
          %204 = sbr.rel (%p202) target = $region28
        $region27: #{_lambda_.6} parent=11 // pred_region
          %s206 = ssub.s32 256, 256
          %207 = vsyncadd [#allocation8], %s206
          %s208 = sshll.u32 [#allocation7], 4
          %s209 = int_to_ptr.vmem [resolvable:$true] %s208
          %214 = dma.hbm_to_vmem [thread:$0]  %s4, 256, %s209, [#allocation8], 128, 128, 8
        $region28: #{_lambda_.6} parent=11 // pred_fallthru
          _
      $region12: #{_lambda_.6} parent=5 // pred_fallthru
        _
      %p215 = scmp.lt.s32.totalorder %s14, 2
      // Predicated region
      $region29: #{_lambda_.6} parent=5 // pred_check
        %p216 = pneg %p215
      $region30: #{_lambda_.6} parent=5 // pred_check_branch
        %218 = sbr.rel (%p216) target = $region32
      $region31: #{_lambda_.6} parent=5 // pred_region
        // Predicated region
        $region33: #{_lambda_.6} parent=31 // pred_check
          %p219 = pneg %p34
        $region34: #{_lambda_.6} parent=31 // pred_check_branch
          %221 = sbr.rel (%p219) target = $region36
        $region35: #{_lambda_.6} parent=31 // pred_region
          %p222 = scmp.lt.s32.totalorder %s14, 1
          %s223 = scalar_select %p222, %s14, 1
          %s224 = smul.addr %s223, 3
          %s225 = smul.addr %s224, 4
          %s226 = scalar_lea.vmem %s0, %s225
        $region36: #{_lambda_.6} parent=31 // pred_fallthru
          _
      $region32: #{_lambda_.6} parent=5 // pred_fallthru
        _
      %p227 = scmp.le.s32.totalorder 1, %s14
      %p228 = scmp.lt.s32.totalorder %s14, 3
      %p229 = pnand %p227, %p228
      %p230 = pneg %p229
      // Predicated region
      $region37: #{_lambda_.6} parent=5 // pred_check
        _
      $region38: #{_lambda_.6} parent=5 // pred_check_branch
        %232 = sbr.rel (%p229) target = $region40
      $region39: #{_lambda_.6} parent=5 // pred_region
        %s233 = ssub.s32 %s14, 1
        // Predicated region
        $region41: #{_lambda_.6} parent=39 // pred_check
          %p234 = pneg %p61
        $region42: #{_lambda_.6} parent=39 // pred_check_branch
          %236 = sbr.rel (%p234) target = $region44
        $region43: #{_lambda_.6} parent=39 // pred_region
          %237 = dma.done [#allocation3], 576
        $region44: #{_lambda_.6} parent=39 // pred_fallthru
          _
        // Predicated region
        $region45: #{_lambda_.6} parent=39 // pred_check
          %p238 = pneg %p82
        $region46: #{_lambda_.6} parent=39 // pred_check_branch
          %240 = sbr.rel (%p238) target = $region48
        $region47: #{_lambda_.6} parent=39 // pred_region
          %241 = dma.done [#allocation5], 128
        $region48: #{_lambda_.6} parent=39 // pred_fallthru
          _
        // Predicated region
        $region49: #{_lambda_.6} parent=39 // pred_check
          %p242 = pneg %p103
        $region50: #{_lambda_.6} parent=39 // pred_check_branch
          %244 = sbr.rel (%p242) target = $region52
        $region51: #{_lambda_.6} parent=39 // pred_region
          %245 = dma.done [#allocation5], 128
        $region52: #{_lambda_.6} parent=39 // pred_fallthru
          _
        // Predicated region
        $region53: #{_lambda_.6} parent=39 // pred_check
          %p246 = pneg %p124
        $region54: #{_lambda_.6} parent=39 // pred_check_branch
          %248 = sbr.rel (%p246) target = $region56
        $region55: #{_lambda_.6} parent=39 // pred_region
          %249 = dma.done [#allocation8], 256
        $region56: #{_lambda_.6} parent=39 // pred_fallthru
          _
        %p250 = scmp.lt.s32.totalorder %s19, 1
        %s251 = scalar_select %p250, %s19, 1
        %s252 = smul.addr %s251, 3
        %s253 = smul.addr %s252, 4
        %s254 = scalar_lea.vmem %s0, %s253
        %p255 = pneg %p40
        %p256 = pneg %p37
        %p257 = pneg %p61
        %p258 = pneg %p58
        %p259 = pneg %p82
        %p260 = pneg %p79
        %p261 = pneg %p103
        %p262 = pneg %p100
        %p263 = pneg %p124
        %p264 = pneg %p121
        %p265 = pneg %p150
        %p266 = pneg %p147
        %p267 = scmp.lt.s32.totalorder %s19, 1
        %s268 = scalar_select %p267, %s19, 1
        %s269 = smul.addr %s268, 6
        %s270 = smul.addr %s269, 8
        %s271 = scalar_lea.vmem %s5, %s270
        %p272 = scmp.lt.s32.totalorder %s19, 1
        %s273 = scalar_select %p272, %s19, 1
        %s274 = smul.addr %s273, 3
        %s275 = smul.addr %s274, 4
        %s276 = scalar_lea.vmem %s0, %s275
        %p277 = scmp.lt.s32.totalorder %s19, 1
        %s278 = scalar_select %p277, %s19, 1
        %s279 = smul.addr %s278, 6
        %s280 = smul.addr %s279, 8
        %s281 = scalar_lea.vmem %s5, %s280
        %v283 = vld [vmem:[%s276] sm:$0xff]
        %v284 = vld [vmem:[%s276 + $0x8] sm:$0xf]
        %v285 = vld [vmem:[#allocation2] sm:$0xf]
        %s286 = scalar_lea.vmem [#allocation2], 4
        %v287 = vld [vmem:[%s286] sm:$0xf]
        %v290 = vunpack.c.l.b16 %v283
        %v291 = vunpack.c.h.b16 %v283
        %v292 = vunpack.c.l.b16 %v284
        %v293 = vpack.c.b16 %v290, %v290
        %v294 = vpack.c.b16 %v291, %v291
        %v295 = vpack.c.b16 %v292, %v292
        %296 = vrot.lane.b32.xlu0 %v293, 127
        %v297 = vpop.permute.xlu0 %296
        %298 = vrot.lane.b32.xlu0 %v294, 127
        %v299 = vpop.permute.xlu0 %298
        %300 = vrot.lane.b32.xlu0 %v295, 127
        %v301 = vpop.permute.xlu0 %300
        %vm302 = vcmask 1039360
        %v303 = vsel %vm302, %v297, %v299
        %v304 = vsel %vm302, %v299, %v301
        %vm305 = vcmask 64512
        %v307 = vsel %vm305, %v287, 0
        %vm309 = vcmask 1043456
        %v311 = vsel %vm309, %v303, 0
        %v314 = vsel %vm309, %v304, 0
        %v317 = vsel %vm309, %v301, 0
        %319 = vmatprep.subr.bf16.mxu0 0
        %320 = vmatpush1.bf16.msra.mxu0 0
        %321 = vmatprep.subr.bf16.mxu0 0
        %322 = vmatpush1.bf16.msra.mxu0 0
        %323 = vmatprep.subr.bf16.mxu0 0
        %324 = vmatpush1.bf16.msra.mxu0 0
        %325 = vmatprep.subr.bf16.mxu0 0
        %326 = vmatpush1.bf16.msra.mxu0 0
        %327 = vmatprep.subr.bf16.mxu0 0
        %328 = vmatpush1.bf16.msra.mxu0 0
        %329 = vmatprep.subr.bf16.mxu0 0
        %330 = vmatpush1.bf16.msra.mxu0 0
        %331 = vmatprep.subr.bf16.mxu0 0
        %332 = vmatpush1.bf16.msra.mxu0 0
        %333 = vmatprep.subr.bf16.mxu0 %v314
        %334 = vmatpush1.bf16.msra.mxu0 %v311
        %335 = vmatprep.subr.bf16.mxu0 0
        %336 = vmatpush2.bf16.msra.mxu0 0
        %337 = vmatprep.subr.bf16.mxu0 0
        %338 = vmatpush2.bf16.msra.mxu0 0
        %339 = vmatprep.subr.bf16.mxu0 0
        %340 = vmatpush2.bf16.msra.mxu0 0
        %341 = vmatprep.subr.bf16.mxu0 0
        %342 = vmatpush2.bf16.msra.mxu0 0
        %343 = vmatprep.subr.bf16.mxu0 0
        %344 = vmatpush2.bf16.msra.mxu0 0
        %345 = vmatprep.subr.bf16.mxu0 0
        %346 = vmatpush2.bf16.msra.mxu0 0
        %347 = vmatprep.subr.bf16.mxu0 0
        %348 = vmatpush2.bf16.msra.mxu0 0
        %349 = vmatprep.subr.bf16.mxu0 0
        %350 = vmatpush2.bf16.msra.mxu0 0
        %351 = vmatprep.mubr.bf16.mxu0 0
        %352 = vmatmul.mubr.bf16.gmra.mxu0 %v307
        %v353 = vpop.f32.mrf.mxu0
        %v354 = vadd.f32 0.0, %v353
        %v355 = vpop.f32.mrf.mxu0
        %v356 = vadd.f32 0.0, %v355
        %v357 = vpop.f32.mrf.mxu0
        %v358 = vpop.f32.mrf.mxu0
        %359 = vdwg.mxu0
        %360 = vmatprep.subr.bf16.mxu0 0
        %361 = vmatpush1.bf16.msra.mxu0 0
        %362 = vmatprep.subr.bf16.mxu0 0
        %363 = vmatpush1.bf16.msra.mxu0 0
        %364 = vmatprep.subr.bf16.mxu0 0
        %365 = vmatpush1.bf16.msra.mxu0 0
        %366 = vmatprep.subr.bf16.mxu0 0
        %367 = vmatpush1.bf16.msra.mxu0 0
        %368 = vmatprep.subr.bf16.mxu0 0
        %369 = vmatpush1.bf16.msra.mxu0 0
        %370 = vmatprep.subr.bf16.mxu0 0
        %371 = vmatpush1.bf16.msra.mxu0 0
        %372 = vmatprep.subr.bf16.mxu0 0
        %373 = vmatpush1.bf16.msra.mxu0 0
        %374 = vmatprep.subr.bf16.mxu0 0
        %375 = vmatpush1.bf16.msra.mxu0 %v317
        %376 = vmatprep.subr.bf16.mxu0 0
        %377 = vmatpush2.bf16.msra.mxu0 0
        %378 = vmatprep.subr.bf16.mxu0 0
        %379 = vmatpush2.bf16.msra.mxu0 0
        %380 = vmatprep.subr.bf16.mxu0 0
        %381 = vmatpush2.bf16.msra.mxu0 0
        %382 = vmatprep.subr.bf16.mxu0 0
        %383 = vmatpush2.bf16.msra.mxu0 0
        %384 = vmatprep.subr.bf16.mxu0 0
        %385 = vmatpush2.bf16.msra.mxu0 0
        %386 = vmatprep.subr.bf16.mxu0 0
        %387 = vmatpush2.bf16.msra.mxu0 0
        %388 = vmatprep.subr.bf16.mxu0 0
        %389 = vmatpush2.bf16.msra.mxu0 0
        %390 = vmatprep.subr.bf16.mxu0 0
        %391 = vmatpush2.bf16.msra.mxu0 0
        %392 = vmatprep.mubr.bf16.mxu0 0
        %393 = vmatmul.mubr.bf16.gmra.mxu0 %v307
        %v394 = vpop.f32.mrf.mxu0
        %v395 = vadd.f32 0.0, %v394
        %v396 = vpop.f32.mrf.mxu0
        %v397 = vpop.f32.mrf.mxu0
        %v398 = vpop.f32.mrf.mxu0
        %399 = vdwg.mxu0
        %v401 = vsel %vm305, %v285, 0
        %v404 = vsel %vm309, %v293, 0
        %v407 = vsel %vm309, %v294, 0
        %v410 = vsel %vm309, %v295, 0
        %412 = vmatprep.subr.bf16.mxu0 0
        %413 = vmatpush1.bf16.msra.mxu0 0
        %414 = vmatprep.subr.bf16.mxu0 0
        %415 = vmatpush1.bf16.msra.mxu0 0
        %416 = vmatprep.subr.bf16.mxu0 0
        %417 = vmatpush1.bf16.msra.mxu0 0
        %418 = vmatprep.subr.bf16.mxu0 0
        %419 = vmatpush1.bf16.msra.mxu0 0
        %420 = vmatprep.subr.bf16.mxu0 0
        %421 = vmatpush1.bf16.msra.mxu0 0
        %422 = vmatprep.subr.bf16.mxu0 0
        %423 = vmatpush1.bf16.msra.mxu0 0
        %424 = vmatprep.subr.bf16.mxu0 0
        %425 = vmatpush1.bf16.msra.mxu0 0
        %426 = vmatprep.subr.bf16.mxu0 %v407
        %427 = vmatpush1.bf16.msra.mxu0 %v404
        %428 = vmatprep.subr.bf16.mxu0 0
        %429 = vmatpush2.bf16.msra.mxu0 0
        %430 = vmatprep.subr.bf16.mxu0 0
        %431 = vmatpush2.bf16.msra.mxu0 0
        %432 = vmatprep.subr.bf16.mxu0 0
        %433 = vmatpush2.bf16.msra.mxu0 0
        %434 = vmatprep.subr.bf16.mxu0 0
        %435 = vmatpush2.bf16.msra.mxu0 0
        %436 = vmatprep.subr.bf16.mxu0 0
        %437 = vmatpush2.bf16.msra.mxu0 0
        %438 = vmatprep.subr.bf16.mxu0 0
        %439 = vmatpush2.bf16.msra.mxu0 0
        %440 = vmatprep.subr.bf16.mxu0 0
        %441 = vmatpush2.bf16.msra.mxu0 0
        %442 = vmatprep.subr.bf16.mxu0 0
        %443 = vmatpush2.bf16.msra.mxu0 0
        %444 = vmatprep.mubr.bf16.mxu0 0
        %445 = vmatmul.mubr.bf16.gmra.mxu0 %v401
        %v446 = vpop.f32.mrf.mxu0
        %v447 = vadd.f32 %v354, %v446
        %v448 = vpop.f32.mrf.mxu0
        %v449 = vadd.f32 %v356, %v448
        %v450 = vpop.f32.mrf.mxu0
        %v451 = vpop.f32.mrf.mxu0
        %452 = vdwg.mxu0
        %453 = vmatprep.subr.bf16.mxu0 0
        %454 = vmatpush1.bf16.msra.mxu0 0
        %455 = vmatprep.subr.bf16.mxu0 0
        %456 = vmatpush1.bf16.msra.mxu0 0
        %457 = vmatprep.subr.bf16.mxu0 0
        %458 = vmatpush1.bf16.msra.mxu0 0
        %459 = vmatprep.subr.bf16.mxu0 0
        %460 = vmatpush1.bf16.msra.mxu0 0
        %461 = vmatprep.subr.bf16.mxu0 0
        %462 = vmatpush1.bf16.msra.mxu0 0
        %463 = vmatprep.subr.bf16.mxu0 0
        %464 = vmatpush1.bf16.msra.mxu0 0
        %465 = vmatprep.subr.bf16.mxu0 0
        %466 = vmatpush1.bf16.msra.mxu0 0
        %467 = vmatprep.subr.bf16.mxu0 0
        %468 = vmatpush1.bf16.msra.mxu0 %v410
        %469 = vmatprep.subr.bf16.mxu0 0
        %470 = vmatpush2.bf16.msra.mxu0 0
        %471 = vmatprep.subr.bf16.mxu0 0
        %472 = vmatpush2.bf16.msra.mxu0 0
        %473 = vmatprep.subr.bf16.mxu0 0
        %474 = vmatpush2.bf16.msra.mxu0 0
        %475 = vmatprep.subr.bf16.mxu0 0
        %476 = vmatpush2.bf16.msra.mxu0 0
        %477 = vmatprep.subr.bf16.mxu0 0
        %478 = vmatpush2.bf16.msra.mxu0 0
        %479 = vmatprep.subr.bf16.mxu0 0
        %480 = vmatpush2.bf16.msra.mxu0 0
        %481 = vmatprep.subr.bf16.mxu0 0
        %482 = vmatpush2.bf16.msra.mxu0 0
        %483 = vmatprep.subr.bf16.mxu0 0
        %484 = vmatpush2.bf16.msra.mxu0 0
        %485 = vmatprep.mubr.bf16.mxu0 0
        %486 = vmatmul.mubr.bf16.gmra.mxu0 %v401
        %v487 = vpop.f32.mrf.mxu0
        %v488 = vadd.f32 %v395, %v487
        %v489 = vpop.f32.mrf.mxu0
        %v490 = vpop.f32.mrf.mxu0
        %v491 = vpop.f32.mrf.mxu0
        %492 = vdwg.mxu0
        %s493 = scalar_lea.vmem [#allocation2], 8
        %v494 = vld [vmem:[%s493] sm:$0xf]
        %495 = vrot.lane.b32.xlu0 %v293, 126
        %v496 = vpop.permute.xlu0 %495
        %497 = vrot.lane.b32.xlu0 %v294, 126
        %v498 = vpop.permute.xlu0 %497
        %499 = vrot.lane.b32.xlu0 %v295, 126
        %v500 = vpop.permute.xlu0 %499
        %vm501 = vcmask 1031168
        %v502 = vsel %vm501, %v496, %v498
        %v503 = vsel %vm501, %v498, %v500
        %v505 = vsel %vm305, %v494, 0
        %v508 = vsel %vm309, %v502, 0
        %v511 = vsel %vm309, %v503, 0
        %v514 = vsel %vm309, %v500, 0
        %516 = vmatprep.subr.bf16.mxu0 0
        %517 = vmatpush1.bf16.msra.mxu0 0
        %518 = vmatprep.subr.bf16.mxu0 0
        %519 = vmatpush1.bf16.msra.mxu0 0
        %520 = vmatprep.subr.bf16.mxu0 0
        %521 = vmatpush1.bf16.msra.mxu0 0
        %522 = vmatprep.subr.bf16.mxu0 0
        %523 = vmatpush1.bf16.msra.mxu0 0
        %524 = vmatprep.subr.bf16.mxu0 0
        %525 = vmatpush1.bf16.msra.mxu0 0
        %526 = vmatprep.subr.bf16.mxu0 0
        %527 = vmatpush1.bf16.msra.mxu0 0
        %528 = vmatprep.subr.bf16.mxu0 0
        %529 = vmatpush1.bf16.msra.mxu0 0
        %530 = vmatprep.subr.bf16.mxu0 %v511
        %531 = vmatpush1.bf16.msra.mxu0 %v508
        %532 = vmatprep.subr.bf16.mxu0 0
        %533 = vmatpush2.bf16.msra.mxu0 0
        %534 = vmatprep.subr.bf16.mxu0 0
        %535 = vmatpush2.bf16.msra.mxu0 0
        %536 = vmatprep.subr.bf16.mxu0 0
        %537 = vmatpush2.bf16.msra.mxu0 0
        %538 = vmatprep.subr.bf16.mxu0 0
        %539 = vmatpush2.bf16.msra.mxu0 0
        %540 = vmatprep.subr.bf16.mxu0 0
        %541 = vmatpush2.bf16.msra.mxu0 0
        %542 = vmatprep.subr.bf16.mxu0 0
        %543 = vmatpush2.bf16.msra.mxu0 0
        %544 = vmatprep.subr.bf16.mxu0 0
        %545 = vmatpush2.bf16.msra.mxu0 0
        %546 = vmatprep.subr.bf16.mxu0 0
        %547 = vmatpush2.bf16.msra.mxu0 0
        %548 = vmatprep.mubr.bf16.mxu0 0
        %549 = vmatmul.mubr.bf16.gmra.mxu0 %v505
        %v550 = vpop.f32.mrf.mxu0
        %v551 = vadd.f32 0.0, %v550
        %v552 = vpop.f32.mrf.mxu0
        %v553 = vadd.f32 0.0, %v552
        %v554 = vpop.f32.mrf.mxu0
        %v555 = vpop.f32.mrf.mxu0
        %556 = vdwg.mxu0
        %557 = vmatprep.subr.bf16.mxu0 0
        %558 = vmatpush1.bf16.msra.mxu0 0
        %559 = vmatprep.subr.bf16.mxu0 0
        %560 = vmatpush1.bf16.msra.mxu0 0
        %561 = vmatprep.subr.bf16.mxu0 0
        %562 = vmatpush1.bf16.msra.mxu0 0
        %563 = vmatprep.subr.bf16.mxu0 0
        %564 = vmatpush1.bf16.msra.mxu0 0
        %565 = vmatprep.subr.bf16.mxu0 0
        %566 = vmatpush1.bf16.msra.mxu0 0
        %567 = vmatprep.subr.bf16.mxu0 0
        %568 = vmatpush1.bf16.msra.mxu0 0
        %569 = vmatprep.subr.bf16.mxu0 0
        %570 = vmatpush1.bf16.msra.mxu0 0
        %571 = vmatprep.subr.bf16.mxu0 0
        %572 = vmatpush1.bf16.msra.mxu0 %v514
        %573 = vmatprep.subr.bf16.mxu0 0
        %574 = vmatpush2.bf16.msra.mxu0 0
        %575 = vmatprep.subr.bf16.mxu0 0
        %576 = vmatpush2.bf16.msra.mxu0 0
        %577 = vmatprep.subr.bf16.mxu0 0
        %578 = vmatpush2.bf16.msra.mxu0 0
        %579 = vmatprep.subr.bf16.mxu0 0
        %580 = vmatpush2.bf16.msra.mxu0 0
        %581 = vmatprep.subr.bf16.mxu0 0
        %582 = vmatpush2.bf16.msra.mxu0 0
        %583 = vmatprep.subr.bf16.mxu0 0
        %584 = vmatpush2.bf16.msra.mxu0 0
        %585 = vmatprep.subr.bf16.mxu0 0
        %586 = vmatpush2.bf16.msra.mxu0 0
        %587 = vmatprep.subr.bf16.mxu0 0
        %588 = vmatpush2.bf16.msra.mxu0 0
        %589 = vmatprep.mubr.bf16.mxu0 0
        %590 = vmatmul.mubr.bf16.gmra.mxu0 %v505
        %v591 = vpop.f32.mrf.mxu0
        %v592 = vadd.f32 0.0, %v591
        %v593 = vpop.f32.mrf.mxu0
        %v594 = vpop.f32.mrf.mxu0
        %v595 = vpop.f32.mrf.mxu0
        %596 = vdwg.mxu0
        %v597 = vadd.f32 %v447, %v551
        %v598 = vadd.f32 %v449, %v553
        %v599 = vadd.f32 %v488, %v592
        %s600 = scalar_lea.vmem [#allocation2], 12
        %v601 = vld [vmem:[%s600] sm:$0xf]
        %602 = vrot.lane.b32.xlu0 %v293, 110
        %v603 = vpop.permute.xlu0 %602
        %604 = vrot.lane.b32.xlu0 %v294, 110
        %v605 = vpop.permute.xlu0 %604
        %606 = vrot.lane.b32.xlu0 %v295, 110
        %v607 = vpop.permute.xlu0 %606
        %vm608 = vcmask 900096
        %v609 = vsel %vm608, %v603, %v605
        %v610 = vsel %vm608, %v605, %v607
        %v612 = vsel %vm305, %v601, 0
        %v615 = vsel %vm309, %v609, 0
        %v618 = vsel %vm309, %v610, 0
        %v621 = vsel %vm309, %v607, 0
        %623 = vmatprep.subr.bf16.mxu0 0
        %624 = vmatpush1.bf16.msra.mxu0 0
        %625 = vmatprep.subr.bf16.mxu0 0
        %626 = vmatpush1.bf16.msra.mxu0 0
        %627 = vmatprep.subr.bf16.mxu0 0
        %628 = vmatpush1.bf16.msra.mxu0 0
        %629 = vmatprep.subr.bf16.mxu0 0
        %630 = vmatpush1.bf16.msra.mxu0 0
        %631 = vmatprep.subr.bf16.mxu0 0
        %632 = vmatpush1.bf16.msra.mxu0 0
        %633 = vmatprep.subr.bf16.mxu0 0
        %634 = vmatpush1.bf16.msra.mxu0 0
        %635 = vmatprep.subr.bf16.mxu0 0
        %636 = vmatpush1.bf16.msra.mxu0 0
        %637 = vmatprep.subr.bf16.mxu0 %v618
        %638 = vmatpush1.bf16.msra.mxu0 %v615
        %639 = vmatprep.subr.bf16.mxu0 0
        %640 = vmatpush2.bf16.msra.mxu0 0
        %641 = vmatprep.subr.bf16.mxu0 0
        %642 = vmatpush2.bf16.msra.mxu0 0
        %643 = vmatprep.subr.bf16.mxu0 0
        %644 = vmatpush2.bf16.msra.mxu0 0
        %645 = vmatprep.subr.bf16.mxu0 0
        %646 = vmatpush2.bf16.msra.mxu0 0
        %647 = vmatprep.subr.bf16.mxu0 0
        %648 = vmatpush2.bf16.msra.mxu0 0
        %649 = vmatprep.subr.bf16.mxu0 0
        %650 = vmatpush2.bf16.msra.mxu0 0
        %651 = vmatprep.subr.bf16.mxu0 0
        %652 = vmatpush2.bf16.msra.mxu0 0
        %653 = vmatprep.subr.bf16.mxu0 0
        %654 = vmatpush2.bf16.msra.mxu0 0
        %655 = vmatprep.mubr.bf16.mxu0 0
        %656 = vmatmul.mubr.bf16.gmra.mxu0 %v612
        %v657 = vpop.f32.mrf.mxu0
        %v658 = vadd.f32 0.0, %v657
        %v659 = vpop.f32.mrf.mxu0
        %v660 = vadd.f32 0.0, %v659
        %v661 = vpop.f32.mrf.mxu0
        %v662 = vpop.f32.mrf.mxu0
        %663 = vdwg.mxu0
        %664 = vmatprep.subr.bf16.mxu0 0
        %665 = vmatpush1.bf16.msra.mxu0 0
        %666 = vmatprep.subr.bf16.mxu0 0
        %667 = vmatpush1.bf16.msra.mxu0 0
        %668 = vmatprep.subr.bf16.mxu0 0
        %669 = vmatpush1.bf16.msra.mxu0 0
        %670 = vmatprep.subr.bf16.mxu0 0
        %671 = vmatpush1.bf16.msra.mxu0 0
        %672 = vmatprep.subr.bf16.mxu0 0
        %673 = vmatpush1.bf16.msra.mxu0 0
        %674 = vmatprep.subr.bf16.mxu0 0
        %675 = vmatpush1.bf16.msra.mxu0 0
        %676 = vmatprep.subr.bf16.mxu0 0
        %677 = vmatpush1.bf16.msra.mxu0 0
        %678 = vmatprep.subr.bf16.mxu0 0
        %679 = vmatpush1.bf16.msra.mxu0 %v621
        %680 = vmatprep.subr.bf16.mxu0 0
        %681 = vmatpush2.bf16.msra.mxu0 0
        %682 = vmatprep.subr.bf16.mxu0 0
        %683 = vmatpush2.bf16.msra.mxu0 0
        %684 = vmatprep.subr.bf16.mxu0 0
        %685 = vmatpush2.bf16.msra.mxu0 0
        %686 = vmatprep.subr.bf16.mxu0 0
        %687 = vmatpush2.bf16.msra.mxu0 0
        %688 = vmatprep.subr.bf16.mxu0 0
        %689 = vmatpush2.bf16.msra.mxu0 0
        %690 = vmatprep.subr.bf16.mxu0 0
        %691 = vmatpush2.bf16.msra.mxu0 0
        %692 = vmatprep.subr.bf16.mxu0 0
        %693 = vmatpush2.bf16.msra.mxu0 0
        %694 = vmatprep.subr.bf16.mxu0 0
        %695 = vmatpush2.bf16.msra.mxu0 0
        %696 = vmatprep.mubr.bf16.mxu0 0
        %697 = vmatmul.mubr.bf16.gmra.mxu0 %v612
        %v698 = vpop.f32.mrf.mxu0
        %v699 = vadd.f32 0.0, %v698
        %v700 = vpop.f32.mrf.mxu0
        %v701 = vpop.f32.mrf.mxu0
        %v702 = vpop.f32.mrf.mxu0
        %703 = vdwg.mxu0
        %v704 = vadd.f32 %v597, %v658
        %v705 = vadd.f32 %v598, %v660
        %v706 = vadd.f32 %v599, %v699
        %s707 = scalar_lea.vmem [#allocation2], 16
        %v708 = vld [vmem:[%s707] sm:$0xf]
        %709 = vrot.lane.b32.xlu0 %v293, 109
        %v710 = vpop.permute.xlu0 %709
        %711 = vrot.lane.b32.xlu0 %v294, 109
        %v712 = vpop.permute.xlu0 %711
        %713 = vrot.lane.b32.xlu0 %v295, 109
        %v714 = vpop.permute.xlu0 %713
        %vm715 = vcmask 891904
        %v716 = vsel %vm715, %v710, %v712
        %v717 = vsel %vm715, %v712, %v714
        %v719 = vsel %vm305, %v708, 0
        %v722 = vsel %vm309, %v716, 0
        %v725 = vsel %vm309, %v717, 0
        %v728 = vsel %vm309, %v714, 0
        %730 = vmatprep.subr.bf16.mxu0 0
        %731 = vmatpush1.bf16.msra.mxu0 0
        %732 = vmatprep.subr.bf16.mxu0 0
        %733 = vmatpush1.bf16.msra.mxu0 0
        %734 = vmatprep.subr.bf16.mxu0 0
        %735 = vmatpush1.bf16.msra.mxu0 0
        %736 = vmatprep.subr.bf16.mxu0 0
        %737 = vmatpush1.bf16.msra.mxu0 0
        %738 = vmatprep.subr.bf16.mxu0 0
        %739 = vmatpush1.bf16.msra.mxu0 0
        %740 = vmatprep.subr.bf16.mxu0 0
        %741 = vmatpush1.bf16.msra.mxu0 0
        %742 = vmatprep.subr.bf16.mxu0 0
        %743 = vmatpush1.bf16.msra.mxu0 0
        %744 = vmatprep.subr.bf16.mxu0 %v725
        %745 = vmatpush1.bf16.msra.mxu0 %v722
        %746 = vmatprep.subr.bf16.mxu0 0
        %747 = vmatpush2.bf16.msra.mxu0 0
        %748 = vmatprep.subr.bf16.mxu0 0
        %749 = vmatpush2.bf16.msra.mxu0 0
        %750 = vmatprep.subr.bf16.mxu0 0
        %751 = vmatpush2.bf16.msra.mxu0 0
        %752 = vmatprep.subr.bf16.mxu0 0
        %753 = vmatpush2.bf16.msra.mxu0 0
        %754 = vmatprep.subr.bf16.mxu0 0
        %755 = vmatpush2.bf16.msra.mxu0 0
        %756 = vmatprep.subr.bf16.mxu0 0
        %757 = vmatpush2.bf16.msra.mxu0 0
        %758 = vmatprep.subr.bf16.mxu0 0
        %759 = vmatpush2.bf16.msra.mxu0 0
        %760 = vmatprep.subr.bf16.mxu0 0
        %761 = vmatpush2.bf16.msra.mxu0 0
        %762 = vmatprep.mubr.bf16.mxu0 0
        %763 = vmatmul.mubr.bf16.gmra.mxu0 %v719
        %v764 = vpop.f32.mrf.mxu0
        %v765 = vadd.f32 0.0, %v764
        %v766 = vpop.f32.mrf.mxu0
        %v767 = vadd.f32 0.0, %v766
        %v768 = vpop.f32.mrf.mxu0
        %v769 = vpop.f32.mrf.mxu0
        %770 = vdwg.mxu0
        %771 = vmatprep.subr.bf16.mxu0 0
        %772 = vmatpush1.bf16.msra.mxu0 0
        %773 = vmatprep.subr.bf16.mxu0 0
        %774 = vmatpush1.bf16.msra.mxu0 0
        %775 = vmatprep.subr.bf16.mxu0 0
        %776 = vmatpush1.bf16.msra.mxu0 0
        %777 = vmatprep.subr.bf16.mxu0 0
        %778 = vmatpush1.bf16.msra.mxu0 0
        %779 = vmatprep.subr.bf16.mxu0 0
        %780 = vmatpush1.bf16.msra.mxu0 0
        %781 = vmatprep.subr.bf16.mxu0 0
        %782 = vmatpush1.bf16.msra.mxu0 0
        %783 = vmatprep.subr.bf16.mxu0 0
        %784 = vmatpush1.bf16.msra.mxu0 0
        %785 = vmatprep.subr.bf16.mxu0 0
        %786 = vmatpush1.bf16.msra.mxu0 %v728
        %787 = vmatprep.subr.bf16.mxu0 0
        %788 = vmatpush2.bf16.msra.mxu0 0
        %789 = vmatprep.subr.bf16.mxu0 0
        %790 = vmatpush2.bf16.msra.mxu0 0
        %791 = vmatprep.subr.bf16.mxu0 0
        %792 = vmatpush2.bf16.msra.mxu0 0
        %793 = vmatprep.subr.bf16.mxu0 0
        %794 = vmatpush2.bf16.msra.mxu0 0
        %795 = vmatprep.subr.bf16.mxu0 0
        %796 = vmatpush2.bf16.msra.mxu0 0
        %797 = vmatprep.subr.bf16.mxu0 0
        %798 = vmatpush2.bf16.msra.mxu0 0
        %799 = vmatprep.subr.bf16.mxu0 0
        %800 = vmatpush2.bf16.msra.mxu0 0
        %801 = vmatprep.subr.bf16.mxu0 0
        %802 = vmatpush2.bf16.msra.mxu0 0
        %803 = vmatprep.mubr.bf16.mxu0 0
        %804 = vmatmul.mubr.bf16.gmra.mxu0 %v719
        %v805 = vpop.f32.mrf.mxu0
        %v806 = vadd.f32 0.0, %v805
        %v807 = vpop.f32.mrf.mxu0
        %v808 = vpop.f32.mrf.mxu0
        %v809 = vpop.f32.mrf.mxu0
        %810 = vdwg.mxu0
        %v811 = vadd.f32 %v704, %v765
        %v812 = vadd.f32 %v705, %v767
        %v813 = vadd.f32 %v706, %v806
        %s814 = scalar_lea.vmem [#allocation2], 20
        %v815 = vld [vmem:[%s814] sm:$0xf]
        %816 = vrot.lane.b32.xlu0 %v293, 108
        %v817 = vpop.permute.xlu0 %816
        %818 = vrot.lane.b32.xlu0 %v294, 108
        %v819 = vpop.permute.xlu0 %818
        %820 = vrot.lane.b32.xlu0 %v295, 108
        %v821 = vpop.permute.xlu0 %820
        %vm822 = vcmask 883712
        %v823 = vsel %vm822, %v817, %v819
        %v824 = vsel %vm822, %v819, %v821
        %v826 = vsel %vm305, %v815, 0
        %v829 = vsel %vm309, %v823, 0
        %v832 = vsel %vm309, %v824, 0
        %v835 = vsel %vm309, %v821, 0
        %837 = vmatprep.subr.bf16.mxu0 0
        %838 = vmatpush1.bf16.msra.mxu0 0
        %839 = vmatprep.subr.bf16.mxu0 0
        %840 = vmatpush1.bf16.msra.mxu0 0
        %841 = vmatprep.subr.bf16.mxu0 0
        %842 = vmatpush1.bf16.msra.mxu0 0
        %843 = vmatprep.subr.bf16.mxu0 0
        %844 = vmatpush1.bf16.msra.mxu0 0
        %845 = vmatprep.subr.bf16.mxu0 0
        %846 = vmatpush1.bf16.msra.mxu0 0
        %847 = vmatprep.subr.bf16.mxu0 0
        %848 = vmatpush1.bf16.msra.mxu0 0
        %849 = vmatprep.subr.bf16.mxu0 0
        %850 = vmatpush1.bf16.msra.mxu0 0
        %851 = vmatprep.subr.bf16.mxu0 %v832
        %852 = vmatpush1.bf16.msra.mxu0 %v829
        %853 = vmatprep.subr.bf16.mxu0 0
        %854 = vmatpush2.bf16.msra.mxu0 0
        %855 = vmatprep.subr.bf16.mxu0 0
        %856 = vmatpush2.bf16.msra.mxu0 0
        %857 = vmatprep.subr.bf16.mxu0 0
        %858 = vmatpush2.bf16.msra.mxu0 0
        %859 = vmatprep.subr.bf16.mxu0 0
        %860 = vmatpush2.bf16.msra.mxu0 0
        %861 = vmatprep.subr.bf16.mxu0 0
        %862 = vmatpush2.bf16.msra.mxu0 0
        %863 = vmatprep.subr.bf16.mxu0 0
        %864 = vmatpush2.bf16.msra.mxu0 0
        %865 = vmatprep.subr.bf16.mxu0 0
        %866 = vmatpush2.bf16.msra.mxu0 0
        %867 = vmatprep.subr.bf16.mxu0 0
        %868 = vmatpush2.bf16.msra.mxu0 0
        %869 = vmatprep.mubr.bf16.mxu0 0
        %870 = vmatmul.mubr.bf16.gmra.mxu0 %v826
        %v871 = vpop.f32.mrf.mxu0
        %v872 = vadd.f32 0.0, %v871
        %v873 = vpop.f32.mrf.mxu0
        %v874 = vadd.f32 0.0, %v873
        %v875 = vpop.f32.mrf.mxu0
        %v876 = vpop.f32.mrf.mxu0
        %877 = vdwg.mxu0
        %878 = vmatprep.subr.bf16.mxu0 0
        %879 = vmatpush1.bf16.msra.mxu0 0
        %880 = vmatprep.subr.bf16.mxu0 0
        %881 = vmatpush1.bf16.msra.mxu0 0
        %882 = vmatprep.subr.bf16.mxu0 0
        %883 = vmatpush1.bf16.msra.mxu0 0
        %884 = vmatprep.subr.bf16.mxu0 0
        %885 = vmatpush1.bf16.msra.mxu0 0
        %886 = vmatprep.subr.bf16.mxu0 0
        %887 = vmatpush1.bf16.msra.mxu0 0
        %888 = vmatprep.subr.bf16.mxu0 0
        %889 = vmatpush1.bf16.msra.mxu0 0
        %890 = vmatprep.subr.bf16.mxu0 0
        %891 = vmatpush1.bf16.msra.mxu0 0
        %892 = vmatprep.subr.bf16.mxu0 0
        %893 = vmatpush1.bf16.msra.mxu0 %v835
        %894 = vmatprep.subr.bf16.mxu0 0
        %895 = vmatpush2.bf16.msra.mxu0 0
        %896 = vmatprep.subr.bf16.mxu0 0
        %897 = vmatpush2.bf16.msra.mxu0 0
        %898 = vmatprep.subr.bf16.mxu0 0
        %899 = vmatpush2.bf16.msra.mxu0 0
        %900 = vmatprep.subr.bf16.mxu0 0
        %901 = vmatpush2.bf16.msra.mxu0 0
        %902 = vmatprep.subr.bf16.mxu0 0
        %903 = vmatpush2.bf16.msra.mxu0 0
        %904 = vmatprep.subr.bf16.mxu0 0
        %905 = vmatpush2.bf16.msra.mxu0 0
        %906 = vmatprep.subr.bf16.mxu0 0
        %907 = vmatpush2.bf16.msra.mxu0 0
        %908 = vmatprep.subr.bf16.mxu0 0
        %909 = vmatpush2.bf16.msra.mxu0 0
        %910 = vmatprep.mubr.bf16.mxu0 0
        %911 = vmatmul.mubr.bf16.gmra.mxu0 %v826
        %v912 = vpop.f32.mrf.mxu0
        %v913 = vadd.f32 0.0, %v912
        %v914 = vpop.f32.mrf.mxu0
        %v915 = vpop.f32.mrf.mxu0
        %v916 = vpop.f32.mrf.mxu0
        %917 = vdwg.mxu0
        %v918 = vadd.f32 %v811, %v872
        %v919 = vadd.f32 %v812, %v874
        %v920 = vadd.f32 %v813, %v913
        %s921 = scalar_lea.vmem [#allocation2], 24
        %v922 = vld [vmem:[%s921] sm:$0xf]
        %923 = vrot.lane.b32.xlu0 %v293, 92
        %v924 = vpop.permute.xlu0 %923
        %925 = vrot.lane.b32.xlu0 %v294, 92
        %v926 = vpop.permute.xlu0 %925
        %927 = vrot.lane.b32.xlu0 %v295, 92
        %v928 = vpop.permute.xlu0 %927
        %vm929 = vcmask 752640
        %v930 = vsel %vm929, %v924, %v926
        %v931 = vsel %vm929, %v926, %v928
        %v933 = vsel %vm305, %v922, 0
        %v936 = vsel %vm309, %v930, 0
        %v939 = vsel %vm309, %v931, 0
        %v942 = vsel %vm309, %v928, 0
        %944 = vmatprep.subr.bf16.mxu0 0
        %945 = vmatpush1.bf16.msra.mxu0 0
        %946 = vmatprep.subr.bf16.mxu0 0
        %947 = vmatpush1.bf16.msra.mxu0 0
        %948 = vmatprep.subr.bf16.mxu0 0
        %949 = vmatpush1.bf16.msra.mxu0 0
        %950 = vmatprep.subr.bf16.mxu0 0
        %951 = vmatpush1.bf16.msra.mxu0 0
        %952 = vmatprep.subr.bf16.mxu0 0
        %953 = vmatpush1.bf16.msra.mxu0 0
        %954 = vmatprep.subr.bf16.mxu0 0
        %955 = vmatpush1.bf16.msra.mxu0 0
        %956 = vmatprep.subr.bf16.mxu0 0
        %957 = vmatpush1.bf16.msra.mxu0 0
        %958 = vmatprep.subr.bf16.mxu0 %v939
        %959 = vmatpush1.bf16.msra.mxu0 %v936
        %960 = vmatprep.subr.bf16.mxu0 0
        %961 = vmatpush2.bf16.msra.mxu0 0
        %962 = vmatprep.subr.bf16.mxu0 0
        %963 = vmatpush2.bf16.msra.mxu0 0
        %964 = vmatprep.subr.bf16.mxu0 0
        %965 = vmatpush2.bf16.msra.mxu0 0
        %966 = vmatprep.subr.bf16.mxu0 0
        %967 = vmatpush2.bf16.msra.mxu0 0
        %968 = vmatprep.subr.bf16.mxu0 0
        %969 = vmatpush2.bf16.msra.mxu0 0
        %970 = vmatprep.subr.bf16.mxu0 0
        %971 = vmatpush2.bf16.msra.mxu0 0
        %972 = vmatprep.subr.bf16.mxu0 0
        %973 = vmatpush2.bf16.msra.mxu0 0
        %974 = vmatprep.subr.bf16.mxu0 0
        %975 = vmatpush2.bf16.msra.mxu0 0
        %976 = vmatprep.mubr.bf16.mxu0 0
        %977 = vmatmul.mubr.bf16.gmra.mxu0 %v933
        %v978 = vpop.f32.mrf.mxu0
        %v979 = vadd.f32 0.0, %v978
        %v980 = vpop.f32.mrf.mxu0
        %v981 = vadd.f32 0.0, %v980
        %v982 = vpop.f32.mrf.mxu0
        %v983 = vpop.f32.mrf.mxu0
        %984 = vdwg.mxu0
        %985 = vmatprep.subr.bf16.mxu0 0
        %986 = vmatpush1.bf16.msra.mxu0 0
        %987 = vmatprep.subr.bf16.mxu0 0
        %988 = vmatpush1.bf16.msra.mxu0 0
        %989 = vmatprep.subr.bf16.mxu0 0
        %990 = vmatpush1.bf16.msra.mxu0 0
        %991 = vmatprep.subr.bf16.mxu0 0
        %992 = vmatpush1.bf16.msra.mxu0 0
        %993 = vmatprep.subr.bf16.mxu0 0
        %994 = vmatpush1.bf16.msra.mxu0 0
        %995 = vmatprep.subr.bf16.mxu0 0
        %996 = vmatpush1.bf16.msra.mxu0 0
        %997 = vmatprep.subr.bf16.mxu0 0
        %998 = vmatpush1.bf16.msra.mxu0 0
        %999 = vmatprep.subr.bf16.mxu0 0
        %1000 = vmatpush1.bf16.msra.mxu0 %v942
        %1001 = vmatprep.subr.bf16.mxu0 0
        %1002 = vmatpush2.bf16.msra.mxu0 0
        %1003 = vmatprep.subr.bf16.mxu0 0
        %1004 = vmatpush2.bf16.msra.mxu0 0
        %1005 = vmatprep.subr.bf16.mxu0 0
        %1006 = vmatpush2.bf16.msra.mxu0 0
        %1007 = vmatprep.subr.bf16.mxu0 0
        %1008 = vmatpush2.bf16.msra.mxu0 0
        %1009 = vmatprep.subr.bf16.mxu0 0
        %1010 = vmatpush2.bf16.msra.mxu0 0
        %1011 = vmatprep.subr.bf16.mxu0 0
        %1012 = vmatpush2.bf16.msra.mxu0 0
        %1013 = vmatprep.subr.bf16.mxu0 0
        %1014 = vmatpush2.bf16.msra.mxu0 0
        %1015 = vmatprep.subr.bf16.mxu0 0
        %1016 = vmatpush2.bf16.msra.mxu0 0
        %1017 = vmatprep.mubr.bf16.mxu0 0
        %1018 = vmatmul.mubr.bf16.gmra.mxu0 %v933
        %v1019 = vpop.f32.mrf.mxu0
        %v1020 = vadd.f32 0.0, %v1019
        %v1021 = vpop.f32.mrf.mxu0
        %v1022 = vpop.f32.mrf.mxu0
        %v1023 = vpop.f32.mrf.mxu0
        %1024 = vdwg.mxu0
        %v1025 = vadd.f32 %v918, %v979
        %v1026 = vadd.f32 %v919, %v981
        %v1027 = vadd.f32 %v920, %v1020
        %s1028 = scalar_lea.vmem [#allocation2], 28
        %v1029 = vld [vmem:[%s1028] sm:$0xf]
        %1030 = vrot.lane.b32.xlu0 %v293, 91
        %v1031 = vpop.permute.xlu0 %1030
        %1032 = vrot.lane.b32.xlu0 %v294, 91
        %v1033 = vpop.permute.xlu0 %1032
        %1034 = vrot.lane.b32.xlu0 %v295, 91
        %v1035 = vpop.permute.xlu0 %1034
        %vm1036 = vcmask 744448
        %v1037 = vsel %vm1036, %v1031, %v1033
        %v1038 = vsel %vm1036, %v1033, %v1035
        %v1040 = vsel %vm305, %v1029, 0
        %v1043 = vsel %vm309, %v1037, 0
        %v1046 = vsel %vm309, %v1038, 0
        %v1049 = vsel %vm309, %v1035, 0
        %1051 = vmatprep.subr.bf16.mxu0 0
        %1052 = vmatpush1.bf16.msra.mxu0 0
        %1053 = vmatprep.subr.bf16.mxu0 0
        %1054 = vmatpush1.bf16.msra.mxu0 0
        %1055 = vmatprep.subr.bf16.mxu0 0
        %1056 = vmatpush1.bf16.msra.mxu0 0
        %1057 = vmatprep.subr.bf16.mxu0 0
        %1058 = vmatpush1.bf16.msra.mxu0 0
        %1059 = vmatprep.subr.bf16.mxu0 0
        %1060 = vmatpush1.bf16.msra.mxu0 0
        %1061 = vmatprep.subr.bf16.mxu0 0
        %1062 = vmatpush1.bf16.msra.mxu0 0
        %1063 = vmatprep.subr.bf16.mxu0 0
        %1064 = vmatpush1.bf16.msra.mxu0 0
        %1065 = vmatprep.subr.bf16.mxu0 %v1046
        %1066 = vmatpush1.bf16.msra.mxu0 %v1043
        %1067 = vmatprep.subr.bf16.mxu0 0
        %1068 = vmatpush2.bf16.msra.mxu0 0
        %1069 = vmatprep.subr.bf16.mxu0 0
        %1070 = vmatpush2.bf16.msra.mxu0 0
        %1071 = vmatprep.subr.bf16.mxu0 0
        %1072 = vmatpush2.bf16.msra.mxu0 0
        %1073 = vmatprep.subr.bf16.mxu0 0
        %1074 = vmatpush2.bf16.msra.mxu0 0
        %1075 = vmatprep.subr.bf16.mxu0 0
        %1076 = vmatpush2.bf16.msra.mxu0 0
        %1077 = vmatprep.subr.bf16.mxu0 0
        %1078 = vmatpush2.bf16.msra.mxu0 0
        %1079 = vmatprep.subr.bf16.mxu0 0
        %1080 = vmatpush2.bf16.msra.mxu0 0
        %1081 = vmatprep.subr.bf16.mxu0 0
        %1082 = vmatpush2.bf16.msra.mxu0 0
        %1083 = vmatprep.mubr.bf16.mxu0 0
        %1084 = vmatmul.mubr.bf16.gmra.mxu0 %v1040
        %v1085 = vpop.f32.mrf.mxu0
        %v1086 = vadd.f32 0.0, %v1085
        %v1087 = vpop.f32.mrf.mxu0
        %v1088 = vadd.f32 0.0, %v1087
        %v1089 = vpop.f32.mrf.mxu0
        %v1090 = vpop.f32.mrf.mxu0
        %1091 = vdwg.mxu0
        %1092 = vmatprep.subr.bf16.mxu0 0
        %1093 = vmatpush1.bf16.msra.mxu0 0
        %1094 = vmatprep.subr.bf16.mxu0 0
        %1095 = vmatpush1.bf16.msra.mxu0 0
        %1096 = vmatprep.subr.bf16.mxu0 0
        %1097 = vmatpush1.bf16.msra.mxu0 0
        %1098 = vmatprep.subr.bf16.mxu0 0
        %1099 = vmatpush1.bf16.msra.mxu0 0
        %1100 = vmatprep.subr.bf16.mxu0 0
        %1101 = vmatpush1.bf16.msra.mxu0 0
        %1102 = vmatprep.subr.bf16.mxu0 0
        %1103 = vmatpush1.bf16.msra.mxu0 0
        %1104 = vmatprep.subr.bf16.mxu0 0
        %1105 = vmatpush1.bf16.msra.mxu0 0
        %1106 = vmatprep.subr.bf16.mxu0 0
        %1107 = vmatpush1.bf16.msra.mxu0 %v1049
        %1108 = vmatprep.subr.bf16.mxu0 0
        %1109 = vmatpush2.bf16.msra.mxu0 0
        %1110 = vmatprep.subr.bf16.mxu0 0
        %1111 = vmatpush2.bf16.msra.mxu0 0
        %1112 = vmatprep.subr.bf16.mxu0 0
        %1113 = vmatpush2.bf16.msra.mxu0 0
        %1114 = vmatprep.subr.bf16.mxu0 0
        %1115 = vmatpush2.bf16.msra.mxu0 0
        %1116 = vmatprep.subr.bf16.mxu0 0
        %1117 = vmatpush2.bf16.msra.mxu0 0
        %1118 = vmatprep.subr.bf16.mxu0 0
        %1119 = vmatpush2.bf16.msra.mxu0 0
        %1120 = vmatprep.subr.bf16.mxu0 0
        %1121 = vmatpush2.bf16.msra.mxu0 0
        %1122 = vmatprep.subr.bf16.mxu0 0
        %1123 = vmatpush2.bf16.msra.mxu0 0
        %1124 = vmatprep.mubr.bf16.mxu0 0
        %1125 = vmatmul.mubr.bf16.gmra.mxu0 %v1040
        %v1126 = vpop.f32.mrf.mxu0
        %v1127 = vadd.f32 0.0, %v1126
        %v1128 = vpop.f32.mrf.mxu0
        %v1129 = vpop.f32.mrf.mxu0
        %v1130 = vpop.f32.mrf.mxu0
        %1131 = vdwg.mxu0
        %v1132 = vadd.f32 %v1025, %v1086
        %v1133 = vadd.f32 %v1026, %v1088
        %v1134 = vadd.f32 %v1027, %v1127
        %s1135 = scalar_lea.vmem [#allocation2], 32
        %v1136 = vld [vmem:[%s1135] sm:$0xf]
        %1137 = vrot.lane.b32.xlu0 %v293, 90
        %v1138 = vpop.permute.xlu0 %1137
        %1139 = vrot.lane.b32.xlu0 %v294, 90
        %v1140 = vpop.permute.xlu0 %1139
        %1141 = vrot.lane.b32.xlu0 %v295, 90
        %v1142 = vpop.permute.xlu0 %1141
        %vm1143 = vcmask 736256
        %v1144 = vsel %vm1143, %v1138, %v1140
        %v1145 = vsel %vm1143, %v1140, %v1142
        %v1147 = vsel %vm305, %v1136, 0
        %v1150 = vsel %vm309, %v1144, 0
        %v1153 = vsel %vm309, %v1145, 0
        %v1156 = vsel %vm309, %v1142, 0
        %1158 = vmatprep.subr.bf16.mxu0 0
        %1159 = vmatpush1.bf16.msra.mxu0 0
        %1160 = vmatprep.subr.bf16.mxu0 0
        %1161 = vmatpush1.bf16.msra.mxu0 0
        %1162 = vmatprep.subr.bf16.mxu0 0
        %1163 = vmatpush1.bf16.msra.mxu0 0
        %1164 = vmatprep.subr.bf16.mxu0 0
        %1165 = vmatpush1.bf16.msra.mxu0 0
        %1166 = vmatprep.subr.bf16.mxu0 0
        %1167 = vmatpush1.bf16.msra.mxu0 0
        %1168 = vmatprep.subr.bf16.mxu0 0
        %1169 = vmatpush1.bf16.msra.mxu0 0
        %1170 = vmatprep.subr.bf16.mxu0 0
        %1171 = vmatpush1.bf16.msra.mxu0 0
        %1172 = vmatprep.subr.bf16.mxu0 %v1153
        %1173 = vmatpush1.bf16.msra.mxu0 %v1150
        %1174 = vmatprep.subr.bf16.mxu0 0
        %1175 = vmatpush2.bf16.msra.mxu0 0
        %1176 = vmatprep.subr.bf16.mxu0 0
        %1177 = vmatpush2.bf16.msra.mxu0 0
        %1178 = vmatprep.subr.bf16.mxu0 0
        %1179 = vmatpush2.bf16.msra.mxu0 0
        %1180 = vmatprep.subr.bf16.mxu0 0
        %1181 = vmatpush2.bf16.msra.mxu0 0
        %1182 = vmatprep.subr.bf16.mxu0 0
        %1183 = vmatpush2.bf16.msra.mxu0 0
        %1184 = vmatprep.subr.bf16.mxu0 0
        %1185 = vmatpush2.bf16.msra.mxu0 0
        %1186 = vmatprep.subr.bf16.mxu0 0
        %1187 = vmatpush2.bf16.msra.mxu0 0
        %1188 = vmatprep.subr.bf16.mxu0 0
        %1189 = vmatpush2.bf16.msra.mxu0 0
        %1190 = vmatprep.mubr.bf16.mxu0 0
        %1191 = vmatmul.mubr.bf16.gmra.mxu0 %v1147
        %v1192 = vpop.f32.mrf.mxu0
        %v1193 = vadd.f32 0.0, %v1192
        %v1194 = vpop.f32.mrf.mxu0
        %v1195 = vadd.f32 0.0, %v1194
        %v1196 = vpop.f32.mrf.mxu0
        %v1197 = vpop.f32.mrf.mxu0
        %1198 = vdwg.mxu0
        %1199 = vmatprep.subr.bf16.mxu0 0
        %1200 = vmatpush1.bf16.msra.mxu0 0
        %1201 = vmatprep.subr.bf16.mxu0 0
        %1202 = vmatpush1.bf16.msra.mxu0 0
        %1203 = vmatprep.subr.bf16.mxu0 0
        %1204 = vmatpush1.bf16.msra.mxu0 0
        %1205 = vmatprep.subr.bf16.mxu0 0
        %1206 = vmatpush1.bf16.msra.mxu0 0
        %1207 = vmatprep.subr.bf16.mxu0 0
        %1208 = vmatpush1.bf16.msra.mxu0 0
        %1209 = vmatprep.subr.bf16.mxu0 0
        %1210 = vmatpush1.bf16.msra.mxu0 0
        %1211 = vmatprep.subr.bf16.mxu0 0
        %1212 = vmatpush1.bf16.msra.mxu0 0
        %1213 = vmatprep.subr.bf16.mxu0 0
        %1214 = vmatpush1.bf16.msra.mxu0 %v1156
        %1215 = vmatprep.subr.bf16.mxu0 0
        %1216 = vmatpush2.bf16.msra.mxu0 0
        %1217 = vmatprep.subr.bf16.mxu0 0
        %1218 = vmatpush2.bf16.msra.mxu0 0
        %1219 = vmatprep.subr.bf16.mxu0 0
        %1220 = vmatpush2.bf16.msra.mxu0 0
        %1221 = vmatprep.subr.bf16.mxu0 0
        %1222 = vmatpush2.bf16.msra.mxu0 0
        %1223 = vmatprep.subr.bf16.mxu0 0
        %1224 = vmatpush2.bf16.msra.mxu0 0
        %1225 = vmatprep.subr.bf16.mxu0 0
        %1226 = vmatpush2.bf16.msra.mxu0 0
        %1227 = vmatprep.subr.bf16.mxu0 0
        %1228 = vmatpush2.bf16.msra.mxu0 0
        %1229 = vmatprep.subr.bf16.mxu0 0
        %1230 = vmatpush2.bf16.msra.mxu0 0
        %1231 = vmatprep.mubr.bf16.mxu0 0
        %1232 = vmatmul.mubr.bf16.gmra.mxu0 %v1147
        %v1233 = vpop.f32.mrf.mxu0
        %v1234 = vadd.f32 0.0, %v1233
        %v1235 = vpop.f32.mrf.mxu0
        %v1236 = vpop.f32.mrf.mxu0
        %v1237 = vpop.f32.mrf.mxu0
        %1238 = vdwg.mxu0
        %v1239 = vadd.f32 %v1132, %v1193
        %v1240 = vadd.f32 %v1133, %v1195
        %v1241 = vadd.f32 %v1134, %v1234
        %v1242 = vld [vmem:[#allocation4] sm:$0xff]
        %1244 = vset.pattern.permute.xlu0 0
        %1245 = vperm.xlu0 %1244, %v1242
        %v1246 = vpop.permute.xlu0 %1245
        %v1248 = vadd.f32 %v1239, %v1246
        %v1249 = vadd.f32 %v1240, %v1246
        %v1250 = vadd.f32 %v1241, %v1246
        %v1251 = vmax.f32 %v1248, 0.0
        %v1252 = vmax.f32 %v1249, 0.0
        %v1253 = vmax.f32 %v1250, 0.0
        %v1254 = vpack.c.bf16 %v1251, %v1251
        %v1255 = vpack.c.bf16 %v1252, %v1252
        %v1256 = vpack.c.bf16 %v1253, %v1253
        %v1257 = vld [vmem:[#allocation6] sm:$0xf]
        %v1258 = vld [vmem:[#allocation6 + $0x4] sm:$0x3]
        %v1259 = vld [vmem:[#allocation7] sm:$0xff]
        %v1260 = vld [vmem:[#allocation7 + $0x8] sm:$0xf]
        %1262 = vset.pattern.permute.xlu0 0
        %1263 = vperm.xlu0 %1262, %v1259
        %v1264 = vpop.permute.xlu0 %1263
        %1267 = vset.pattern.permute.xlu0 0
        %1268 = vperm.xlu0 %1267, %v1260
        %v1269 = vpop.permute.xlu0 %1268
        %v1273 = vunpack.c.l.b16 %v1257
        %v1274 = vunpack.c.l.b16 %v1258
        %v1275 = vpack.c.b16 %v1274, %v1273
        %v1277 = vsel %vm305, %v1275, 0
        %v1280 = vsel %vm309, %v1254, 0
        %v1283 = vsel %vm309, %v1255, 0
        %v1286 = vsel %vm309, %v1256, 0
        %1288 = vmatprep.subr.bf16.mxu0 0
        %1289 = vmatpush1.bf16.msra.mxu0 0
        %1290 = vmatprep.subr.bf16.mxu0 0
        %1291 = vmatpush1.bf16.msra.mxu0 0
        %1292 = vmatprep.subr.bf16.mxu0 0
        %1293 = vmatpush1.bf16.msra.mxu0 0
        %1294 = vmatprep.subr.bf16.mxu0 0
        %1295 = vmatpush1.bf16.msra.mxu0 0
        %1296 = vmatprep.subr.bf16.mxu0 0
        %1297 = vmatpush1.bf16.msra.mxu0 0
        %1298 = vmatprep.subr.bf16.mxu0 0
        %1299 = vmatpush1.bf16.msra.mxu0 0
        %1300 = vmatprep.subr.bf16.mxu0 0
        %1301 = vmatpush1.bf16.msra.mxu0 0
        %1302 = vmatprep.subr.bf16.mxu0 %v1283
        %1303 = vmatpush1.bf16.msra.mxu0 %v1280
        %1304 = vmatprep.subr.bf16.mxu0 0
        %1305 = vmatpush2.bf16.msra.mxu0 0
        %1306 = vmatprep.subr.bf16.mxu0 0
        %1307 = vmatpush2.bf16.msra.mxu0 0
        %1308 = vmatprep.subr.bf16.mxu0 0
        %1309 = vmatpush2.bf16.msra.mxu0 0
        %1310 = vmatprep.subr.bf16.mxu0 0
        %1311 = vmatpush2.bf16.msra.mxu0 0
        %1312 = vmatprep.subr.bf16.mxu0 0
        %1313 = vmatpush2.bf16.msra.mxu0 0
        %1314 = vmatprep.subr.bf16.mxu0 0
        %1315 = vmatpush2.bf16.msra.mxu0 0
        %1316 = vmatprep.subr.bf16.mxu0 0
        %1317 = vmatpush2.bf16.msra.mxu0 0
        %1318 = vmatprep.subr.bf16.mxu0 0
        %1319 = vmatpush2.bf16.msra.mxu0 0
        %1320 = vmatprep.mubr.bf16.mxu0 0
        %1321 = vmatmul.mubr.bf16.gmra.mxu0 %v1277
        %v1322 = vpop.f32.mrf.mxu0
        %v1323 = vadd.f32 %v1264, %v1322
        %v1324 = vpop.f32.mrf.mxu0
        %v1325 = vadd.f32 %v1264, %v1324
        %v1326 = vpop.f32.mrf.mxu0
        %v1327 = vadd.f32 %v1269, %v1326
        %v1328 = vpop.f32.mrf.mxu0
        %v1329 = vadd.f32 %v1269, %v1328
        %1330 = vdwg.mxu0
        %1331 = vmatprep.subr.bf16.mxu0 0
        %1332 = vmatpush1.bf16.msra.mxu0 0
        %1333 = vmatprep.subr.bf16.mxu0 0
        %1334 = vmatpush1.bf16.msra.mxu0 0
        %1335 = vmatprep.subr.bf16.mxu0 0
        %1336 = vmatpush1.bf16.msra.mxu0 0
        %1337 = vmatprep.subr.bf16.mxu0 0
        %1338 = vmatpush1.bf16.msra.mxu0 0
        %1339 = vmatprep.subr.bf16.mxu0 0
        %1340 = vmatpush1.bf16.msra.mxu0 0
        %1341 = vmatprep.subr.bf16.mxu0 0
        %1342 = vmatpush1.bf16.msra.mxu0 0
        %1343 = vmatprep.subr.bf16.mxu0 0
        %1344 = vmatpush1.bf16.msra.mxu0 0
        %1345 = vmatprep.subr.bf16.mxu0 0
        %1346 = vmatpush1.bf16.msra.mxu0 %v1286
        %1347 = vmatprep.subr.bf16.mxu0 0
        %1348 = vmatpush2.bf16.msra.mxu0 0
        %1349 = vmatprep.subr.bf16.mxu0 0
        %1350 = vmatpush2.bf16.msra.mxu0 0
        %1351 = vmatprep.subr.bf16.mxu0 0
        %1352 = vmatpush2.bf16.msra.mxu0 0
        %1353 = vmatprep.subr.bf16.mxu0 0
        %1354 = vmatpush2.bf16.msra.mxu0 0
        %1355 = vmatprep.subr.bf16.mxu0 0
        %1356 = vmatpush2.bf16.msra.mxu0 0
        %1357 = vmatprep.subr.bf16.mxu0 0
        %1358 = vmatpush2.bf16.msra.mxu0 0
        %1359 = vmatprep.subr.bf16.mxu0 0
        %1360 = vmatpush2.bf16.msra.mxu0 0
        %1361 = vmatprep.subr.bf16.mxu0 0
        %1362 = vmatpush2.bf16.msra.mxu0 0
        %1363 = vmatprep.mubr.bf16.mxu0 0
        %1364 = vmatmul.mubr.bf16.gmra.mxu0 %v1277
        %v1365 = vpop.f32.mrf.mxu0
        %v1366 = vadd.f32 %v1264, %v1365
        %v1367 = vpop.f32.mrf.mxu0
        %v1368 = vpop.f32.mrf.mxu0
        %v1369 = vadd.f32 %v1269, %v1368
        %v1370 = vpop.f32.mrf.mxu0
        %1371 = vdwg.mxu0
        %1372 = vst [vmem:[%s281] sm:$0xff] %v1323
        %1373 = vst [vmem:[%s281 + $0x8] sm:$0xff] %v1325
        %vm1374 = vcmask 261120
        %1375 = vst.msk [vmem:[%s281 + $0x10] sm:$0xff] %vm1374, %v1366
        %1376 = vst [vmem:[%s281 + $0x18] sm:$0xf] %v1327
        %1377 = vst [vmem:[%s281 + $0x20] sm:$0xf] %v1329
        %vm1378 = vcmask 257024
        %1379 = vst.msk [vmem:[%s281 + $0x28] sm:$0xf] %vm1378, %v1369
        %p1380 = scmp.lt.s32.totalorder %s19, 1
        %s1381 = scalar_select %p1380, %s19, 1
        %s1382 = smul.addr %s1381, 6
        %s1383 = smul.addr %s1382, 8
        %s1384 = scalar_lea.vmem %s5, %s1383
        // Predicated region
        $region57: #{_lambda_.6} parent=39 // pred_check
          %p1385 = pneg %p147
        $region58: #{_lambda_.6} parent=39 // pred_check_branch
          %1387 = sbr.rel (%p1385) target = $region60
        $region59: #{_lambda_.6} parent=39 // pred_region
          _
        $region60: #{_lambda_.6} parent=39 // pred_fallthru
          _
      $region40: #{_lambda_.6} parent=5 // pred_fallthru
        _
      %p1388 = scmp.le.s32.totalorder 2, %s14
      // Predicated region
      $region61: #{_lambda_.6} parent=5 // pred_check
        %p1389 = pneg %p1388
      $region62: #{_lambda_.6} parent=5 // pred_check_branch
        %1391 = sbr.rel (%p1389) target = $region64
      $region63: #{_lambda_.6} parent=5 // pred_region
        %s1392 = ssub.s32 %s14, 2
        // Predicated region
        $region65: #{_lambda_.6} parent=63 // pred_check
          %p1393 = pneg %p153
        $region66: #{_lambda_.6} parent=63 // pred_check_branch
          %1395 = sbr.rel (%p1393) target = $region68
        $region67: #{_lambda_.6} parent=63 // pred_region
          %p1396 = scmp.lt.s32.totalorder %s20, 1
          %s1397 = scalar_select %p1396, %s20, 1
          %s1398 = smul.addr %s1397, 6
          %s1399 = smul.addr %s1398, 8
          %s1400 = scalar_lea.vmem %s5, %s1399
        $region68: #{_lambda_.6} parent=63 // pred_fallthru
          _
      $region64: #{_lambda_.6} parent=5 // pred_fallthru
        _
    $region6: #{_lambda_.6} parent=1 // loop_footer
      %s18 = sadd.s32 1, %s14
    $region7: #{_lambda_.6} parent=1 // loop_footer_branch
      %13 = sbr.rel target = $region3
    $region8: #{_lambda_.6} parent=1 // loop_exit
      _
    %1401 = vsyncpa [#allocation3], 1
    %s1402 = scalar_lea.sflag [#allocation3], 1
    %1403 = vsyncpa %s1402, 1
    %1404 = vsyncpa [#allocation5], 1
    %1405 = vsyncpa [#allocation8], 1

// kernel: _lambda_.5
$region0: #{_lambda_.5}
  #allocation0 [shape = 'u32[]', space=smem, size = 0x4, offset = 0x4, fixed_abs, tag = 'smem constant byte address 0x4 - core index']
  #allocation1 [shape = 'u32[144,128]{1,0:T(1,128)}', space=vmem, size = 0x12000, scoped, tag = 'internal scratch']
  %s0 = inlined_call_operand.vmem [shape: bf16[2,8,384], index: 0, kind: input, shape index: {}]
  %s1 = inlined_call_operand.hbm [shape: bf16[9,8,8], index: 1, kind: input, shape index: {}]
  %s2 = inlined_call_operand.hbm [shape: f32[8,1], index: 2, kind: input, shape index: {}]
  %s3 = inlined_call_operand.hbm [shape: f32[1,288], index: 3, kind: input, shape index: {}]
  %s4 = inlined_call_operand.vmem [shape: bf16[2,8,384], index: 4, kind: output, shape index: {}]
  %s5 = sld [smem:[#allocation0]]
  $region61: #{_lambda_.5} parent=0
    _
  %s7 = ssub.s32 1, %s5
  %s8 = scalar_select 0, %s7, %s5
  $region1: #{_lambda_.5} parent=0
    #allocation2 [shape = 'u8[18432]{0}', space=vmem, size = 0x4800, scoped, tag = 'input window, operand 1, single buffered']
    #allocation3 [shape = 's32[2]{0}', space=sflag, size = 0x8, scoped, tag = 'scoped memory for _lambda_.5']
    #allocation4 [shape = 'u8[4096]{0}', space=vmem, size = 0x1000, scoped, tag = 'input window, operand 2, single buffered']
    #allocation5 [shape = 's32[1]{0}', space=sflag, size = 0x4, scoped, tag = 'scoped memory for _lambda_.5']
    #allocation6 [shape = 'u8[1536]{0}', space=vmem, size = 0x800, scoped, tag = 'input window, operand 3, single buffered']
    %9 = vsyncpa [#allocation3], 0
    %10 = vsyncpa [#allocation5], 0
    loop: start=0, step=1, limit=4
    $region2: #{_lambda_.5} parent=1 // loop_pre_header
      _
    $region3: #{_lambda_.5} parent=1 // loop_header
      %s12 = sphi 0, %s16
      %p13 = scmp.ge.s32.totalorder %s12, 4
      %s22 = sphi 0, %s24
      %s25 = sphi 0, %s22
      %s26 = sphi 0, %s25
      %s42 = sphi 0, %s26
      %s46 = sphi 0, %s46
      %s48 = sphi 0, %s46
      %s49 = sphi 0, %s48
      %s63 = sphi 0, %s49
      %s67 = sphi 0, %s67
      %s69 = sphi 0, %s67
      %s70 = sphi 0, %s69
      %s84 = sphi 0, %s70
      %s88 = sphi 0, %s88
      %s90 = sphi 0, %s88
      %s91 = sphi 0, %s90
      %s105 = sphi 0, %s91
      %s111 = sphi 0, %s113
      %s114 = sphi 0, %s111
      %s115 = sphi 0, %s114
      %s131 = sphi 0, %s115
    $region4: #{_lambda_.5} parent=1 // loop_header_branch
      %15 = sbr.rel (%p13) target = $region8
    $region5: #{_lambda_.5} parent=1 // loop_body
      %s17 = ssub.s32 %s12, 1
      %s18 = ssub.s32 %s12, 2
      %s19 = sadd.s32 %s12, 1
      %s20 = ssub.s32 %s12, %s19
      %p21 = scmp.eq.s32.totalorder %s20, 0
      %s23 = sadd.s32 %s22, 1
      %s24 = scalar_select %p21, %s22, %s23
      %p27 = pneg %p21
      %p28 = scmp.eq.s32.totalorder %s12, 1
      %p29 = por %p27, %p28
      %p30 = scmp.ne.s32.totalorder %s22, %s25
      %p31 = scmp.eq.s32.totalorder %s12, 0
      %p32 = por %p30, %p31
      %p33 = scmp.ne.s32.totalorder %s22, %s25
      %p34 = scmp.eq.s32.totalorder %s17, 1
      %p35 = por %p33, %p34
      %p36 = scmp.ne.s32.totalorder %s25, %s26
      %p37 = scmp.eq.s32.totalorder %s17, 0
      %p38 = por %p36, %p37
      %p39 = scmp.ne.s32.totalorder %s25, %s26
      %p40 = scmp.eq.s32.totalorder %s18, 1
      %p41 = por %p39, %p40
      %p43 = scmp.ne.s32.totalorder %s26, %s42
      %p44 = scmp.eq.s32.totalorder %s18, 0
      %p45 = por %p43, %p44
      %s47 = sadd.s32 %s46, 1
      %p50 = scmp.eq.s32.totalorder %s12, 1
      %p51 = scmp.ne.s32.totalorder %s46, %s48
      %p52 = scmp.eq.s32.totalorder %s12, 0
      %p53 = por %p51, %p52
      %p54 = scmp.ne.s32.totalorder %s46, %s48
      %p55 = scmp.eq.s32.totalorder %s17, 1
      %p56 = por %p54, %p55
      %p57 = scmp.ne.s32.totalorder %s48, %s49
      %p58 = scmp.eq.s32.totalorder %s17, 0
      %p59 = por %p57, %p58
      %p60 = scmp.ne.s32.totalorder %s48, %s49
      %p61 = scmp.eq.s32.totalorder %s18, 1
      %p62 = por %p60, %p61
      %p64 = scmp.ne.s32.totalorder %s49, %s63
      %p65 = scmp.eq.s32.totalorder %s18, 0
      %p66 = por %p64, %p65
      %s68 = sadd.s32 %s67, 1
      %p71 = scmp.eq.s32.totalorder %s12, 1
      %p72 = scmp.ne.s32.totalorder %s67, %s69
      %p73 = scmp.eq.s32.totalorder %s12, 0
      %p74 = por %p72, %p73
      %p75 = scmp.ne.s32.totalorder %s67, %s69
      %p76 = scmp.eq.s32.totalorder %s17, 1
      %p77 = por %p75, %p76
      %p78 = scmp.ne.s32.totalorder %s69, %s70
      %p79 = scmp.eq.s32.totalorder %s17, 0
      %p80 = por %p78, %p79
      %p81 = scmp.ne.s32.totalorder %s69, %s70
      %p82 = scmp.eq.s32.totalorder %s18, 1
      %p83 = por %p81, %p82
      %p85 = scmp.ne.s32.totalorder %s70, %s84
      %p86 = scmp.eq.s32.totalorder %s18, 0
      %p87 = por %p85, %p86
      %s89 = sadd.s32 %s88, 1
      %p92 = scmp.eq.s32.totalorder %s12, 1
      %p93 = scmp.ne.s32.totalorder %s88, %s90
      %p94 = scmp.eq.s32.totalorder %s12, 0
      %p95 = por %p93, %p94
      %p96 = scmp.ne.s32.totalorder %s88, %s90
      %p97 = scmp.eq.s32.totalorder %s17, 1
      %p98 = por %p96, %p97
      %p99 = scmp.ne.s32.totalorder %s90, %s91
      %p100 = scmp.eq.s32.totalorder %s17, 0
      %p101 = por %p99, %p100
      %p102 = scmp.ne.s32.totalorder %s90, %s91
      %p103 = scmp.eq.s32.totalorder %s18, 1
      %p104 = por %p102, %p103
      %p106 = scmp.ne.s32.totalorder %s91, %s105
      %p107 = scmp.eq.s32.totalorder %s18, 0
      %p108 = por %p106, %p107
      %s109 = ssub.s32 %s12, %s19
      %p110 = scmp.eq.s32.totalorder %s109, 0
      %s112 = sadd.s32 %s111, 1
      %s113 = scalar_select %p110, %s111, %s112
      %p116 = pneg %p110
      %p117 = scmp.eq.s32.totalorder %s12, 1
      %p118 = por %p116, %p117
      %p119 = scmp.ne.s32.totalorder %s111, %s114
      %p120 = scmp.eq.s32.totalorder %s12, 0
      %p121 = por %p119, %p120
      %p122 = scmp.ne.s32.totalorder %s111, %s114
      %p123 = scmp.eq.s32.totalorder %s17, 1
      %p124 = por %p122, %p123
      %p125 = scmp.ne.s32.totalorder %s114, %s115
      %p126 = scmp.eq.s32.totalorder %s17, 0
      %p127 = por %p125, %p126
      %p128 = scmp.ne.s32.totalorder %s114, %s115
      %p129 = scmp.eq.s32.totalorder %s18, 1
      %p130 = por %p128, %p129
      %p132 = scmp.ne.s32.totalorder %s115, %s131
      %p133 = scmp.eq.s32.totalorder %s18, 0
      %p134 = por %p132, %p133
      %p135 = scmp.le.s32.totalorder 1, %s12
      %p136 = scmp.lt.s32.totalorder %s12, 3
      %p137 = pnand %p135, %p136
      %p138 = pneg %p137
      // Predicated region
      $region9: #{_lambda_.5} parent=5 // pred_check
        _
      $region10: #{_lambda_.5} parent=5 // pred_check_branch
        %140 = sbr.rel (%p137) target = $region12
      $region11: #{_lambda_.5} parent=5 // pred_region
        %s141 = ssub.s32 %s12, 1
        // Predicated region
        $region13: #{_lambda_.5} parent=11 // pred_check
          %p142 = pneg %p59
        $region14: #{_lambda_.5} parent=11 // pred_check_branch
          %144 = sbr.rel (%p142) target = $region16
        $region15: #{_lambda_.5} parent=11 // pred_region
          %s146 = ssub.s32 576, 576
          %147 = vsyncadd [#allocation3], %s146
          %s148 = sshll.u32 [#allocation2], 4
          %s149 = int_to_ptr.vmem [resolvable:$true] %s148
          %154 = dma.hbm_to_vmem [thread:$0]  %s1, 576, %s149, [#allocation3], 64, 64, 4
        $region16: #{_lambda_.5} parent=11 // pred_fallthru
          _
        // Predicated region
        $region17: #{_lambda_.5} parent=11 // pred_check
          %p155 = pneg %p80
        $region18: #{_lambda_.5} parent=11 // pred_check_branch
          %157 = sbr.rel (%p155) target = $region20
        $region19: #{_lambda_.5} parent=11 // pred_region
          %s159 = ssub.s32 128, 128
          %160 = vsyncadd [#allocation5], %s159
          %s162 = sshll.u32 [#allocation4], 4
          %s163 = int_to_ptr.vmem [resolvable:$true] %s162
          %165 = dma.hbm_to_vmem [thread:$0]  %s2, 128, %s163, [#allocation5]
        $region20: #{_lambda_.5} parent=11 // pred_fallthru
          _
        // Predicated region
        $region21: #{_lambda_.5} parent=11 // pred_check
          %p166 = pneg %p101
        $region22: #{_lambda_.5} parent=11 // pred_check_branch
          %168 = sbr.rel (%p166) target = $region24
        $region23: #{_lambda_.5} parent=11 // pred_region
          %s170 = ssub.s32 48, 48
          %171 = vsyncadd [#allocation5], %s170
          %s173 = sshll.u32 [#allocation6], 4
          %s174 = int_to_ptr.vmem [resolvable:$true] %s173
          %176 = dma.hbm_to_vmem [thread:$0]  %s3, 48, %s174, [#allocation5]
        $region24: #{_lambda_.5} parent=11 // pred_fallthru
          _
      $region12: #{_lambda_.5} parent=5 // pred_fallthru
        _
      %p177 = scmp.lt.s32.totalorder %s12, 2
      // Predicated region
      $region25: #{_lambda_.5} parent=5 // pred_check
        %p178 = pneg %p177
      $region26: #{_lambda_.5} parent=5 // pred_check_branch
        %180 = sbr.rel (%p178) target = $region28
      $region27: #{_lambda_.5} parent=5 // pred_region
        // Predicated region
        $region29: #{_lambda_.5} parent=27 // pred_check
          %p181 = pneg %p32
        $region30: #{_lambda_.5} parent=27 // pred_check_branch
          %183 = sbr.rel (%p181) target = $region32
        $region31: #{_lambda_.5} parent=27 // pred_region
          %p184 = scmp.lt.s32.totalorder %s12, 1
          %s185 = scalar_select %p184, %s12, 1
          %s186 = smul.addr %s185, 3
          %s187 = smul.addr %s186, 4
          %s188 = scalar_lea.vmem %s0, %s187
        $region32: #{_lambda_.5} parent=27 // pred_fallthru
          _
      $region28: #{_lambda_.5} parent=5 // pred_fallthru
        _
      %p189 = scmp.le.s32.totalorder 1, %s12
      %p190 = scmp.lt.s32.totalorder %s12, 3
      %p191 = pnand %p189, %p190
      %p192 = pneg %p191
      // Predicated region
      $region33: #{_lambda_.5} parent=5 // pred_check
        _
      $region34: #{_lambda_.5} parent=5 // pred_check_branch
        %194 = sbr.rel (%p191) target = $region36
      $region35: #{_lambda_.5} parent=5 // pred_region
        %s195 = ssub.s32 %s12, 1
        // Predicated region
        $region37: #{_lambda_.5} parent=35 // pred_check
          %p196 = pneg %p59
        $region38: #{_lambda_.5} parent=35 // pred_check_branch
          %198 = sbr.rel (%p196) target = $region40
        $region39: #{_lambda_.5} parent=35 // pred_region
          %199 = dma.done [#allocation3], 576
        $region40: #{_lambda_.5} parent=35 // pred_fallthru
          _
        // Predicated region
        $region41: #{_lambda_.5} parent=35 // pred_check
          %p200 = pneg %p80
        $region42: #{_lambda_.5} parent=35 // pred_check_branch
          %202 = sbr.rel (%p200) target = $region44
        $region43: #{_lambda_.5} parent=35 // pred_region
          %203 = dma.done [#allocation5], 128
        $region44: #{_lambda_.5} parent=35 // pred_fallthru
          _
        // Predicated region
        $region45: #{_lambda_.5} parent=35 // pred_check
          %p204 = pneg %p101
        $region46: #{_lambda_.5} parent=35 // pred_check_branch
          %206 = sbr.rel (%p204) target = $region48
        $region47: #{_lambda_.5} parent=35 // pred_region
          %207 = dma.done [#allocation5], 48
        $region48: #{_lambda_.5} parent=35 // pred_fallthru
          _
        %p208 = scmp.lt.s32.totalorder %s17, 1
        %s209 = scalar_select %p208, %s17, 1
        %s210 = smul.addr %s209, 3
        %s211 = smul.addr %s210, 4
        %s212 = scalar_lea.vmem %s0, %s211
        %p213 = pneg %p38
        %p214 = pneg %p35
        %p215 = pneg %p59
        %p216 = pneg %p56
        %p217 = pneg %p80
        %p218 = pneg %p77
        %p219 = pneg %p101
        %p220 = pneg %p98
        %p221 = pneg %p127
        %p222 = pneg %p124
        %p223 = scmp.lt.s32.totalorder %s17, 1
        %s224 = scalar_select %p223, %s17, 1
        %s225 = smul.addr %s224, 3
        %s226 = smul.addr %s225, 4
        %s227 = scalar_lea.vmem %s4, %s226
        %p228 = scmp.lt.s32.totalorder %s17, 1
        %s229 = scalar_select %p228, %s17, 1
        %s230 = smul.addr %s229, 3
        %s231 = smul.addr %s230, 4
        %s232 = scalar_lea.vmem %s0, %s231
        %p233 = scmp.lt.s32.totalorder %s17, 1
        %s234 = scalar_select %p233, %s17, 1
        %s235 = smul.addr %s234, 3
        %s236 = smul.addr %s235, 4
        %s237 = scalar_lea.vmem %s4, %s236
        %v239 = vld [vmem:[%s232] sm:$0xff]
        %v240 = vld [vmem:[%s232 + $0x8] sm:$0xf]
        %v241 = vld [vmem:[#allocation2] sm:$0xf]
        %s242 = scalar_lea.vmem [#allocation2], 4
        %v243 = vld [vmem:[%s242] sm:$0xf]
        %v246 = vunpack.c.l.b16 %v239
        %v247 = vunpack.c.h.b16 %v239
        %v248 = vunpack.c.l.b16 %v240
        %v249 = vpack.c.b16 %v246, %v246
        %v250 = vpack.c.b16 %v247, %v247
        %v251 = vpack.c.b16 %v248, %v248
        %252 = vrot.lane.b32.xlu0 %v249, 127
        %v253 = vpop.permute.xlu0 %252
        %254 = vrot.lane.b32.xlu0 %v250, 127
        %v255 = vpop.permute.xlu0 %254
        %256 = vrot.lane.b32.xlu0 %v251, 127
        %v257 = vpop.permute.xlu0 %256
        %vm258 = vcmask 1039360
        %v259 = vsel %vm258, %v253, %v255
        %v260 = vsel %vm258, %v255, %v257
        %vm261 = vcmask 64512
        %v263 = vsel %vm261, %v243, 0
        %vm265 = vcmask 1043456
        %v267 = vsel %vm265, %v259, 0
        %v270 = vsel %vm265, %v260, 0
        %v273 = vsel %vm265, %v257, 0
        %275 = vmatprep.subr.bf16.mxu0 0
        %276 = vmatpush1.bf16.msra.mxu0 0
        %277 = vmatprep.subr.bf16.mxu0 0
        %278 = vmatpush1.bf16.msra.mxu0 0
        %279 = vmatprep.subr.bf16.mxu0 0
        %280 = vmatpush1.bf16.msra.mxu0 0
        %281 = vmatprep.subr.bf16.mxu0 0
        %282 = vmatpush1.bf16.msra.mxu0 0
        %283 = vmatprep.subr.bf16.mxu0 0
        %284 = vmatpush1.bf16.msra.mxu0 0
        %285 = vmatprep.subr.bf16.mxu0 0
        %286 = vmatpush1.bf16.msra.mxu0 0
        %287 = vmatprep.subr.bf16.mxu0 0
        %288 = vmatpush1.bf16.msra.mxu0 0
        %289 = vmatprep.subr.bf16.mxu0 %v270
        %290 = vmatpush1.bf16.msra.mxu0 %v267
        %291 = vmatprep.subr.bf16.mxu0 0
        %292 = vmatpush2.bf16.msra.mxu0 0
        %293 = vmatprep.subr.bf16.mxu0 0
        %294 = vmatpush2.bf16.msra.mxu0 0
        %295 = vmatprep.subr.bf16.mxu0 0
        %296 = vmatpush2.bf16.msra.mxu0 0
        %297 = vmatprep.subr.bf16.mxu0 0
        %298 = vmatpush2.bf16.msra.mxu0 0
        %299 = vmatprep.subr.bf16.mxu0 0
        %300 = vmatpush2.bf16.msra.mxu0 0
        %301 = vmatprep.subr.bf16.mxu0 0
        %302 = vmatpush2.bf16.msra.mxu0 0
        %303 = vmatprep.subr.bf16.mxu0 0
        %304 = vmatpush2.bf16.msra.mxu0 0
        %305 = vmatprep.subr.bf16.mxu0 0
        %306 = vmatpush2.bf16.msra.mxu0 0
        %307 = vmatprep.mubr.bf16.mxu0 0
        %308 = vmatmul.mubr.bf16.gmra.mxu0 %v263
        %v309 = vpop.f32.mrf.mxu0
        %v310 = vadd.f32 0.0, %v309
        %v311 = vpop.f32.mrf.mxu0
        %v312 = vadd.f32 0.0, %v311
        %v313 = vpop.f32.mrf.mxu0
        %v314 = vpop.f32.mrf.mxu0
        %315 = vdwg.mxu0
        %316 = vmatprep.subr.bf16.mxu0 0
        %317 = vmatpush1.bf16.msra.mxu0 0
        %318 = vmatprep.subr.bf16.mxu0 0
        %319 = vmatpush1.bf16.msra.mxu0 0
        %320 = vmatprep.subr.bf16.mxu0 0
        %321 = vmatpush1.bf16.msra.mxu0 0
        %322 = vmatprep.subr.bf16.mxu0 0
        %323 = vmatpush1.bf16.msra.mxu0 0
        %324 = vmatprep.subr.bf16.mxu0 0
        %325 = vmatpush1.bf16.msra.mxu0 0
        %326 = vmatprep.subr.bf16.mxu0 0
        %327 = vmatpush1.bf16.msra.mxu0 0
        %328 = vmatprep.subr.bf16.mxu0 0
        %329 = vmatpush1.bf16.msra.mxu0 0
        %330 = vmatprep.subr.bf16.mxu0 0
        %331 = vmatpush1.bf16.msra.mxu0 %v273
        %332 = vmatprep.subr.bf16.mxu0 0
        %333 = vmatpush2.bf16.msra.mxu0 0
        %334 = vmatprep.subr.bf16.mxu0 0
        %335 = vmatpush2.bf16.msra.mxu0 0
        %336 = vmatprep.subr.bf16.mxu0 0
        %337 = vmatpush2.bf16.msra.mxu0 0
        %338 = vmatprep.subr.bf16.mxu0 0
        %339 = vmatpush2.bf16.msra.mxu0 0
        %340 = vmatprep.subr.bf16.mxu0 0
        %341 = vmatpush2.bf16.msra.mxu0 0
        %342 = vmatprep.subr.bf16.mxu0 0
        %343 = vmatpush2.bf16.msra.mxu0 0
        %344 = vmatprep.subr.bf16.mxu0 0
        %345 = vmatpush2.bf16.msra.mxu0 0
        %346 = vmatprep.subr.bf16.mxu0 0
        %347 = vmatpush2.bf16.msra.mxu0 0
        %348 = vmatprep.mubr.bf16.mxu0 0
        %349 = vmatmul.mubr.bf16.gmra.mxu0 %v263
        %v350 = vpop.f32.mrf.mxu0
        %v351 = vadd.f32 0.0, %v350
        %v352 = vpop.f32.mrf.mxu0
        %v353 = vpop.f32.mrf.mxu0
        %v354 = vpop.f32.mrf.mxu0
        %355 = vdwg.mxu0
        %v357 = vsel %vm261, %v241, 0
        %v360 = vsel %vm265, %v249, 0
        %v363 = vsel %vm265, %v250, 0
        %v366 = vsel %vm265, %v251, 0
        %368 = vmatprep.subr.bf16.mxu0 0
        %369 = vmatpush1.bf16.msra.mxu0 0
        %370 = vmatprep.subr.bf16.mxu0 0
        %371 = vmatpush1.bf16.msra.mxu0 0
        %372 = vmatprep.subr.bf16.mxu0 0
        %373 = vmatpush1.bf16.msra.mxu0 0
        %374 = vmatprep.subr.bf16.mxu0 0
        %375 = vmatpush1.bf16.msra.mxu0 0
        %376 = vmatprep.subr.bf16.mxu0 0
        %377 = vmatpush1.bf16.msra.mxu0 0
        %378 = vmatprep.subr.bf16.mxu0 0
        %379 = vmatpush1.bf16.msra.mxu0 0
        %380 = vmatprep.subr.bf16.mxu0 0
        %381 = vmatpush1.bf16.msra.mxu0 0
        %382 = vmatprep.subr.bf16.mxu0 %v363
        %383 = vmatpush1.bf16.msra.mxu0 %v360
        %384 = vmatprep.subr.bf16.mxu0 0
        %385 = vmatpush2.bf16.msra.mxu0 0
        %386 = vmatprep.subr.bf16.mxu0 0
        %387 = vmatpush2.bf16.msra.mxu0 0
        %388 = vmatprep.subr.bf16.mxu0 0
        %389 = vmatpush2.bf16.msra.mxu0 0
        %390 = vmatprep.subr.bf16.mxu0 0
        %391 = vmatpush2.bf16.msra.mxu0 0
        %392 = vmatprep.subr.bf16.mxu0 0
        %393 = vmatpush2.bf16.msra.mxu0 0
        %394 = vmatprep.subr.bf16.mxu0 0
        %395 = vmatpush2.bf16.msra.mxu0 0
        %396 = vmatprep.subr.bf16.mxu0 0
        %397 = vmatpush2.bf16.msra.mxu0 0
        %398 = vmatprep.subr.bf16.mxu0 0
        %399 = vmatpush2.bf16.msra.mxu0 0
        %400 = vmatprep.mubr.bf16.mxu0 0
        %401 = vmatmul.mubr.bf16.gmra.mxu0 %v357
        %v402 = vpop.f32.mrf.mxu0
        %v403 = vadd.f32 %v310, %v402
        %v404 = vpop.f32.mrf.mxu0
        %v405 = vadd.f32 %v312, %v404
        %v406 = vpop.f32.mrf.mxu0
        %v407 = vpop.f32.mrf.mxu0
        %408 = vdwg.mxu0
        %409 = vmatprep.subr.bf16.mxu0 0
        %410 = vmatpush1.bf16.msra.mxu0 0
        %411 = vmatprep.subr.bf16.mxu0 0
        %412 = vmatpush1.bf16.msra.mxu0 0
        %413 = vmatprep.subr.bf16.mxu0 0
        %414 = vmatpush1.bf16.msra.mxu0 0
        %415 = vmatprep.subr.bf16.mxu0 0
        %416 = vmatpush1.bf16.msra.mxu0 0
        %417 = vmatprep.subr.bf16.mxu0 0
        %418 = vmatpush1.bf16.msra.mxu0 0
        %419 = vmatprep.subr.bf16.mxu0 0
        %420 = vmatpush1.bf16.msra.mxu0 0
        %421 = vmatprep.subr.bf16.mxu0 0
        %422 = vmatpush1.bf16.msra.mxu0 0
        %423 = vmatprep.subr.bf16.mxu0 0
        %424 = vmatpush1.bf16.msra.mxu0 %v366
        %425 = vmatprep.subr.bf16.mxu0 0
        %426 = vmatpush2.bf16.msra.mxu0 0
        %427 = vmatprep.subr.bf16.mxu0 0
        %428 = vmatpush2.bf16.msra.mxu0 0
        %429 = vmatprep.subr.bf16.mxu0 0
        %430 = vmatpush2.bf16.msra.mxu0 0
        %431 = vmatprep.subr.bf16.mxu0 0
        %432 = vmatpush2.bf16.msra.mxu0 0
        %433 = vmatprep.subr.bf16.mxu0 0
        %434 = vmatpush2.bf16.msra.mxu0 0
        %435 = vmatprep.subr.bf16.mxu0 0
        %436 = vmatpush2.bf16.msra.mxu0 0
        %437 = vmatprep.subr.bf16.mxu0 0
        %438 = vmatpush2.bf16.msra.mxu0 0
        %439 = vmatprep.subr.bf16.mxu0 0
        %440 = vmatpush2.bf16.msra.mxu0 0
        %441 = vmatprep.mubr.bf16.mxu0 0
        %442 = vmatmul.mubr.bf16.gmra.mxu0 %v357
        %v443 = vpop.f32.mrf.mxu0
        %v444 = vadd.f32 %v351, %v443
        %v445 = vpop.f32.mrf.mxu0
        %v446 = vpop.f32.mrf.mxu0
        %v447 = vpop.f32.mrf.mxu0
        %448 = vdwg.mxu0
        %s449 = scalar_lea.vmem [#allocation2], 8
        %v450 = vld [vmem:[%s449] sm:$0xf]
        %451 = vrot.lane.b32.xlu0 %v249, 126
        %v452 = vpop.permute.xlu0 %451
        %453 = vrot.lane.b32.xlu0 %v250, 126
        %v454 = vpop.permute.xlu0 %453
        %455 = vrot.lane.b32.xlu0 %v251, 126
        %v456 = vpop.permute.xlu0 %455
        %vm457 = vcmask 1031168
        %v458 = vsel %vm457, %v452, %v454
        %v459 = vsel %vm457, %v454, %v456
        %v461 = vsel %vm261, %v450, 0
        %v464 = vsel %vm265, %v458, 0
        %v467 = vsel %vm265, %v459, 0
        %v470 = vsel %vm265, %v456, 0
        %472 = vmatprep.subr.bf16.mxu0 0
        %473 = vmatpush1.bf16.msra.mxu0 0
        %474 = vmatprep.subr.bf16.mxu0 0
        %475 = vmatpush1.bf16.msra.mxu0 0
        %476 = vmatprep.subr.bf16.mxu0 0
        %477 = vmatpush1.bf16.msra.mxu0 0
        %478 = vmatprep.subr.bf16.mxu0 0
        %479 = vmatpush1.bf16.msra.mxu0 0
        %480 = vmatprep.subr.bf16.mxu0 0
        %481 = vmatpush1.bf16.msra.mxu0 0
        %482 = vmatprep.subr.bf16.mxu0 0
        %483 = vmatpush1.bf16.msra.mxu0 0
        %484 = vmatprep.subr.bf16.mxu0 0
        %485 = vmatpush1.bf16.msra.mxu0 0
        %486 = vmatprep.subr.bf16.mxu0 %v467
        %487 = vmatpush1.bf16.msra.mxu0 %v464
        %488 = vmatprep.subr.bf16.mxu0 0
        %489 = vmatpush2.bf16.msra.mxu0 0
        %490 = vmatprep.subr.bf16.mxu0 0
        %491 = vmatpush2.bf16.msra.mxu0 0
        %492 = vmatprep.subr.bf16.mxu0 0
        %493 = vmatpush2.bf16.msra.mxu0 0
        %494 = vmatprep.subr.bf16.mxu0 0
        %495 = vmatpush2.bf16.msra.mxu0 0
        %496 = vmatprep.subr.bf16.mxu0 0
        %497 = vmatpush2.bf16.msra.mxu0 0
        %498 = vmatprep.subr.bf16.mxu0 0
        %499 = vmatpush2.bf16.msra.mxu0 0
        %500 = vmatprep.subr.bf16.mxu0 0
        %501 = vmatpush2.bf16.msra.mxu0 0
        %502 = vmatprep.subr.bf16.mxu0 0
        %503 = vmatpush2.bf16.msra.mxu0 0
        %504 = vmatprep.mubr.bf16.mxu0 0
        %505 = vmatmul.mubr.bf16.gmra.mxu0 %v461
        %v506 = vpop.f32.mrf.mxu0
        %v507 = vadd.f32 0.0, %v506
        %v508 = vpop.f32.mrf.mxu0
        %v509 = vadd.f32 0.0, %v508
        %v510 = vpop.f32.mrf.mxu0
        %v511 = vpop.f32.mrf.mxu0
        %512 = vdwg.mxu0
        %513 = vmatprep.subr.bf16.mxu0 0
        %514 = vmatpush1.bf16.msra.mxu0 0
        %515 = vmatprep.subr.bf16.mxu0 0
        %516 = vmatpush1.bf16.msra.mxu0 0
        %517 = vmatprep.subr.bf16.mxu0 0
        %518 = vmatpush1.bf16.msra.mxu0 0
        %519 = vmatprep.subr.bf16.mxu0 0
        %520 = vmatpush1.bf16.msra.mxu0 0
        %521 = vmatprep.subr.bf16.mxu0 0
        %522 = vmatpush1.bf16.msra.mxu0 0
        %523 = vmatprep.subr.bf16.mxu0 0
        %524 = vmatpush1.bf16.msra.mxu0 0
        %525 = vmatprep.subr.bf16.mxu0 0
        %526 = vmatpush1.bf16.msra.mxu0 0
        %527 = vmatprep.subr.bf16.mxu0 0
        %528 = vmatpush1.bf16.msra.mxu0 %v470
        %529 = vmatprep.subr.bf16.mxu0 0
        %530 = vmatpush2.bf16.msra.mxu0 0
        %531 = vmatprep.subr.bf16.mxu0 0
        %532 = vmatpush2.bf16.msra.mxu0 0
        %533 = vmatprep.subr.bf16.mxu0 0
        %534 = vmatpush2.bf16.msra.mxu0 0
        %535 = vmatprep.subr.bf16.mxu0 0
        %536 = vmatpush2.bf16.msra.mxu0 0
        %537 = vmatprep.subr.bf16.mxu0 0
        %538 = vmatpush2.bf16.msra.mxu0 0
        %539 = vmatprep.subr.bf16.mxu0 0
        %540 = vmatpush2.bf16.msra.mxu0 0
        %541 = vmatprep.subr.bf16.mxu0 0
        %542 = vmatpush2.bf16.msra.mxu0 0
        %543 = vmatprep.subr.bf16.mxu0 0
        %544 = vmatpush2.bf16.msra.mxu0 0
        %545 = vmatprep.mubr.bf16.mxu0 0
        %546 = vmatmul.mubr.bf16.gmra.mxu0 %v461
        %v547 = vpop.f32.mrf.mxu0
        %v548 = vadd.f32 0.0, %v547
        %v549 = vpop.f32.mrf.mxu0
        %v550 = vpop.f32.mrf.mxu0
        %v551 = vpop.f32.mrf.mxu0
        %552 = vdwg.mxu0
        %v553 = vadd.f32 %v403, %v507
        %v554 = vadd.f32 %v405, %v509
        %v555 = vadd.f32 %v444, %v548
        %s556 = scalar_lea.vmem [#allocation2], 12
        %v557 = vld [vmem:[%s556] sm:$0xf]
        %558 = vrot.lane.b32.xlu0 %v249, 110
        %v559 = vpop.permute.xlu0 %558
        %560 = vrot.lane.b32.xlu0 %v250, 110
        %v561 = vpop.permute.xlu0 %560
        %562 = vrot.lane.b32.xlu0 %v251, 110
        %v563 = vpop.permute.xlu0 %562
        %vm564 = vcmask 900096
        %v565 = vsel %vm564, %v559, %v561
        %v566 = vsel %vm564, %v561, %v563
        %v568 = vsel %vm261, %v557, 0
        %v571 = vsel %vm265, %v565, 0
        %v574 = vsel %vm265, %v566, 0
        %v577 = vsel %vm265, %v563, 0
        %579 = vmatprep.subr.bf16.mxu0 0
        %580 = vmatpush1.bf16.msra.mxu0 0
        %581 = vmatprep.subr.bf16.mxu0 0
        %582 = vmatpush1.bf16.msra.mxu0 0
        %583 = vmatprep.subr.bf16.mxu0 0
        %584 = vmatpush1.bf16.msra.mxu0 0
        %585 = vmatprep.subr.bf16.mxu0 0
        %586 = vmatpush1.bf16.msra.mxu0 0
        %587 = vmatprep.subr.bf16.mxu0 0
        %588 = vmatpush1.bf16.msra.mxu0 0
        %589 = vmatprep.subr.bf16.mxu0 0
        %590 = vmatpush1.bf16.msra.mxu0 0
        %591 = vmatprep.subr.bf16.mxu0 0
        %592 = vmatpush1.bf16.msra.mxu0 0
        %593 = vmatprep.subr.bf16.mxu0 %v574
        %594 = vmatpush1.bf16.msra.mxu0 %v571
        %595 = vmatprep.subr.bf16.mxu0 0
        %596 = vmatpush2.bf16.msra.mxu0 0
        %597 = vmatprep.subr.bf16.mxu0 0
        %598 = vmatpush2.bf16.msra.mxu0 0
        %599 = vmatprep.subr.bf16.mxu0 0
        %600 = vmatpush2.bf16.msra.mxu0 0
        %601 = vmatprep.subr.bf16.mxu0 0
        %602 = vmatpush2.bf16.msra.mxu0 0
        %603 = vmatprep.subr.bf16.mxu0 0
        %604 = vmatpush2.bf16.msra.mxu0 0
        %605 = vmatprep.subr.bf16.mxu0 0
        %606 = vmatpush2.bf16.msra.mxu0 0
        %607 = vmatprep.subr.bf16.mxu0 0
        %608 = vmatpush2.bf16.msra.mxu0 0
        %609 = vmatprep.subr.bf16.mxu0 0
        %610 = vmatpush2.bf16.msra.mxu0 0
        %611 = vmatprep.mubr.bf16.mxu0 0
        %612 = vmatmul.mubr.bf16.gmra.mxu0 %v568
        %v613 = vpop.f32.mrf.mxu0
        %v614 = vadd.f32 0.0, %v613
        %v615 = vpop.f32.mrf.mxu0
        %v616 = vadd.f32 0.0, %v615
        %v617 = vpop.f32.mrf.mxu0
        %v618 = vpop.f32.mrf.mxu0
        %619 = vdwg.mxu0
        %620 = vmatprep.subr.bf16.mxu0 0
        %621 = vmatpush1.bf16.msra.mxu0 0
        %622 = vmatprep.subr.bf16.mxu0 0
        %623 = vmatpush1.bf16.msra.mxu0 0
        %624 = vmatprep.subr.bf16.mxu0 0
        %625 = vmatpush1.bf16.msra.mxu0 0
        %626 = vmatprep.subr.bf16.mxu0 0
        %627 = vmatpush1.bf16.msra.mxu0 0
        %628 = vmatprep.subr.bf16.mxu0 0
        %629 = vmatpush1.bf16.msra.mxu0 0
        %630 = vmatprep.subr.bf16.mxu0 0
        %631 = vmatpush1.bf16.msra.mxu0 0
        %632 = vmatprep.subr.bf16.mxu0 0
        %633 = vmatpush1.bf16.msra.mxu0 0
        %634 = vmatprep.subr.bf16.mxu0 0
        %635 = vmatpush1.bf16.msra.mxu0 %v577
        %636 = vmatprep.subr.bf16.mxu0 0
        %637 = vmatpush2.bf16.msra.mxu0 0
        %638 = vmatprep.subr.bf16.mxu0 0
        %639 = vmatpush2.bf16.msra.mxu0 0
        %640 = vmatprep.subr.bf16.mxu0 0
        %641 = vmatpush2.bf16.msra.mxu0 0
        %642 = vmatprep.subr.bf16.mxu0 0
        %643 = vmatpush2.bf16.msra.mxu0 0
        %644 = vmatprep.subr.bf16.mxu0 0
        %645 = vmatpush2.bf16.msra.mxu0 0
        %646 = vmatprep.subr.bf16.mxu0 0
        %647 = vmatpush2.bf16.msra.mxu0 0
        %648 = vmatprep.subr.bf16.mxu0 0
        %649 = vmatpush2.bf16.msra.mxu0 0
        %650 = vmatprep.subr.bf16.mxu0 0
        %651 = vmatpush2.bf16.msra.mxu0 0
        %652 = vmatprep.mubr.bf16.mxu0 0
        %653 = vmatmul.mubr.bf16.gmra.mxu0 %v568
        %v654 = vpop.f32.mrf.mxu0
        %v655 = vadd.f32 0.0, %v654
        %v656 = vpop.f32.mrf.mxu0
        %v657 = vpop.f32.mrf.mxu0
        %v658 = vpop.f32.mrf.mxu0
        %659 = vdwg.mxu0
        %v660 = vadd.f32 %v553, %v614
        %v661 = vadd.f32 %v554, %v616
        %v662 = vadd.f32 %v555, %v655
        %s663 = scalar_lea.vmem [#allocation2], 16
        %v664 = vld [vmem:[%s663] sm:$0xf]
        %665 = vrot.lane.b32.xlu0 %v249, 109
        %v666 = vpop.permute.xlu0 %665
        %667 = vrot.lane.b32.xlu0 %v250, 109
        %v668 = vpop.permute.xlu0 %667
        %669 = vrot.lane.b32.xlu0 %v251, 109
        %v670 = vpop.permute.xlu0 %669
        %vm671 = vcmask 891904
        %v672 = vsel %vm671, %v666, %v668
        %v673 = vsel %vm671, %v668, %v670
        %v675 = vsel %vm261, %v664, 0
        %v678 = vsel %vm265, %v672, 0
        %v681 = vsel %vm265, %v673, 0
        %v684 = vsel %vm265, %v670, 0
        %686 = vmatprep.subr.bf16.mxu0 0
        %687 = vmatpush1.bf16.msra.mxu0 0
        %688 = vmatprep.subr.bf16.mxu0 0
        %689 = vmatpush1.bf16.msra.mxu0 0
        %690 = vmatprep.subr.bf16.mxu0 0
        %691 = vmatpush1.bf16.msra.mxu0 0
        %692 = vmatprep.subr.bf16.mxu0 0
        %693 = vmatpush1.bf16.msra.mxu0 0
        %694 = vmatprep.subr.bf16.mxu0 0
        %695 = vmatpush1.bf16.msra.mxu0 0
        %696 = vmatprep.subr.bf16.mxu0 0
        %697 = vmatpush1.bf16.msra.mxu0 0
        %698 = vmatprep.subr.bf16.mxu0 0
        %699 = vmatpush1.bf16.msra.mxu0 0
        %700 = vmatprep.subr.bf16.mxu0 %v681
        %701 = vmatpush1.bf16.msra.mxu0 %v678
        %702 = vmatprep.subr.bf16.mxu0 0
        %703 = vmatpush2.bf16.msra.mxu0 0
        %704 = vmatprep.subr.bf16.mxu0 0
        %705 = vmatpush2.bf16.msra.mxu0 0
        %706 = vmatprep.subr.bf16.mxu0 0
        %707 = vmatpush2.bf16.msra.mxu0 0
        %708 = vmatprep.subr.bf16.mxu0 0
        %709 = vmatpush2.bf16.msra.mxu0 0
        %710 = vmatprep.subr.bf16.mxu0 0
        %711 = vmatpush2.bf16.msra.mxu0 0
        %712 = vmatprep.subr.bf16.mxu0 0
        %713 = vmatpush2.bf16.msra.mxu0 0
        %714 = vmatprep.subr.bf16.mxu0 0
        %715 = vmatpush2.bf16.msra.mxu0 0
        %716 = vmatprep.subr.bf16.mxu0 0
        %717 = vmatpush2.bf16.msra.mxu0 0
        %718 = vmatprep.mubr.bf16.mxu0 0
        %719 = vmatmul.mubr.bf16.gmra.mxu0 %v675
        %v720 = vpop.f32.mrf.mxu0
        %v721 = vadd.f32 0.0, %v720
        %v722 = vpop.f32.mrf.mxu0
        %v723 = vadd.f32 0.0, %v722
        %v724 = vpop.f32.mrf.mxu0
        %v725 = vpop.f32.mrf.mxu0
        %726 = vdwg.mxu0
        %727 = vmatprep.subr.bf16.mxu0 0
        %728 = vmatpush1.bf16.msra.mxu0 0
        %729 = vmatprep.subr.bf16.mxu0 0
        %730 = vmatpush1.bf16.msra.mxu0 0
        %731 = vmatprep.subr.bf16.mxu0 0
        %732 = vmatpush1.bf16.msra.mxu0 0
        %733 = vmatprep.subr.bf16.mxu0 0
        %734 = vmatpush1.bf16.msra.mxu0 0
        %735 = vmatprep.subr.bf16.mxu0 0
        %736 = vmatpush1.bf16.msra.mxu0 0
        %737 = vmatprep.subr.bf16.mxu0 0
        %738 = vmatpush1.bf16.msra.mxu0 0
        %739 = vmatprep.subr.bf16.mxu0 0
        %740 = vmatpush1.bf16.msra.mxu0 0
        %741 = vmatprep.subr.bf16.mxu0 0
        %742 = vmatpush1.bf16.msra.mxu0 %v684
        %743 = vmatprep.subr.bf16.mxu0 0
        %744 = vmatpush2.bf16.msra.mxu0 0
        %745 = vmatprep.subr.bf16.mxu0 0
        %746 = vmatpush2.bf16.msra.mxu0 0
        %747 = vmatprep.subr.bf16.mxu0 0
        %748 = vmatpush2.bf16.msra.mxu0 0
        %749 = vmatprep.subr.bf16.mxu0 0
        %750 = vmatpush2.bf16.msra.mxu0 0
        %751 = vmatprep.subr.bf16.mxu0 0
        %752 = vmatpush2.bf16.msra.mxu0 0
        %753 = vmatprep.subr.bf16.mxu0 0
        %754 = vmatpush2.bf16.msra.mxu0 0
        %755 = vmatprep.subr.bf16.mxu0 0
        %756 = vmatpush2.bf16.msra.mxu0 0
        %757 = vmatprep.subr.bf16.mxu0 0
        %758 = vmatpush2.bf16.msra.mxu0 0
        %759 = vmatprep.mubr.bf16.mxu0 0
        %760 = vmatmul.mubr.bf16.gmra.mxu0 %v675
        %v761 = vpop.f32.mrf.mxu0
        %v762 = vadd.f32 0.0, %v761
        %v763 = vpop.f32.mrf.mxu0
        %v764 = vpop.f32.mrf.mxu0
        %v765 = vpop.f32.mrf.mxu0
        %766 = vdwg.mxu0
        %v767 = vadd.f32 %v660, %v721
        %v768 = vadd.f32 %v661, %v723
        %v769 = vadd.f32 %v662, %v762
        %s770 = scalar_lea.vmem [#allocation2], 20
        %v771 = vld [vmem:[%s770] sm:$0xf]
        %772 = vrot.lane.b32.xlu0 %v249, 108
        %v773 = vpop.permute.xlu0 %772
        %774 = vrot.lane.b32.xlu0 %v250, 108
        %v775 = vpop.permute.xlu0 %774
        %776 = vrot.lane.b32.xlu0 %v251, 108
        %v777 = vpop.permute.xlu0 %776
        %vm778 = vcmask 883712
        %v779 = vsel %vm778, %v773, %v775
        %v780 = vsel %vm778, %v775, %v777
        %v782 = vsel %vm261, %v771, 0
        %v785 = vsel %vm265, %v779, 0
        %v788 = vsel %vm265, %v780, 0
        %v791 = vsel %vm265, %v777, 0
        %793 = vmatprep.subr.bf16.mxu0 0
        %794 = vmatpush1.bf16.msra.mxu0 0
        %795 = vmatprep.subr.bf16.mxu0 0
        %796 = vmatpush1.bf16.msra.mxu0 0
        %797 = vmatprep.subr.bf16.mxu0 0
        %798 = vmatpush1.bf16.msra.mxu0 0
        %799 = vmatprep.subr.bf16.mxu0 0
        %800 = vmatpush1.bf16.msra.mxu0 0
        %801 = vmatprep.subr.bf16.mxu0 0
        %802 = vmatpush1.bf16.msra.mxu0 0
        %803 = vmatprep.subr.bf16.mxu0 0
        %804 = vmatpush1.bf16.msra.mxu0 0
        %805 = vmatprep.subr.bf16.mxu0 0
        %806 = vmatpush1.bf16.msra.mxu0 0
        %807 = vmatprep.subr.bf16.mxu0 %v788
        %808 = vmatpush1.bf16.msra.mxu0 %v785
        %809 = vmatprep.subr.bf16.mxu0 0
        %810 = vmatpush2.bf16.msra.mxu0 0
        %811 = vmatprep.subr.bf16.mxu0 0
        %812 = vmatpush2.bf16.msra.mxu0 0
        %813 = vmatprep.subr.bf16.mxu0 0
        %814 = vmatpush2.bf16.msra.mxu0 0
        %815 = vmatprep.subr.bf16.mxu0 0
        %816 = vmatpush2.bf16.msra.mxu0 0
        %817 = vmatprep.subr.bf16.mxu0 0
        %818 = vmatpush2.bf16.msra.mxu0 0
        %819 = vmatprep.subr.bf16.mxu0 0
        %820 = vmatpush2.bf16.msra.mxu0 0
        %821 = vmatprep.subr.bf16.mxu0 0
        %822 = vmatpush2.bf16.msra.mxu0 0
        %823 = vmatprep.subr.bf16.mxu0 0
        %824 = vmatpush2.bf16.msra.mxu0 0
        %825 = vmatprep.mubr.bf16.mxu0 0
        %826 = vmatmul.mubr.bf16.gmra.mxu0 %v782
        %v827 = vpop.f32.mrf.mxu0
        %v828 = vadd.f32 0.0, %v827
        %v829 = vpop.f32.mrf.mxu0
        %v830 = vadd.f32 0.0, %v829
        %v831 = vpop.f32.mrf.mxu0
        %v832 = vpop.f32.mrf.mxu0
        %833 = vdwg.mxu0
        %834 = vmatprep.subr.bf16.mxu0 0
        %835 = vmatpush1.bf16.msra.mxu0 0
        %836 = vmatprep.subr.bf16.mxu0 0
        %837 = vmatpush1.bf16.msra.mxu0 0
        %838 = vmatprep.subr.bf16.mxu0 0
        %839 = vmatpush1.bf16.msra.mxu0 0
        %840 = vmatprep.subr.bf16.mxu0 0
        %841 = vmatpush1.bf16.msra.mxu0 0
        %842 = vmatprep.subr.bf16.mxu0 0
        %843 = vmatpush1.bf16.msra.mxu0 0
        %844 = vmatprep.subr.bf16.mxu0 0
        %845 = vmatpush1.bf16.msra.mxu0 0
        %846 = vmatprep.subr.bf16.mxu0 0
        %847 = vmatpush1.bf16.msra.mxu0 0
        %848 = vmatprep.subr.bf16.mxu0 0
        %849 = vmatpush1.bf16.msra.mxu0 %v791
        %850 = vmatprep.subr.bf16.mxu0 0
        %851 = vmatpush2.bf16.msra.mxu0 0
        %852 = vmatprep.subr.bf16.mxu0 0
        %853 = vmatpush2.bf16.msra.mxu0 0
        %854 = vmatprep.subr.bf16.mxu0 0
        %855 = vmatpush2.bf16.msra.mxu0 0
        %856 = vmatprep.subr.bf16.mxu0 0
        %857 = vmatpush2.bf16.msra.mxu0 0
        %858 = vmatprep.subr.bf16.mxu0 0
        %859 = vmatpush2.bf16.msra.mxu0 0
        %860 = vmatprep.subr.bf16.mxu0 0
        %861 = vmatpush2.bf16.msra.mxu0 0
        %862 = vmatprep.subr.bf16.mxu0 0
        %863 = vmatpush2.bf16.msra.mxu0 0
        %864 = vmatprep.subr.bf16.mxu0 0
        %865 = vmatpush2.bf16.msra.mxu0 0
        %866 = vmatprep.mubr.bf16.mxu0 0
        %867 = vmatmul.mubr.bf16.gmra.mxu0 %v782
        %v868 = vpop.f32.mrf.mxu0
        %v869 = vadd.f32 0.0, %v868
        %v870 = vpop.f32.mrf.mxu0
        %v871 = vpop.f32.mrf.mxu0
        %v872 = vpop.f32.mrf.mxu0
        %873 = vdwg.mxu0
        %v874 = vadd.f32 %v767, %v828
        %v875 = vadd.f32 %v768, %v830
        %v876 = vadd.f32 %v769, %v869
        %s877 = scalar_lea.vmem [#allocation2], 24
        %v878 = vld [vmem:[%s877] sm:$0xf]
        %879 = vrot.lane.b32.xlu0 %v249, 92
        %v880 = vpop.permute.xlu0 %879
        %881 = vrot.lane.b32.xlu0 %v250, 92
        %v882 = vpop.permute.xlu0 %881
        %883 = vrot.lane.b32.xlu0 %v251, 92
        %v884 = vpop.permute.xlu0 %883
        %vm885 = vcmask 752640
        %v886 = vsel %vm885, %v880, %v882
        %v887 = vsel %vm885, %v882, %v884
        %v889 = vsel %vm261, %v878, 0
        %v892 = vsel %vm265, %v886, 0
        %v895 = vsel %vm265, %v887, 0
        %v898 = vsel %vm265, %v884, 0
        %900 = vmatprep.subr.bf16.mxu0 0
        %901 = vmatpush1.bf16.msra.mxu0 0
        %902 = vmatprep.subr.bf16.mxu0 0
        %903 = vmatpush1.bf16.msra.mxu0 0
        %904 = vmatprep.subr.bf16.mxu0 0
        %905 = vmatpush1.bf16.msra.mxu0 0
        %906 = vmatprep.subr.bf16.mxu0 0
        %907 = vmatpush1.bf16.msra.mxu0 0
        %908 = vmatprep.subr.bf16.mxu0 0
        %909 = vmatpush1.bf16.msra.mxu0 0
        %910 = vmatprep.subr.bf16.mxu0 0
        %911 = vmatpush1.bf16.msra.mxu0 0
        %912 = vmatprep.subr.bf16.mxu0 0
        %913 = vmatpush1.bf16.msra.mxu0 0
        %914 = vmatprep.subr.bf16.mxu0 %v895
        %915 = vmatpush1.bf16.msra.mxu0 %v892
        %916 = vmatprep.subr.bf16.mxu0 0
        %917 = vmatpush2.bf16.msra.mxu0 0
        %918 = vmatprep.subr.bf16.mxu0 0
        %919 = vmatpush2.bf16.msra.mxu0 0
        %920 = vmatprep.subr.bf16.mxu0 0
        %921 = vmatpush2.bf16.msra.mxu0 0
        %922 = vmatprep.subr.bf16.mxu0 0
        %923 = vmatpush2.bf16.msra.mxu0 0
        %924 = vmatprep.subr.bf16.mxu0 0
        %925 = vmatpush2.bf16.msra.mxu0 0
        %926 = vmatprep.subr.bf16.mxu0 0
        %927 = vmatpush2.bf16.msra.mxu0 0
        %928 = vmatprep.subr.bf16.mxu0 0
        %929 = vmatpush2.bf16.msra.mxu0 0
        %930 = vmatprep.subr.bf16.mxu0 0
        %931 = vmatpush2.bf16.msra.mxu0 0
        %932 = vmatprep.mubr.bf16.mxu0 0
        %933 = vmatmul.mubr.bf16.gmra.mxu0 %v889
        %v934 = vpop.f32.mrf.mxu0
        %v935 = vadd.f32 0.0, %v934
        %v936 = vpop.f32.mrf.mxu0
        %v937 = vadd.f32 0.0, %v936
        %v938 = vpop.f32.mrf.mxu0
        %v939 = vpop.f32.mrf.mxu0
        %940 = vdwg.mxu0
        %941 = vmatprep.subr.bf16.mxu0 0
        %942 = vmatpush1.bf16.msra.mxu0 0
        %943 = vmatprep.subr.bf16.mxu0 0
        %944 = vmatpush1.bf16.msra.mxu0 0
        %945 = vmatprep.subr.bf16.mxu0 0
        %946 = vmatpush1.bf16.msra.mxu0 0
        %947 = vmatprep.subr.bf16.mxu0 0
        %948 = vmatpush1.bf16.msra.mxu0 0
        %949 = vmatprep.subr.bf16.mxu0 0
        %950 = vmatpush1.bf16.msra.mxu0 0
        %951 = vmatprep.subr.bf16.mxu0 0
        %952 = vmatpush1.bf16.msra.mxu0 0
        %953 = vmatprep.subr.bf16.mxu0 0
        %954 = vmatpush1.bf16.msra.mxu0 0
        %955 = vmatprep.subr.bf16.mxu0 0
        %956 = vmatpush1.bf16.msra.mxu0 %v898
        %957 = vmatprep.subr.bf16.mxu0 0
        %958 = vmatpush2.bf16.msra.mxu0 0
        %959 = vmatprep.subr.bf16.mxu0 0
        %960 = vmatpush2.bf16.msra.mxu0 0
        %961 = vmatprep.subr.bf16.mxu0 0
        %962 = vmatpush2.bf16.msra.mxu0 0
        %963 = vmatprep.subr.bf16.mxu0 0
        %964 = vmatpush2.bf16.msra.mxu0 0
        %965 = vmatprep.subr.bf16.mxu0 0
        %966 = vmatpush2.bf16.msra.mxu0 0
        %967 = vmatprep.subr.bf16.mxu0 0
        %968 = vmatpush2.bf16.msra.mxu0 0
        %969 = vmatprep.subr.bf16.mxu0 0
        %970 = vmatpush2.bf16.msra.mxu0 0
        %971 = vmatprep.subr.bf16.mxu0 0
        %972 = vmatpush2.bf16.msra.mxu0 0
        %973 = vmatprep.mubr.bf16.mxu0 0
        %974 = vmatmul.mubr.bf16.gmra.mxu0 %v889
        %v975 = vpop.f32.mrf.mxu0
        %v976 = vadd.f32 0.0, %v975
        %v977 = vpop.f32.mrf.mxu0
        %v978 = vpop.f32.mrf.mxu0
        %v979 = vpop.f32.mrf.mxu0
        %980 = vdwg.mxu0
        %v981 = vadd.f32 %v874, %v935
        %v982 = vadd.f32 %v875, %v937
        %v983 = vadd.f32 %v876, %v976
        %s984 = scalar_lea.vmem [#allocation2], 28
        %v985 = vld [vmem:[%s984] sm:$0xf]
        %986 = vrot.lane.b32.xlu0 %v249, 91
        %v987 = vpop.permute.xlu0 %986
        %988 = vrot.lane.b32.xlu0 %v250, 91
        %v989 = vpop.permute.xlu0 %988
        %990 = vrot.lane.b32.xlu0 %v251, 91
        %v991 = vpop.permute.xlu0 %990
        %vm992 = vcmask 744448
        %v993 = vsel %vm992, %v987, %v989
        %v994 = vsel %vm992, %v989, %v991
        %v996 = vsel %vm261, %v985, 0
        %v999 = vsel %vm265, %v993, 0
        %v1002 = vsel %vm265, %v994, 0
        %v1005 = vsel %vm265, %v991, 0
        %1007 = vmatprep.subr.bf16.mxu0 0
        %1008 = vmatpush1.bf16.msra.mxu0 0
        %1009 = vmatprep.subr.bf16.mxu0 0
        %1010 = vmatpush1.bf16.msra.mxu0 0
        %1011 = vmatprep.subr.bf16.mxu0 0
        %1012 = vmatpush1.bf16.msra.mxu0 0
        %1013 = vmatprep.subr.bf16.mxu0 0
        %1014 = vmatpush1.bf16.msra.mxu0 0
        %1015 = vmatprep.subr.bf16.mxu0 0
        %1016 = vmatpush1.bf16.msra.mxu0 0
        %1017 = vmatprep.subr.bf16.mxu0 0
        %1018 = vmatpush1.bf16.msra.mxu0 0
        %1019 = vmatprep.subr.bf16.mxu0 0
        %1020 = vmatpush1.bf16.msra.mxu0 0
        %1021 = vmatprep.subr.bf16.mxu0 %v1002
        %1022 = vmatpush1.bf16.msra.mxu0 %v999
        %1023 = vmatprep.subr.bf16.mxu0 0
        %1024 = vmatpush2.bf16.msra.mxu0 0
        %1025 = vmatprep.subr.bf16.mxu0 0
        %1026 = vmatpush2.bf16.msra.mxu0 0
        %1027 = vmatprep.subr.bf16.mxu0 0
        %1028 = vmatpush2.bf16.msra.mxu0 0
        %1029 = vmatprep.subr.bf16.mxu0 0
        %1030 = vmatpush2.bf16.msra.mxu0 0
        %1031 = vmatprep.subr.bf16.mxu0 0
        %1032 = vmatpush2.bf16.msra.mxu0 0
        %1033 = vmatprep.subr.bf16.mxu0 0
        %1034 = vmatpush2.bf16.msra.mxu0 0
        %1035 = vmatprep.subr.bf16.mxu0 0
        %1036 = vmatpush2.bf16.msra.mxu0 0
        %1037 = vmatprep.subr.bf16.mxu0 0
        %1038 = vmatpush2.bf16.msra.mxu0 0
        %1039 = vmatprep.mubr.bf16.mxu0 0
        %1040 = vmatmul.mubr.bf16.gmra.mxu0 %v996
        %v1041 = vpop.f32.mrf.mxu0
        %v1042 = vadd.f32 0.0, %v1041
        %v1043 = vpop.f32.mrf.mxu0
        %v1044 = vadd.f32 0.0, %v1043
        %v1045 = vpop.f32.mrf.mxu0
        %v1046 = vpop.f32.mrf.mxu0
        %1047 = vdwg.mxu0
        %1048 = vmatprep.subr.bf16.mxu0 0
        %1049 = vmatpush1.bf16.msra.mxu0 0
        %1050 = vmatprep.subr.bf16.mxu0 0
        %1051 = vmatpush1.bf16.msra.mxu0 0
        %1052 = vmatprep.subr.bf16.mxu0 0
        %1053 = vmatpush1.bf16.msra.mxu0 0
        %1054 = vmatprep.subr.bf16.mxu0 0
        %1055 = vmatpush1.bf16.msra.mxu0 0
        %1056 = vmatprep.subr.bf16.mxu0 0
        %1057 = vmatpush1.bf16.msra.mxu0 0
        %1058 = vmatprep.subr.bf16.mxu0 0
        %1059 = vmatpush1.bf16.msra.mxu0 0
        %1060 = vmatprep.subr.bf16.mxu0 0
        %1061 = vmatpush1.bf16.msra.mxu0 0
        %1062 = vmatprep.subr.bf16.mxu0 0
        %1063 = vmatpush1.bf16.msra.mxu0 %v1005
        %1064 = vmatprep.subr.bf16.mxu0 0
        %1065 = vmatpush2.bf16.msra.mxu0 0
        %1066 = vmatprep.subr.bf16.mxu0 0
        %1067 = vmatpush2.bf16.msra.mxu0 0
        %1068 = vmatprep.subr.bf16.mxu0 0
        %1069 = vmatpush2.bf16.msra.mxu0 0
        %1070 = vmatprep.subr.bf16.mxu0 0
        %1071 = vmatpush2.bf16.msra.mxu0 0
        %1072 = vmatprep.subr.bf16.mxu0 0
        %1073 = vmatpush2.bf16.msra.mxu0 0
        %1074 = vmatprep.subr.bf16.mxu0 0
        %1075 = vmatpush2.bf16.msra.mxu0 0
        %1076 = vmatprep.subr.bf16.mxu0 0
        %1077 = vmatpush2.bf16.msra.mxu0 0
        %1078 = vmatprep.subr.bf16.mxu0 0
        %1079 = vmatpush2.bf16.msra.mxu0 0
        %1080 = vmatprep.mubr.bf16.mxu0 0
        %1081 = vmatmul.mubr.bf16.gmra.mxu0 %v996
        %v1082 = vpop.f32.mrf.mxu0
        %v1083 = vadd.f32 0.0, %v1082
        %v1084 = vpop.f32.mrf.mxu0
        %v1085 = vpop.f32.mrf.mxu0
        %v1086 = vpop.f32.mrf.mxu0
        %1087 = vdwg.mxu0
        %v1088 = vadd.f32 %v981, %v1042
        %v1089 = vadd.f32 %v982, %v1044
        %v1090 = vadd.f32 %v983, %v1083
        %s1091 = scalar_lea.vmem [#allocation2], 32
        %v1092 = vld [vmem:[%s1091] sm:$0xf]
        %1093 = vrot.lane.b32.xlu0 %v249, 90
        %v1094 = vpop.permute.xlu0 %1093
        %1095 = vrot.lane.b32.xlu0 %v250, 90
        %v1096 = vpop.permute.xlu0 %1095
        %1097 = vrot.lane.b32.xlu0 %v251, 90
        %v1098 = vpop.permute.xlu0 %1097
        %vm1099 = vcmask 736256
        %v1100 = vsel %vm1099, %v1094, %v1096
        %v1101 = vsel %vm1099, %v1096, %v1098
        %v1103 = vsel %vm261, %v1092, 0
        %v1106 = vsel %vm265, %v1100, 0
        %v1109 = vsel %vm265, %v1101, 0
        %v1112 = vsel %vm265, %v1098, 0
        %1114 = vmatprep.subr.bf16.mxu0 0
        %1115 = vmatpush1.bf16.msra.mxu0 0
        %1116 = vmatprep.subr.bf16.mxu0 0
        %1117 = vmatpush1.bf16.msra.mxu0 0
        %1118 = vmatprep.subr.bf16.mxu0 0
        %1119 = vmatpush1.bf16.msra.mxu0 0
        %1120 = vmatprep.subr.bf16.mxu0 0
        %1121 = vmatpush1.bf16.msra.mxu0 0
        %1122 = vmatprep.subr.bf16.mxu0 0
        %1123 = vmatpush1.bf16.msra.mxu0 0
        %1124 = vmatprep.subr.bf16.mxu0 0
        %1125 = vmatpush1.bf16.msra.mxu0 0
        %1126 = vmatprep.subr.bf16.mxu0 0
        %1127 = vmatpush1.bf16.msra.mxu0 0
        %1128 = vmatprep.subr.bf16.mxu0 %v1109
        %1129 = vmatpush1.bf16.msra.mxu0 %v1106
        %1130 = vmatprep.subr.bf16.mxu0 0
        %1131 = vmatpush2.bf16.msra.mxu0 0
        %1132 = vmatprep.subr.bf16.mxu0 0
        %1133 = vmatpush2.bf16.msra.mxu0 0
        %1134 = vmatprep.subr.bf16.mxu0 0
        %1135 = vmatpush2.bf16.msra.mxu0 0
        %1136 = vmatprep.subr.bf16.mxu0 0
        %1137 = vmatpush2.bf16.msra.mxu0 0
        %1138 = vmatprep.subr.bf16.mxu0 0
        %1139 = vmatpush2.bf16.msra.mxu0 0
        %1140 = vmatprep.subr.bf16.mxu0 0
        %1141 = vmatpush2.bf16.msra.mxu0 0
        %1142 = vmatprep.subr.bf16.mxu0 0
        %1143 = vmatpush2.bf16.msra.mxu0 0
        %1144 = vmatprep.subr.bf16.mxu0 0
        %1145 = vmatpush2.bf16.msra.mxu0 0
        %1146 = vmatprep.mubr.bf16.mxu0 0
        %1147 = vmatmul.mubr.bf16.gmra.mxu0 %v1103
        %v1148 = vpop.f32.mrf.mxu0
        %v1149 = vadd.f32 0.0, %v1148
        %v1150 = vpop.f32.mrf.mxu0
        %v1151 = vadd.f32 0.0, %v1150
        %v1152 = vpop.f32.mrf.mxu0
        %v1153 = vpop.f32.mrf.mxu0
        %1154 = vdwg.mxu0
        %1155 = vmatprep.subr.bf16.mxu0 0
        %1156 = vmatpush1.bf16.msra.mxu0 0
        %1157 = vmatprep.subr.bf16.mxu0 0
        %1158 = vmatpush1.bf16.msra.mxu0 0
        %1159 = vmatprep.subr.bf16.mxu0 0
        %1160 = vmatpush1.bf16.msra.mxu0 0
        %1161 = vmatprep.subr.bf16.mxu0 0
        %1162 = vmatpush1.bf16.msra.mxu0 0
        %1163 = vmatprep.subr.bf16.mxu0 0
        %1164 = vmatpush1.bf16.msra.mxu0 0
        %1165 = vmatprep.subr.bf16.mxu0 0
        %1166 = vmatpush1.bf16.msra.mxu0 0
        %1167 = vmatprep.subr.bf16.mxu0 0
        %1168 = vmatpush1.bf16.msra.mxu0 0
        %1169 = vmatprep.subr.bf16.mxu0 0
        %1170 = vmatpush1.bf16.msra.mxu0 %v1112
        %1171 = vmatprep.subr.bf16.mxu0 0
        %1172 = vmatpush2.bf16.msra.mxu0 0
        %1173 = vmatprep.subr.bf16.mxu0 0
        %1174 = vmatpush2.bf16.msra.mxu0 0
        %1175 = vmatprep.subr.bf16.mxu0 0
        %1176 = vmatpush2.bf16.msra.mxu0 0
        %1177 = vmatprep.subr.bf16.mxu0 0
        %1178 = vmatpush2.bf16.msra.mxu0 0
        %1179 = vmatprep.subr.bf16.mxu0 0
        %1180 = vmatpush2.bf16.msra.mxu0 0
        %1181 = vmatprep.subr.bf16.mxu0 0
        %1182 = vmatpush2.bf16.msra.mxu0 0
        %1183 = vmatprep.subr.bf16.mxu0 0
        %1184 = vmatpush2.bf16.msra.mxu0 0
        %1185 = vmatprep.subr.bf16.mxu0 0
        %1186 = vmatpush2.bf16.msra.mxu0 0
        %1187 = vmatprep.mubr.bf16.mxu0 0
        %1188 = vmatmul.mubr.bf16.gmra.mxu0 %v1103
        %v1189 = vpop.f32.mrf.mxu0
        %v1190 = vadd.f32 0.0, %v1189
        %v1191 = vpop.f32.mrf.mxu0
        %v1192 = vpop.f32.mrf.mxu0
        %v1193 = vpop.f32.mrf.mxu0
        %1194 = vdwg.mxu0
        %v1195 = vadd.f32 %v1088, %v1149
        %v1196 = vadd.f32 %v1089, %v1151
        %v1197 = vadd.f32 %v1090, %v1190
        %v1198 = vld [vmem:[#allocation4] sm:$0xff]
        %1200 = vset.pattern.permute.xlu0 0
        %1201 = vperm.xlu0 %1200, %v1198
        %v1202 = vpop.permute.xlu0 %1201
        %v1204 = vadd.f32 %v1195, %v1202
        %v1205 = vadd.f32 %v1196, %v1202
        %v1206 = vadd.f32 %v1197, %v1202
        %v1207 = vmax.f32 %v1204, 0.0
        %v1208 = vmax.f32 %v1205, 0.0
        %v1209 = vmax.f32 %v1206, 0.0
        %v1210 = vld [vmem:[#allocation6] sm:$0x7]
        %v1212 = vlaneseq
        %v1213 = vshrl.u32 %v1212, 7
        %v1214 = vsub.s32 0, %v1213
        %v1215 = vrot.slane %v1210, %v1214
        %v1216 = vlaneseq
        %v1217 = vshrl.u32 %v1216, 7
        %v1218 = vsub.s32 1, %v1217
        %v1219 = vrot.slane %v1210, %v1218
        %v1220 = vlaneseq
        %v1221 = vshrl.u32 %v1220, 7
        %v1222 = vsub.s32 2, %v1221
        %v1223 = vrot.slane %v1210, %v1222
        %v1227 = vmul.f32 %v1207, %v1215
        %v1228 = vmul.f32 %v1208, %v1219
        %v1229 = vmul.f32 %v1209, %v1223
        %1230 = vst [vmem:[%s237] sm:$0xff] 0
        %1231 = vst [vmem:[%s237 + $0x8] sm:$0xf] 0
        %v1232 = vpack.c.bf16 %v1227, %v1227
        %v1233 = vpack.c.bf16 %v1228, %v1228
        %v1234 = vpack.c.bf16 %v1229, %v1229
        %v1238 = vunpack.c.l.b16 %v1232
        %v1239 = vunpack.c.l.b16 %v1233
        %v1240 = vunpack.c.l.b16 %v1234
        %v1241 = vpack.c.b16 %v1239, %v1238
        %v1242 = vpack.c.b16 %v1240, %v1240
        %1243 = vrot.lane.b32.xlu0 %v1241, 19
        %v1244 = vpop.permute.xlu0 %1243
        %1245 = vrot.lane.b32.xlu0 %v1242, 19
        %v1246 = vpop.permute.xlu0 %1245
        %v1247 = vrot.slane %v1244, 4
        %vm1248 = vcmask 154624
        %v1249 = vsel %vm1248, %v1247, %v1244
        %v1250 = vsel %vm1248, %v1247, %v1246
        %vm1253 = vcmask 1043608
        %vm1254 = vcmask 1047556
        %vm1255 = vmor %vm1254, %vm1253
        %1256 = vst.msk [vmem:[%s237] sm:$0xff] %vm1255, %v1249
        %vm1257 = vcmask 412672
        %1258 = vst.msk [vmem:[%s237 + $0x8] sm:$0xf] %vm1257, %v1250
        %p1259 = scmp.lt.s32.totalorder %s17, 1
        %s1260 = scalar_select %p1259, %s17, 1
        %s1261 = smul.addr %s1260, 3
        %s1262 = smul.addr %s1261, 4
        %s1263 = scalar_lea.vmem %s4, %s1262
        // Predicated region
        $region49: #{_lambda_.5} parent=35 // pred_check
          %p1264 = pneg %p124
        $region50: #{_lambda_.5} parent=35 // pred_check_branch
          %1266 = sbr.rel (%p1264) target = $region52
        $region51: #{_lambda_.5} parent=35 // pred_region
          _
        $region52: #{_lambda_.5} parent=35 // pred_fallthru
          _
      $region36: #{_lambda_.5} parent=5 // pred_fallthru
        _
      %p1267 = scmp.le.s32.totalorder 2, %s12
      // Predicated region
      $region53: #{_lambda_.5} parent=5 // pred_check
        %p1268 = pneg %p1267
      $region54: #{_lambda_.5} parent=5 // pred_check_branch
        %1270 = sbr.rel (%p1268) target = $region56
      $region55: #{_lambda_.5} parent=5 // pred_region
        %s1271 = ssub.s32 %s12, 2
        // Predicated region
        $region57: #{_lambda_.5} parent=55 // pred_check
          %p1272 = pneg %p130
        $region58: #{_lambda_.5} parent=55 // pred_check_branch
          %1274 = sbr.rel (%p1272) target = $region60
        $region59: #{_lambda_.5} parent=55 // pred_region
          %p1275 = scmp.lt.s32.totalorder %s18, 1
          %s1276 = scalar_select %p1275, %s18, 1
          %s1277 = smul.addr %s1276, 3
          %s1278 = smul.addr %s1277, 4
          %s1279 = scalar_lea.vmem %s4, %s1278
        $region60: #{_lambda_.5} parent=55 // pred_fallthru
          _
      $region56: #{_lambda_.5} parent=5 // pred_fallthru
        _
    $region6: #{_lambda_.5} parent=1 // loop_footer
      %s16 = sadd.s32 1, %s12
    $region7: #{_lambda_.5} parent=1 // loop_footer_branch
      %11 = sbr.rel target = $region3
    $region8: #{_lambda_.5} parent=1 // loop_exit
      _
    %1280 = vsyncpa [#allocation3], 1
    %s1281 = scalar_lea.sflag [#allocation3], 1
    %1282 = vsyncpa %s1281, 1
    %1283 = vsyncpa [#allocation5], 1

// kernel: _lambda_.4
$region0: #{_lambda_.4}
  #allocation0 [shape = 'u32[]', space=smem, size = 0x4, offset = 0x4, fixed_abs, tag = 'smem constant byte address 0x4 - core index']
  #allocation1 [shape = 'u32[144,128]{1,0:T(1,128)}', space=vmem, size = 0x12000, scoped, tag = 'internal scratch']
  %s0 = inlined_call_operand.vmem [shape: bf16[2,3,384], index: 0, kind: input, shape index: {}]
  %s1 = inlined_call_operand.hbm [shape: bf16[9,8,3], index: 1, kind: input, shape index: {}]
  %s2 = inlined_call_operand.hbm [shape: f32[8,1], index: 2, kind: input, shape index: {}]
  %s3 = inlined_call_operand.hbm [shape: f32[1,288], index: 3, kind: input, shape index: {}]
  %s4 = inlined_call_operand.vmem [shape: bf16[2,8,384], index: 4, kind: output, shape index: {}]
  %s5 = sld [smem:[#allocation0]]
  $region61: #{_lambda_.4} parent=0
    _
  %s7 = ssub.s32 1, %s5
  %s8 = scalar_select 0, %s7, %s5
  $region1: #{_lambda_.4} parent=0
    #allocation2 [shape = 'u8[18432]{0}', space=vmem, size = 0x4800, scoped, tag = 'input window, operand 1, single buffered']
    #allocation3 [shape = 's32[2]{0}', space=sflag, size = 0x8, scoped, tag = 'scoped memory for _lambda_.4']
    #allocation4 [shape = 'u8[4096]{0}', space=vmem, size = 0x1000, scoped, tag = 'input window, operand 2, single buffered']
    #allocation5 [shape = 's32[1]{0}', space=sflag, size = 0x4, scoped, tag = 'scoped memory for _lambda_.4']
    #allocation6 [shape = 'u8[1536]{0}', space=vmem, size = 0x800, scoped, tag = 'input window, operand 3, single buffered']
    %9 = vsyncpa [#allocation3], 0
    %10 = vsyncpa [#allocation5], 0
    loop: start=0, step=1, limit=4
    $region2: #{_lambda_.4} parent=1 // loop_pre_header
      _
    $region3: #{_lambda_.4} parent=1 // loop_header
      %s12 = sphi 0, %s16
      %p13 = scmp.ge.s32.totalorder %s12, 4
      %s22 = sphi 0, %s24
      %s25 = sphi 0, %s22
      %s26 = sphi 0, %s25
      %s42 = sphi 0, %s26
      %s46 = sphi 0, %s46
      %s48 = sphi 0, %s46
      %s49 = sphi 0, %s48
      %s63 = sphi 0, %s49
      %s67 = sphi 0, %s67
      %s69 = sphi 0, %s67
      %s70 = sphi 0, %s69
      %s84 = sphi 0, %s70
      %s88 = sphi 0, %s88
      %s90 = sphi 0, %s88
      %s91 = sphi 0, %s90
      %s105 = sphi 0, %s91
      %s111 = sphi 0, %s113
      %s114 = sphi 0, %s111
      %s115 = sphi 0, %s114
      %s131 = sphi 0, %s115
    $region4: #{_lambda_.4} parent=1 // loop_header_branch
      %15 = sbr.rel (%p13) target = $region8
    $region5: #{_lambda_.4} parent=1 // loop_body
      %s17 = ssub.s32 %s12, 1
      %s18 = ssub.s32 %s12, 2
      %s19 = sadd.s32 %s12, 1
      %s20 = ssub.s32 %s12, %s19
      %p21 = scmp.eq.s32.totalorder %s20, 0
      %s23 = sadd.s32 %s22, 1
      %s24 = scalar_select %p21, %s22, %s23
      %p27 = pneg %p21
      %p28 = scmp.eq.s32.totalorder %s12, 1
      %p29 = por %p27, %p28
      %p30 = scmp.ne.s32.totalorder %s22, %s25
      %p31 = scmp.eq.s32.totalorder %s12, 0
      %p32 = por %p30, %p31
      %p33 = scmp.ne.s32.totalorder %s22, %s25
      %p34 = scmp.eq.s32.totalorder %s17, 1
      %p35 = por %p33, %p34
      %p36 = scmp.ne.s32.totalorder %s25, %s26
      %p37 = scmp.eq.s32.totalorder %s17, 0
      %p38 = por %p36, %p37
      %p39 = scmp.ne.s32.totalorder %s25, %s26
      %p40 = scmp.eq.s32.totalorder %s18, 1
      %p41 = por %p39, %p40
      %p43 = scmp.ne.s32.totalorder %s26, %s42
      %p44 = scmp.eq.s32.totalorder %s18, 0
      %p45 = por %p43, %p44
      %s47 = sadd.s32 %s46, 1
      %p50 = scmp.eq.s32.totalorder %s12, 1
      %p51 = scmp.ne.s32.totalorder %s46, %s48
      %p52 = scmp.eq.s32.totalorder %s12, 0
      %p53 = por %p51, %p52
      %p54 = scmp.ne.s32.totalorder %s46, %s48
      %p55 = scmp.eq.s32.totalorder %s17, 1
      %p56 = por %p54, %p55
      %p57 = scmp.ne.s32.totalorder %s48, %s49
      %p58 = scmp.eq.s32.totalorder %s17, 0
      %p59 = por %p57, %p58
      %p60 = scmp.ne.s32.totalorder %s48, %s49
      %p61 = scmp.eq.s32.totalorder %s18, 1
      %p62 = por %p60, %p61
      %p64 = scmp.ne.s32.totalorder %s49, %s63
      %p65 = scmp.eq.s32.totalorder %s18, 0
      %p66 = por %p64, %p65
      %s68 = sadd.s32 %s67, 1
      %p71 = scmp.eq.s32.totalorder %s12, 1
      %p72 = scmp.ne.s32.totalorder %s67, %s69
      %p73 = scmp.eq.s32.totalorder %s12, 0
      %p74 = por %p72, %p73
      %p75 = scmp.ne.s32.totalorder %s67, %s69
      %p76 = scmp.eq.s32.totalorder %s17, 1
      %p77 = por %p75, %p76
      %p78 = scmp.ne.s32.totalorder %s69, %s70
      %p79 = scmp.eq.s32.totalorder %s17, 0
      %p80 = por %p78, %p79
      %p81 = scmp.ne.s32.totalorder %s69, %s70
      %p82 = scmp.eq.s32.totalorder %s18, 1
      %p83 = por %p81, %p82
      %p85 = scmp.ne.s32.totalorder %s70, %s84
      %p86 = scmp.eq.s32.totalorder %s18, 0
      %p87 = por %p85, %p86
      %s89 = sadd.s32 %s88, 1
      %p92 = scmp.eq.s32.totalorder %s12, 1
      %p93 = scmp.ne.s32.totalorder %s88, %s90
      %p94 = scmp.eq.s32.totalorder %s12, 0
      %p95 = por %p93, %p94
      %p96 = scmp.ne.s32.totalorder %s88, %s90
      %p97 = scmp.eq.s32.totalorder %s17, 1
      %p98 = por %p96, %p97
      %p99 = scmp.ne.s32.totalorder %s90, %s91
      %p100 = scmp.eq.s32.totalorder %s17, 0
      %p101 = por %p99, %p100
      %p102 = scmp.ne.s32.totalorder %s90, %s91
      %p103 = scmp.eq.s32.totalorder %s18, 1
      %p104 = por %p102, %p103
      %p106 = scmp.ne.s32.totalorder %s91, %s105
      %p107 = scmp.eq.s32.totalorder %s18, 0
      %p108 = por %p106, %p107
      %s109 = ssub.s32 %s12, %s19
      %p110 = scmp.eq.s32.totalorder %s109, 0
      %s112 = sadd.s32 %s111, 1
      %s113 = scalar_select %p110, %s111, %s112
      %p116 = pneg %p110
      %p117 = scmp.eq.s32.totalorder %s12, 1
      %p118 = por %p116, %p117
      %p119 = scmp.ne.s32.totalorder %s111, %s114
      %p120 = scmp.eq.s32.totalorder %s12, 0
      %p121 = por %p119, %p120
      %p122 = scmp.ne.s32.totalorder %s111, %s114
      %p123 = scmp.eq.s32.totalorder %s17, 1
      %p124 = por %p122, %p123
      %p125 = scmp.ne.s32.totalorder %s114, %s115
      %p126 = scmp.eq.s32.totalorder %s17, 0
      %p127 = por %p125, %p126
      %p128 = scmp.ne.s32.totalorder %s114, %s115
      %p129 = scmp.eq.s32.totalorder %s18, 1
      %p130 = por %p128, %p129
      %p132 = scmp.ne.s32.totalorder %s115, %s131
      %p133 = scmp.eq.s32.totalorder %s18, 0
      %p134 = por %p132, %p133
      %p135 = scmp.le.s32.totalorder 1, %s12
      %p136 = scmp.lt.s32.totalorder %s12, 3
      %p137 = pnand %p135, %p136
      %p138 = pneg %p137
      // Predicated region
      $region9: #{_lambda_.4} parent=5 // pred_check
        _
      $region10: #{_lambda_.4} parent=5 // pred_check_branch
        %140 = sbr.rel (%p137) target = $region12
      $region11: #{_lambda_.4} parent=5 // pred_region
        %s141 = ssub.s32 %s12, 1
        // Predicated region
        $region13: #{_lambda_.4} parent=11 // pred_check
          %p142 = pneg %p59
        $region14: #{_lambda_.4} parent=11 // pred_check_branch
          %144 = sbr.rel (%p142) target = $region16
        $region15: #{_lambda_.4} parent=11 // pred_region
          %s146 = ssub.s32 576, 576
          %147 = vsyncadd [#allocation3], %s146
          %s148 = sshll.u32 [#allocation2], 4
          %s149 = int_to_ptr.vmem [resolvable:$true] %s148
          %154 = dma.hbm_to_vmem [thread:$0]  %s1, 576, %s149, [#allocation3], 64, 64, 4
        $region16: #{_lambda_.4} parent=11 // pred_fallthru
          _
        // Predicated region
        $region17: #{_lambda_.4} parent=11 // pred_check
          %p155 = pneg %p80
        $region18: #{_lambda_.4} parent=11 // pred_check_branch
          %157 = sbr.rel (%p155) target = $region20
        $region19: #{_lambda_.4} parent=11 // pred_region
          %s159 = ssub.s32 128, 128
          %160 = vsyncadd [#allocation5], %s159
          %s162 = sshll.u32 [#allocation4], 4
          %s163 = int_to_ptr.vmem [resolvable:$true] %s162
          %165 = dma.hbm_to_vmem [thread:$0]  %s2, 128, %s163, [#allocation5]
        $region20: #{_lambda_.4} parent=11 // pred_fallthru
          _
        // Predicated region
        $region21: #{_lambda_.4} parent=11 // pred_check
          %p166 = pneg %p101
        $region22: #{_lambda_.4} parent=11 // pred_check_branch
          %168 = sbr.rel (%p166) target = $region24
        $region23: #{_lambda_.4} parent=11 // pred_region
          %s170 = ssub.s32 48, 48
          %171 = vsyncadd [#allocation5], %s170
          %s173 = sshll.u32 [#allocation6], 4
          %s174 = int_to_ptr.vmem [resolvable:$true] %s173
          %176 = dma.hbm_to_vmem [thread:$0]  %s3, 48, %s174, [#allocation5]
        $region24: #{_lambda_.4} parent=11 // pred_fallthru
          _
      $region12: #{_lambda_.4} parent=5 // pred_fallthru
        _
      %p177 = scmp.lt.s32.totalorder %s12, 2
      // Predicated region
      $region25: #{_lambda_.4} parent=5 // pred_check
        %p178 = pneg %p177
      $region26: #{_lambda_.4} parent=5 // pred_check_branch
        %180 = sbr.rel (%p178) target = $region28
      $region27: #{_lambda_.4} parent=5 // pred_region
        // Predicated region
        $region29: #{_lambda_.4} parent=27 // pred_check
          %p181 = pneg %p32
        $region30: #{_lambda_.4} parent=27 // pred_check_branch
          %183 = sbr.rel (%p181) target = $region32
        $region31: #{_lambda_.4} parent=27 // pred_region
          %p184 = scmp.lt.s32.totalorder %s12, 1
          %s185 = scalar_select %p184, %s12, 1
          %s186 = smul.addr %s185, 3
          %s187 = smul.addr %s186, 2
          %s188 = scalar_lea.vmem %s0, %s187
        $region32: #{_lambda_.4} parent=27 // pred_fallthru
          _
      $region28: #{_lambda_.4} parent=5 // pred_fallthru
        _
      %p189 = scmp.le.s32.totalorder 1, %s12
      %p190 = scmp.lt.s32.totalorder %s12, 3
      %p191 = pnand %p189, %p190
      %p192 = pneg %p191
      // Predicated region
      $region33: #{_lambda_.4} parent=5 // pred_check
        _
      $region34: #{_lambda_.4} parent=5 // pred_check_branch
        %194 = sbr.rel (%p191) target = $region36
      $region35: #{_lambda_.4} parent=5 // pred_region
        %s195 = ssub.s32 %s12, 1
        // Predicated region
        $region37: #{_lambda_.4} parent=35 // pred_check
          %p196 = pneg %p59
        $region38: #{_lambda_.4} parent=35 // pred_check_branch
          %198 = sbr.rel (%p196) target = $region40
        $region39: #{_lambda_.4} parent=35 // pred_region
          %199 = dma.done [#allocation3], 576
        $region40: #{_lambda_.4} parent=35 // pred_fallthru
          _
        // Predicated region
        $region41: #{_lambda_.4} parent=35 // pred_check
          %p200 = pneg %p80
        $region42: #{_lambda_.4} parent=35 // pred_check_branch
          %202 = sbr.rel (%p200) target = $region44
        $region43: #{_lambda_.4} parent=35 // pred_region
          %203 = dma.done [#allocation5], 128
        $region44: #{_lambda_.4} parent=35 // pred_fallthru
          _
        // Predicated region
        $region45: #{_lambda_.4} parent=35 // pred_check
          %p204 = pneg %p101
        $region46: #{_lambda_.4} parent=35 // pred_check_branch
          %206 = sbr.rel (%p204) target = $region48
        $region47: #{_lambda_.4} parent=35 // pred_region
          %207 = dma.done [#allocation5], 48
        $region48: #{_lambda_.4} parent=35 // pred_fallthru
          _
        %p208 = scmp.lt.s32.totalorder %s17, 1
        %s209 = scalar_select %p208, %s17, 1
        %s210 = smul.addr %s209, 3
        %s211 = smul.addr %s210, 2
        %s212 = scalar_lea.vmem %s0, %s211
        %p213 = pneg %p38
        %p214 = pneg %p35
        %p215 = pneg %p59
        %p216 = pneg %p56
        %p217 = pneg %p80
        %p218 = pneg %p77
        %p219 = pneg %p101
        %p220 = pneg %p98
        %p221 = pneg %p127
        %p222 = pneg %p124
        %p223 = scmp.lt.s32.totalorder %s17, 1
        %s224 = scalar_select %p223, %s17, 1
        %s225 = smul.addr %s224, 3
        %s226 = smul.addr %s225, 4
        %s227 = scalar_lea.vmem %s4, %s226
        %p228 = scmp.lt.s32.totalorder %s17, 1
        %s229 = scalar_select %p228, %s17, 1
        %s230 = smul.addr %s229, 3
        %s231 = smul.addr %s230, 2
        %s232 = scalar_lea.vmem %s0, %s231
        %p233 = scmp.lt.s32.totalorder %s17, 1
        %s234 = scalar_select %p233, %s17, 1
        %s235 = smul.addr %s234, 3
        %s236 = smul.addr %s235, 4
        %s237 = scalar_lea.vmem %s4, %s236
        %v239 = vld [vmem:[%s232] sm:$0x3f]
        %v240 = vld [vmem:[#allocation2] sm:$0xf]
        %s241 = scalar_lea.vmem [#allocation2], 4
        %v242 = vld [vmem:[%s241] sm:$0xf]
        %v244 = vcombine.high %v239, %v239
        %v246 = vunpack.c.l.s4 1983009808
        %v247 = vunpack.c.0.s8 %v246
        %v248 = vlaneseq
        %v249 = vshrl.u32 %v248, 7
        %v250 = vsub.s32 %v247, %v249
        %v251 = vrot.slane %v239, %v250
        %v253 = vunpack.c.l.s4 1983009808
        %v254 = vunpack.c.0.s8 %v253
        %v255 = vlaneseq
        %v256 = vshrl.u32 %v255, 7
        %v257 = vsub.s32 %v254, %v256
        %v258 = vrot.slane %v244, %v257
        %v259 = vcombine.high %v251, %v251
        %260 = vrot.lane.b32.xlu0 %v251, 127
        %v261 = vpop.permute.xlu0 %260
        %262 = vrot.lane.b32.xlu0 %v259, 127
        %v263 = vpop.permute.xlu0 %262
        %264 = vrot.lane.b32.xlu0 %v258, 127
        %v265 = vpop.permute.xlu0 %264
        %vm266 = vcmask 1039360
        %v267 = vsel %vm266, %v261, %v263
        %v268 = vsel %vm266, %v263, %v265
        %vm269 = vcmask 23552
        %v271 = vsel %vm269, %v242, 0
        %vm273 = vcmask 1040384
        %vm274 = vcmask 1041408
        %v275 = vsel %vm273, 4294967295, 65535
        %v276 = vsel %vm274, %v275, 0
        %v278 = vand.u32 %v267, %v276
        %v281 = vand.u32 %v268, %v276
        %v284 = vand.u32 %v265, %v276
        %286 = vmatprep.subr.bf16.mxu0 0
        %287 = vmatpush1.bf16.msra.mxu0 0
        %288 = vmatprep.subr.bf16.mxu0 0
        %289 = vmatpush1.bf16.msra.mxu0 0
        %290 = vmatprep.subr.bf16.mxu0 0
        %291 = vmatpush1.bf16.msra.mxu0 0
        %292 = vmatprep.subr.bf16.mxu0 0
        %293 = vmatpush1.bf16.msra.mxu0 0
        %294 = vmatprep.subr.bf16.mxu0 0
        %295 = vmatpush1.bf16.msra.mxu0 0
        %296 = vmatprep.subr.bf16.mxu0 0
        %297 = vmatpush1.bf16.msra.mxu0 0
        %298 = vmatprep.subr.bf16.mxu0 0
        %299 = vmatpush1.bf16.msra.mxu0 0
        %300 = vmatprep.subr.bf16.mxu0 %v281
        %301 = vmatpush1.bf16.msra.mxu0 %v278
        %302 = vmatprep.subr.bf16.mxu0 0
        %303 = vmatpush2.bf16.msra.mxu0 0
        %304 = vmatprep.subr.bf16.mxu0 0
        %305 = vmatpush2.bf16.msra.mxu0 0
        %306 = vmatprep.subr.bf16.mxu0 0
        %307 = vmatpush2.bf16.msra.mxu0 0
        %308 = vmatprep.subr.bf16.mxu0 0
        %309 = vmatpush2.bf16.msra.mxu0 0
        %310 = vmatprep.subr.bf16.mxu0 0
        %311 = vmatpush2.bf16.msra.mxu0 0
        %312 = vmatprep.subr.bf16.mxu0 0
        %313 = vmatpush2.bf16.msra.mxu0 0
        %314 = vmatprep.subr.bf16.mxu0 0
        %315 = vmatpush2.bf16.msra.mxu0 0
        %316 = vmatprep.subr.bf16.mxu0 0
        %317 = vmatpush2.bf16.msra.mxu0 0
        %318 = vmatprep.mubr.bf16.mxu0 0
        %319 = vmatmul.mubr.bf16.gmra.mxu0 %v271
        %v320 = vpop.f32.mrf.mxu0
        %v321 = vadd.f32 0.0, %v320
        %v322 = vpop.f32.mrf.mxu0
        %v323 = vadd.f32 0.0, %v322
        %v324 = vpop.f32.mrf.mxu0
        %v325 = vpop.f32.mrf.mxu0
        %326 = vdwg.mxu0
        %327 = vmatprep.subr.bf16.mxu0 0
        %328 = vmatpush1.bf16.msra.mxu0 0
        %329 = vmatprep.subr.bf16.mxu0 0
        %330 = vmatpush1.bf16.msra.mxu0 0
        %331 = vmatprep.subr.bf16.mxu0 0
        %332 = vmatpush1.bf16.msra.mxu0 0
        %333 = vmatprep.subr.bf16.mxu0 0
        %334 = vmatpush1.bf16.msra.mxu0 0
        %335 = vmatprep.subr.bf16.mxu0 0
        %336 = vmatpush1.bf16.msra.mxu0 0
        %337 = vmatprep.subr.bf16.mxu0 0
        %338 = vmatpush1.bf16.msra.mxu0 0
        %339 = vmatprep.subr.bf16.mxu0 0
        %340 = vmatpush1.bf16.msra.mxu0 0
        %341 = vmatprep.subr.bf16.mxu0 0
        %342 = vmatpush1.bf16.msra.mxu0 %v284
        %343 = vmatprep.subr.bf16.mxu0 0
        %344 = vmatpush2.bf16.msra.mxu0 0
        %345 = vmatprep.subr.bf16.mxu0 0
        %346 = vmatpush2.bf16.msra.mxu0 0
        %347 = vmatprep.subr.bf16.mxu0 0
        %348 = vmatpush2.bf16.msra.mxu0 0
        %349 = vmatprep.subr.bf16.mxu0 0
        %350 = vmatpush2.bf16.msra.mxu0 0
        %351 = vmatprep.subr.bf16.mxu0 0
        %352 = vmatpush2.bf16.msra.mxu0 0
        %353 = vmatprep.subr.bf16.mxu0 0
        %354 = vmatpush2.bf16.msra.mxu0 0
        %355 = vmatprep.subr.bf16.mxu0 0
        %356 = vmatpush2.bf16.msra.mxu0 0
        %357 = vmatprep.subr.bf16.mxu0 0
        %358 = vmatpush2.bf16.msra.mxu0 0
        %359 = vmatprep.mubr.bf16.mxu0 0
        %360 = vmatmul.mubr.bf16.gmra.mxu0 %v271
        %v361 = vpop.f32.mrf.mxu0
        %v362 = vadd.f32 0.0, %v361
        %v363 = vpop.f32.mrf.mxu0
        %v364 = vpop.f32.mrf.mxu0
        %v365 = vpop.f32.mrf.mxu0
        %366 = vdwg.mxu0
        %v368 = vsel %vm269, %v240, 0
        %v371 = vand.u32 %v251, %v276
        %v374 = vand.u32 %v259, %v276
        %v377 = vand.u32 %v258, %v276
        %379 = vmatprep.subr.bf16.mxu0 0
        %380 = vmatpush1.bf16.msra.mxu0 0
        %381 = vmatprep.subr.bf16.mxu0 0
        %382 = vmatpush1.bf16.msra.mxu0 0
        %383 = vmatprep.subr.bf16.mxu0 0
        %384 = vmatpush1.bf16.msra.mxu0 0
        %385 = vmatprep.subr.bf16.mxu0 0
        %386 = vmatpush1.bf16.msra.mxu0 0
        %387 = vmatprep.subr.bf16.mxu0 0
        %388 = vmatpush1.bf16.msra.mxu0 0
        %389 = vmatprep.subr.bf16.mxu0 0
        %390 = vmatpush1.bf16.msra.mxu0 0
        %391 = vmatprep.subr.bf16.mxu0 0
        %392 = vmatpush1.bf16.msra.mxu0 0
        %393 = vmatprep.subr.bf16.mxu0 %v374
        %394 = vmatpush1.bf16.msra.mxu0 %v371
        %395 = vmatprep.subr.bf16.mxu0 0
        %396 = vmatpush2.bf16.msra.mxu0 0
        %397 = vmatprep.subr.bf16.mxu0 0
        %398 = vmatpush2.bf16.msra.mxu0 0
        %399 = vmatprep.subr.bf16.mxu0 0
        %400 = vmatpush2.bf16.msra.mxu0 0
        %401 = vmatprep.subr.bf16.mxu0 0
        %402 = vmatpush2.bf16.msra.mxu0 0
        %403 = vmatprep.subr.bf16.mxu0 0
        %404 = vmatpush2.bf16.msra.mxu0 0
        %405 = vmatprep.subr.bf16.mxu0 0
        %406 = vmatpush2.bf16.msra.mxu0 0
        %407 = vmatprep.subr.bf16.mxu0 0
        %408 = vmatpush2.bf16.msra.mxu0 0
        %409 = vmatprep.subr.bf16.mxu0 0
        %410 = vmatpush2.bf16.msra.mxu0 0
        %411 = vmatprep.mubr.bf16.mxu0 0
        %412 = vmatmul.mubr.bf16.gmra.mxu0 %v368
        %v413 = vpop.f32.mrf.mxu0
        %v414 = vadd.f32 %v321, %v413
        %v415 = vpop.f32.mrf.mxu0
        %v416 = vadd.f32 %v323, %v415
        %v417 = vpop.f32.mrf.mxu0
        %v418 = vpop.f32.mrf.mxu0
        %419 = vdwg.mxu0
        %420 = vmatprep.subr.bf16.mxu0 0
        %421 = vmatpush1.bf16.msra.mxu0 0
        %422 = vmatprep.subr.bf16.mxu0 0
        %423 = vmatpush1.bf16.msra.mxu0 0
        %424 = vmatprep.subr.bf16.mxu0 0
        %425 = vmatpush1.bf16.msra.mxu0 0
        %426 = vmatprep.subr.bf16.mxu0 0
        %427 = vmatpush1.bf16.msra.mxu0 0
        %428 = vmatprep.subr.bf16.mxu0 0
        %429 = vmatpush1.bf16.msra.mxu0 0
        %430 = vmatprep.subr.bf16.mxu0 0
        %431 = vmatpush1.bf16.msra.mxu0 0
        %432 = vmatprep.subr.bf16.mxu0 0
        %433 = vmatpush1.bf16.msra.mxu0 0
        %434 = vmatprep.subr.bf16.mxu0 0
        %435 = vmatpush1.bf16.msra.mxu0 %v377
        %436 = vmatprep.subr.bf16.mxu0 0
        %437 = vmatpush2.bf16.msra.mxu0 0
        %438 = vmatprep.subr.bf16.mxu0 0
        %439 = vmatpush2.bf16.msra.mxu0 0
        %440 = vmatprep.subr.bf16.mxu0 0
        %441 = vmatpush2.bf16.msra.mxu0 0
        %442 = vmatprep.subr.bf16.mxu0 0
        %443 = vmatpush2.bf16.msra.mxu0 0
        %444 = vmatprep.subr.bf16.mxu0 0
        %445 = vmatpush2.bf16.msra.mxu0 0
        %446 = vmatprep.subr.bf16.mxu0 0
        %447 = vmatpush2.bf16.msra.mxu0 0
        %448 = vmatprep.subr.bf16.mxu0 0
        %449 = vmatpush2.bf16.msra.mxu0 0
        %450 = vmatprep.subr.bf16.mxu0 0
        %451 = vmatpush2.bf16.msra.mxu0 0
        %452 = vmatprep.mubr.bf16.mxu0 0
        %453 = vmatmul.mubr.bf16.gmra.mxu0 %v368
        %v454 = vpop.f32.mrf.mxu0
        %v455 = vadd.f32 %v362, %v454
        %v456 = vpop.f32.mrf.mxu0
        %v457 = vpop.f32.mrf.mxu0
        %v458 = vpop.f32.mrf.mxu0
        %459 = vdwg.mxu0
        %s460 = scalar_lea.vmem [#allocation2], 8
        %v461 = vld [vmem:[%s460] sm:$0xf]
        %462 = vrot.lane.b32.xlu0 %v251, 126
        %v463 = vpop.permute.xlu0 %462
        %464 = vrot.lane.b32.xlu0 %v259, 126
        %v465 = vpop.permute.xlu0 %464
        %466 = vrot.lane.b32.xlu0 %v258, 126
        %v467 = vpop.permute.xlu0 %466
        %vm468 = vcmask 1031168
        %v469 = vsel %vm468, %v463, %v465
        %v470 = vsel %vm468, %v465, %v467
        %v472 = vsel %vm269, %v461, 0
        %v475 = vand.u32 %v469, %v276
        %v478 = vand.u32 %v470, %v276
        %v481 = vand.u32 %v467, %v276
        %483 = vmatprep.subr.bf16.mxu0 0
        %484 = vmatpush1.bf16.msra.mxu0 0
        %485 = vmatprep.subr.bf16.mxu0 0
        %486 = vmatpush1.bf16.msra.mxu0 0
        %487 = vmatprep.subr.bf16.mxu0 0
        %488 = vmatpush1.bf16.msra.mxu0 0
        %489 = vmatprep.subr.bf16.mxu0 0
        %490 = vmatpush1.bf16.msra.mxu0 0
        %491 = vmatprep.subr.bf16.mxu0 0
        %492 = vmatpush1.bf16.msra.mxu0 0
        %493 = vmatprep.subr.bf16.mxu0 0
        %494 = vmatpush1.bf16.msra.mxu0 0
        %495 = vmatprep.subr.bf16.mxu0 0
        %496 = vmatpush1.bf16.msra.mxu0 0
        %497 = vmatprep.subr.bf16.mxu0 %v478
        %498 = vmatpush1.bf16.msra.mxu0 %v475
        %499 = vmatprep.subr.bf16.mxu0 0
        %500 = vmatpush2.bf16.msra.mxu0 0
        %501 = vmatprep.subr.bf16.mxu0 0
        %502 = vmatpush2.bf16.msra.mxu0 0
        %503 = vmatprep.subr.bf16.mxu0 0
        %504 = vmatpush2.bf16.msra.mxu0 0
        %505 = vmatprep.subr.bf16.mxu0 0
        %506 = vmatpush2.bf16.msra.mxu0 0
        %507 = vmatprep.subr.bf16.mxu0 0
        %508 = vmatpush2.bf16.msra.mxu0 0
        %509 = vmatprep.subr.bf16.mxu0 0
        %510 = vmatpush2.bf16.msra.mxu0 0
        %511 = vmatprep.subr.bf16.mxu0 0
        %512 = vmatpush2.bf16.msra.mxu0 0
        %513 = vmatprep.subr.bf16.mxu0 0
        %514 = vmatpush2.bf16.msra.mxu0 0
        %515 = vmatprep.mubr.bf16.mxu0 0
        %516 = vmatmul.mubr.bf16.gmra.mxu0 %v472
        %v517 = vpop.f32.mrf.mxu0
        %v518 = vadd.f32 0.0, %v517
        %v519 = vpop.f32.mrf.mxu0
        %v520 = vadd.f32 0.0, %v519
        %v521 = vpop.f32.mrf.mxu0
        %v522 = vpop.f32.mrf.mxu0
        %523 = vdwg.mxu0
        %524 = vmatprep.subr.bf16.mxu0 0
        %525 = vmatpush1.bf16.msra.mxu0 0
        %526 = vmatprep.subr.bf16.mxu0 0
        %527 = vmatpush1.bf16.msra.mxu0 0
        %528 = vmatprep.subr.bf16.mxu0 0
        %529 = vmatpush1.bf16.msra.mxu0 0
        %530 = vmatprep.subr.bf16.mxu0 0
        %531 = vmatpush1.bf16.msra.mxu0 0
        %532 = vmatprep.subr.bf16.mxu0 0
        %533 = vmatpush1.bf16.msra.mxu0 0
        %534 = vmatprep.subr.bf16.mxu0 0
        %535 = vmatpush1.bf16.msra.mxu0 0
        %536 = vmatprep.subr.bf16.mxu0 0
        %537 = vmatpush1.bf16.msra.mxu0 0
        %538 = vmatprep.subr.bf16.mxu0 0
        %539 = vmatpush1.bf16.msra.mxu0 %v481
        %540 = vmatprep.subr.bf16.mxu0 0
        %541 = vmatpush2.bf16.msra.mxu0 0
        %542 = vmatprep.subr.bf16.mxu0 0
        %543 = vmatpush2.bf16.msra.mxu0 0
        %544 = vmatprep.subr.bf16.mxu0 0
        %545 = vmatpush2.bf16.msra.mxu0 0
        %546 = vmatprep.subr.bf16.mxu0 0
        %547 = vmatpush2.bf16.msra.mxu0 0
        %548 = vmatprep.subr.bf16.mxu0 0
        %549 = vmatpush2.bf16.msra.mxu0 0
        %550 = vmatprep.subr.bf16.mxu0 0
        %551 = vmatpush2.bf16.msra.mxu0 0
        %552 = vmatprep.subr.bf16.mxu0 0
        %553 = vmatpush2.bf16.msra.mxu0 0
        %554 = vmatprep.subr.bf16.mxu0 0
        %555 = vmatpush2.bf16.msra.mxu0 0
        %556 = vmatprep.mubr.bf16.mxu0 0
        %557 = vmatmul.mubr.bf16.gmra.mxu0 %v472
        %v558 = vpop.f32.mrf.mxu0
        %v559 = vadd.f32 0.0, %v558
        %v560 = vpop.f32.mrf.mxu0
        %v561 = vpop.f32.mrf.mxu0
        %v562 = vpop.f32.mrf.mxu0
        %563 = vdwg.mxu0
        %v564 = vadd.f32 %v414, %v518
        %v565 = vadd.f32 %v416, %v520
        %v566 = vadd.f32 %v455, %v559
        %s567 = scalar_lea.vmem [#allocation2], 12
        %v568 = vld [vmem:[%s567] sm:$0xf]
        %569 = vrot.lane.b32.xlu0 %v251, 110
        %v570 = vpop.permute.xlu0 %569
        %571 = vrot.lane.b32.xlu0 %v259, 110
        %v572 = vpop.permute.xlu0 %571
        %573 = vrot.lane.b32.xlu0 %v258, 110
        %v574 = vpop.permute.xlu0 %573
        %vm575 = vcmask 900096
        %v576 = vsel %vm575, %v570, %v572
        %v577 = vsel %vm575, %v572, %v574
        %v579 = vsel %vm269, %v568, 0
        %v582 = vand.u32 %v576, %v276
        %v585 = vand.u32 %v577, %v276
        %v588 = vand.u32 %v574, %v276
        %590 = vmatprep.subr.bf16.mxu0 0
        %591 = vmatpush1.bf16.msra.mxu0 0
        %592 = vmatprep.subr.bf16.mxu0 0
        %593 = vmatpush1.bf16.msra.mxu0 0
        %594 = vmatprep.subr.bf16.mxu0 0
        %595 = vmatpush1.bf16.msra.mxu0 0
        %596 = vmatprep.subr.bf16.mxu0 0
        %597 = vmatpush1.bf16.msra.mxu0 0
        %598 = vmatprep.subr.bf16.mxu0 0
        %599 = vmatpush1.bf16.msra.mxu0 0
        %600 = vmatprep.subr.bf16.mxu0 0
        %601 = vmatpush1.bf16.msra.mxu0 0
        %602 = vmatprep.subr.bf16.mxu0 0
        %603 = vmatpush1.bf16.msra.mxu0 0
        %604 = vmatprep.subr.bf16.mxu0 %v585
        %605 = vmatpush1.bf16.msra.mxu0 %v582
        %606 = vmatprep.subr.bf16.mxu0 0
        %607 = vmatpush2.bf16.msra.mxu0 0
        %608 = vmatprep.subr.bf16.mxu0 0
        %609 = vmatpush2.bf16.msra.mxu0 0
        %610 = vmatprep.subr.bf16.mxu0 0
        %611 = vmatpush2.bf16.msra.mxu0 0
        %612 = vmatprep.subr.bf16.mxu0 0
        %613 = vmatpush2.bf16.msra.mxu0 0
        %614 = vmatprep.subr.bf16.mxu0 0
        %615 = vmatpush2.bf16.msra.mxu0 0
        %616 = vmatprep.subr.bf16.mxu0 0
        %617 = vmatpush2.bf16.msra.mxu0 0
        %618 = vmatprep.subr.bf16.mxu0 0
        %619 = vmatpush2.bf16.msra.mxu0 0
        %620 = vmatprep.subr.bf16.mxu0 0
        %621 = vmatpush2.bf16.msra.mxu0 0
        %622 = vmatprep.mubr.bf16.mxu0 0
        %623 = vmatmul.mubr.bf16.gmra.mxu0 %v579
        %v624 = vpop.f32.mrf.mxu0
        %v625 = vadd.f32 0.0, %v624
        %v626 = vpop.f32.mrf.mxu0
        %v627 = vadd.f32 0.0, %v626
        %v628 = vpop.f32.mrf.mxu0
        %v629 = vpop.f32.mrf.mxu0
        %630 = vdwg.mxu0
        %631 = vmatprep.subr.bf16.mxu0 0
        %632 = vmatpush1.bf16.msra.mxu0 0
        %633 = vmatprep.subr.bf16.mxu0 0
        %634 = vmatpush1.bf16.msra.mxu0 0
        %635 = vmatprep.subr.bf16.mxu0 0
        %636 = vmatpush1.bf16.msra.mxu0 0
        %637 = vmatprep.subr.bf16.mxu0 0
        %638 = vmatpush1.bf16.msra.mxu0 0
        %639 = vmatprep.subr.bf16.mxu0 0
        %640 = vmatpush1.bf16.msra.mxu0 0
        %641 = vmatprep.subr.bf16.mxu0 0
        %642 = vmatpush1.bf16.msra.mxu0 0
        %643 = vmatprep.subr.bf16.mxu0 0
        %644 = vmatpush1.bf16.msra.mxu0 0
        %645 = vmatprep.subr.bf16.mxu0 0
        %646 = vmatpush1.bf16.msra.mxu0 %v588
        %647 = vmatprep.subr.bf16.mxu0 0
        %648 = vmatpush2.bf16.msra.mxu0 0
        %649 = vmatprep.subr.bf16.mxu0 0
        %650 = vmatpush2.bf16.msra.mxu0 0
        %651 = vmatprep.subr.bf16.mxu0 0
        %652 = vmatpush2.bf16.msra.mxu0 0
        %653 = vmatprep.subr.bf16.mxu0 0
        %654 = vmatpush2.bf16.msra.mxu0 0
        %655 = vmatprep.subr.bf16.mxu0 0
        %656 = vmatpush2.bf16.msra.mxu0 0
        %657 = vmatprep.subr.bf16.mxu0 0
        %658 = vmatpush2.bf16.msra.mxu0 0
        %659 = vmatprep.subr.bf16.mxu0 0
        %660 = vmatpush2.bf16.msra.mxu0 0
        %661 = vmatprep.subr.bf16.mxu0 0
        %662 = vmatpush2.bf16.msra.mxu0 0
        %663 = vmatprep.mubr.bf16.mxu0 0
        %664 = vmatmul.mubr.bf16.gmra.mxu0 %v579
        %v665 = vpop.f32.mrf.mxu0
        %v666 = vadd.f32 0.0, %v665
        %v667 = vpop.f32.mrf.mxu0
        %v668 = vpop.f32.mrf.mxu0
        %v669 = vpop.f32.mrf.mxu0
        %670 = vdwg.mxu0
        %v671 = vadd.f32 %v564, %v625
        %v672 = vadd.f32 %v565, %v627
        %v673 = vadd.f32 %v566, %v666
        %s674 = scalar_lea.vmem [#allocation2], 16
        %v675 = vld [vmem:[%s674] sm:$0xf]
        %676 = vrot.lane.b32.xlu0 %v251, 109
        %v677 = vpop.permute.xlu0 %676
        %678 = vrot.lane.b32.xlu0 %v259, 109
        %v679 = vpop.permute.xlu0 %678
        %680 = vrot.lane.b32.xlu0 %v258, 109
        %v681 = vpop.permute.xlu0 %680
        %vm682 = vcmask 891904
        %v683 = vsel %vm682, %v677, %v679
        %v684 = vsel %vm682, %v679, %v681
        %v686 = vsel %vm269, %v675, 0
        %v689 = vand.u32 %v683, %v276
        %v692 = vand.u32 %v684, %v276
        %v695 = vand.u32 %v681, %v276
        %697 = vmatprep.subr.bf16.mxu0 0
        %698 = vmatpush1.bf16.msra.mxu0 0
        %699 = vmatprep.subr.bf16.mxu0 0
        %700 = vmatpush1.bf16.msra.mxu0 0
        %701 = vmatprep.subr.bf16.mxu0 0
        %702 = vmatpush1.bf16.msra.mxu0 0
        %703 = vmatprep.subr.bf16.mxu0 0
        %704 = vmatpush1.bf16.msra.mxu0 0
        %705 = vmatprep.subr.bf16.mxu0 0
        %706 = vmatpush1.bf16.msra.mxu0 0
        %707 = vmatprep.subr.bf16.mxu0 0
        %708 = vmatpush1.bf16.msra.mxu0 0
        %709 = vmatprep.subr.bf16.mxu0 0
        %710 = vmatpush1.bf16.msra.mxu0 0
        %711 = vmatprep.subr.bf16.mxu0 %v692
        %712 = vmatpush1.bf16.msra.mxu0 %v689
        %713 = vmatprep.subr.bf16.mxu0 0
        %714 = vmatpush2.bf16.msra.mxu0 0
        %715 = vmatprep.subr.bf16.mxu0 0
        %716 = vmatpush2.bf16.msra.mxu0 0
        %717 = vmatprep.subr.bf16.mxu0 0
        %718 = vmatpush2.bf16.msra.mxu0 0
        %719 = vmatprep.subr.bf16.mxu0 0
        %720 = vmatpush2.bf16.msra.mxu0 0
        %721 = vmatprep.subr.bf16.mxu0 0
        %722 = vmatpush2.bf16.msra.mxu0 0
        %723 = vmatprep.subr.bf16.mxu0 0
        %724 = vmatpush2.bf16.msra.mxu0 0
        %725 = vmatprep.subr.bf16.mxu0 0
        %726 = vmatpush2.bf16.msra.mxu0 0
        %727 = vmatprep.subr.bf16.mxu0 0
        %728 = vmatpush2.bf16.msra.mxu0 0
        %729 = vmatprep.mubr.bf16.mxu0 0
        %730 = vmatmul.mubr.bf16.gmra.mxu0 %v686
        %v731 = vpop.f32.mrf.mxu0
        %v732 = vadd.f32 0.0, %v731
        %v733 = vpop.f32.mrf.mxu0
        %v734 = vadd.f32 0.0, %v733
        %v735 = vpop.f32.mrf.mxu0
        %v736 = vpop.f32.mrf.mxu0
        %737 = vdwg.mxu0
        %738 = vmatprep.subr.bf16.mxu0 0
        %739 = vmatpush1.bf16.msra.mxu0 0
        %740 = vmatprep.subr.bf16.mxu0 0
        %741 = vmatpush1.bf16.msra.mxu0 0
        %742 = vmatprep.subr.bf16.mxu0 0
        %743 = vmatpush1.bf16.msra.mxu0 0
        %744 = vmatprep.subr.bf16.mxu0 0
        %745 = vmatpush1.bf16.msra.mxu0 0
        %746 = vmatprep.subr.bf16.mxu0 0
        %747 = vmatpush1.bf16.msra.mxu0 0
        %748 = vmatprep.subr.bf16.mxu0 0
        %749 = vmatpush1.bf16.msra.mxu0 0
        %750 = vmatprep.subr.bf16.mxu0 0
        %751 = vmatpush1.bf16.msra.mxu0 0
        %752 = vmatprep.subr.bf16.mxu0 0
        %753 = vmatpush1.bf16.msra.mxu0 %v695
        %754 = vmatprep.subr.bf16.mxu0 0
        %755 = vmatpush2.bf16.msra.mxu0 0
        %756 = vmatprep.subr.bf16.mxu0 0
        %757 = vmatpush2.bf16.msra.mxu0 0
        %758 = vmatprep.subr.bf16.mxu0 0
        %759 = vmatpush2.bf16.msra.mxu0 0
        %760 = vmatprep.subr.bf16.mxu0 0
        %761 = vmatpush2.bf16.msra.mxu0 0
        %762 = vmatprep.subr.bf16.mxu0 0
        %763 = vmatpush2.bf16.msra.mxu0 0
        %764 = vmatprep.subr.bf16.mxu0 0
        %765 = vmatpush2.bf16.msra.mxu0 0
        %766 = vmatprep.subr.bf16.mxu0 0
        %767 = vmatpush2.bf16.msra.mxu0 0
        %768 = vmatprep.subr.bf16.mxu0 0
        %769 = vmatpush2.bf16.msra.mxu0 0
        %770 = vmatprep.mubr.bf16.mxu0 0
        %771 = vmatmul.mubr.bf16.gmra.mxu0 %v686
        %v772 = vpop.f32.mrf.mxu0
        %v773 = vadd.f32 0.0, %v772
        %v774 = vpop.f32.mrf.mxu0
        %v775 = vpop.f32.mrf.mxu0
        %v776 = vpop.f32.mrf.mxu0
        %777 = vdwg.mxu0
        %v778 = vadd.f32 %v671, %v732
        %v779 = vadd.f32 %v672, %v734
        %v780 = vadd.f32 %v673, %v773
        %s781 = scalar_lea.vmem [#allocation2], 20
        %v782 = vld [vmem:[%s781] sm:$0xf]
        %783 = vrot.lane.b32.xlu0 %v251, 108
        %v784 = vpop.permute.xlu0 %783
        %785 = vrot.lane.b32.xlu0 %v259, 108
        %v786 = vpop.permute.xlu0 %785
        %787 = vrot.lane.b32.xlu0 %v258, 108
        %v788 = vpop.permute.xlu0 %787
        %vm789 = vcmask 883712
        %v790 = vsel %vm789, %v784, %v786
        %v791 = vsel %vm789, %v786, %v788
        %v793 = vsel %vm269, %v782, 0
        %v796 = vand.u32 %v790, %v276
        %v799 = vand.u32 %v791, %v276
        %v802 = vand.u32 %v788, %v276
        %804 = vmatprep.subr.bf16.mxu0 0
        %805 = vmatpush1.bf16.msra.mxu0 0
        %806 = vmatprep.subr.bf16.mxu0 0
        %807 = vmatpush1.bf16.msra.mxu0 0
        %808 = vmatprep.subr.bf16.mxu0 0
        %809 = vmatpush1.bf16.msra.mxu0 0
        %810 = vmatprep.subr.bf16.mxu0 0
        %811 = vmatpush1.bf16.msra.mxu0 0
        %812 = vmatprep.subr.bf16.mxu0 0
        %813 = vmatpush1.bf16.msra.mxu0 0
        %814 = vmatprep.subr.bf16.mxu0 0
        %815 = vmatpush1.bf16.msra.mxu0 0
        %816 = vmatprep.subr.bf16.mxu0 0
        %817 = vmatpush1.bf16.msra.mxu0 0
        %818 = vmatprep.subr.bf16.mxu0 %v799
        %819 = vmatpush1.bf16.msra.mxu0 %v796
        %820 = vmatprep.subr.bf16.mxu0 0
        %821 = vmatpush2.bf16.msra.mxu0 0
        %822 = vmatprep.subr.bf16.mxu0 0
        %823 = vmatpush2.bf16.msra.mxu0 0
        %824 = vmatprep.subr.bf16.mxu0 0
        %825 = vmatpush2.bf16.msra.mxu0 0
        %826 = vmatprep.subr.bf16.mxu0 0
        %827 = vmatpush2.bf16.msra.mxu0 0
        %828 = vmatprep.subr.bf16.mxu0 0
        %829 = vmatpush2.bf16.msra.mxu0 0
        %830 = vmatprep.subr.bf16.mxu0 0
        %831 = vmatpush2.bf16.msra.mxu0 0
        %832 = vmatprep.subr.bf16.mxu0 0
        %833 = vmatpush2.bf16.msra.mxu0 0
        %834 = vmatprep.subr.bf16.mxu0 0
        %835 = vmatpush2.bf16.msra.mxu0 0
        %836 = vmatprep.mubr.bf16.mxu0 0
        %837 = vmatmul.mubr.bf16.gmra.mxu0 %v793
        %v838 = vpop.f32.mrf.mxu0
        %v839 = vadd.f32 0.0, %v838
        %v840 = vpop.f32.mrf.mxu0
        %v841 = vadd.f32 0.0, %v840
        %v842 = vpop.f32.mrf.mxu0
        %v843 = vpop.f32.mrf.mxu0
        %844 = vdwg.mxu0
        %845 = vmatprep.subr.bf16.mxu0 0
        %846 = vmatpush1.bf16.msra.mxu0 0
        %847 = vmatprep.subr.bf16.mxu0 0
        %848 = vmatpush1.bf16.msra.mxu0 0
        %849 = vmatprep.subr.bf16.mxu0 0
        %850 = vmatpush1.bf16.msra.mxu0 0
        %851 = vmatprep.subr.bf16.mxu0 0
        %852 = vmatpush1.bf16.msra.mxu0 0
        %853 = vmatprep.subr.bf16.mxu0 0
        %854 = vmatpush1.bf16.msra.mxu0 0
        %855 = vmatprep.subr.bf16.mxu0 0
        %856 = vmatpush1.bf16.msra.mxu0 0
        %857 = vmatprep.subr.bf16.mxu0 0
        %858 = vmatpush1.bf16.msra.mxu0 0
        %859 = vmatprep.subr.bf16.mxu0 0
        %860 = vmatpush1.bf16.msra.mxu0 %v802
        %861 = vmatprep.subr.bf16.mxu0 0
        %862 = vmatpush2.bf16.msra.mxu0 0
        %863 = vmatprep.subr.bf16.mxu0 0
        %864 = vmatpush2.bf16.msra.mxu0 0
        %865 = vmatprep.subr.bf16.mxu0 0
        %866 = vmatpush2.bf16.msra.mxu0 0
        %867 = vmatprep.subr.bf16.mxu0 0
        %868 = vmatpush2.bf16.msra.mxu0 0
        %869 = vmatprep.subr.bf16.mxu0 0
        %870 = vmatpush2.bf16.msra.mxu0 0
        %871 = vmatprep.subr.bf16.mxu0 0
        %872 = vmatpush2.bf16.msra.mxu0 0
        %873 = vmatprep.subr.bf16.mxu0 0
        %874 = vmatpush2.bf16.msra.mxu0 0
        %875 = vmatprep.subr.bf16.mxu0 0
        %876 = vmatpush2.bf16.msra.mxu0 0
        %877 = vmatprep.mubr.bf16.mxu0 0
        %878 = vmatmul.mubr.bf16.gmra.mxu0 %v793
        %v879 = vpop.f32.mrf.mxu0
        %v880 = vadd.f32 0.0, %v879
        %v881 = vpop.f32.mrf.mxu0
        %v882 = vpop.f32.mrf.mxu0
        %v883 = vpop.f32.mrf.mxu0
        %884 = vdwg.mxu0
        %v885 = vadd.f32 %v778, %v839
        %v886 = vadd.f32 %v779, %v841
        %v887 = vadd.f32 %v780, %v880
        %s888 = scalar_lea.vmem [#allocation2], 24
        %v889 = vld [vmem:[%s888] sm:$0xf]
        %890 = vrot.lane.b32.xlu0 %v251, 92
        %v891 = vpop.permute.xlu0 %890
        %892 = vrot.lane.b32.xlu0 %v259, 92
        %v893 = vpop.permute.xlu0 %892
        %894 = vrot.lane.b32.xlu0 %v258, 92
        %v895 = vpop.permute.xlu0 %894
        %vm896 = vcmask 752640
        %v897 = vsel %vm896, %v891, %v893
        %v898 = vsel %vm896, %v893, %v895
        %v900 = vsel %vm269, %v889, 0
        %v903 = vand.u32 %v897, %v276
        %v906 = vand.u32 %v898, %v276
        %v909 = vand.u32 %v895, %v276
        %911 = vmatprep.subr.bf16.mxu0 0
        %912 = vmatpush1.bf16.msra.mxu0 0
        %913 = vmatprep.subr.bf16.mxu0 0
        %914 = vmatpush1.bf16.msra.mxu0 0
        %915 = vmatprep.subr.bf16.mxu0 0
        %916 = vmatpush1.bf16.msra.mxu0 0
        %917 = vmatprep.subr.bf16.mxu0 0
        %918 = vmatpush1.bf16.msra.mxu0 0
        %919 = vmatprep.subr.bf16.mxu0 0
        %920 = vmatpush1.bf16.msra.mxu0 0
        %921 = vmatprep.subr.bf16.mxu0 0
        %922 = vmatpush1.bf16.msra.mxu0 0
        %923 = vmatprep.subr.bf16.mxu0 0
        %924 = vmatpush1.bf16.msra.mxu0 0
        %925 = vmatprep.subr.bf16.mxu0 %v906
        %926 = vmatpush1.bf16.msra.mxu0 %v903
        %927 = vmatprep.subr.bf16.mxu0 0
        %928 = vmatpush2.bf16.msra.mxu0 0
        %929 = vmatprep.subr.bf16.mxu0 0
        %930 = vmatpush2.bf16.msra.mxu0 0
        %931 = vmatprep.subr.bf16.mxu0 0
        %932 = vmatpush2.bf16.msra.mxu0 0
        %933 = vmatprep.subr.bf16.mxu0 0
        %934 = vmatpush2.bf16.msra.mxu0 0
        %935 = vmatprep.subr.bf16.mxu0 0
        %936 = vmatpush2.bf16.msra.mxu0 0
        %937 = vmatprep.subr.bf16.mxu0 0
        %938 = vmatpush2.bf16.msra.mxu0 0
        %939 = vmatprep.subr.bf16.mxu0 0
        %940 = vmatpush2.bf16.msra.mxu0 0
        %941 = vmatprep.subr.bf16.mxu0 0
        %942 = vmatpush2.bf16.msra.mxu0 0
        %943 = vmatprep.mubr.bf16.mxu0 0
        %944 = vmatmul.mubr.bf16.gmra.mxu0 %v900
        %v945 = vpop.f32.mrf.mxu0
        %v946 = vadd.f32 0.0, %v945
        %v947 = vpop.f32.mrf.mxu0
        %v948 = vadd.f32 0.0, %v947
        %v949 = vpop.f32.mrf.mxu0
        %v950 = vpop.f32.mrf.mxu0
        %951 = vdwg.mxu0
        %952 = vmatprep.subr.bf16.mxu0 0
        %953 = vmatpush1.bf16.msra.mxu0 0
        %954 = vmatprep.subr.bf16.mxu0 0
        %955 = vmatpush1.bf16.msra.mxu0 0
        %956 = vmatprep.subr.bf16.mxu0 0
        %957 = vmatpush1.bf16.msra.mxu0 0
        %958 = vmatprep.subr.bf16.mxu0 0
        %959 = vmatpush1.bf16.msra.mxu0 0
        %960 = vmatprep.subr.bf16.mxu0 0
        %961 = vmatpush1.bf16.msra.mxu0 0
        %962 = vmatprep.subr.bf16.mxu0 0
        %963 = vmatpush1.bf16.msra.mxu0 0
        %964 = vmatprep.subr.bf16.mxu0 0
        %965 = vmatpush1.bf16.msra.mxu0 0
        %966 = vmatprep.subr.bf16.mxu0 0
        %967 = vmatpush1.bf16.msra.mxu0 %v909
        %968 = vmatprep.subr.bf16.mxu0 0
        %969 = vmatpush2.bf16.msra.mxu0 0
        %970 = vmatprep.subr.bf16.mxu0 0
        %971 = vmatpush2.bf16.msra.mxu0 0
        %972 = vmatprep.subr.bf16.mxu0 0
        %973 = vmatpush2.bf16.msra.mxu0 0
        %974 = vmatprep.subr.bf16.mxu0 0
        %975 = vmatpush2.bf16.msra.mxu0 0
        %976 = vmatprep.subr.bf16.mxu0 0
        %977 = vmatpush2.bf16.msra.mxu0 0
        %978 = vmatprep.subr.bf16.mxu0 0
        %979 = vmatpush2.bf16.msra.mxu0 0
        %980 = vmatprep.subr.bf16.mxu0 0
        %981 = vmatpush2.bf16.msra.mxu0 0
        %982 = vmatprep.subr.bf16.mxu0 0
        %983 = vmatpush2.bf16.msra.mxu0 0
        %984 = vmatprep.mubr.bf16.mxu0 0
        %985 = vmatmul.mubr.bf16.gmra.mxu0 %v900
        %v986 = vpop.f32.mrf.mxu0
        %v987 = vadd.f32 0.0, %v986
        %v988 = vpop.f32.mrf.mxu0
        %v989 = vpop.f32.mrf.mxu0
        %v990 = vpop.f32.mrf.mxu0
        %991 = vdwg.mxu0
        %v992 = vadd.f32 %v885, %v946
        %v993 = vadd.f32 %v886, %v948
        %v994 = vadd.f32 %v887, %v987
        %s995 = scalar_lea.vmem [#allocation2], 28
        %v996 = vld [vmem:[%s995] sm:$0xf]
        %997 = vrot.lane.b32.xlu0 %v251, 91
        %v998 = vpop.permute.xlu0 %997
        %999 = vrot.lane.b32.xlu0 %v259, 91
        %v1000 = vpop.permute.xlu0 %999
        %1001 = vrot.lane.b32.xlu0 %v258, 91
        %v1002 = vpop.permute.xlu0 %1001
        %vm1003 = vcmask 744448
        %v1004 = vsel %vm1003, %v998, %v1000
        %v1005 = vsel %vm1003, %v1000, %v1002
        %v1007 = vsel %vm269, %v996, 0
        %v1010 = vand.u32 %v1004, %v276
        %v1013 = vand.u32 %v1005, %v276
        %v1016 = vand.u32 %v1002, %v276
        %1018 = vmatprep.subr.bf16.mxu0 0
        %1019 = vmatpush1.bf16.msra.mxu0 0
        %1020 = vmatprep.subr.bf16.mxu0 0
        %1021 = vmatpush1.bf16.msra.mxu0 0
        %1022 = vmatprep.subr.bf16.mxu0 0
        %1023 = vmatpush1.bf16.msra.mxu0 0
        %1024 = vmatprep.subr.bf16.mxu0 0
        %1025 = vmatpush1.bf16.msra.mxu0 0
        %1026 = vmatprep.subr.bf16.mxu0 0
        %1027 = vmatpush1.bf16.msra.mxu0 0
        %1028 = vmatprep.subr.bf16.mxu0 0
        %1029 = vmatpush1.bf16.msra.mxu0 0
        %1030 = vmatprep.subr.bf16.mxu0 0
        %1031 = vmatpush1.bf16.msra.mxu0 0
        %1032 = vmatprep.subr.bf16.mxu0 %v1013
        %1033 = vmatpush1.bf16.msra.mxu0 %v1010
        %1034 = vmatprep.subr.bf16.mxu0 0
        %1035 = vmatpush2.bf16.msra.mxu0 0
        %1036 = vmatprep.subr.bf16.mxu0 0
        %1037 = vmatpush2.bf16.msra.mxu0 0
        %1038 = vmatprep.subr.bf16.mxu0 0
        %1039 = vmatpush2.bf16.msra.mxu0 0
        %1040 = vmatprep.subr.bf16.mxu0 0
        %1041 = vmatpush2.bf16.msra.mxu0 0
        %1042 = vmatprep.subr.bf16.mxu0 0
        %1043 = vmatpush2.bf16.msra.mxu0 0
        %1044 = vmatprep.subr.bf16.mxu0 0
        %1045 = vmatpush2.bf16.msra.mxu0 0
        %1046 = vmatprep.subr.bf16.mxu0 0
        %1047 = vmatpush2.bf16.msra.mxu0 0
        %1048 = vmatprep.subr.bf16.mxu0 0
        %1049 = vmatpush2.bf16.msra.mxu0 0
        %1050 = vmatprep.mubr.bf16.mxu0 0
        %1051 = vmatmul.mubr.bf16.gmra.mxu0 %v1007
        %v1052 = vpop.f32.mrf.mxu0
        %v1053 = vadd.f32 0.0, %v1052
        %v1054 = vpop.f32.mrf.mxu0
        %v1055 = vadd.f32 0.0, %v1054
        %v1056 = vpop.f32.mrf.mxu0
        %v1057 = vpop.f32.mrf.mxu0
        %1058 = vdwg.mxu0
        %1059 = vmatprep.subr.bf16.mxu0 0
        %1060 = vmatpush1.bf16.msra.mxu0 0
        %1061 = vmatprep.subr.bf16.mxu0 0
        %1062 = vmatpush1.bf16.msra.mxu0 0
        %1063 = vmatprep.subr.bf16.mxu0 0
        %1064 = vmatpush1.bf16.msra.mxu0 0
        %1065 = vmatprep.subr.bf16.mxu0 0
        %1066 = vmatpush1.bf16.msra.mxu0 0
        %1067 = vmatprep.subr.bf16.mxu0 0
        %1068 = vmatpush1.bf16.msra.mxu0 0
        %1069 = vmatprep.subr.bf16.mxu0 0
        %1070 = vmatpush1.bf16.msra.mxu0 0
        %1071 = vmatprep.subr.bf16.mxu0 0
        %1072 = vmatpush1.bf16.msra.mxu0 0
        %1073 = vmatprep.subr.bf16.mxu0 0
        %1074 = vmatpush1.bf16.msra.mxu0 %v1016
        %1075 = vmatprep.subr.bf16.mxu0 0
        %1076 = vmatpush2.bf16.msra.mxu0 0
        %1077 = vmatprep.subr.bf16.mxu0 0
        %1078 = vmatpush2.bf16.msra.mxu0 0
        %1079 = vmatprep.subr.bf16.mxu0 0
        %1080 = vmatpush2.bf16.msra.mxu0 0
        %1081 = vmatprep.subr.bf16.mxu0 0
        %1082 = vmatpush2.bf16.msra.mxu0 0
        %1083 = vmatprep.subr.bf16.mxu0 0
        %1084 = vmatpush2.bf16.msra.mxu0 0
        %1085 = vmatprep.subr.bf16.mxu0 0
        %1086 = vmatpush2.bf16.msra.mxu0 0
        %1087 = vmatprep.subr.bf16.mxu0 0
        %1088 = vmatpush2.bf16.msra.mxu0 0
        %1089 = vmatprep.subr.bf16.mxu0 0
        %1090 = vmatpush2.bf16.msra.mxu0 0
        %1091 = vmatprep.mubr.bf16.mxu0 0
        %1092 = vmatmul.mubr.bf16.gmra.mxu0 %v1007
        %v1093 = vpop.f32.mrf.mxu0
        %v1094 = vadd.f32 0.0, %v1093
        %v1095 = vpop.f32.mrf.mxu0
        %v1096 = vpop.f32.mrf.mxu0
        %v1097 = vpop.f32.mrf.mxu0
        %1098 = vdwg.mxu0
        %v1099 = vadd.f32 %v992, %v1053
        %v1100 = vadd.f32 %v993, %v1055
        %v1101 = vadd.f32 %v994, %v1094
        %s1102 = scalar_lea.vmem [#allocation2], 32
        %v1103 = vld [vmem:[%s1102] sm:$0xf]
        %1104 = vrot.lane.b32.xlu0 %v251, 90
        %v1105 = vpop.permute.xlu0 %1104
        %1106 = vrot.lane.b32.xlu0 %v259, 90
        %v1107 = vpop.permute.xlu0 %1106
        %1108 = vrot.lane.b32.xlu0 %v258, 90
        %v1109 = vpop.permute.xlu0 %1108
        %vm1110 = vcmask 736256
        %v1111 = vsel %vm1110, %v1105, %v1107
        %v1112 = vsel %vm1110, %v1107, %v1109
        %v1114 = vsel %vm269, %v1103, 0
        %v1117 = vand.u32 %v1111, %v276
        %v1120 = vand.u32 %v1112, %v276
        %v1123 = vand.u32 %v1109, %v276
        %1125 = vmatprep.subr.bf16.mxu0 0
        %1126 = vmatpush1.bf16.msra.mxu0 0
        %1127 = vmatprep.subr.bf16.mxu0 0
        %1128 = vmatpush1.bf16.msra.mxu0 0
        %1129 = vmatprep.subr.bf16.mxu0 0
        %1130 = vmatpush1.bf16.msra.mxu0 0
        %1131 = vmatprep.subr.bf16.mxu0 0
        %1132 = vmatpush1.bf16.msra.mxu0 0
        %1133 = vmatprep.subr.bf16.mxu0 0
        %1134 = vmatpush1.bf16.msra.mxu0 0
        %1135 = vmatprep.subr.bf16.mxu0 0
        %1136 = vmatpush1.bf16.msra.mxu0 0
        %1137 = vmatprep.subr.bf16.mxu0 0
        %1138 = vmatpush1.bf16.msra.mxu0 0
        %1139 = vmatprep.subr.bf16.mxu0 %v1120
        %1140 = vmatpush1.bf16.msra.mxu0 %v1117
        %1141 = vmatprep.subr.bf16.mxu0 0
        %1142 = vmatpush2.bf16.msra.mxu0 0
        %1143 = vmatprep.subr.bf16.mxu0 0
        %1144 = vmatpush2.bf16.msra.mxu0 0
        %1145 = vmatprep.subr.bf16.mxu0 0
        %1146 = vmatpush2.bf16.msra.mxu0 0
        %1147 = vmatprep.subr.bf16.mxu0 0
        %1148 = vmatpush2.bf16.msra.mxu0 0
        %1149 = vmatprep.subr.bf16.mxu0 0
        %1150 = vmatpush2.bf16.msra.mxu0 0
        %1151 = vmatprep.subr.bf16.mxu0 0
        %1152 = vmatpush2.bf16.msra.mxu0 0
        %1153 = vmatprep.subr.bf16.mxu0 0
        %1154 = vmatpush2.bf16.msra.mxu0 0
        %1155 = vmatprep.subr.bf16.mxu0 0
        %1156 = vmatpush2.bf16.msra.mxu0 0
        %1157 = vmatprep.mubr.bf16.mxu0 0
        %1158 = vmatmul.mubr.bf16.gmra.mxu0 %v1114
        %v1159 = vpop.f32.mrf.mxu0
        %v1160 = vadd.f32 0.0, %v1159
        %v1161 = vpop.f32.mrf.mxu0
        %v1162 = vadd.f32 0.0, %v1161
        %v1163 = vpop.f32.mrf.mxu0
        %v1164 = vpop.f32.mrf.mxu0
        %1165 = vdwg.mxu0
        %1166 = vmatprep.subr.bf16.mxu0 0
        %1167 = vmatpush1.bf16.msra.mxu0 0
        %1168 = vmatprep.subr.bf16.mxu0 0
        %1169 = vmatpush1.bf16.msra.mxu0 0
        %1170 = vmatprep.subr.bf16.mxu0 0
        %1171 = vmatpush1.bf16.msra.mxu0 0
        %1172 = vmatprep.subr.bf16.mxu0 0
        %1173 = vmatpush1.bf16.msra.mxu0 0
        %1174 = vmatprep.subr.bf16.mxu0 0
        %1175 = vmatpush1.bf16.msra.mxu0 0
        %1176 = vmatprep.subr.bf16.mxu0 0
        %1177 = vmatpush1.bf16.msra.mxu0 0
        %1178 = vmatprep.subr.bf16.mxu0 0
        %1179 = vmatpush1.bf16.msra.mxu0 0
        %1180 = vmatprep.subr.bf16.mxu0 0
        %1181 = vmatpush1.bf16.msra.mxu0 %v1123
        %1182 = vmatprep.subr.bf16.mxu0 0
        %1183 = vmatpush2.bf16.msra.mxu0 0
        %1184 = vmatprep.subr.bf16.mxu0 0
        %1185 = vmatpush2.bf16.msra.mxu0 0
        %1186 = vmatprep.subr.bf16.mxu0 0
        %1187 = vmatpush2.bf16.msra.mxu0 0
        %1188 = vmatprep.subr.bf16.mxu0 0
        %1189 = vmatpush2.bf16.msra.mxu0 0
        %1190 = vmatprep.subr.bf16.mxu0 0
        %1191 = vmatpush2.bf16.msra.mxu0 0
        %1192 = vmatprep.subr.bf16.mxu0 0
        %1193 = vmatpush2.bf16.msra.mxu0 0
        %1194 = vmatprep.subr.bf16.mxu0 0
        %1195 = vmatpush2.bf16.msra.mxu0 0
        %1196 = vmatprep.subr.bf16.mxu0 0
        %1197 = vmatpush2.bf16.msra.mxu0 0
        %1198 = vmatprep.mubr.bf16.mxu0 0
        %1199 = vmatmul.mubr.bf16.gmra.mxu0 %v1114
        %v1200 = vpop.f32.mrf.mxu0
        %v1201 = vadd.f32 0.0, %v1200
        %v1202 = vpop.f32.mrf.mxu0
        %v1203 = vpop.f32.mrf.mxu0
        %v1204 = vpop.f32.mrf.mxu0
        %1205 = vdwg.mxu0
        %v1206 = vadd.f32 %v1099, %v1160
        %v1207 = vadd.f32 %v1100, %v1162
        %v1208 = vadd.f32 %v1101, %v1201
        %v1209 = vld [vmem:[#allocation4] sm:$0xff]
        %1211 = vset.pattern.permute.xlu0 0
        %1212 = vperm.xlu0 %1211, %v1209
        %v1213 = vpop.permute.xlu0 %1212
        %v1215 = vadd.f32 %v1206, %v1213
        %v1216 = vadd.f32 %v1207, %v1213
        %v1217 = vadd.f32 %v1208, %v1213
        %v1218 = vmax.f32 %v1215, 0.0
        %v1219 = vmax.f32 %v1216, 0.0
        %v1220 = vmax.f32 %v1217, 0.0
        %v1221 = vld [vmem:[#allocation6] sm:$0x7]
        %v1223 = vlaneseq
        %v1224 = vshrl.u32 %v1223, 7
        %v1225 = vsub.s32 0, %v1224
        %v1226 = vrot.slane %v1221, %v1225
        %v1227 = vlaneseq
        %v1228 = vshrl.u32 %v1227, 7
        %v1229 = vsub.s32 1, %v1228
        %v1230 = vrot.slane %v1221, %v1229
        %v1231 = vlaneseq
        %v1232 = vshrl.u32 %v1231, 7
        %v1233 = vsub.s32 2, %v1232
        %v1234 = vrot.slane %v1221, %v1233
        %v1238 = vmul.f32 %v1218, %v1226
        %v1239 = vmul.f32 %v1219, %v1230
        %v1240 = vmul.f32 %v1220, %v1234
        %1241 = vst [vmem:[%s237] sm:$0xff] 0
        %1242 = vst [vmem:[%s237 + $0x8] sm:$0xf] 0
        %v1243 = vpack.c.bf16 %v1238, %v1238
        %v1244 = vpack.c.bf16 %v1239, %v1239
        %v1245 = vpack.c.bf16 %v1240, %v1240
        %v1249 = vunpack.c.l.b16 %v1243
        %v1250 = vunpack.c.l.b16 %v1244
        %v1251 = vunpack.c.l.b16 %v1245
        %v1252 = vpack.c.b16 %v1250, %v1249
        %v1253 = vpack.c.b16 %v1251, %v1251
        %1254 = vrot.lane.b32.xlu0 %v1252, 19
        %v1255 = vpop.permute.xlu0 %1254
        %1256 = vrot.lane.b32.xlu0 %v1253, 19
        %v1257 = vpop.permute.xlu0 %1256
        %v1258 = vrot.slane %v1255, 4
        %vm1259 = vcmask 154624
        %v1260 = vsel %vm1259, %v1258, %v1255
        %v1261 = vsel %vm1259, %v1258, %v1257
        %vm1264 = vcmask 1043608
        %vm1265 = vcmask 1047556
        %vm1266 = vmor %vm1265, %vm1264
        %1267 = vst.msk [vmem:[%s237] sm:$0xff] %vm1266, %v1260
        %vm1268 = vcmask 412672
        %1269 = vst.msk [vmem:[%s237 + $0x8] sm:$0xf] %vm1268, %v1261
        %p1270 = scmp.lt.s32.totalorder %s17, 1
        %s1271 = scalar_select %p1270, %s17, 1
        %s1272 = smul.addr %s1271, 3
        %s1273 = smul.addr %s1272, 4
        %s1274 = scalar_lea.vmem %s4, %s1273
        // Predicated region
        $region49: #{_lambda_.4} parent=35 // pred_check
          %p1275 = pneg %p124
        $region50: #{_lambda_.4} parent=35 // pred_check_branch
          %1277 = sbr.rel (%p1275) target = $region52
        $region51: #{_lambda_.4} parent=35 // pred_region
          _
        $region52: #{_lambda_.4} parent=35 // pred_fallthru
          _
      $region36: #{_lambda_.4} parent=5 // pred_fallthru
        _
      %p1278 = scmp.le.s32.totalorder 2, %s12
      // Predicated region
      $region53: #{_lambda_.4} parent=5 // pred_check
        %p1279 = pneg %p1278
      $region54: #{_lambda_.4} parent=5 // pred_check_branch
        %1281 = sbr.rel (%p1279) target = $region56
      $region55: #{_lambda_.4} parent=5 // pred_region
        %s1282 = ssub.s32 %s12, 2
        // Predicated region
        $region57: #{_lambda_.4} parent=55 // pred_check
          %p1283 = pneg %p130
        $region58: #{_lambda_.4} parent=55 // pred_check_branch
          %1285 = sbr.rel (%p1283) target = $region60
        $region59: #{_lambda_.4} parent=55 // pred_region
          %p1286 = scmp.lt.s32.totalorder %s18, 1
          %s1287 = scalar_select %p1286, %s18, 1
          %s1288 = smul.addr %s1287, 3
          %s1289 = smul.addr %s1288, 4
          %s1290 = scalar_lea.vmem %s4, %s1289
        $region60: #{_lambda_.4} parent=55 // pred_fallthru
          _
      $region56: #{_lambda_.4} parent=5 // pred_fallthru
        _
    $region6: #{_lambda_.4} parent=1 // loop_footer
      %s16 = sadd.s32 1, %s12
    $region7: #{_lambda_.4} parent=1 // loop_footer_branch
      %11 = sbr.rel target = $region3
    $region8: #{_lambda_.4} parent=1 // loop_exit
      _
    %1291 = vsyncpa [#allocation3], 1
    %s1292 = scalar_lea.sflag [#allocation3], 1
    %1293 = vsyncpa %s1292, 1
    %1294 = vsyncpa [#allocation5], 1

// kernel: _lambda_.7
$region0: #{_lambda_.7}
  #allocation0 [shape = 'u32[]', space=smem, size = 0x4, offset = 0x4, fixed_abs, tag = 'smem constant byte address 0x4 - core index']
  #allocation1 [shape = 'u32[144,128]{1,0:T(1,128)}', space=vmem, size = 0x12000, scoped, tag = 'internal scratch']
  %s0 = inlined_call_operand.vmem [shape: f32[2,12,16,18], index: 0, kind: input, shape index: {}]
  %s1 = inlined_call_operand.hbm [shape: f32[2,3,16,16], index: 1, kind: input, shape index: {}]
  %s2 = inlined_call_operand.hbm [shape: f32[2,16,16], index: 2, kind: input, shape index: {}]
  %s3 = inlined_call_operand.hbm [shape: f32[2,16,16], index: 3, kind: input, shape index: {}]
  %s4 = inlined_call_operand.vmem [shape: f32[2,12,16,16], index: 4, kind: output, shape index: {}]
  %s5 = sld [smem:[#allocation0]]
  $region61: #{_lambda_.7} parent=0
    _
  %s7 = ssub.s32 1, %s5
  %s8 = scalar_select 0, %s7, %s5
  $region1: #{_lambda_.7} parent=0
    #allocation2 [shape = 'u8[49152]{0}', space=vmem, size = 0xc000, scoped, tag = 'input window, operand 1']
    #allocation3 [shape = 's32[2]{0}', space=sflag, size = 0x8, scoped, tag = 'scoped memory for _lambda_.7']
    #allocation4 [shape = 'u8[16384]{0}', space=vmem, size = 0x4000, scoped, tag = 'input window, operand 2, single buffered']
    #allocation5 [shape = 's32[1]{0}', space=sflag, size = 0x4, scoped, tag = 'scoped memory for _lambda_.7']
    #allocation6 [shape = 'u8[16384]{0}', space=vmem, size = 0x4000, scoped, tag = 'input window, operand 3, single buffered']
    %9 = vsyncpa [#allocation3], 0
    %s10 = scalar_lea.sflag [#allocation3], 1
    %11 = vsyncpa %s10, 0
    %12 = vsyncpa [#allocation5], 0
    loop: start=0, step=1, limit=4
    $region2: #{_lambda_.7} parent=1 // loop_pre_header
      _
    $region3: #{_lambda_.7} parent=1 // loop_header
      %s14 = sphi 0, %s18
      %p15 = scmp.ge.s32.totalorder %s14, 4
      %s24 = sphi 0, %s26
      %s27 = sphi 0, %s24
      %s28 = sphi 0, %s27
      %s44 = sphi 0, %s28
      %s50 = sphi 0, %s52
      %s53 = sphi 0, %s50
      %s54 = sphi 0, %s53
      %s70 = sphi 0, %s54
      %s74 = sphi 0, %s74
      %s76 = sphi 0, %s74
      %s77 = sphi 0, %s76
      %s91 = sphi 0, %s77
      %s95 = sphi 0, %s95
      %s97 = sphi 0, %s95
      %s98 = sphi 0, %s97
      %s112 = sphi 0, %s98
      %s118 = sphi 0, %s120
      %s121 = sphi 0, %s118
      %s122 = sphi 0, %s121
      %s138 = sphi 0, %s122
    $region4: #{_lambda_.7} parent=1 // loop_header_branch
      %17 = sbr.rel (%p15) target = $region8
    $region5: #{_lambda_.7} parent=1 // loop_body
      %s19 = ssub.s32 %s14, 1
      %s20 = ssub.s32 %s14, 2
      %s21 = sadd.s32 %s14, 1
      %s22 = ssub.s32 %s14, %s21
      %p23 = scmp.eq.s32.totalorder %s22, 0
      %s25 = sadd.s32 %s24, 1
      %s26 = scalar_select %p23, %s24, %s25
      %p29 = pneg %p23
      %p30 = scmp.eq.s32.totalorder %s14, 1
      %p31 = por %p29, %p30
      %p32 = scmp.ne.s32.totalorder %s24, %s27
      %p33 = scmp.eq.s32.totalorder %s14, 0
      %p34 = por %p32, %p33
      %p35 = scmp.ne.s32.totalorder %s24, %s27
      %p36 = scmp.eq.s32.totalorder %s19, 1
      %p37 = por %p35, %p36
      %p38 = scmp.ne.s32.totalorder %s27, %s28
      %p39 = scmp.eq.s32.totalorder %s19, 0
      %p40 = por %p38, %p39
      %p41 = scmp.ne.s32.totalorder %s27, %s28
      %p42 = scmp.eq.s32.totalorder %s20, 1
      %p43 = por %p41, %p42
      %p45 = scmp.ne.s32.totalorder %s28, %s44
      %p46 = scmp.eq.s32.totalorder %s20, 0
      %p47 = por %p45, %p46
      %s48 = ssub.s32 %s14, %s21
      %p49 = scmp.eq.s32.totalorder %s48, 0
      %s51 = sadd.s32 %s50, 1
      %s52 = scalar_select %p49, %s50, %s51
      %p55 = pneg %p49
      %p56 = scmp.eq.s32.totalorder %s14, 1
      %p57 = por %p55, %p56
      %p58 = scmp.ne.s32.totalorder %s50, %s53
      %p59 = scmp.eq.s32.totalorder %s14, 0
      %p60 = por %p58, %p59
      %p61 = scmp.ne.s32.totalorder %s50, %s53
      %p62 = scmp.eq.s32.totalorder %s19, 1
      %p63 = por %p61, %p62
      %p64 = scmp.ne.s32.totalorder %s53, %s54
      %p65 = scmp.eq.s32.totalorder %s19, 0
      %p66 = por %p64, %p65
      %p67 = scmp.ne.s32.totalorder %s53, %s54
      %p68 = scmp.eq.s32.totalorder %s20, 1
      %p69 = por %p67, %p68
      %p71 = scmp.ne.s32.totalorder %s54, %s70
      %p72 = scmp.eq.s32.totalorder %s20, 0
      %p73 = por %p71, %p72
      %s75 = sadd.s32 %s74, 1
      %p78 = scmp.eq.s32.totalorder %s14, 1
      %p79 = scmp.ne.s32.totalorder %s74, %s76
      %p80 = scmp.eq.s32.totalorder %s14, 0
      %p81 = por %p79, %p80
      %p82 = scmp.ne.s32.totalorder %s74, %s76
      %p83 = scmp.eq.s32.totalorder %s19, 1
      %p84 = por %p82, %p83
      %p85 = scmp.ne.s32.totalorder %s76, %s77
      %p86 = scmp.eq.s32.totalorder %s19, 0
      %p87 = por %p85, %p86
      %p88 = scmp.ne.s32.totalorder %s76, %s77
      %p89 = scmp.eq.s32.totalorder %s20, 1
      %p90 = por %p88, %p89
      %p92 = scmp.ne.s32.totalorder %s77, %s91
      %p93 = scmp.eq.s32.totalorder %s20, 0
      %p94 = por %p92, %p93
      %s96 = sadd.s32 %s95, 1
      %p99 = scmp.eq.s32.totalorder %s14, 1
      %p100 = scmp.ne.s32.totalorder %s95, %s97
      %p101 = scmp.eq.s32.totalorder %s14, 0
      %p102 = por %p100, %p101
      %p103 = scmp.ne.s32.totalorder %s95, %s97
      %p104 = scmp.eq.s32.totalorder %s19, 1
      %p105 = por %p103, %p104
      %p106 = scmp.ne.s32.totalorder %s97, %s98
      %p107 = scmp.eq.s32.totalorder %s19, 0
      %p108 = por %p106, %p107
      %p109 = scmp.ne.s32.totalorder %s97, %s98
      %p110 = scmp.eq.s32.totalorder %s20, 1
      %p111 = por %p109, %p110
      %p113 = scmp.ne.s32.totalorder %s98, %s112
      %p114 = scmp.eq.s32.totalorder %s20, 0
      %p115 = por %p113, %p114
      %s116 = ssub.s32 %s14, %s21
      %p117 = scmp.eq.s32.totalorder %s116, 0
      %s119 = sadd.s32 %s118, 1
      %s120 = scalar_select %p117, %s118, %s119
      %p123 = pneg %p117
      %p124 = scmp.eq.s32.totalorder %s14, 1
      %p125 = por %p123, %p124
      %p126 = scmp.ne.s32.totalorder %s118, %s121
      %p127 = scmp.eq.s32.totalorder %s14, 0
      %p128 = por %p126, %p127
      %p129 = scmp.ne.s32.totalorder %s118, %s121
      %p130 = scmp.eq.s32.totalorder %s19, 1
      %p131 = por %p129, %p130
      %p132 = scmp.ne.s32.totalorder %s121, %s122
      %p133 = scmp.eq.s32.totalorder %s19, 0
      %p134 = por %p132, %p133
      %p135 = scmp.ne.s32.totalorder %s121, %s122
      %p136 = scmp.eq.s32.totalorder %s20, 1
      %p137 = por %p135, %p136
      %p139 = scmp.ne.s32.totalorder %s122, %s138
      %p140 = scmp.eq.s32.totalorder %s20, 0
      %p141 = por %p139, %p140
      %p142 = scmp.le.s32.totalorder 1, %s14
      %p143 = scmp.lt.s32.totalorder %s14, 3
      %p144 = pnand %p142, %p143
      %p145 = pneg %p144
      // Predicated region
      $region9: #{_lambda_.7} parent=5 // pred_check
        _
      $region10: #{_lambda_.7} parent=5 // pred_check_branch
        %147 = sbr.rel (%p144) target = $region12
      $region11: #{_lambda_.7} parent=5 // pred_region
        %s148 = ssub.s32 %s14, 1
        // Predicated region
        $region13: #{_lambda_.7} parent=11 // pred_check
          %p149 = pneg %p87
        $region14: #{_lambda_.7} parent=11 // pred_check_branch
          %151 = sbr.rel (%p149) target = $region16
        $region15: #{_lambda_.7} parent=11 // pred_region
          %s153 = ssub.s32 512, 512
          %154 = vsyncadd [#allocation5], %s153
          %s155 = sshll.u32 [#allocation4], 4
          %s156 = int_to_ptr.vmem [resolvable:$true] %s155
          %161 = dma.hbm_to_vmem [thread:$0]  %s2, 512, %s156, [#allocation5], 128, 128, 8
        $region16: #{_lambda_.7} parent=11 // pred_fallthru
          _
        // Predicated region
        $region17: #{_lambda_.7} parent=11 // pred_check
          %p162 = pneg %p108
        $region18: #{_lambda_.7} parent=11 // pred_check_branch
          %164 = sbr.rel (%p162) target = $region20
        $region19: #{_lambda_.7} parent=11 // pred_region
          %s166 = ssub.s32 512, 512
          %167 = vsyncadd [#allocation5], %s166
          %s168 = sshll.u32 [#allocation6], 4
          %s169 = int_to_ptr.vmem [resolvable:$true] %s168
          %174 = dma.hbm_to_vmem [thread:$0]  %s3, 512, %s169, [#allocation5], 128, 128, 8
        $region20: #{_lambda_.7} parent=11 // pred_fallthru
          _
      $region12: #{_lambda_.7} parent=5 // pred_fallthru
        _
      %p175 = scmp.lt.s32.totalorder %s14, 2
      // Predicated region
      $region21: #{_lambda_.7} parent=5 // pred_check
        %p176 = pneg %p175
      $region22: #{_lambda_.7} parent=5 // pred_check_branch
        %178 = sbr.rel (%p176) target = $region24
      $region23: #{_lambda_.7} parent=5 // pred_region
        // Predicated region
        $region25: #{_lambda_.7} parent=23 // pred_check
          %p179 = pneg %p34
        $region26: #{_lambda_.7} parent=23 // pred_check_branch
          %181 = sbr.rel (%p179) target = $region28
        $region27: #{_lambda_.7} parent=23 // pred_region
          %p182 = scmp.lt.s32.totalorder %s14, 1
          %s183 = scalar_select %p182, %s14, 1
          %s184 = smul.addr %s183, 24
          %s185 = smul.addr %s184, 8
          %s186 = scalar_lea.vmem %s0, %s185
        $region28: #{_lambda_.7} parent=23 // pred_fallthru
          _
        // Predicated region
        $region29: #{_lambda_.7} parent=23 // pred_check
          %p187 = pneg %p60
        $region30: #{_lambda_.7} parent=23 // pred_check_branch
          %189 = sbr.rel (%p187) target = $region32
        $region31: #{_lambda_.7} parent=23 // pred_region
          %s190 = sand.u32 %s50, 1
          %s191 = scalar_lea.sflag [#allocation3], %s190
          %s192 = sand.u32 %s50, 1
          %s193 = smul.addr %s192, 48
          %s194 = scalar_lea.vmem [#allocation2], %s193
          %s196 = ssub.s32 768, 768
          %197 = vsyncadd %s191, %s196
          %s198 = smul.addr %s14, 6
          %s199 = smul.addr %s198, 128
          %s200 = scalar_lea.hbm %s1, %s199
          %s201 = sshll.u32 %s194, 4
          %s202 = int_to_ptr.vmem [resolvable:$true] %s201
          %207 = dma.hbm_to_vmem [thread:$0]  %s200, 768, %s202, %s191, 128, 128, 8
        $region32: #{_lambda_.7} parent=23 // pred_fallthru
          _
      $region24: #{_lambda_.7} parent=5 // pred_fallthru
        _
      %p208 = scmp.le.s32.totalorder 1, %s14
      %p209 = scmp.lt.s32.totalorder %s14, 3
      %p210 = pnand %p208, %p209
      %p211 = pneg %p210
      // Predicated region
      $region33: #{_lambda_.7} parent=5 // pred_check
        _
      $region34: #{_lambda_.7} parent=5 // pred_check_branch
        %213 = sbr.rel (%p210) target = $region36
      $region35: #{_lambda_.7} parent=5 // pred_region
        %s214 = ssub.s32 %s14, 1
        %s215 = sand.u32 %s53, 1
        %s216 = scalar_lea.sflag [#allocation3], %s215
        %s217 = sand.u32 %s53, 1
        %s218 = smul.addr %s217, 48
        %s219 = scalar_lea.vmem [#allocation2], %s218
        // Predicated region
        $region37: #{_lambda_.7} parent=35 // pred_check
          %p220 = pneg %p66
        $region38: #{_lambda_.7} parent=35 // pred_check_branch
          %222 = sbr.rel (%p220) target = $region40
        $region39: #{_lambda_.7} parent=35 // pred_region
          %223 = dma.done %s216, 768
        $region40: #{_lambda_.7} parent=35 // pred_fallthru
          _
        // Predicated region
        $region41: #{_lambda_.7} parent=35 // pred_check
          %p224 = pneg %p87
        $region42: #{_lambda_.7} parent=35 // pred_check_branch
          %226 = sbr.rel (%p224) target = $region44
        $region43: #{_lambda_.7} parent=35 // pred_region
          %227 = dma.done [#allocation5], 512
        $region44: #{_lambda_.7} parent=35 // pred_fallthru
          _
        // Predicated region
        $region45: #{_lambda_.7} parent=35 // pred_check
          %p228 = pneg %p108
        $region46: #{_lambda_.7} parent=35 // pred_check_branch
          %230 = sbr.rel (%p228) target = $region48
        $region47: #{_lambda_.7} parent=35 // pred_region
          %231 = dma.done [#allocation5], 512
        $region48: #{_lambda_.7} parent=35 // pred_fallthru
          _
        %p232 = scmp.lt.s32.totalorder %s19, 1
        %s233 = scalar_select %p232, %s19, 1
        %s234 = smul.addr %s233, 24
        %s235 = smul.addr %s234, 8
        %s236 = scalar_lea.vmem %s0, %s235
        %p237 = pneg %p40
        %p238 = pneg %p37
        %s239 = sand.u32 %s53, 1
        %s240 = scalar_lea.sflag [#allocation3], %s239
        %s241 = sand.u32 %s53, 1
        %s242 = smul.addr %s241, 48
        %s243 = scalar_lea.vmem [#allocation2], %s242
        %p244 = pneg %p66
        %p245 = pneg %p63
        %p246 = pneg %p87
        %p247 = pneg %p84
        %p248 = pneg %p108
        %p249 = pneg %p105
        %p250 = pneg %p134
        %p251 = pneg %p131
        %p252 = scmp.lt.s32.totalorder %s19, 1
        %s253 = scalar_select %p252, %s19, 1
        %s254 = smul.addr %s253, 24
        %s255 = smul.addr %s254, 8
        %s256 = scalar_lea.vmem %s4, %s255
        %p257 = scmp.lt.s32.totalorder %s19, 1
        %s258 = scalar_select %p257, %s19, 1
        %s259 = smul.addr %s258, 24
        %s260 = smul.addr %s259, 8
        %s261 = scalar_lea.vmem %s0, %s260
        %p262 = scmp.lt.s32.totalorder %s19, 1
        %s263 = scalar_select %p262, %s19, 1
        %s264 = smul.addr %s263, 24
        %s265 = smul.addr %s264, 8
        %s266 = scalar_lea.vmem %s4, %s265
        %v267 = vld [vmem:[%s219] sm:$0xff]
        %v268 = vld [vmem:[%s219 + $0x8] sm:$0xff]
        %v269 = vld [vmem:[#allocation4] sm:$0xff]
        %v270 = vld [vmem:[#allocation4 + $0x8] sm:$0xff]
        %vm271 = vcmask 130048
        %v273 = vsel %vm271, %v269, 0
        %v276 = vsel %vm271, %v270, 0
        %278 = vmatprep.subr.mxu0 0.0
        %279 = vmatpush1.msra.mxu0 0.0
        %280 = vmatprep.subr.mxu0 0.0
        %281 = vmatpush1.msra.mxu0 0.0
        %282 = vmatprep.subr.mxu0 0.0
        %283 = vmatpush1.msra.mxu0 0.0
        %284 = vmatprep.subr.mxu0 0.0
        %285 = vmatpush1.msra.mxu0 0.0
        %286 = vmatprep.subr.mxu0 0.0
        %287 = vmatpush1.msra.mxu0 0.0
        %288 = vmatprep.subr.mxu0 0.0
        %289 = vmatpush1.msra.mxu0 0.0
        %290 = vmatprep.subr.mxu0 0.0
        %291 = vmatpush1.msra.mxu0 0.0
        %292 = vmatprep.subr.mxu0 0.0
        %293 = vmatpush1.msra.mxu0 0.0
        %294 = vmatprep.subr.mxu0 0.0
        %295 = vmatpush1.msra.mxu0 0.0
        %296 = vmatprep.subr.mxu0 0.0
        %297 = vmatpush1.msra.mxu0 0.0
        %298 = vmatprep.subr.mxu0 0.0
        %299 = vmatpush1.msra.mxu0 0.0
        %300 = vmatprep.subr.mxu0 0.0
        %301 = vmatpush1.msra.mxu0 0.0
        %302 = vmatprep.subr.mxu0 0.0
        %303 = vmatpush1.msra.mxu0 0.0
        %304 = vmatprep.subr.mxu0 0.0
        %305 = vmatpush1.msra.mxu0 0.0
        %306 = vmatprep.subr.mxu0 0.0
        %307 = vmatpush1.msra.mxu0 %v268
        %308 = vmatprep.subr.mxu0 0.0
        %309 = vmatpush1.msra.mxu0 %v267
        %310 = vmatprep.subr.mxu0 0.0
        %311 = vmatpush2.msra.mxu0 0.0
        %312 = vmatprep.subr.mxu0 0.0
        %313 = vmatpush2.msra.mxu0 0.0
        %314 = vmatprep.subr.mxu0 0.0
        %315 = vmatpush2.msra.mxu0 0.0
        %316 = vmatprep.subr.mxu0 0.0
        %317 = vmatpush2.msra.mxu0 0.0
        %318 = vmatprep.subr.mxu0 0.0
        %319 = vmatpush2.msra.mxu0 0.0
        %320 = vmatprep.subr.mxu0 0.0
        %321 = vmatpush2.msra.mxu0 0.0
        %322 = vmatprep.subr.mxu0 0.0
        %323 = vmatpush2.msra.mxu0 0.0
        %324 = vmatprep.subr.mxu0 0.0
        %325 = vmatpush2.msra.mxu0 0.0
        %326 = vmatprep.subr.mxu0 0.0
        %327 = vmatpush2.msra.mxu0 0.0
        %328 = vmatprep.subr.mxu0 0.0
        %329 = vmatpush2.msra.mxu0 0.0
        %330 = vmatprep.subr.mxu0 0.0
        %331 = vmatpush2.msra.mxu0 0.0
        %332 = vmatprep.subr.mxu0 0.0
        %333 = vmatpush2.msra.mxu0 0.0
        %334 = vmatprep.subr.mxu0 0.0
        %335 = vmatpush2.msra.mxu0 0.0
        %336 = vmatprep.subr.mxu0 0.0
        %337 = vmatpush2.msra.mxu0 0.0
        %338 = vmatprep.subr.mxu0 0.0
        %339 = vmatpush2.msra.mxu0 0.0
        %340 = vmatprep.subr.mxu0 0.0
        %341 = vmatpush2.msra.mxu0 0.0
        %342 = vmatprep.mubr.f32.mxu0 0.0
        %343 = vmatmul.mubr.f32.gmra.mxu0 %v273
        %v344 = vpop.f32.mrf.mxu0
        %v345 = vadd.f32 0.0, %v344
        %v346 = vpop.f32.mrf.mxu0
        %347 = vmatprep.mubr.f32.mxu0 0.0
        %348 = vmatmul.mubr.f32.gmra.mxu0 %v276
        %v349 = vpop.f32.mrf.mxu0
        %v350 = vadd.f32 0.0, %v349
        %v351 = vpop.f32.mrf.mxu0
        %352 = vdwg.mxu0
        %v353 = vld [vmem:[#allocation6] sm:$0xff]
        %v354 = vld [vmem:[#allocation6 + $0x8] sm:$0xff]
        %v356 = vsel %vm271, %v345, 0
        %v359 = vsel %vm271, %v350, 0
        %361 = vmatprep.subr.mxu0 0.0
        %362 = vmatpush1.msra.mxu0 0.0
        %363 = vmatprep.subr.mxu0 0.0
        %364 = vmatpush1.msra.mxu0 0.0
        %365 = vmatprep.subr.mxu0 0.0
        %366 = vmatpush1.msra.mxu0 0.0
        %367 = vmatprep.subr.mxu0 0.0
        %368 = vmatpush1.msra.mxu0 0.0
        %369 = vmatprep.subr.mxu0 0.0
        %370 = vmatpush1.msra.mxu0 0.0
        %371 = vmatprep.subr.mxu0 0.0
        %372 = vmatpush1.msra.mxu0 0.0
        %373 = vmatprep.subr.mxu0 0.0
        %374 = vmatpush1.msra.mxu0 0.0
        %375 = vmatprep.subr.mxu0 0.0
        %376 = vmatpush1.msra.mxu0 0.0
        %377 = vmatprep.subr.mxu0 0.0
        %378 = vmatpush1.msra.mxu0 0.0
        %379 = vmatprep.subr.mxu0 0.0
        %380 = vmatpush1.msra.mxu0 0.0
        %381 = vmatprep.subr.mxu0 0.0
        %382 = vmatpush1.msra.mxu0 0.0
        %383 = vmatprep.subr.mxu0 0.0
        %384 = vmatpush1.msra.mxu0 0.0
        %385 = vmatprep.subr.mxu0 0.0
        %386 = vmatpush1.msra.mxu0 0.0
        %387 = vmatprep.subr.mxu0 0.0
        %388 = vmatpush1.msra.mxu0 0.0
        %389 = vmatprep.subr.mxu0 0.0
        %390 = vmatpush1.msra.mxu0 %v354
        %391 = vmatprep.subr.mxu0 0.0
        %392 = vmatpush1.msra.mxu0 %v353
        %393 = vmatprep.subr.mxu0 0.0
        %394 = vmatpush2.msra.mxu0 0.0
        %395 = vmatprep.subr.mxu0 0.0
        %396 = vmatpush2.msra.mxu0 0.0
        %397 = vmatprep.subr.mxu0 0.0
        %398 = vmatpush2.msra.mxu0 0.0
        %399 = vmatprep.subr.mxu0 0.0
        %400 = vmatpush2.msra.mxu0 0.0
        %401 = vmatprep.subr.mxu0 0.0
        %402 = vmatpush2.msra.mxu0 0.0
        %403 = vmatprep.subr.mxu0 0.0
        %404 = vmatpush2.msra.mxu0 0.0
        %405 = vmatprep.subr.mxu0 0.0
        %406 = vmatpush2.msra.mxu0 0.0
        %407 = vmatprep.subr.mxu0 0.0
        %408 = vmatpush2.msra.mxu0 0.0
        %409 = vmatprep.subr.mxu0 0.0
        %410 = vmatpush2.msra.mxu0 0.0
        %411 = vmatprep.subr.mxu0 0.0
        %412 = vmatpush2.msra.mxu0 0.0
        %413 = vmatprep.subr.mxu0 0.0
        %414 = vmatpush2.msra.mxu0 0.0
        %415 = vmatprep.subr.mxu0 0.0
        %416 = vmatpush2.msra.mxu0 0.0
        %417 = vmatprep.subr.mxu0 0.0
        %418 = vmatpush2.msra.mxu0 0.0
        %419 = vmatprep.subr.mxu0 0.0
        %420 = vmatpush2.msra.mxu0 0.0
        %421 = vmatprep.subr.mxu0 0.0
        %422 = vmatpush2.msra.mxu0 0.0
        %423 = vmatprep.subr.mxu0 0.0
        %424 = vmatpush2.msra.mxu0 0.0
        %425 = vmatprep.mubr.f32.mxu0 0.0
        %426 = vmatmul.mubr.f32.gmra.mxu0 %v356
        %v427 = vpop.f32.mrf.mxu0
        %v428 = vadd.f32 0.0, %v427
        %v429 = vpop.f32.mrf.mxu0
        %430 = vmatprep.mubr.f32.mxu0 0.0
        %431 = vmatmul.mubr.f32.gmra.mxu0 %v359
        %v432 = vpop.f32.mrf.mxu0
        %v433 = vadd.f32 0.0, %v432
        %v434 = vpop.f32.mrf.mxu0
        %435 = vdwg.mxu0
        %v436 = vld [vmem:[%s261] sm:$0xff]
        %v437 = vld [vmem:[%s261 + $0x8] sm:$0xff]
        %440 = vrot.lane.b32.xlu0 %v428, 1
        %v441 = vpop.permute.xlu0 %440
        %442 = vrot.lane.b32.xlu0 %v433, 1
        %v443 = vpop.permute.xlu0 %442
        %v446 = vadd.f32 %v436, %v441
        %v447 = vadd.f32 %v437, %v443
        %v448 = vmax.f32 %v446, -1.0
        %v449 = vmax.f32 %v447, -1.0
        %v450 = vmin.f32 %v448, 1.0
        %v451 = vmin.f32 %v449, 1.0
        %454 = vrot.lane.b32.xlu0 %v450, 127
        %v455 = vpop.permute.xlu0 %454
        %456 = vrot.lane.b32.xlu0 %v451, 127
        %v457 = vpop.permute.xlu0 %456
        %460 = vst.msk [vmem:[%s266] sm:$0xff] %vm271, %v455
        %461 = vst.msk [vmem:[%s266 + $0x8] sm:$0xff] %vm271, %v457
        %s462 = scalar_lea.vmem [#allocation6], 16
        %v463 = vld [vmem:[%s462] sm:$0xff]
        %v464 = vld [vmem:[%s462 + $0x8] sm:$0xff]
        %465 = vmatprep.subr.mxu0 0.0
        %466 = vmatpush1.msra.mxu0 0.0
        %467 = vmatprep.subr.mxu0 0.0
        %468 = vmatpush1.msra.mxu0 0.0
        %469 = vmatprep.subr.mxu0 0.0
        %470 = vmatpush1.msra.mxu0 0.0
        %471 = vmatprep.subr.mxu0 0.0
        %472 = vmatpush1.msra.mxu0 0.0
        %473 = vmatprep.subr.mxu0 0.0
        %474 = vmatpush1.msra.mxu0 0.0
        %475 = vmatprep.subr.mxu0 0.0
        %476 = vmatpush1.msra.mxu0 0.0
        %477 = vmatprep.subr.mxu0 0.0
        %478 = vmatpush1.msra.mxu0 0.0
        %479 = vmatprep.subr.mxu0 0.0
        %480 = vmatpush1.msra.mxu0 0.0
        %481 = vmatprep.subr.mxu0 0.0
        %482 = vmatpush1.msra.mxu0 0.0
        %483 = vmatprep.subr.mxu0 0.0
        %484 = vmatpush1.msra.mxu0 0.0
        %485 = vmatprep.subr.mxu0 0.0
        %486 = vmatpush1.msra.mxu0 0.0
        %487 = vmatprep.subr.mxu0 0.0
        %488 = vmatpush1.msra.mxu0 0.0
        %489 = vmatprep.subr.mxu0 0.0
        %490 = vmatpush1.msra.mxu0 0.0
        %491 = vmatprep.subr.mxu0 0.0
        %492 = vmatpush1.msra.mxu0 0.0
        %493 = vmatprep.subr.mxu0 0.0
        %494 = vmatpush1.msra.mxu0 %v464
        %495 = vmatprep.subr.mxu0 0.0
        %496 = vmatpush1.msra.mxu0 %v463
        %497 = vmatprep.subr.mxu0 0.0
        %498 = vmatpush2.msra.mxu0 0.0
        %499 = vmatprep.subr.mxu0 0.0
        %500 = vmatpush2.msra.mxu0 0.0
        %501 = vmatprep.subr.mxu0 0.0
        %502 = vmatpush2.msra.mxu0 0.0
        %503 = vmatprep.subr.mxu0 0.0
        %504 = vmatpush2.msra.mxu0 0.0
        %505 = vmatprep.subr.mxu0 0.0
        %506 = vmatpush2.msra.mxu0 0.0
        %507 = vmatprep.subr.mxu0 0.0
        %508 = vmatpush2.msra.mxu0 0.0
        %509 = vmatprep.subr.mxu0 0.0
        %510 = vmatpush2.msra.mxu0 0.0
        %511 = vmatprep.subr.mxu0 0.0
        %512 = vmatpush2.msra.mxu0 0.0
        %513 = vmatprep.subr.mxu0 0.0
        %514 = vmatpush2.msra.mxu0 0.0
        %515 = vmatprep.subr.mxu0 0.0
        %516 = vmatpush2.msra.mxu0 0.0
        %517 = vmatprep.subr.mxu0 0.0
        %518 = vmatpush2.msra.mxu0 0.0
        %519 = vmatprep.subr.mxu0 0.0
        %520 = vmatpush2.msra.mxu0 0.0
        %521 = vmatprep.subr.mxu0 0.0
        %522 = vmatpush2.msra.mxu0 0.0
        %523 = vmatprep.subr.mxu0 0.0
        %524 = vmatpush2.msra.mxu0 0.0
        %525 = vmatprep.subr.mxu0 0.0
        %526 = vmatpush2.msra.mxu0 0.0
        %527 = vmatprep.subr.mxu0 0.0
        %528 = vmatpush2.msra.mxu0 0.0
        %529 = vmatprep.mubr.f32.mxu0 0.0
        %530 = vmatmul.mubr.f32.gmra.mxu0 %v356
        %v531 = vpop.f32.mrf.mxu0
        %v532 = vadd.f32 0.0, %v531
        %v533 = vpop.f32.mrf.mxu0
        %534 = vmatprep.mubr.f32.mxu0 0.0
        %535 = vmatmul.mubr.f32.gmra.mxu0 %v359
        %v536 = vpop.f32.mrf.mxu0
        %v537 = vadd.f32 0.0, %v536
        %v538 = vpop.f32.mrf.mxu0
        %539 = vdwg.mxu0
        %s540 = scalar_lea.vmem %s261, 16
        %v541 = vld [vmem:[%s540] sm:$0xff]
        %v542 = vld [vmem:[%s540 + $0x8] sm:$0xff]
        %545 = vrot.lane.b32.xlu0 %v532, 1
        %v546 = vpop.permute.xlu0 %545
        %547 = vrot.lane.b32.xlu0 %v537, 1
        %v548 = vpop.permute.xlu0 %547
        %v551 = vadd.f32 %v541, %v546
        %v552 = vadd.f32 %v542, %v548
        %v553 = vmax.f32 %v551, -1.0
        %v554 = vmax.f32 %v552, -1.0
        %v555 = vmin.f32 %v553, 1.0
        %v556 = vmin.f32 %v554, 1.0
        %559 = vrot.lane.b32.xlu0 %v555, 127
        %v560 = vpop.permute.xlu0 %559
        %561 = vrot.lane.b32.xlu0 %v556, 127
        %v562 = vpop.permute.xlu0 %561
        %s565 = scalar_lea.vmem %s266, 16
        %566 = vst.msk [vmem:[%s565] sm:$0xff] %vm271, %v560
        %567 = vst.msk [vmem:[%s565 + $0x8] sm:$0xff] %vm271, %v562
        %s568 = scalar_lea.vmem [#allocation4], 16
        %v569 = vld [vmem:[%s568] sm:$0xff]
        %v570 = vld [vmem:[%s568 + $0x8] sm:$0xff]
        %v572 = vsel %vm271, %v569, 0
        %v575 = vsel %vm271, %v570, 0
        %577 = vmatprep.subr.mxu0 0.0
        %578 = vmatpush1.msra.mxu0 0.0
        %579 = vmatprep.subr.mxu0 0.0
        %580 = vmatpush1.msra.mxu0 0.0
        %581 = vmatprep.subr.mxu0 0.0
        %582 = vmatpush1.msra.mxu0 0.0
        %583 = vmatprep.subr.mxu0 0.0
        %584 = vmatpush1.msra.mxu0 0.0
        %585 = vmatprep.subr.mxu0 0.0
        %586 = vmatpush1.msra.mxu0 0.0
        %587 = vmatprep.subr.mxu0 0.0
        %588 = vmatpush1.msra.mxu0 0.0
        %589 = vmatprep.subr.mxu0 0.0
        %590 = vmatpush1.msra.mxu0 0.0
        %591 = vmatprep.subr.mxu0 0.0
        %592 = vmatpush1.msra.mxu0 0.0
        %593 = vmatprep.subr.mxu0 0.0
        %594 = vmatpush1.msra.mxu0 0.0
        %595 = vmatprep.subr.mxu0 0.0
        %596 = vmatpush1.msra.mxu0 0.0
        %597 = vmatprep.subr.mxu0 0.0
        %598 = vmatpush1.msra.mxu0 0.0
        %599 = vmatprep.subr.mxu0 0.0
        %600 = vmatpush1.msra.mxu0 0.0
        %601 = vmatprep.subr.mxu0 0.0
        %602 = vmatpush1.msra.mxu0 0.0
        %603 = vmatprep.subr.mxu0 0.0
        %604 = vmatpush1.msra.mxu0 0.0
        %605 = vmatprep.subr.mxu0 0.0
        %606 = vmatpush1.msra.mxu0 %v268
        %607 = vmatprep.subr.mxu0 0.0
        %608 = vmatpush1.msra.mxu0 %v267
        %609 = vmatprep.subr.mxu0 0.0
        %610 = vmatpush2.msra.mxu0 0.0
        %611 = vmatprep.subr.mxu0 0.0
        %612 = vmatpush2.msra.mxu0 0.0
        %613 = vmatprep.subr.mxu0 0.0
        %614 = vmatpush2.msra.mxu0 0.0
        %615 = vmatprep.subr.mxu0 0.0
        %616 = vmatpush2.msra.mxu0 0.0
        %617 = vmatprep.subr.mxu0 0.0
        %618 = vmatpush2.msra.mxu0 0.0
        %619 = vmatprep.subr.mxu0 0.0
        %620 = vmatpush2.msra.mxu0 0.0
        %621 = vmatprep.subr.mxu0 0.0
        %622 = vmatpush2.msra.mxu0 0.0
        %623 = vmatprep.subr.mxu0 0.0
        %624 = vmatpush2.msra.mxu0 0.0
        %625 = vmatprep.subr.mxu0 0.0
        %626 = vmatpush2.msra.mxu0 0.0
        %627 = vmatprep.subr.mxu0 0.0
        %628 = vmatpush2.msra.mxu0 0.0
        %629 = vmatprep.subr.mxu0 0.0
        %630 = vmatpush2.msra.mxu0 0.0
        %631 = vmatprep.subr.mxu0 0.0
        %632 = vmatpush2.msra.mxu0 0.0
        %633 = vmatprep.subr.mxu0 0.0
        %634 = vmatpush2.msra.mxu0 0.0
        %635 = vmatprep.subr.mxu0 0.0
        %636 = vmatpush2.msra.mxu0 0.0
        %637 = vmatprep.subr.mxu0 0.0
        %638 = vmatpush2.msra.mxu0 0.0
        %639 = vmatprep.subr.mxu0 0.0
        %640 = vmatpush2.msra.mxu0 0.0
        %641 = vmatprep.mubr.f32.mxu0 0.0
        %642 = vmatmul.mubr.f32.gmra.mxu0 %v572
        %v643 = vpop.f32.mrf.mxu0
        %v644 = vadd.f32 0.0, %v643
        %v645 = vpop.f32.mrf.mxu0
        %646 = vmatprep.mubr.f32.mxu0 0.0
        %647 = vmatmul.mubr.f32.gmra.mxu0 %v575
        %v648 = vpop.f32.mrf.mxu0
        %v649 = vadd.f32 0.0, %v648
        %v650 = vpop.f32.mrf.mxu0
        %651 = vdwg.mxu0
        %v652 = vld [vmem:[#allocation6] sm:$0xff]
        %v653 = vld [vmem:[#allocation6 + $0x8] sm:$0xff]
        %v655 = vsel %vm271, %v644, 0
        %v658 = vsel %vm271, %v649, 0
        %660 = vmatprep.subr.mxu0 0.0
        %661 = vmatpush1.msra.mxu0 0.0
        %662 = vmatprep.subr.mxu0 0.0
        %663 = vmatpush1.msra.mxu0 0.0
        %664 = vmatprep.subr.mxu0 0.0
        %665 = vmatpush1.msra.mxu0 0.0
        %666 = vmatprep.subr.mxu0 0.0
        %667 = vmatpush1.msra.mxu0 0.0
        %668 = vmatprep.subr.mxu0 0.0
        %669 = vmatpush1.msra.mxu0 0.0
        %670 = vmatprep.subr.mxu0 0.0
        %671 = vmatpush1.msra.mxu0 0.0
        %672 = vmatprep.subr.mxu0 0.0
        %673 = vmatpush1.msra.mxu0 0.0
        %674 = vmatprep.subr.mxu0 0.0
        %675 = vmatpush1.msra.mxu0 0.0
        %676 = vmatprep.subr.mxu0 0.0
        %677 = vmatpush1.msra.mxu0 0.0
        %678 = vmatprep.subr.mxu0 0.0
        %679 = vmatpush1.msra.mxu0 0.0
        %680 = vmatprep.subr.mxu0 0.0
        %681 = vmatpush1.msra.mxu0 0.0
        %682 = vmatprep.subr.mxu0 0.0
        %683 = vmatpush1.msra.mxu0 0.0
        %684 = vmatprep.subr.mxu0 0.0
        %685 = vmatpush1.msra.mxu0 0.0
        %686 = vmatprep.subr.mxu0 0.0
        %687 = vmatpush1.msra.mxu0 0.0
        %688 = vmatprep.subr.mxu0 0.0
        %689 = vmatpush1.msra.mxu0 %v653
        %690 = vmatprep.subr.mxu0 0.0
        %691 = vmatpush1.msra.mxu0 %v652
        %692 = vmatprep.subr.mxu0 0.0
        %693 = vmatpush2.msra.mxu0 0.0
        %694 = vmatprep.subr.mxu0 0.0
        %695 = vmatpush2.msra.mxu0 0.0
        %696 = vmatprep.subr.mxu0 0.0
        %697 = vmatpush2.msra.mxu0 0.0
        %698 = vmatprep.subr.mxu0 0.0
        %699 = vmatpush2.msra.mxu0 0.0
        %700 = vmatprep.subr.mxu0 0.0
        %701 = vmatpush2.msra.mxu0 0.0
        %702 = vmatprep.subr.mxu0 0.0
        %703 = vmatpush2.msra.mxu0 0.0
        %704 = vmatprep.subr.mxu0 0.0
        %705 = vmatpush2.msra.mxu0 0.0
        %706 = vmatprep.subr.mxu0 0.0
        %707 = vmatpush2.msra.mxu0 0.0
        %708 = vmatprep.subr.mxu0 0.0
        %709 = vmatpush2.msra.mxu0 0.0
        %710 = vmatprep.subr.mxu0 0.0
        %711 = vmatpush2.msra.mxu0 0.0
        %712 = vmatprep.subr.mxu0 0.0
        %713 = vmatpush2.msra.mxu0 0.0
        %714 = vmatprep.subr.mxu0 0.0
        %715 = vmatpush2.msra.mxu0 0.0
        %716 = vmatprep.subr.mxu0 0.0
        %717 = vmatpush2.msra.mxu0 0.0
        %718 = vmatprep.subr.mxu0 0.0
        %719 = vmatpush2.msra.mxu0 0.0
        %720 = vmatprep.subr.mxu0 0.0
        %721 = vmatpush2.msra.mxu0 0.0
        %722 = vmatprep.subr.mxu0 0.0
        %723 = vmatpush2.msra.mxu0 0.0
        %724 = vmatprep.mubr.f32.mxu0 0.0
        %725 = vmatmul.mubr.f32.gmra.mxu0 %v655
        %v726 = vpop.f32.mrf.mxu0
        %v727 = vadd.f32 0.0, %v726
        %v728 = vpop.f32.mrf.mxu0
        %729 = vmatprep.mubr.f32.mxu0 0.0
        %730 = vmatmul.mubr.f32.gmra.mxu0 %v658
        %v731 = vpop.f32.mrf.mxu0
        %v732 = vadd.f32 0.0, %v731
        %v733 = vpop.f32.mrf.mxu0
        %734 = vdwg.mxu0
        %s735 = scalar_lea.vmem %s261, 32
        %v736 = vld [vmem:[%s735] sm:$0xff]
        %v737 = vld [vmem:[%s735 + $0x8] sm:$0xff]
        %740 = vrot.lane.b32.xlu0 %v727, 1
        %v741 = vpop.permute.xlu0 %740
        %742 = vrot.lane.b32.xlu0 %v732, 1
        %v743 = vpop.permute.xlu0 %742
        %v746 = vadd.f32 %v736, %v741
        %v747 = vadd.f32 %v737, %v743
        %v748 = vmax.f32 %v746, -1.0
        %v749 = vmax.f32 %v747, -1.0
        %v750 = vmin.f32 %v748, 1.0
        %v751 = vmin.f32 %v749, 1.0
        %754 = vrot.lane.b32.xlu0 %v750, 127
        %v755 = vpop.permute.xlu0 %754
        %756 = vrot.lane.b32.xlu0 %v751, 127
        %v757 = vpop.permute.xlu0 %756
        %s760 = scalar_lea.vmem %s266, 32
        %761 = vst.msk [vmem:[%s760] sm:$0xff] %vm271, %v755
        %762 = vst.msk [vmem:[%s760 + $0x8] sm:$0xff] %vm271, %v757
        %v763 = vld [vmem:[%s462] sm:$0xff]
        %v764 = vld [vmem:[%s462 + $0x8] sm:$0xff]
        %765 = vmatprep.subr.mxu0 0.0
        %766 = vmatpush1.msra.mxu0 0.0
        %767 = vmatprep.subr.mxu0 0.0
        %768 = vmatpush1.msra.mxu0 0.0
        %769 = vmatprep.subr.mxu0 0.0
        %770 = vmatpush1.msra.mxu0 0.0
        %771 = vmatprep.subr.mxu0 0.0
        %772 = vmatpush1.msra.mxu0 0.0
        %773 = vmatprep.subr.mxu0 0.0
        %774 = vmatpush1.msra.mxu0 0.0
        %775 = vmatprep.subr.mxu0 0.0
        %776 = vmatpush1.msra.mxu0 0.0
        %777 = vmatprep.subr.mxu0 0.0
        %778 = vmatpush1.msra.mxu0 0.0
        %779 = vmatprep.subr.mxu0 0.0
        %780 = vmatpush1.msra.mxu0 0.0
        %781 = vmatprep.subr.mxu0 0.0
        %782 = vmatpush1.msra.mxu0 0.0
        %783 = vmatprep.subr.mxu0 0.0
        %784 = vmatpush1.msra.mxu0 0.0
        %785 = vmatprep.subr.mxu0 0.0
        %786 = vmatpush1.msra.mxu0 0.0
        %787 = vmatprep.subr.mxu0 0.0
        %788 = vmatpush1.msra.mxu0 0.0
        %789 = vmatprep.subr.mxu0 0.0
        %790 = vmatpush1.msra.mxu0 0.0
        %791 = vmatprep.subr.mxu0 0.0
        %792 = vmatpush1.msra.mxu0 0.0
        %793 = vmatprep.subr.mxu0 0.0
        %794 = vmatpush1.msra.mxu0 %v764
        %795 = vmatprep.subr.mxu0 0.0
        %796 = vmatpush1.msra.mxu0 %v763
        %797 = vmatprep.subr.mxu0 0.0
        %798 = vmatpush2.msra.mxu0 0.0
        %799 = vmatprep.subr.mxu0 0.0
        %800 = vmatpush2.msra.mxu0 0.0
        %801 = vmatprep.subr.mxu0 0.0
        %802 = vmatpush2.msra.mxu0 0.0
        %803 = vmatprep.subr.mxu0 0.0
        %804 = vmatpush2.msra.mxu0 0.0
        %805 = vmatprep.subr.mxu0 0.0
        %806 = vmatpush2.msra.mxu0 0.0
        %807 = vmatprep.subr.mxu0 0.0
        %808 = vmatpush2.msra.mxu0 0.0
        %809 = vmatprep.subr.mxu0 0.0
        %810 = vmatpush2.msra.mxu0 0.0
        %811 = vmatprep.subr.mxu0 0.0
        %812 = vmatpush2.msra.mxu0 0.0
        %813 = vmatprep.subr.mxu0 0.0
        %814 = vmatpush2.msra.mxu0 0.0
        %815 = vmatprep.subr.mxu0 0.0
        %816 = vmatpush2.msra.mxu0 0.0
        %817 = vmatprep.subr.mxu0 0.0
        %818 = vmatpush2.msra.mxu0 0.0
        %819 = vmatprep.subr.mxu0 0.0
        %820 = vmatpush2.msra.mxu0 0.0
        %821 = vmatprep.subr.mxu0 0.0
        %822 = vmatpush2.msra.mxu0 0.0
        %823 = vmatprep.subr.mxu0 0.0
        %824 = vmatpush2.msra.mxu0 0.0
        %825 = vmatprep.subr.mxu0 0.0
        %826 = vmatpush2.msra.mxu0 0.0
        %827 = vmatprep.subr.mxu0 0.0
        %828 = vmatpush2.msra.mxu0 0.0
        %829 = vmatprep.mubr.f32.mxu0 0.0
        %830 = vmatmul.mubr.f32.gmra.mxu0 %v655
        %v831 = vpop.f32.mrf.mxu0
        %v832 = vadd.f32 0.0, %v831
        %v833 = vpop.f32.mrf.mxu0
        %834 = vmatprep.mubr.f32.mxu0 0.0
        %835 = vmatmul.mubr.f32.gmra.mxu0 %v658
        %v836 = vpop.f32.mrf.mxu0
        %v837 = vadd.f32 0.0, %v836
        %v838 = vpop.f32.mrf.mxu0
        %839 = vdwg.mxu0
        %s840 = scalar_lea.vmem %s261, 48
        %v841 = vld [vmem:[%s840] sm:$0xff]
        %v842 = vld [vmem:[%s840 + $0x8] sm:$0xff]
        %845 = vrot.lane.b32.xlu0 %v832, 1
        %v846 = vpop.permute.xlu0 %845
        %847 = vrot.lane.b32.xlu0 %v837, 1
        %v848 = vpop.permute.xlu0 %847
        %v851 = vadd.f32 %v841, %v846
        %v852 = vadd.f32 %v842, %v848
        %v853 = vmax.f32 %v851, -1.0
        %v854 = vmax.f32 %v852, -1.0
        %v855 = vmin.f32 %v853, 1.0
        %v856 = vmin.f32 %v854, 1.0
        %859 = vrot.lane.b32.xlu0 %v855, 127
        %v860 = vpop.permute.xlu0 %859
        %861 = vrot.lane.b32.xlu0 %v856, 127
        %v862 = vpop.permute.xlu0 %861
        %s865 = scalar_lea.vmem %s266, 48
        %866 = vst.msk [vmem:[%s865] sm:$0xff] %vm271, %v860
        %867 = vst.msk [vmem:[%s865 + $0x8] sm:$0xff] %vm271, %v862
        %s868 = scalar_lea.vmem %s219, 16 [#allocation2]
        %v869 = vld [vmem:[%s868] sm:$0xff]
        %v870 = vld [vmem:[%s868 + $0x8] sm:$0xff]
        %v871 = vld [vmem:[#allocation4] sm:$0xff]
        %v872 = vld [vmem:[#allocation4 + $0x8] sm:$0xff]
        %v874 = vsel %vm271, %v871, 0
        %v877 = vsel %vm271, %v872, 0
        %879 = vmatprep.subr.mxu0 0.0
        %880 = vmatpush1.msra.mxu0 0.0
        %881 = vmatprep.subr.mxu0 0.0
        %882 = vmatpush1.msra.mxu0 0.0
        %883 = vmatprep.subr.mxu0 0.0
        %884 = vmatpush1.msra.mxu0 0.0
        %885 = vmatprep.subr.mxu0 0.0
        %886 = vmatpush1.msra.mxu0 0.0
        %887 = vmatprep.subr.mxu0 0.0
        %888 = vmatpush1.msra.mxu0 0.0
        %889 = vmatprep.subr.mxu0 0.0
        %890 = vmatpush1.msra.mxu0 0.0
        %891 = vmatprep.subr.mxu0 0.0
        %892 = vmatpush1.msra.mxu0 0.0
        %893 = vmatprep.subr.mxu0 0.0
        %894 = vmatpush1.msra.mxu0 0.0
        %895 = vmatprep.subr.mxu0 0.0
        %896 = vmatpush1.msra.mxu0 0.0
        %897 = vmatprep.subr.mxu0 0.0
        %898 = vmatpush1.msra.mxu0 0.0
        %899 = vmatprep.subr.mxu0 0.0
        %900 = vmatpush1.msra.mxu0 0.0
        %901 = vmatprep.subr.mxu0 0.0
        %902 = vmatpush1.msra.mxu0 0.0
        %903 = vmatprep.subr.mxu0 0.0
        %904 = vmatpush1.msra.mxu0 0.0
        %905 = vmatprep.subr.mxu0 0.0
        %906 = vmatpush1.msra.mxu0 0.0
        %907 = vmatprep.subr.mxu0 0.0
        %908 = vmatpush1.msra.mxu0 %v870
        %909 = vmatprep.subr.mxu0 0.0
        %910 = vmatpush1.msra.mxu0 %v869
        %911 = vmatprep.subr.mxu0 0.0
        %912 = vmatpush2.msra.mxu0 0.0
        %913 = vmatprep.subr.mxu0 0.0
        %914 = vmatpush2.msra.mxu0 0.0
        %915 = vmatprep.subr.mxu0 0.0
        %916 = vmatpush2.msra.mxu0 0.0
        %917 = vmatprep.subr.mxu0 0.0
        %918 = vmatpush2.msra.mxu0 0.0
        %919 = vmatprep.subr.mxu0 0.0
        %920 = vmatpush2.msra.mxu0 0.0
        %921 = vmatprep.subr.mxu0 0.0
        %922 = vmatpush2.msra.mxu0 0.0
        %923 = vmatprep.subr.mxu0 0.0
        %924 = vmatpush2.msra.mxu0 0.0
        %925 = vmatprep.subr.mxu0 0.0
        %926 = vmatpush2.msra.mxu0 0.0
        %927 = vmatprep.subr.mxu0 0.0
        %928 = vmatpush2.msra.mxu0 0.0
        %929 = vmatprep.subr.mxu0 0.0
        %930 = vmatpush2.msra.mxu0 0.0
        %931 = vmatprep.subr.mxu0 0.0
        %932 = vmatpush2.msra.mxu0 0.0
        %933 = vmatprep.subr.mxu0 0.0
        %934 = vmatpush2.msra.mxu0 0.0
        %935 = vmatprep.subr.mxu0 0.0
        %936 = vmatpush2.msra.mxu0 0.0
        %937 = vmatprep.subr.mxu0 0.0
        %938 = vmatpush2.msra.mxu0 0.0
        %939 = vmatprep.subr.mxu0 0.0
        %940 = vmatpush2.msra.mxu0 0.0
        %941 = vmatprep.subr.mxu0 0.0
        %942 = vmatpush2.msra.mxu0 0.0
        %943 = vmatprep.mubr.f32.mxu0 0.0
        %944 = vmatmul.mubr.f32.gmra.mxu0 %v874
        %v945 = vpop.f32.mrf.mxu0
        %v946 = vadd.f32 0.0, %v945
        %v947 = vpop.f32.mrf.mxu0
        %948 = vmatprep.mubr.f32.mxu0 0.0
        %949 = vmatmul.mubr.f32.gmra.mxu0 %v877
        %v950 = vpop.f32.mrf.mxu0
        %v951 = vadd.f32 0.0, %v950
        %v952 = vpop.f32.mrf.mxu0
        %953 = vdwg.mxu0
        %v954 = vld [vmem:[#allocation6] sm:$0xff]
        %v955 = vld [vmem:[#allocation6 + $0x8] sm:$0xff]
        %v957 = vsel %vm271, %v946, 0
        %v960 = vsel %vm271, %v951, 0
        %962 = vmatprep.subr.mxu0 0.0
        %963 = vmatpush1.msra.mxu0 0.0
        %964 = vmatprep.subr.mxu0 0.0
        %965 = vmatpush1.msra.mxu0 0.0
        %966 = vmatprep.subr.mxu0 0.0
        %967 = vmatpush1.msra.mxu0 0.0
        %968 = vmatprep.subr.mxu0 0.0
        %969 = vmatpush1.msra.mxu0 0.0
        %970 = vmatprep.subr.mxu0 0.0
        %971 = vmatpush1.msra.mxu0 0.0
        %972 = vmatprep.subr.mxu0 0.0
        %973 = vmatpush1.msra.mxu0 0.0
        %974 = vmatprep.subr.mxu0 0.0
        %975 = vmatpush1.msra.mxu0 0.0
        %976 = vmatprep.subr.mxu0 0.0
        %977 = vmatpush1.msra.mxu0 0.0
        %978 = vmatprep.subr.mxu0 0.0
        %979 = vmatpush1.msra.mxu0 0.0
        %980 = vmatprep.subr.mxu0 0.0
        %981 = vmatpush1.msra.mxu0 0.0
        %982 = vmatprep.subr.mxu0 0.0
        %983 = vmatpush1.msra.mxu0 0.0
        %984 = vmatprep.subr.mxu0 0.0
        %985 = vmatpush1.msra.mxu0 0.0
        %986 = vmatprep.subr.mxu0 0.0
        %987 = vmatpush1.msra.mxu0 0.0
        %988 = vmatprep.subr.mxu0 0.0
        %989 = vmatpush1.msra.mxu0 0.0
        %990 = vmatprep.subr.mxu0 0.0
        %991 = vmatpush1.msra.mxu0 %v955
        %992 = vmatprep.subr.mxu0 0.0
        %993 = vmatpush1.msra.mxu0 %v954
        %994 = vmatprep.subr.mxu0 0.0
        %995 = vmatpush2.msra.mxu0 0.0
        %996 = vmatprep.subr.mxu0 0.0
        %997 = vmatpush2.msra.mxu0 0.0
        %998 = vmatprep.subr.mxu0 0.0
        %999 = vmatpush2.msra.mxu0 0.0
        %1000 = vmatprep.subr.mxu0 0.0
        %1001 = vmatpush2.msra.mxu0 0.0
        %1002 = vmatprep.subr.mxu0 0.0
        %1003 = vmatpush2.msra.mxu0 0.0
        %1004 = vmatprep.subr.mxu0 0.0
        %1005 = vmatpush2.msra.mxu0 0.0
        %1006 = vmatprep.subr.mxu0 0.0
        %1007 = vmatpush2.msra.mxu0 0.0
        %1008 = vmatprep.subr.mxu0 0.0
        %1009 = vmatpush2.msra.mxu0 0.0
        %1010 = vmatprep.subr.mxu0 0.0
        %1011 = vmatpush2.msra.mxu0 0.0
        %1012 = vmatprep.subr.mxu0 0.0
        %1013 = vmatpush2.msra.mxu0 0.0
        %1014 = vmatprep.subr.mxu0 0.0
        %1015 = vmatpush2.msra.mxu0 0.0
        %1016 = vmatprep.subr.mxu0 0.0
        %1017 = vmatpush2.msra.mxu0 0.0
        %1018 = vmatprep.subr.mxu0 0.0
        %1019 = vmatpush2.msra.mxu0 0.0
        %1020 = vmatprep.subr.mxu0 0.0
        %1021 = vmatpush2.msra.mxu0 0.0
        %1022 = vmatprep.subr.mxu0 0.0
        %1023 = vmatpush2.msra.mxu0 0.0
        %1024 = vmatprep.subr.mxu0 0.0
        %1025 = vmatpush2.msra.mxu0 0.0
        %1026 = vmatprep.mubr.f32.mxu0 0.0
        %1027 = vmatmul.mubr.f32.gmra.mxu0 %v957
        %v1028 = vpop.f32.mrf.mxu0
        %v1029 = vadd.f32 0.0, %v1028
        %v1030 = vpop.f32.mrf.mxu0
        %1031 = vmatprep.mubr.f32.mxu0 0.0
        %1032 = vmatmul.mubr.f32.gmra.mxu0 %v960
        %v1033 = vpop.f32.mrf.mxu0
        %v1034 = vadd.f32 0.0, %v1033
        %v1035 = vpop.f32.mrf.mxu0
        %1036 = vdwg.mxu0
        %s1037 = scalar_lea.vmem %s261, 64
        %v1038 = vld [vmem:[%s1037] sm:$0xff]
        %v1039 = vld [vmem:[%s1037 + $0x8] sm:$0xff]
        %1042 = vrot.lane.b32.xlu0 %v1029, 1
        %v1043 = vpop.permute.xlu0 %1042
        %1044 = vrot.lane.b32.xlu0 %v1034, 1
        %v1045 = vpop.permute.xlu0 %1044
        %v1048 = vadd.f32 %v1038, %v1043
        %v1049 = vadd.f32 %v1039, %v1045
        %v1050 = vmax.f32 %v1048, -1.0
        %v1051 = vmax.f32 %v1049, -1.0
        %v1052 = vmin.f32 %v1050, 1.0
        %v1053 = vmin.f32 %v1051, 1.0
        %1056 = vrot.lane.b32.xlu0 %v1052, 127
        %v1057 = vpop.permute.xlu0 %1056
        %1058 = vrot.lane.b32.xlu0 %v1053, 127
        %v1059 = vpop.permute.xlu0 %1058
        %s1062 = scalar_lea.vmem %s266, 64
        %1063 = vst.msk [vmem:[%s1062] sm:$0xff] %vm271, %v1057
        %1064 = vst.msk [vmem:[%s1062 + $0x8] sm:$0xff] %vm271, %v1059
        %v1065 = vld [vmem:[%s462] sm:$0xff]
        %v1066 = vld [vmem:[%s462 + $0x8] sm:$0xff]
        %1067 = vmatprep.subr.mxu0 0.0
        %1068 = vmatpush1.msra.mxu0 0.0
        %1069 = vmatprep.subr.mxu0 0.0
        %1070 = vmatpush1.msra.mxu0 0.0
        %1071 = vmatprep.subr.mxu0 0.0
        %1072 = vmatpush1.msra.mxu0 0.0
        %1073 = vmatprep.subr.mxu0 0.0
        %1074 = vmatpush1.msra.mxu0 0.0
        %1075 = vmatprep.subr.mxu0 0.0
        %1076 = vmatpush1.msra.mxu0 0.0
        %1077 = vmatprep.subr.mxu0 0.0
        %1078 = vmatpush1.msra.mxu0 0.0
        %1079 = vmatprep.subr.mxu0 0.0
        %1080 = vmatpush1.msra.mxu0 0.0
        %1081 = vmatprep.subr.mxu0 0.0
        %1082 = vmatpush1.msra.mxu0 0.0
        %1083 = vmatprep.subr.mxu0 0.0
        %1084 = vmatpush1.msra.mxu0 0.0
        %1085 = vmatprep.subr.mxu0 0.0
        %1086 = vmatpush1.msra.mxu0 0.0
        %1087 = vmatprep.subr.mxu0 0.0
        %1088 = vmatpush1.msra.mxu0 0.0
        %1089 = vmatprep.subr.mxu0 0.0
        %1090 = vmatpush1.msra.mxu0 0.0
        %1091 = vmatprep.subr.mxu0 0.0
        %1092 = vmatpush1.msra.mxu0 0.0
        %1093 = vmatprep.subr.mxu0 0.0
        %1094 = vmatpush1.msra.mxu0 0.0
        %1095 = vmatprep.subr.mxu0 0.0
        %1096 = vmatpush1.msra.mxu0 %v1066
        %1097 = vmatprep.subr.mxu0 0.0
        %1098 = vmatpush1.msra.mxu0 %v1065
        %1099 = vmatprep.subr.mxu0 0.0
        %1100 = vmatpush2.msra.mxu0 0.0
        %1101 = vmatprep.subr.mxu0 0.0
        %1102 = vmatpush2.msra.mxu0 0.0
        %1103 = vmatprep.subr.mxu0 0.0
        %1104 = vmatpush2.msra.mxu0 0.0
        %1105 = vmatprep.subr.mxu0 0.0
        %1106 = vmatpush2.msra.mxu0 0.0
        %1107 = vmatprep.subr.mxu0 0.0
        %1108 = vmatpush2.msra.mxu0 0.0
        %1109 = vmatprep.subr.mxu0 0.0
        %1110 = vmatpush2.msra.mxu0 0.0
        %1111 = vmatprep.subr.mxu0 0.0
        %1112 = vmatpush2.msra.mxu0 0.0
        %1113 = vmatprep.subr.mxu0 0.0
        %1114 = vmatpush2.msra.mxu0 0.0
        %1115 = vmatprep.subr.mxu0 0.0
        %1116 = vmatpush2.msra.mxu0 0.0
        %1117 = vmatprep.subr.mxu0 0.0
        %1118 = vmatpush2.msra.mxu0 0.0
        %1119 = vmatprep.subr.mxu0 0.0
        %1120 = vmatpush2.msra.mxu0 0.0
        %1121 = vmatprep.subr.mxu0 0.0
        %1122 = vmatpush2.msra.mxu0 0.0
        %1123 = vmatprep.subr.mxu0 0.0
        %1124 = vmatpush2.msra.mxu0 0.0
        %1125 = vmatprep.subr.mxu0 0.0
        %1126 = vmatpush2.msra.mxu0 0.0
        %1127 = vmatprep.subr.mxu0 0.0
        %1128 = vmatpush2.msra.mxu0 0.0
        %1129 = vmatprep.subr.mxu0 0.0
        %1130 = vmatpush2.msra.mxu0 0.0
        %1131 = vmatprep.mubr.f32.mxu0 0.0
        %1132 = vmatmul.mubr.f32.gmra.mxu0 %v957
        %v1133 = vpop.f32.mrf.mxu0
        %v1134 = vadd.f32 0.0, %v1133
        %v1135 = vpop.f32.mrf.mxu0
        %1136 = vmatprep.mubr.f32.mxu0 0.0
        %1137 = vmatmul.mubr.f32.gmra.mxu0 %v960
        %v1138 = vpop.f32.mrf.mxu0
        %v1139 = vadd.f32 0.0, %v1138
        %v1140 = vpop.f32.mrf.mxu0
        %1141 = vdwg.mxu0
        %s1142 = scalar_lea.vmem %s261, 80
        %v1143 = vld [vmem:[%s1142] sm:$0xff]
        %v1144 = vld [vmem:[%s1142 + $0x8] sm:$0xff]
        %1147 = vrot.lane.b32.xlu0 %v1134, 1
        %v1148 = vpop.permute.xlu0 %1147
        %1149 = vrot.lane.b32.xlu0 %v1139, 1
        %v1150 = vpop.permute.xlu0 %1149
        %v1153 = vadd.f32 %v1143, %v1148
        %v1154 = vadd.f32 %v1144, %v1150
        %v1155 = vmax.f32 %v1153, -1.0
        %v1156 = vmax.f32 %v1154, -1.0
        %v1157 = vmin.f32 %v1155, 1.0
        %v1158 = vmin.f32 %v1156, 1.0
        %1161 = vrot.lane.b32.xlu0 %v1157, 127
        %v1162 = vpop.permute.xlu0 %1161
        %1163 = vrot.lane.b32.xlu0 %v1158, 127
        %v1164 = vpop.permute.xlu0 %1163
        %s1167 = scalar_lea.vmem %s266, 80
        %1168 = vst.msk [vmem:[%s1167] sm:$0xff] %vm271, %v1162
        %1169 = vst.msk [vmem:[%s1167 + $0x8] sm:$0xff] %vm271, %v1164
        %v1170 = vld [vmem:[%s568] sm:$0xff]
        %v1171 = vld [vmem:[%s568 + $0x8] sm:$0xff]
        %v1173 = vsel %vm271, %v1170, 0
        %v1176 = vsel %vm271, %v1171, 0
        %1178 = vmatprep.subr.mxu0 0.0
        %1179 = vmatpush1.msra.mxu0 0.0
        %1180 = vmatprep.subr.mxu0 0.0
        %1181 = vmatpush1.msra.mxu0 0.0
        %1182 = vmatprep.subr.mxu0 0.0
        %1183 = vmatpush1.msra.mxu0 0.0
        %1184 = vmatprep.subr.mxu0 0.0
        %1185 = vmatpush1.msra.mxu0 0.0
        %1186 = vmatprep.subr.mxu0 0.0
        %1187 = vmatpush1.msra.mxu0 0.0
        %1188 = vmatprep.subr.mxu0 0.0
        %1189 = vmatpush1.msra.mxu0 0.0
        %1190 = vmatprep.subr.mxu0 0.0
        %1191 = vmatpush1.msra.mxu0 0.0
        %1192 = vmatprep.subr.mxu0 0.0
        %1193 = vmatpush1.msra.mxu0 0.0
        %1194 = vmatprep.subr.mxu0 0.0
        %1195 = vmatpush1.msra.mxu0 0.0
        %1196 = vmatprep.subr.mxu0 0.0
        %1197 = vmatpush1.msra.mxu0 0.0
        %1198 = vmatprep.subr.mxu0 0.0
        %1199 = vmatpush1.msra.mxu0 0.0
        %1200 = vmatprep.subr.mxu0 0.0
        %1201 = vmatpush1.msra.mxu0 0.0
        %1202 = vmatprep.subr.mxu0 0.0
        %1203 = vmatpush1.msra.mxu0 0.0
        %1204 = vmatprep.subr.mxu0 0.0
        %1205 = vmatpush1.msra.mxu0 0.0
        %1206 = vmatprep.subr.mxu0 0.0
        %1207 = vmatpush1.msra.mxu0 %v870
        %1208 = vmatprep.subr.mxu0 0.0
        %1209 = vmatpush1.msra.mxu0 %v869
        %1210 = vmatprep.subr.mxu0 0.0
        %1211 = vmatpush2.msra.mxu0 0.0
        %1212 = vmatprep.subr.mxu0 0.0
        %1213 = vmatpush2.msra.mxu0 0.0
        %1214 = vmatprep.subr.mxu0 0.0
        %1215 = vmatpush2.msra.mxu0 0.0
        %1216 = vmatprep.subr.mxu0 0.0
        %1217 = vmatpush2.msra.mxu0 0.0
        %1218 = vmatprep.subr.mxu0 0.0
        %1219 = vmatpush2.msra.mxu0 0.0
        %1220 = vmatprep.subr.mxu0 0.0
        %1221 = vmatpush2.msra.mxu0 0.0
        %1222 = vmatprep.subr.mxu0 0.0
        %1223 = vmatpush2.msra.mxu0 0.0
        %1224 = vmatprep.subr.mxu0 0.0
        %1225 = vmatpush2.msra.mxu0 0.0
        %1226 = vmatprep.subr.mxu0 0.0
        %1227 = vmatpush2.msra.mxu0 0.0
        %1228 = vmatprep.subr.mxu0 0.0
        %1229 = vmatpush2.msra.mxu0 0.0
        %1230 = vmatprep.subr.mxu0 0.0
        %1231 = vmatpush2.msra.mxu0 0.0
        %1232 = vmatprep.subr.mxu0 0.0
        %1233 = vmatpush2.msra.mxu0 0.0
        %1234 = vmatprep.subr.mxu0 0.0
        %1235 = vmatpush2.msra.mxu0 0.0
        %1236 = vmatprep.subr.mxu0 0.0
        %1237 = vmatpush2.msra.mxu0 0.0
        %1238 = vmatprep.subr.mxu0 0.0
        %1239 = vmatpush2.msra.mxu0 0.0
        %1240 = vmatprep.subr.mxu0 0.0
        %1241 = vmatpush2.msra.mxu0 0.0
        %1242 = vmatprep.mubr.f32.mxu0 0.0
        %1243 = vmatmul.mubr.f32.gmra.mxu0 %v1173
        %v1244 = vpop.f32.mrf.mxu0
        %v1245 = vadd.f32 0.0, %v1244
        %v1246 = vpop.f32.mrf.mxu0
        %1247 = vmatprep.mubr.f32.mxu0 0.0
        %1248 = vmatmul.mubr.f32.gmra.mxu0 %v1176
        %v1249 = vpop.f32.mrf.mxu0
        %v1250 = vadd.f32 0.0, %v1249
        %v1251 = vpop.f32.mrf.mxu0
        %1252 = vdwg.mxu0
        %v1253 = vld [vmem:[#allocation6] sm:$0xff]
        %v1254 = vld [vmem:[#allocation6 + $0x8] sm:$0xff]
        %v1256 = vsel %vm271, %v1245, 0
        %v1259 = vsel %vm271, %v1250, 0
        %1261 = vmatprep.subr.mxu0 0.0
        %1262 = vmatpush1.msra.mxu0 0.0
        %1263 = vmatprep.subr.mxu0 0.0
        %1264 = vmatpush1.msra.mxu0 0.0
        %1265 = vmatprep.subr.mxu0 0.0
        %1266 = vmatpush1.msra.mxu0 0.0
        %1267 = vmatprep.subr.mxu0 0.0
        %1268 = vmatpush1.msra.mxu0 0.0
        %1269 = vmatprep.subr.mxu0 0.0
        %1270 = vmatpush1.msra.mxu0 0.0
        %1271 = vmatprep.subr.mxu0 0.0
        %1272 = vmatpush1.msra.mxu0 0.0
        %1273 = vmatprep.subr.mxu0 0.0
        %1274 = vmatpush1.msra.mxu0 0.0
        %1275 = vmatprep.subr.mxu0 0.0
        %1276 = vmatpush1.msra.mxu0 0.0
        %1277 = vmatprep.subr.mxu0 0.0
        %1278 = vmatpush1.msra.mxu0 0.0
        %1279 = vmatprep.subr.mxu0 0.0
        %1280 = vmatpush1.msra.mxu0 0.0
        %1281 = vmatprep.subr.mxu0 0.0
        %1282 = vmatpush1.msra.mxu0 0.0
        %1283 = vmatprep.subr.mxu0 0.0
        %1284 = vmatpush1.msra.mxu0 0.0
        %1285 = vmatprep.subr.mxu0 0.0
        %1286 = vmatpush1.msra.mxu0 0.0
        %1287 = vmatprep.subr.mxu0 0.0
        %1288 = vmatpush1.msra.mxu0 0.0
        %1289 = vmatprep.subr.mxu0 0.0
        %1290 = vmatpush1.msra.mxu0 %v1254
        %1291 = vmatprep.subr.mxu0 0.0
        %1292 = vmatpush1.msra.mxu0 %v1253
        %1293 = vmatprep.subr.mxu0 0.0
        %1294 = vmatpush2.msra.mxu0 0.0
        %1295 = vmatprep.subr.mxu0 0.0
        %1296 = vmatpush2.msra.mxu0 0.0
        %1297 = vmatprep.subr.mxu0 0.0
        %1298 = vmatpush2.msra.mxu0 0.0
        %1299 = vmatprep.subr.mxu0 0.0
        %1300 = vmatpush2.msra.mxu0 0.0
        %1301 = vmatprep.subr.mxu0 0.0
        %1302 = vmatpush2.msra.mxu0 0.0
        %1303 = vmatprep.subr.mxu0 0.0
        %1304 = vmatpush2.msra.mxu0 0.0
        %1305 = vmatprep.subr.mxu0 0.0
        %1306 = vmatpush2.msra.mxu0 0.0
        %1307 = vmatprep.subr.mxu0 0.0
        %1308 = vmatpush2.msra.mxu0 0.0
        %1309 = vmatprep.subr.mxu0 0.0
        %1310 = vmatpush2.msra.mxu0 0.0
        %1311 = vmatprep.subr.mxu0 0.0
        %1312 = vmatpush2.msra.mxu0 0.0
        %1313 = vmatprep.subr.mxu0 0.0
        %1314 = vmatpush2.msra.mxu0 0.0
        %1315 = vmatprep.subr.mxu0 0.0
        %1316 = vmatpush2.msra.mxu0 0.0
        %1317 = vmatprep.subr.mxu0 0.0
        %1318 = vmatpush2.msra.mxu0 0.0
        %1319 = vmatprep.subr.mxu0 0.0
        %1320 = vmatpush2.msra.mxu0 0.0
        %1321 = vmatprep.subr.mxu0 0.0
        %1322 = vmatpush2.msra.mxu0 0.0
        %1323 = vmatprep.subr.mxu0 0.0
        %1324 = vmatpush2.msra.mxu0 0.0
        %1325 = vmatprep.mubr.f32.mxu0 0.0
        %1326 = vmatmul.mubr.f32.gmra.mxu0 %v1256
        %v1327 = vpop.f32.mrf.mxu0
        %v1328 = vadd.f32 0.0, %v1327
        %v1329 = vpop.f32.mrf.mxu0
        %1330 = vmatprep.mubr.f32.mxu0 0.0
        %1331 = vmatmul.mubr.f32.gmra.mxu0 %v1259
        %v1332 = vpop.f32.mrf.mxu0
        %v1333 = vadd.f32 0.0, %v1332
        %v1334 = vpop.f32.mrf.mxu0
        %1335 = vdwg.mxu0
        %s1336 = scalar_lea.vmem %s261, 96
        %v1337 = vld [vmem:[%s1336] sm:$0xff]
        %v1338 = vld [vmem:[%s1336 + $0x8] sm:$0xff]
        %1341 = vrot.lane.b32.xlu0 %v1328, 1
        %v1342 = vpop.permute.xlu0 %1341
        %1343 = vrot.lane.b32.xlu0 %v1333, 1
        %v1344 = vpop.permute.xlu0 %1343
        %v1347 = vadd.f32 %v1337, %v1342
        %v1348 = vadd.f32 %v1338, %v1344
        %v1349 = vmax.f32 %v1347, -1.0
        %v1350 = vmax.f32 %v1348, -1.0
        %v1351 = vmin.f32 %v1349, 1.0
        %v1352 = vmin.f32 %v1350, 1.0
        %1355 = vrot.lane.b32.xlu0 %v1351, 127
        %v1356 = vpop.permute.xlu0 %1355
        %1357 = vrot.lane.b32.xlu0 %v1352, 127
        %v1358 = vpop.permute.xlu0 %1357
        %s1361 = scalar_lea.vmem %s266, 96
        %1362 = vst.msk [vmem:[%s1361] sm:$0xff] %vm271, %v1356
        %1363 = vst.msk [vmem:[%s1361 + $0x8] sm:$0xff] %vm271, %v1358
        %v1364 = vld [vmem:[%s462] sm:$0xff]
        %v1365 = vld [vmem:[%s462 + $0x8] sm:$0xff]
        %1366 = vmatprep.subr.mxu0 0.0
        %1367 = vmatpush1.msra.mxu0 0.0
        %1368 = vmatprep.subr.mxu0 0.0
        %1369 = vmatpush1.msra.mxu0 0.0
        %1370 = vmatprep.subr.mxu0 0.0
        %1371 = vmatpush1.msra.mxu0 0.0
        %1372 = vmatprep.subr.mxu0 0.0
        %1373 = vmatpush1.msra.mxu0 0.0
        %1374 = vmatprep.subr.mxu0 0.0
        %1375 = vmatpush1.msra.mxu0 0.0
        %1376 = vmatprep.subr.mxu0 0.0
        %1377 = vmatpush1.msra.mxu0 0.0
        %1378 = vmatprep.subr.mxu0 0.0
        %1379 = vmatpush1.msra.mxu0 0.0
        %1380 = vmatprep.subr.mxu0 0.0
        %1381 = vmatpush1.msra.mxu0 0.0
        %1382 = vmatprep.subr.mxu0 0.0
        %1383 = vmatpush1.msra.mxu0 0.0
        %1384 = vmatprep.subr.mxu0 0.0
        %1385 = vmatpush1.msra.mxu0 0.0
        %1386 = vmatprep.subr.mxu0 0.0
        %1387 = vmatpush1.msra.mxu0 0.0
        %1388 = vmatprep.subr.mxu0 0.0
        %1389 = vmatpush1.msra.mxu0 0.0
        %1390 = vmatprep.subr.mxu0 0.0
        %1391 = vmatpush1.msra.mxu0 0.0
        %1392 = vmatprep.subr.mxu0 0.0
        %1393 = vmatpush1.msra.mxu0 0.0
        %1394 = vmatprep.subr.mxu0 0.0
        %1395 = vmatpush1.msra.mxu0 %v1365
        %1396 = vmatprep.subr.mxu0 0.0
        %1397 = vmatpush1.msra.mxu0 %v1364
        %1398 = vmatprep.subr.mxu0 0.0
        %1399 = vmatpush2.msra.mxu0 0.0
        %1400 = vmatprep.subr.mxu0 0.0
        %1401 = vmatpush2.msra.mxu0 0.0
        %1402 = vmatprep.subr.mxu0 0.0
        %1403 = vmatpush2.msra.mxu0 0.0
        %1404 = vmatprep.subr.mxu0 0.0
        %1405 = vmatpush2.msra.mxu0 0.0
        %1406 = vmatprep.subr.mxu0 0.0
        %1407 = vmatpush2.msra.mxu0 0.0
        %1408 = vmatprep.subr.mxu0 0.0
        %1409 = vmatpush2.msra.mxu0 0.0
        %1410 = vmatprep.subr.mxu0 0.0
        %1411 = vmatpush2.msra.mxu0 0.0
        %1412 = vmatprep.subr.mxu0 0.0
        %1413 = vmatpush2.msra.mxu0 0.0
        %1414 = vmatprep.subr.mxu0 0.0
        %1415 = vmatpush2.msra.mxu0 0.0
        %1416 = vmatprep.subr.mxu0 0.0
        %1417 = vmatpush2.msra.mxu0 0.0
        %1418 = vmatprep.subr.mxu0 0.0
        %1419 = vmatpush2.msra.mxu0 0.0
        %1420 = vmatprep.subr.mxu0 0.0
        %1421 = vmatpush2.msra.mxu0 0.0
        %1422 = vmatprep.subr.mxu0 0.0
        %1423 = vmatpush2.msra.mxu0 0.0
        %1424 = vmatprep.subr.mxu0 0.0
        %1425 = vmatpush2.msra.mxu0 0.0
        %1426 = vmatprep.subr.mxu0 0.0
        %1427 = vmatpush2.msra.mxu0 0.0
        %1428 = vmatprep.subr.mxu0 0.0
        %1429 = vmatpush2.msra.mxu0 0.0
        %1430 = vmatprep.mubr.f32.mxu0 0.0
        %1431 = vmatmul.mubr.f32.gmra.mxu0 %v1256
        %v1432 = vpop.f32.mrf.mxu0
        %v1433 = vadd.f32 0.0, %v1432
        %v1434 = vpop.f32.mrf.mxu0
        %1435 = vmatprep.mubr.f32.mxu0 0.0
        %1436 = vmatmul.mubr.f32.gmra.mxu0 %v1259
        %v1437 = vpop.f32.mrf.mxu0
        %v1438 = vadd.f32 0.0, %v1437
        %v1439 = vpop.f32.mrf.mxu0
        %1440 = vdwg.mxu0
        %s1441 = scalar_lea.vmem %s261, 112
        %v1442 = vld [vmem:[%s1441] sm:$0xff]
        %v1443 = vld [vmem:[%s1441 + $0x8] sm:$0xff]
        %1446 = vrot.lane.b32.xlu0 %v1433, 1
        %v1447 = vpop.permute.xlu0 %1446
        %1448 = vrot.lane.b32.xlu0 %v1438, 1
        %v1449 = vpop.permute.xlu0 %1448
        %v1452 = vadd.f32 %v1442, %v1447
        %v1453 = vadd.f32 %v1443, %v1449
        %v1454 = vmax.f32 %v1452, -1.0
        %v1455 = vmax.f32 %v1453, -1.0
        %v1456 = vmin.f32 %v1454, 1.0
        %v1457 = vmin.f32 %v1455, 1.0
        %1460 = vrot.lane.b32.xlu0 %v1456, 127
        %v1461 = vpop.permute.xlu0 %1460
        %1462 = vrot.lane.b32.xlu0 %v1457, 127
        %v1463 = vpop.permute.xlu0 %1462
        %s1466 = scalar_lea.vmem %s266, 112
        %1467 = vst.msk [vmem:[%s1466] sm:$0xff] %vm271, %v1461
        %1468 = vst.msk [vmem:[%s1466 + $0x8] sm:$0xff] %vm271, %v1463
        %s1469 = scalar_lea.vmem %s219, 32 [#allocation2]
        %v1470 = vld [vmem:[%s1469] sm:$0xff]
        %v1471 = vld [vmem:[%s1469 + $0x8] sm:$0xff]
        %v1472 = vld [vmem:[#allocation4] sm:$0xff]
        %v1473 = vld [vmem:[#allocation4 + $0x8] sm:$0xff]
        %v1475 = vsel %vm271, %v1472, 0
        %v1478 = vsel %vm271, %v1473, 0
        %1480 = vmatprep.subr.mxu0 0.0
        %1481 = vmatpush1.msra.mxu0 0.0
        %1482 = vmatprep.subr.mxu0 0.0
        %1483 = vmatpush1.msra.mxu0 0.0
        %1484 = vmatprep.subr.mxu0 0.0
        %1485 = vmatpush1.msra.mxu0 0.0
        %1486 = vmatprep.subr.mxu0 0.0
        %1487 = vmatpush1.msra.mxu0 0.0
        %1488 = vmatprep.subr.mxu0 0.0
        %1489 = vmatpush1.msra.mxu0 0.0
        %1490 = vmatprep.subr.mxu0 0.0
        %1491 = vmatpush1.msra.mxu0 0.0
        %1492 = vmatprep.subr.mxu0 0.0
        %1493 = vmatpush1.msra.mxu0 0.0
        %1494 = vmatprep.subr.mxu0 0.0
        %1495 = vmatpush1.msra.mxu0 0.0
        %1496 = vmatprep.subr.mxu0 0.0
        %1497 = vmatpush1.msra.mxu0 0.0
        %1498 = vmatprep.subr.mxu0 0.0
        %1499 = vmatpush1.msra.mxu0 0.0
        %1500 = vmatprep.subr.mxu0 0.0
        %1501 = vmatpush1.msra.mxu0 0.0
        %1502 = vmatprep.subr.mxu0 0.0
        %1503 = vmatpush1.msra.mxu0 0.0
        %1504 = vmatprep.subr.mxu0 0.0
        %1505 = vmatpush1.msra.mxu0 0.0
        %1506 = vmatprep.subr.mxu0 0.0
        %1507 = vmatpush1.msra.mxu0 0.0
        %1508 = vmatprep.subr.mxu0 0.0
        %1509 = vmatpush1.msra.mxu0 %v1471
        %1510 = vmatprep.subr.mxu0 0.0
        %1511 = vmatpush1.msra.mxu0 %v1470
        %1512 = vmatprep.subr.mxu0 0.0
        %1513 = vmatpush2.msra.mxu0 0.0
        %1514 = vmatprep.subr.mxu0 0.0
        %1515 = vmatpush2.msra.mxu0 0.0
        %1516 = vmatprep.subr.mxu0 0.0
        %1517 = vmatpush2.msra.mxu0 0.0
        %1518 = vmatprep.subr.mxu0 0.0
        %1519 = vmatpush2.msra.mxu0 0.0
        %1520 = vmatprep.subr.mxu0 0.0
        %1521 = vmatpush2.msra.mxu0 0.0
        %1522 = vmatprep.subr.mxu0 0.0
        %1523 = vmatpush2.msra.mxu0 0.0
        %1524 = vmatprep.subr.mxu0 0.0
        %1525 = vmatpush2.msra.mxu0 0.0
        %1526 = vmatprep.subr.mxu0 0.0
        %1527 = vmatpush2.msra.mxu0 0.0
        %1528 = vmatprep.subr.mxu0 0.0
        %1529 = vmatpush2.msra.mxu0 0.0
        %1530 = vmatprep.subr.mxu0 0.0
        %1531 = vmatpush2.msra.mxu0 0.0
        %1532 = vmatprep.subr.mxu0 0.0
        %1533 = vmatpush2.msra.mxu0 0.0
        %1534 = vmatprep.subr.mxu0 0.0
        %1535 = vmatpush2.msra.mxu0 0.0
        %1536 = vmatprep.subr.mxu0 0.0
        %1537 = vmatpush2.msra.mxu0 0.0
        %1538 = vmatprep.subr.mxu0 0.0
        %1539 = vmatpush2.msra.mxu0 0.0
        %1540 = vmatprep.subr.mxu0 0.0
        %1541 = vmatpush2.msra.mxu0 0.0
        %1542 = vmatprep.subr.mxu0 0.0
        %1543 = vmatpush2.msra.mxu0 0.0
        %1544 = vmatprep.mubr.f32.mxu0 0.0
        %1545 = vmatmul.mubr.f32.gmra.mxu0 %v1475
        %v1546 = vpop.f32.mrf.mxu0
        %v1547 = vadd.f32 0.0, %v1546
        %v1548 = vpop.f32.mrf.mxu0
        %1549 = vmatprep.mubr.f32.mxu0 0.0
        %1550 = vmatmul.mubr.f32.gmra.mxu0 %v1478
        %v1551 = vpop.f32.mrf.mxu0
        %v1552 = vadd.f32 0.0, %v1551
        %v1553 = vpop.f32.mrf.mxu0
        %1554 = vdwg.mxu0
        %v1555 = vld [vmem:[#allocation6] sm:$0xff]
        %v1556 = vld [vmem:[#allocation6 + $0x8] sm:$0xff]
        %v1558 = vsel %vm271, %v1547, 0
        %v1561 = vsel %vm271, %v1552, 0
        %1563 = vmatprep.subr.mxu0 0.0
        %1564 = vmatpush1.msra.mxu0 0.0
        %1565 = vmatprep.subr.mxu0 0.0
        %1566 = vmatpush1.msra.mxu0 0.0
        %1567 = vmatprep.subr.mxu0 0.0
        %1568 = vmatpush1.msra.mxu0 0.0
        %1569 = vmatprep.subr.mxu0 0.0
        %1570 = vmatpush1.msra.mxu0 0.0
        %1571 = vmatprep.subr.mxu0 0.0
        %1572 = vmatpush1.msra.mxu0 0.0
        %1573 = vmatprep.subr.mxu0 0.0
        %1574 = vmatpush1.msra.mxu0 0.0
        %1575 = vmatprep.subr.mxu0 0.0
        %1576 = vmatpush1.msra.mxu0 0.0
        %1577 = vmatprep.subr.mxu0 0.0
        %1578 = vmatpush1.msra.mxu0 0.0
        %1579 = vmatprep.subr.mxu0 0.0
        %1580 = vmatpush1.msra.mxu0 0.0
        %1581 = vmatprep.subr.mxu0 0.0
        %1582 = vmatpush1.msra.mxu0 0.0
        %1583 = vmatprep.subr.mxu0 0.0
        %1584 = vmatpush1.msra.mxu0 0.0
        %1585 = vmatprep.subr.mxu0 0.0
        %1586 = vmatpush1.msra.mxu0 0.0
        %1587 = vmatprep.subr.mxu0 0.0
        %1588 = vmatpush1.msra.mxu0 0.0
        %1589 = vmatprep.subr.mxu0 0.0
        %1590 = vmatpush1.msra.mxu0 0.0
        %1591 = vmatprep.subr.mxu0 0.0
        %1592 = vmatpush1.msra.mxu0 %v1556
        %1593 = vmatprep.subr.mxu0 0.0
        %1594 = vmatpush1.msra.mxu0 %v1555
        %1595 = vmatprep.subr.mxu0 0.0
        %1596 = vmatpush2.msra.mxu0 0.0
        %1597 = vmatprep.subr.mxu0 0.0
        %1598 = vmatpush2.msra.mxu0 0.0
        %1599 = vmatprep.subr.mxu0 0.0
        %1600 = vmatpush2.msra.mxu0 0.0
        %1601 = vmatprep.subr.mxu0 0.0
        %1602 = vmatpush2.msra.mxu0 0.0
        %1603 = vmatprep.subr.mxu0 0.0
        %1604 = vmatpush2.msra.mxu0 0.0
        %1605 = vmatprep.subr.mxu0 0.0
        %1606 = vmatpush2.msra.mxu0 0.0
        %1607 = vmatprep.subr.mxu0 0.0
        %1608 = vmatpush2.msra.mxu0 0.0
        %1609 = vmatprep.subr.mxu0 0.0
        %1610 = vmatpush2.msra.mxu0 0.0
        %1611 = vmatprep.subr.mxu0 0.0
        %1612 = vmatpush2.msra.mxu0 0.0
        %1613 = vmatprep.subr.mxu0 0.0
        %1614 = vmatpush2.msra.mxu0 0.0
        %1615 = vmatprep.subr.mxu0 0.0
        %1616 = vmatpush2.msra.mxu0 0.0
        %1617 = vmatprep.subr.mxu0 0.0
        %1618 = vmatpush2.msra.mxu0 0.0
        %1619 = vmatprep.subr.mxu0 0.0
        %1620 = vmatpush2.msra.mxu0 0.0
        %1621 = vmatprep.subr.mxu0 0.0
        %1622 = vmatpush2.msra.mxu0 0.0
        %1623 = vmatprep.subr.mxu0 0.0
        %1624 = vmatpush2.msra.mxu0 0.0
        %1625 = vmatprep.subr.mxu0 0.0
        %1626 = vmatpush2.msra.mxu0 0.0
        %1627 = vmatprep.mubr.f32.mxu0 0.0
        %1628 = vmatmul.mubr.f32.gmra.mxu0 %v1558
        %v1629 = vpop.f32.mrf.mxu0
        %v1630 = vadd.f32 0.0, %v1629
        %v1631 = vpop.f32.mrf.mxu0
        %1632 = vmatprep.mubr.f32.mxu0 0.0
        %1633 = vmatmul.mubr.f32.gmra.mxu0 %v1561
        %v1634 = vpop.f32.mrf.mxu0
        %v1635 = vadd.f32 0.0, %v1634
        %v1636 = vpop.f32.mrf.mxu0
        %1637 = vdwg.mxu0
        %s1638 = scalar_lea.vmem %s261, 128
        %v1639 = vld [vmem:[%s1638] sm:$0xff]
        %v1640 = vld [vmem:[%s1638 + $0x8] sm:$0xff]
        %1643 = vrot.lane.b32.xlu0 %v1630, 1
        %v1644 = vpop.permute.xlu0 %1643
        %1645 = vrot.lane.b32.xlu0 %v1635, 1
        %v1646 = vpop.permute.xlu0 %1645
        %v1649 = vadd.f32 %v1639, %v1644
        %v1650 = vadd.f32 %v1640, %v1646
        %v1651 = vmax.f32 %v1649, -1.0
        %v1652 = vmax.f32 %v1650, -1.0
        %v1653 = vmin.f32 %v1651, 1.0
        %v1654 = vmin.f32 %v1652, 1.0
        %1657 = vrot.lane.b32.xlu0 %v1653, 127
        %v1658 = vpop.permute.xlu0 %1657
        %1659 = vrot.lane.b32.xlu0 %v1654, 127
        %v1660 = vpop.permute.xlu0 %1659
        %s1663 = scalar_lea.vmem %s266, 128
        %1664 = vst.msk [vmem:[%s1663] sm:$0xff] %vm271, %v1658
        %1665 = vst.msk [vmem:[%s1663 + $0x8] sm:$0xff] %vm271, %v1660
        %v1666 = vld [vmem:[%s462] sm:$0xff]
        %v1667 = vld [vmem:[%s462 + $0x8] sm:$0xff]
        %1668 = vmatprep.subr.mxu0 0.0
        %1669 = vmatpush1.msra.mxu0 0.0
        %1670 = vmatprep.subr.mxu0 0.0
        %1671 = vmatpush1.msra.mxu0 0.0
        %1672 = vmatprep.subr.mxu0 0.0
        %1673 = vmatpush1.msra.mxu0 0.0
        %1674 = vmatprep.subr.mxu0 0.0
        %1675 = vmatpush1.msra.mxu0 0.0
        %1676 = vmatprep.subr.mxu0 0.0
        %1677 = vmatpush1.msra.mxu0 0.0
        %1678 = vmatprep.subr.mxu0 0.0
        %1679 = vmatpush1.msra.mxu0 0.0
        %1680 = vmatprep.subr.mxu0 0.0
        %1681 = vmatpush1.msra.mxu0 0.0
        %1682 = vmatprep.subr.mxu0 0.0
        %1683 = vmatpush1.msra.mxu0 0.0
        %1684 = vmatprep.subr.mxu0 0.0
        %1685 = vmatpush1.msra.mxu0 0.0
        %1686 = vmatprep.subr.mxu0 0.0
        %1687 = vmatpush1.msra.mxu0 0.0
        %1688 = vmatprep.subr.mxu0 0.0
        %1689 = vmatpush1.msra.mxu0 0.0
        %1690 = vmatprep.subr.mxu0 0.0
        %1691 = vmatpush1.msra.mxu0 0.0
        %1692 = vmatprep.subr.mxu0 0.0
        %1693 = vmatpush1.msra.mxu0 0.0
        %1694 = vmatprep.subr.mxu0 0.0
        %1695 = vmatpush1.msra.mxu0 0.0
        %1696 = vmatprep.subr.mxu0 0.0
        %1697 = vmatpush1.msra.mxu0 %v1667
        %1698 = vmatprep.subr.mxu0 0.0
        %1699 = vmatpush1.msra.mxu0 %v1666
        %1700 = vmatprep.subr.mxu0 0.0
        %1701 = vmatpush2.msra.mxu0 0.0
        %1702 = vmatprep.subr.mxu0 0.0
        %1703 = vmatpush2.msra.mxu0 0.0
        %1704 = vmatprep.subr.mxu0 0.0
        %1705 = vmatpush2.msra.mxu0 0.0
        %1706 = vmatprep.subr.mxu0 0.0
        %1707 = vmatpush2.msra.mxu0 0.0
        %1708 = vmatprep.subr.mxu0 0.0
        %1709 = vmatpush2.msra.mxu0 0.0
        %1710 = vmatprep.subr.mxu0 0.0
        %1711 = vmatpush2.msra.mxu0 0.0
        %1712 = vmatprep.subr.mxu0 0.0
        %1713 = vmatpush2.msra.mxu0 0.0
        %1714 = vmatprep.subr.mxu0 0.0
        %1715 = vmatpush2.msra.mxu0 0.0
        %1716 = vmatprep.subr.mxu0 0.0
        %1717 = vmatpush2.msra.mxu0 0.0
        %1718 = vmatprep.subr.mxu0 0.0
        %1719 = vmatpush2.msra.mxu0 0.0
        %1720 = vmatprep.subr.mxu0 0.0
        %1721 = vmatpush2.msra.mxu0 0.0
        %1722 = vmatprep.subr.mxu0 0.0
        %1723 = vmatpush2.msra.mxu0 0.0
        %1724 = vmatprep.subr.mxu0 0.0
        %1725 = vmatpush2.msra.mxu0 0.0
        %1726 = vmatprep.subr.mxu0 0.0
        %1727 = vmatpush2.msra.mxu0 0.0
        %1728 = vmatprep.subr.mxu0 0.0
        %1729 = vmatpush2.msra.mxu0 0.0
        %1730 = vmatprep.subr.mxu0 0.0
        %1731 = vmatpush2.msra.mxu0 0.0
        %1732 = vmatprep.mubr.f32.mxu0 0.0
        %1733 = vmatmul.mubr.f32.gmra.mxu0 %v1558
        %v1734 = vpop.f32.mrf.mxu0
        %v1735 = vadd.f32 0.0, %v1734
        %v1736 = vpop.f32.mrf.mxu0
        %1737 = vmatprep.mubr.f32.mxu0 0.0
        %1738 = vmatmul.mubr.f32.gmra.mxu0 %v1561
        %v1739 = vpop.f32.mrf.mxu0
        %v1740 = vadd.f32 0.0, %v1739
        %v1741 = vpop.f32.mrf.mxu0
        %1742 = vdwg.mxu0
        %s1743 = scalar_lea.vmem %s261, 144
        %v1744 = vld [vmem:[%s1743] sm:$0xff]
        %v1745 = vld [vmem:[%s1743 + $0x8] sm:$0xff]
        %1748 = vrot.lane.b32.xlu0 %v1735, 1
        %v1749 = vpop.permute.xlu0 %1748
        %1750 = vrot.lane.b32.xlu0 %v1740, 1
        %v1751 = vpop.permute.xlu0 %1750
        %v1754 = vadd.f32 %v1744, %v1749
        %v1755 = vadd.f32 %v1745, %v1751
        %v1756 = vmax.f32 %v1754, -1.0
        %v1757 = vmax.f32 %v1755, -1.0
        %v1758 = vmin.f32 %v1756, 1.0
        %v1759 = vmin.f32 %v1757, 1.0
        %1762 = vrot.lane.b32.xlu0 %v1758, 127
        %v1763 = vpop.permute.xlu0 %1762
        %1764 = vrot.lane.b32.xlu0 %v1759, 127
        %v1765 = vpop.permute.xlu0 %1764
        %s1768 = scalar_lea.vmem %s266, 144
        %1769 = vst.msk [vmem:[%s1768] sm:$0xff] %vm271, %v1763
        %1770 = vst.msk [vmem:[%s1768 + $0x8] sm:$0xff] %vm271, %v1765
        %v1771 = vld [vmem:[%s568] sm:$0xff]
        %v1772 = vld [vmem:[%s568 + $0x8] sm:$0xff]
        %v1774 = vsel %vm271, %v1771, 0
        %v1777 = vsel %vm271, %v1772, 0
        %1779 = vmatprep.subr.mxu0 0.0
        %1780 = vmatpush1.msra.mxu0 0.0
        %1781 = vmatprep.subr.mxu0 0.0
        %1782 = vmatpush1.msra.mxu0 0.0
        %1783 = vmatprep.subr.mxu0 0.0
        %1784 = vmatpush1.msra.mxu0 0.0
        %1785 = vmatprep.subr.mxu0 0.0
        %1786 = vmatpush1.msra.mxu0 0.0
        %1787 = vmatprep.subr.mxu0 0.0
        %1788 = vmatpush1.msra.mxu0 0.0
        %1789 = vmatprep.subr.mxu0 0.0
        %1790 = vmatpush1.msra.mxu0 0.0
        %1791 = vmatprep.subr.mxu0 0.0
        %1792 = vmatpush1.msra.mxu0 0.0
        %1793 = vmatprep.subr.mxu0 0.0
        %1794 = vmatpush1.msra.mxu0 0.0
        %1795 = vmatprep.subr.mxu0 0.0
        %1796 = vmatpush1.msra.mxu0 0.0
        %1797 = vmatprep.subr.mxu0 0.0
        %1798 = vmatpush1.msra.mxu0 0.0
        %1799 = vmatprep.subr.mxu0 0.0
        %1800 = vmatpush1.msra.mxu0 0.0
        %1801 = vmatprep.subr.mxu0 0.0
        %1802 = vmatpush1.msra.mxu0 0.0
        %1803 = vmatprep.subr.mxu0 0.0
        %1804 = vmatpush1.msra.mxu0 0.0
        %1805 = vmatprep.subr.mxu0 0.0
        %1806 = vmatpush1.msra.mxu0 0.0
        %1807 = vmatprep.subr.mxu0 0.0
        %1808 = vmatpush1.msra.mxu0 %v1471
        %1809 = vmatprep.subr.mxu0 0.0
        %1810 = vmatpush1.msra.mxu0 %v1470
        %1811 = vmatprep.subr.mxu0 0.0
        %1812 = vmatpush2.msra.mxu0 0.0
        %1813 = vmatprep.subr.mxu0 0.0
        %1814 = vmatpush2.msra.mxu0 0.0
        %1815 = vmatprep.subr.mxu0 0.0
        %1816 = vmatpush2.msra.mxu0 0.0
        %1817 = vmatprep.subr.mxu0 0.0
        %1818 = vmatpush2.msra.mxu0 0.0
        %1819 = vmatprep.subr.mxu0 0.0
        %1820 = vmatpush2.msra.mxu0 0.0
        %1821 = vmatprep.subr.mxu0 0.0
        %1822 = vmatpush2.msra.mxu0 0.0
        %1823 = vmatprep.subr.mxu0 0.0
        %1824 = vmatpush2.msra.mxu0 0.0
        %1825 = vmatprep.subr.mxu0 0.0
        %1826 = vmatpush2.msra.mxu0 0.0
        %1827 = vmatprep.subr.mxu0 0.0
        %1828 = vmatpush2.msra.mxu0 0.0
        %1829 = vmatprep.subr.mxu0 0.0
        %1830 = vmatpush2.msra.mxu0 0.0
        %1831 = vmatprep.subr.mxu0 0.0
        %1832 = vmatpush2.msra.mxu0 0.0
        %1833 = vmatprep.subr.mxu0 0.0
        %1834 = vmatpush2.msra.mxu0 0.0
        %1835 = vmatprep.subr.mxu0 0.0
        %1836 = vmatpush2.msra.mxu0 0.0
        %1837 = vmatprep.subr.mxu0 0.0
        %1838 = vmatpush2.msra.mxu0 0.0
        %1839 = vmatprep.subr.mxu0 0.0
        %1840 = vmatpush2.msra.mxu0 0.0
        %1841 = vmatprep.subr.mxu0 0.0
        %1842 = vmatpush2.msra.mxu0 0.0
        %1843 = vmatprep.mubr.f32.mxu0 0.0
        %1844 = vmatmul.mubr.f32.gmra.mxu0 %v1774
        %v1845 = vpop.f32.mrf.mxu0
        %v1846 = vadd.f32 0.0, %v1845
        %v1847 = vpop.f32.mrf.mxu0
        %1848 = vmatprep.mubr.f32.mxu0 0.0
        %1849 = vmatmul.mubr.f32.gmra.mxu0 %v1777
        %v1850 = vpop.f32.mrf.mxu0
        %v1851 = vadd.f32 0.0, %v1850
        %v1852 = vpop.f32.mrf.mxu0
        %1853 = vdwg.mxu0
        %v1854 = vld [vmem:[#allocation6] sm:$0xff]
        %v1855 = vld [vmem:[#allocation6 + $0x8] sm:$0xff]
        %v1857 = vsel %vm271, %v1846, 0
        %v1860 = vsel %vm271, %v1851, 0
        %1862 = vmatprep.subr.mxu0 0.0
        %1863 = vmatpush1.msra.mxu0 0.0
        %1864 = vmatprep.subr.mxu0 0.0
        %1865 = vmatpush1.msra.mxu0 0.0
        %1866 = vmatprep.subr.mxu0 0.0
        %1867 = vmatpush1.msra.mxu0 0.0
        %1868 = vmatprep.subr.mxu0 0.0
        %1869 = vmatpush1.msra.mxu0 0.0
        %1870 = vmatprep.subr.mxu0 0.0
        %1871 = vmatpush1.msra.mxu0 0.0
        %1872 = vmatprep.subr.mxu0 0.0
        %1873 = vmatpush1.msra.mxu0 0.0
        %1874 = vmatprep.subr.mxu0 0.0
        %1875 = vmatpush1.msra.mxu0 0.0
        %1876 = vmatprep.subr.mxu0 0.0
        %1877 = vmatpush1.msra.mxu0 0.0
        %1878 = vmatprep.subr.mxu0 0.0
        %1879 = vmatpush1.msra.mxu0 0.0
        %1880 = vmatprep.subr.mxu0 0.0
        %1881 = vmatpush1.msra.mxu0 0.0
        %1882 = vmatprep.subr.mxu0 0.0
        %1883 = vmatpush1.msra.mxu0 0.0
        %1884 = vmatprep.subr.mxu0 0.0
        %1885 = vmatpush1.msra.mxu0 0.0
        %1886 = vmatprep.subr.mxu0 0.0
        %1887 = vmatpush1.msra.mxu0 0.0
        %1888 = vmatprep.subr.mxu0 0.0
        %1889 = vmatpush1.msra.mxu0 0.0
        %1890 = vmatprep.subr.mxu0 0.0
        %1891 = vmatpush1.msra.mxu0 %v1855
        %1892 = vmatprep.subr.mxu0 0.0
        %1893 = vmatpush1.msra.mxu0 %v1854
        %1894 = vmatprep.subr.mxu0 0.0
        %1895 = vmatpush2.msra.mxu0 0.0
        %1896 = vmatprep.subr.mxu0 0.0
        %1897 = vmatpush2.msra.mxu0 0.0
        %1898 = vmatprep.subr.mxu0 0.0
        %1899 = vmatpush2.msra.mxu0 0.0
        %1900 = vmatprep.subr.mxu0 0.0
        %1901 = vmatpush2.msra.mxu0 0.0
        %1902 = vmatprep.subr.mxu0 0.0
        %1903 = vmatpush2.msra.mxu0 0.0
        %1904 = vmatprep.subr.mxu0 0.0
        %1905 = vmatpush2.msra.mxu0 0.0
        %1906 = vmatprep.subr.mxu0 0.0
        %1907 = vmatpush2.msra.mxu0 0.0
        %1908 = vmatprep.subr.mxu0 0.0
        %1909 = vmatpush2.msra.mxu0 0.0
        %1910 = vmatprep.subr.mxu0 0.0
        %1911 = vmatpush2.msra.mxu0 0.0
        %1912 = vmatprep.subr.mxu0 0.0
        %1913 = vmatpush2.msra.mxu0 0.0
        %1914 = vmatprep.subr.mxu0 0.0
        %1915 = vmatpush2.msra.mxu0 0.0
        %1916 = vmatprep.subr.mxu0 0.0
        %1917 = vmatpush2.msra.mxu0 0.0
        %1918 = vmatprep.subr.mxu0 0.0
        %1919 = vmatpush2.msra.mxu0 0.0
        %1920 = vmatprep.subr.mxu0 0.0
        %1921 = vmatpush2.msra.mxu0 0.0
        %1922 = vmatprep.subr.mxu0 0.0
        %1923 = vmatpush2.msra.mxu0 0.0
        %1924 = vmatprep.subr.mxu0 0.0
        %1925 = vmatpush2.msra.mxu0 0.0
        %1926 = vmatprep.mubr.f32.mxu0 0.0
        %1927 = vmatmul.mubr.f32.gmra.mxu0 %v1857
        %v1928 = vpop.f32.mrf.mxu0
        %v1929 = vadd.f32 0.0, %v1928
        %v1930 = vpop.f32.mrf.mxu0
        %1931 = vmatprep.mubr.f32.mxu0 0.0
        %1932 = vmatmul.mubr.f32.gmra.mxu0 %v1860
        %v1933 = vpop.f32.mrf.mxu0
        %v1934 = vadd.f32 0.0, %v1933
        %v1935 = vpop.f32.mrf.mxu0
        %1936 = vdwg.mxu0
        %s1937 = scalar_lea.vmem %s261, 160
        %v1938 = vld [vmem:[%s1937] sm:$0xff]
        %v1939 = vld [vmem:[%s1937 + $0x8] sm:$0xff]
        %1942 = vrot.lane.b32.xlu0 %v1929, 1
        %v1943 = vpop.permute.xlu0 %1942
        %1944 = vrot.lane.b32.xlu0 %v1934, 1
        %v1945 = vpop.permute.xlu0 %1944
        %v1948 = vadd.f32 %v1938, %v1943
        %v1949 = vadd.f32 %v1939, %v1945
        %v1950 = vmax.f32 %v1948, -1.0
        %v1951 = vmax.f32 %v1949, -1.0
        %v1952 = vmin.f32 %v1950, 1.0
        %v1953 = vmin.f32 %v1951, 1.0
        %1956 = vrot.lane.b32.xlu0 %v1952, 127
        %v1957 = vpop.permute.xlu0 %1956
        %1958 = vrot.lane.b32.xlu0 %v1953, 127
        %v1959 = vpop.permute.xlu0 %1958
        %s1962 = scalar_lea.vmem %s266, 160
        %1963 = vst.msk [vmem:[%s1962] sm:$0xff] %vm271, %v1957
        %1964 = vst.msk [vmem:[%s1962 + $0x8] sm:$0xff] %vm271, %v1959
        %v1965 = vld [vmem:[%s462] sm:$0xff]
        %v1966 = vld [vmem:[%s462 + $0x8] sm:$0xff]
        %1967 = vmatprep.subr.mxu0 0.0
        %1968 = vmatpush1.msra.mxu0 0.0
        %1969 = vmatprep.subr.mxu0 0.0
        %1970 = vmatpush1.msra.mxu0 0.0
        %1971 = vmatprep.subr.mxu0 0.0
        %1972 = vmatpush1.msra.mxu0 0.0
        %1973 = vmatprep.subr.mxu0 0.0
        %1974 = vmatpush1.msra.mxu0 0.0
        %1975 = vmatprep.subr.mxu0 0.0
        %1976 = vmatpush1.msra.mxu0 0.0
        %1977 = vmatprep.subr.mxu0 0.0
        %1978 = vmatpush1.msra.mxu0 0.0
        %1979 = vmatprep.subr.mxu0 0.0
        %1980 = vmatpush1.msra.mxu0 0.0
        %1981 = vmatprep.subr.mxu0 0.0
        %1982 = vmatpush1.msra.mxu0 0.0
        %1983 = vmatprep.subr.mxu0 0.0
        %1984 = vmatpush1.msra.mxu0 0.0
        %1985 = vmatprep.subr.mxu0 0.0
        %1986 = vmatpush1.msra.mxu0 0.0
        %1987 = vmatprep.subr.mxu0 0.0
        %1988 = vmatpush1.msra.mxu0 0.0
        %1989 = vmatprep.subr.mxu0 0.0
        %1990 = vmatpush1.msra.mxu0 0.0
        %1991 = vmatprep.subr.mxu0 0.0
        %1992 = vmatpush1.msra.mxu0 0.0
        %1993 = vmatprep.subr.mxu0 0.0
        %1994 = vmatpush1.msra.mxu0 0.0
        %1995 = vmatprep.subr.mxu0 0.0
        %1996 = vmatpush1.msra.mxu0 %v1966
        %1997 = vmatprep.subr.mxu0 0.0
        %1998 = vmatpush1.msra.mxu0 %v1965
        %1999 = vmatprep.subr.mxu0 0.0
        %2000 = vmatpush2.msra.mxu0 0.0
        %2001 = vmatprep.subr.mxu0 0.0
        %2002 = vmatpush2.msra.mxu0 0.0
        %2003 = vmatprep.subr.mxu0 0.0
        %2004 = vmatpush2.msra.mxu0 0.0
        %2005 = vmatprep.subr.mxu0 0.0
        %2006 = vmatpush2.msra.mxu0 0.0
        %2007 = vmatprep.subr.mxu0 0.0
        %2008 = vmatpush2.msra.mxu0 0.0
        %2009 = vmatprep.subr.mxu0 0.0
        %2010 = vmatpush2.msra.mxu0 0.0
        %2011 = vmatprep.subr.mxu0 0.0
        %2012 = vmatpush2.msra.mxu0 0.0
        %2013 = vmatprep.subr.mxu0 0.0
        %2014 = vmatpush2.msra.mxu0 0.0
        %2015 = vmatprep.subr.mxu0 0.0
        %2016 = vmatpush2.msra.mxu0 0.0
        %2017 = vmatprep.subr.mxu0 0.0
        %2018 = vmatpush2.msra.mxu0 0.0
        %2019 = vmatprep.subr.mxu0 0.0
        %2020 = vmatpush2.msra.mxu0 0.0
        %2021 = vmatprep.subr.mxu0 0.0
        %2022 = vmatpush2.msra.mxu0 0.0
        %2023 = vmatprep.subr.mxu0 0.0
        %2024 = vmatpush2.msra.mxu0 0.0
        %2025 = vmatprep.subr.mxu0 0.0
        %2026 = vmatpush2.msra.mxu0 0.0
        %2027 = vmatprep.subr.mxu0 0.0
        %2028 = vmatpush2.msra.mxu0 0.0
        %2029 = vmatprep.subr.mxu0 0.0
        %2030 = vmatpush2.msra.mxu0 0.0
        %2031 = vmatprep.mubr.f32.mxu0 0.0
        %2032 = vmatmul.mubr.f32.gmra.mxu0 %v1857
        %v2033 = vpop.f32.mrf.mxu0
        %v2034 = vadd.f32 0.0, %v2033
        %v2035 = vpop.f32.mrf.mxu0
        %2036 = vmatprep.mubr.f32.mxu0 0.0
        %2037 = vmatmul.mubr.f32.gmra.mxu0 %v1860
        %v2038 = vpop.f32.mrf.mxu0
        %v2039 = vadd.f32 0.0, %v2038
        %v2040 = vpop.f32.mrf.mxu0
        %2041 = vdwg.mxu0
        %s2042 = scalar_lea.vmem %s261, 176
        %v2043 = vld [vmem:[%s2042] sm:$0xff]
        %v2044 = vld [vmem:[%s2042 + $0x8] sm:$0xff]
        %2047 = vrot.lane.b32.xlu0 %v2034, 1
        %v2048 = vpop.permute.xlu0 %2047
        %2049 = vrot.lane.b32.xlu0 %v2039, 1
        %v2050 = vpop.permute.xlu0 %2049
        %v2053 = vadd.f32 %v2043, %v2048
        %v2054 = vadd.f32 %v2044, %v2050
        %v2055 = vmax.f32 %v2053, -1.0
        %v2056 = vmax.f32 %v2054, -1.0
        %v2057 = vmin.f32 %v2055, 1.0
        %v2058 = vmin.f32 %v2056, 1.0
        %2061 = vrot.lane.b32.xlu0 %v2057, 127
        %v2062 = vpop.permute.xlu0 %2061
        %2063 = vrot.lane.b32.xlu0 %v2058, 127
        %v2064 = vpop.permute.xlu0 %2063
        %s2067 = scalar_lea.vmem %s266, 176
        %2068 = vst.msk [vmem:[%s2067] sm:$0xff] %vm271, %v2062
        %2069 = vst.msk [vmem:[%s2067 + $0x8] sm:$0xff] %vm271, %v2064
        %p2070 = scmp.lt.s32.totalorder %s19, 1
        %s2071 = scalar_select %p2070, %s19, 1
        %s2072 = smul.addr %s2071, 24
        %s2073 = smul.addr %s2072, 8
        %s2074 = scalar_lea.vmem %s4, %s2073
        // Predicated region
        $region49: #{_lambda_.7} parent=35 // pred_check
          %p2075 = pneg %p131
        $region50: #{_lambda_.7} parent=35 // pred_check_branch
          %2077 = sbr.rel (%p2075) target = $region52
        $region51: #{_lambda_.7} parent=35 // pred_region
          _
        $region52: #{_lambda_.7} parent=35 // pred_fallthru
          _
      $region36: #{_lambda_.7} parent=5 // pred_fallthru
        _
      %p2078 = scmp.le.s32.totalorder 2, %s14
      // Predicated region
      $region53: #{_lambda_.7} parent=5 // pred_check
        %p2079 = pneg %p2078
      $region54: #{_lambda_.7} parent=5 // pred_check_branch
        %2081 = sbr.rel (%p2079) target = $region56
      $region55: #{_lambda_.7} parent=5 // pred_region
        %s2082 = ssub.s32 %s14, 2
        // Predicated region
        $region57: #{_lambda_.7} parent=55 // pred_check
          %p2083 = pneg %p137
        $region58: #{_lambda_.7} parent=55 // pred_check_branch
          %2085 = sbr.rel (%p2083) target = $region60
        $region59: #{_lambda_.7} parent=55 // pred_region
          %p2086 = scmp.lt.s32.totalorder %s20, 1
          %s2087 = scalar_select %p2086, %s20, 1
          %s2088 = smul.addr %s2087, 24
          %s2089 = smul.addr %s2088, 8
          %s2090 = scalar_lea.vmem %s4, %s2089
        $region60: #{_lambda_.7} parent=55 // pred_fallthru
          _
      $region56: #{_lambda_.7} parent=5 // pred_fallthru
        _
    $region6: #{_lambda_.7} parent=1 // loop_footer
      %s18 = sadd.s32 1, %s14
    $region7: #{_lambda_.7} parent=1 // loop_footer_branch
      %13 = sbr.rel target = $region3
    $region8: #{_lambda_.7} parent=1 // loop_exit
      _
    %2091 = vsyncpa [#allocation3], 1
    %s2092 = scalar_lea.sflag [#allocation3], 1
    %2093 = vsyncpa %s2092, 1
    %2094 = vsyncpa [#allocation5], 1

</llo_original>
